<compile_context>
chip_gen: v6e
topology: v6e:2x2x1
jax: 0.10.0
libtpu: 0.0.40
codegen_flags: <defaults>
</compile_context>

<pallas_src>
import jax
import jax.numpy as jnp
from jax.experimental import pallas as pl
from jax.experimental.pallas import tpu as pltpu


# ----------------------------------------------------------------------------
# In-kernel BiLSTM stage (direction-fused, per-gate pre-split weights)
# ----------------------------------------------------------------------------
def _bilstm_stage(x, wx_ref, wh_ref, b_ref):
    """One bidirectional LSTM layer on a VMEM/vreg-resident value.

    x:      (T, B, Din) f32, time-major.
    wx_ref: (4, 2*Din, 2H) bf16  per-gate input weights, block-diag over
            [x(t) | x(T-1-t)] so one matmul covers both directions.
    wh_ref: (4, 2H, 2H)   bf16  per-gate hidden weights, block-diag over [h_f|h_r].
    b_ref:  (4, 1, 2H)    f32   per-gate [b_fwd | b_rev] (stands in for b_ih+b_hh).
    Gate order along the leading axis: (i, f, o, g).

    Returns (T, B, 2H) f32 with out[t] = [h_fwd(t) | h_rev(t)] (PyTorch concat).
    """
    T, B, Din = x.shape
    H2 = wh_ref.shape[2]
    H = H2 // 2

    # Pair each timestep with its time-mirror so the block-diagonal weights
    # give the reverse direction its reversed input stream for free.
    # (Static stack of leading-dim slices; no lax.rev needed.)
    x_rev = jnp.stack([x[T - 1 - t] for t in range(T)], axis=0)       # (T,B,Din)
    xx = jnp.concatenate([x, x_rev], axis=-1)                          # (T,B,2Din)
    xx2 = xx.reshape(T * B, 2 * Din).astype(jnp.bfloat16)

    # Hoisted per-gate input projections (bias folded in), time-major so the
    # per-step read is a leading-dim index.  bf16 operands, f32 accumulate.
    gx = [
        (jnp.dot(xx2, wx_ref[k], preferred_element_type=jnp.float32)
         + b_ref[k]).reshape(T, B, H2)
        for k in range(4)
    ]
    wh = [wh_ref[k] for k in range(4)]                                 # bf16 (2H,2H)

    # Serial recurrence: only h @ W_hh per gate on the critical path; every
    # gate tile lives at lane offset 0 (no gate slicing).  h/c stay f32.
    h = jnp.zeros((B, H2), jnp.float32)
    c = jnp.zeros((B, H2), jnp.float32)
    hs = []
    for s in range(T):
        hb = h.astype(jnp.bfloat16)
        i = jax.nn.sigmoid(gx[0][s] + jnp.dot(hb, wh[0], preferred_element_type=jnp.float32))
        f = jax.nn.sigmoid(gx[1][s] + jnp.dot(hb, wh[1], preferred_element_type=jnp.float32))
        o = jax.nn.sigmoid(gx[2][s] + jnp.dot(hb, wh[2], preferred_element_type=jnp.float32))
        g = jnp.tanh(gx[3][s] + jnp.dot(hb, wh[3], preferred_element_type=jnp.float32))
        c = f * c + i * g
        h = o * jnp.tanh(c)
        hs.append(h)

    # Epilogue (off the serial path): reassemble PyTorch-style output
    # out[t] = [fwd hidden at step t | rev hidden at step T-1-t].
    out = jnp.stack(
        [jnp.concatenate([hs[t][:, :H], hs[T - 1 - t][:, H:]], axis=-1)
         for t in range(T)],
        axis=0)                                                        # (T,B,2H)
    return out


# ----------------------------------------------------------------------------
# Fused forward kernel: 3 BiLSTM layers + fused classifier heads, one launch
# (per batch tile).  Activations are handed between stages as values; each
# output ref is written exactly once (slab writeback).
# ----------------------------------------------------------------------------
def _postagger_kernel(
    x_ref,                                   # (T, Bt, D) f32, time-major
    wx1, wh1, b1,                            # wordBILSTM1 stand-in
    wx2, wh2, b2,                            # wordBILSTM2 stand-in
    wx3, wh3, b3,                            # tag_bilstm
    wc_ref, bc_ref,                          # fused classifiers (lane-padded)
    emb2_ref, emb3_ref, emb4_ref, logits_ref,
):
    x1 = x_ref[...]

    y1 = _bilstm_stage(x1, wx1, wh1, b1)     # (T, Bt, 2H1)
    emb2_ref[...] = y1                       # single slab write

    y2 = _bilstm_stage(y1, wx2, wh2, b2)     # (T, Bt, 2H2)
    emb3_ref[...] = y2

    y3 = _bilstm_stage(y2, wx3, wh3, b3)     # (T, Bt, 2H3)
    emb4_ref[...] = y3

    # Dropout(0.4) is identity in eval mode.  Fused classifier heads: one
    # lane-dense (Cpad multiple of 128) matmul, bf16 operands, f32 accumulate.
    T, Bt, H2o = y3.shape
    logits = (jnp.dot(y3.reshape(T * Bt, H2o).astype(jnp.bfloat16), wc_ref[...],
                      preferred_element_type=jnp.float32) + bc_ref[...])
    logits_ref[...] = logits.reshape(T, Bt, -1)


def postagger_forward_pallas(x_tm, p_word1, p_word2, p_tag, wc, bc, *, b_tile=8):
    """x_tm: (T, Bp, D) f32 time-major, Bp a multiple of b_tile (itself a
    multiple of 8).  Returns time-major (emb2, emb3, emb4, padded_logits)."""
    T, Bp, D = x_tm.shape
    assert Bp % b_tile == 0 and b_tile % 8 == 0
    H1 = p_word1[1].shape[2] // 2
    H2 = p_word2[1].shape[2] // 2
    H3 = p_tag[1].shape[2] // 2
    Cpad = wc.shape[1]

    grid = (Bp // b_tile,)

    def batch_map(b):
        return (0, b, 0)

    def const3(b):
        return (0, 0, 0)

    def const2(b):
        return (0, 0)

    def full3(arr):
        return pl.BlockSpec(arr.shape, const3)

    in_specs = [
        pl.BlockSpec((T, b_tile, D), batch_map),
        full3(p_word1[0]), full3(p_word1[1]), full3(p_word1[2]),
        full3(p_word2[0]), full3(p_word2[1]), full3(p_word2[2]),
        full3(p_tag[0]), full3(p_tag[1]), full3(p_tag[2]),
        pl.BlockSpec(wc.shape, const2),
        pl.BlockSpec(bc.shape, const2),
    ]
    out_specs = (
        pl.BlockSpec((T, b_tile, 2 * H1), batch_map),
        pl.BlockSpec((T, b_tile, 2 * H2), batch_map),
        pl.BlockSpec((T, b_tile, 2 * H3), batch_map),
        pl.BlockSpec((T, b_tile, Cpad), batch_map),
    )
    out_shape = (
        jax.ShapeDtypeStruct((T, Bp, 2 * H1), jnp.float32),
        jax.ShapeDtypeStruct((T, Bp, 2 * H2), jnp.float32),
        jax.ShapeDtypeStruct((T, Bp, 2 * H3), jnp.float32),
        jax.ShapeDtypeStruct((T, Bp, Cpad), jnp.float32),
    )

    return pl.pallas_call(
        _postagger_kernel,
        out_shape=out_shape,
        grid=grid,
        in_specs=in_specs,
        out_specs=out_specs,
        compiler_params=pltpu.CompilerParams(
            # Batch tiles are independent -> parallel axis (v7x dual-TC).
            dimension_semantics=("parallel",),
            # Per-tile footprint is a few hundred KiB; explicit, safe budget
            # on all of v5e/v6e/v7x.
            vmem_limit_bytes=32 * 1024 * 1024,
        ),
    )(x_tm, *p_word1, *p_word2, *p_tag, wc, bc)


# ----------------------------------------------------------------------------
# Parameter construction (deterministic, synthetic)
# ----------------------------------------------------------------------------
def init_bilstm_packed(key, Din, H, scale=0.1, mm_dtype=jnp.bfloat16):
    """Per-gate, direction-fused, block-diagonal BiLSTM weight packing.

    Returns:
      wx: (4, 2*Din, 2H) mm_dtype  — block-diag [[W_ih_fwd, 0], [0, W_ih_rev]]
      wh: (4, 2H, 2H)    mm_dtype  — block-diag [[W_hh_fwd, 0], [0, W_hh_rev]]
      b : (4, 1, 2H)     f32       — [b_fwd | b_rev]  (stands in for b_ih + b_hh)
    Gate order on the leading axis: (i, f, o, g).  A real PyTorch checkpoint's
    (4H, ·) matrices would be split into its (i, f, g, o) row chunks and
    re-packed the same way.
    """
    ks = jax.random.split(key, 6)
    wih_f = scale * jax.random.normal(ks[0], (4, Din, H), jnp.float32)
    whh_f = scale * jax.random.normal(ks[1], (4, H, H), jnp.float32)
    b_f = scale * jax.random.normal(ks[2], (4, 1, H), jnp.float32)
    wih_r = scale * jax.random.normal(ks[3], (4, Din, H), jnp.float32)
    whh_r = scale * jax.random.normal(ks[4], (4, H, H), jnp.float32)
    b_r = scale * jax.random.normal(ks[5], (4, 1, H), jnp.float32)

    def blkdiag(a, c):
        # a: (4, P, H) fwd block, c: (4, Q, H) rev block -> (4, P+Q, 2H)
        P, Q = a.shape[1], c.shape[1]
        top = jnp.concatenate([a, jnp.zeros((4, P, H), jnp.float32)], axis=-1)
        bot = jnp.concatenate([jnp.zeros((4, Q, H), jnp.float32), c], axis=-1)
        return jnp.concatenate([top, bot], axis=1)

    wx = blkdiag(wih_f, wih_r).astype(mm_dtype)
    wh = blkdiag(whh_f, whh_r).astype(mm_dtype)
    b = jnp.concatenate([b_f, b_r], axis=-1)          # f32
    return wx, wh, b


def init_linear_params(key, K, C, scale=0.1):
    kw, kb = jax.random.split(key)
    return (scale * jax.random.normal(kw, (K, C), jnp.float32),
            scale * jax.random.normal(kb, (1, C), jnp.float32))


class POSTaggerPallas:
    """Pallas re-implementation of POSTagger.forward (inference semantics)."""

    def __init__(self, key, *, vocab_size, word_embedding_size, n_bilstm_hidden,
                 dataset_tag_counts):
        D = word_embedding_size
        H = n_bilstm_hidden
        self.D, self.H = D, H
        keys = jax.random.split(key, 5 + len(dataset_tag_counts))

        # charBILSTM stand-in: embedding table (lookup done in wrapper).
        self.char_emb = 0.1 * jax.random.normal(keys[0], (vocab_size, D), jnp.float32)

        # word BiLSTM stand-ins (output width D = 2 * (D // 2)).
        self.wordBILSTM1 = init_bilstm_packed(keys[1], D, D // 2)
        self.wordBILSTM2 = init_bilstm_packed(keys[2], D, D // 2)
        # tag_bilstm: LSTM(D, H, bidirectional=True, batch_first=True).
        self.tag_bilstm = init_bilstm_packed(keys[3], D, H)

        # Per-dataset classifiers, fused into one lane-padded (mult-of-128)
        # weight matrix; weights stored bf16 for MXU, bias/logits stay f32.
        self.dataset2id = {f"dataset_{i}": i for i in range(len(dataset_tag_counts))}
        ws, bs, slices = [], [], {}
        off = 0
        for i, c in enumerate(dataset_tag_counts):
            w, b = init_linear_params(keys[5 + i], 2 * H, c)
            ws.append(w)
            bs.append(b)
            slices[f"dataset_{i}"] = (off, c)
            off += c
        sum_c = off
        c_pad = ((sum_c + 127) // 128) * 128
        w_cat = jnp.concatenate(ws, axis=1)
        b_cat = jnp.concatenate(bs, axis=1)
        self.wc = jnp.pad(w_cat, ((0, 0), (0, c_pad - sum_c))).astype(jnp.bfloat16)
        self.bc = jnp.pad(b_cat, ((0, 0), (0, c_pad - sum_c)))
        self.dataset_slices = slices

    def __call__(self, token_ids):
        """token_ids: (B, T) int32.  All sequences have length T (lens == T)."""
        B, T = token_ids.shape
        output = {'embeddings1': None, 'embeddings2': None, 'embeddings3': None,
                  'embeddings3_fwd': None, 'embeddings3_rev': None,
                  'embeddings4': None, 'length': None}
        output.update({name: None for name in self.dataset2id})

        lens = [T] * B

        # charBILSTM stand-in (glue: embedding gather).
        embeddings1 = jnp.take(self.char_emb, token_ids, axis=0)    # (B, T, D)
        output['embeddings1'] = embeddings1

        # Pad batch to a multiple of 8 (f32 sublane tile) and go time-major
        # for the kernel; all layout plumbing stays in the wrapper.
        Bp = ((B + 7) // 8) * 8
        emb1_pad = embeddings1 if Bp == B else jnp.pad(
            embeddings1, ((0, Bp - B), (0, 0), (0, 0)))
        x_tm = jnp.transpose(emb1_pad, (1, 0, 2))                   # (T, Bp, D)

        # Single fused Pallas launch per batch tile: wordBILSTM1 -> wordBILSTM2
        # -> tag_bilstm -> fused classifier heads, all VMEM/vreg-resident.
        emb2_tm, emb3_tm, emb4_tm, logits_tm = postagger_forward_pallas(
            x_tm, self.wordBILSTM1, self.wordBILSTM2, self.tag_bilstm,
            self.wc, self.bc)

        to_bf = lambda a: jnp.transpose(a, (1, 0, 2))[:B]            # batch-first
        emb2 = to_bf(emb2_tm)                                        # (B, T, D)
        emb3 = to_bf(emb3_tm)                                        # (B, T, D)
        emb4 = to_bf(emb4_tm)                                        # (B, T, 2H)
        logits_pad = to_bf(logits_tm)                                # (B, T, Cpad)

        output['embeddings2'] = emb2
        output['embeddings3'] = emb3
        half = self.D // 2
        # TODO(synk): stand-in for wordBILSTM2's (rev, fwd) auxiliary outputs.
        output['embeddings3_fwd'] = emb3[..., :half]
        output['embeddings3_rev'] = emb3[..., half:]
        output['length'] = max(lens)
        # pack_sequence / pad_packed_sequence are identities for equal lengths.
        output['embeddings4'] = emb4

        # dropout(0.4) in eval mode -> identity (already applied as such).
        for name, (off, c) in self.dataset_slices.items():
            output[name] = logits_pad[:, :output['length'], off:off + c]  # (B, T, C)

        return output


if __name__ == "__main__":
    key = jax.random.PRNGKey(0)
    k_model, k_data = jax.random.split(key)

    B, T = 2, 8
    VOCAB = 50
    WORD_EMB = 32          # word_embedding_size (even: D//2 halves concat back to D)
    N_BILSTM_HIDDEN = 32   # n_bilstm_hidden -> classifier input is 64
    DATASET_TAGS = (12, 17)

    model = POSTaggerPallas(k_model,
                            vocab_size=VOCAB,
                            word_embedding_size=WORD_EMB,
                            n_bilstm_hidden=N_BILSTM_HIDDEN,
                            dataset_tag_counts=DATASET_TAGS)

    token_ids = jax.random.randint(k_data, (B, T), 0, VOCAB, dtype=jnp.int32)

    out = model(token_ids)
    for v in out.values():
        if isinstance(v, jnp.ndarray):
            jax.block_until_ready(v)

    assert out['embeddings1'].shape == (B, T, WORD_EMB)
    assert out['embeddings2'].shape == (B, T, WORD_EMB)
    assert out['embeddings3'].shape == (B, T, WORD_EMB)
    assert out['embeddings3_fwd'].shape == (B, T, WORD_EMB // 2)
    assert out['embeddings3_rev'].shape == (B, T, WORD_EMB // 2)
    assert out['embeddings4'].shape == (B, T, 2 * N_BILSTM_HIDDEN)
    assert out['dataset_0'].shape == (B, T, DATASET_TAGS[0])
    assert out['dataset_1'].shape == (B, T, DATASET_TAGS[1])
    assert out['length'] == T
    print("KERNEL_OK")
</pallas_src>

<mosaic_0001>
module attributes {stable_mosaic.version = 11 : i64} {
  func.func @_postagger_kernel(%arg0: i32, %arg1: memref<8x8x32xf32, #tpu.memory_space<vmem>>, %arg2: memref<4x64x32xbf16, #tpu.memory_space<vmem>>, %arg3: memref<4x32x32xbf16, #tpu.memory_space<vmem>>, %arg4: memref<4x1x32xf32, #tpu.memory_space<vmem>>, %arg5: memref<4x64x32xbf16, #tpu.memory_space<vmem>>, %arg6: memref<4x32x32xbf16, #tpu.memory_space<vmem>>, %arg7: memref<4x1x32xf32, #tpu.memory_space<vmem>>, %arg8: memref<4x64x64xbf16, #tpu.memory_space<vmem>>, %arg9: memref<4x64x64xbf16, #tpu.memory_space<vmem>>, %arg10: memref<4x1x64xf32, #tpu.memory_space<vmem>>, %arg11: memref<64x128xbf16, #tpu.memory_space<vmem>>, %arg12: memref<1x128xf32, #tpu.memory_space<vmem>>, %arg13: memref<8x8x32xf32, #tpu.memory_space<vmem>>, %arg14: memref<8x8x32xf32, #tpu.memory_space<vmem>>, %arg15: memref<8x8x64xf32, #tpu.memory_space<vmem>>, %arg16: memref<8x8x128xf32, #tpu.memory_space<vmem>>) attributes {dimension_semantics = [#tpu.dimension_semantics<parallel>], iteration_bounds = array<i64: 1>, scalar_prefetch = 0 : i64, scratch_operands = 0 : i64, tpu.core_type = #tpu.core_type<tc>, window_params = [{transform_indices = @transform_0, window_bounds = array<i64: 8, 8, 32>}, {pipeline_mode = #tpu.pipeline_mode<synchronous>, transform_indices = @transform_1, window_bounds = array<i64: 4, 64, 32>}, {pipeline_mode = #tpu.pipeline_mode<synchronous>, transform_indices = @transform_2, window_bounds = array<i64: 4, 32, 32>}, {pipeline_mode = #tpu.pipeline_mode<synchronous>, transform_indices = @transform_3, window_bounds = array<i64: 4, 1, 32>}, {pipeline_mode = #tpu.pipeline_mode<synchronous>, transform_indices = @transform_4, window_bounds = array<i64: 4, 64, 32>}, {pipeline_mode = #tpu.pipeline_mode<synchronous>, transform_indices = @transform_5, window_bounds = array<i64: 4, 32, 32>}, {pipeline_mode = #tpu.pipeline_mode<synchronous>, transform_indices = @transform_6, window_bounds = array<i64: 4, 1, 32>}, {pipeline_mode = #tpu.pipeline_mode<synchronous>, transform_indices = @transform_7, window_bounds = array<i64: 4, 64, 64>}, {pipeline_mode = #tpu.pipeline_mode<synchronous>, transform_indices = @transform_8, window_bounds = array<i64: 4, 64, 64>}, {pipeline_mode = #tpu.pipeline_mode<synchronous>, transform_indices = @transform_9, window_bounds = array<i64: 4, 1, 64>}, {pipeline_mode = #tpu.pipeline_mode<synchronous>, transform_indices = @transform_10, window_bounds = array<i64: 64, 128>}, {pipeline_mode = #tpu.pipeline_mode<synchronous>, transform_indices = @transform_11, window_bounds = array<i64: 1, 128>}, {transform_indices = @transform_12, window_bounds = array<i64: 8, 8, 32>}, {transform_indices = @transform_13, window_bounds = array<i64: 8, 8, 32>}, {transform_indices = @transform_14, window_bounds = array<i64: 8, 8, 64>}, {transform_indices = @transform_15, window_bounds = array<i64: 8, 8, 128>}]} {
    %c0 = arith.constant 0 : index
    %c0_0 = arith.constant 0 : index
    %c0_1 = arith.constant 0 : index
    %0 = vector.load %arg1[%c0, %c0_0, %c0_1] : memref<8x8x32xf32, #tpu.memory_space<vmem>>, vector<8x8x32xf32>
    %1 = vector.extract_strided_slice %0 {offsets = [7, 0, 0], sizes = [1, 8, 32], strides = [1, 1, 1]} : vector<8x8x32xf32> to vector<1x8x32xf32>
    %2 = vector.shape_cast %1 : vector<1x8x32xf32> to vector<8x32xf32>
    %3 = vector.extract_strided_slice %0 {offsets = [6, 0, 0], sizes = [1, 8, 32], strides = [1, 1, 1]} : vector<8x8x32xf32> to vector<1x8x32xf32>
    %4 = vector.shape_cast %3 : vector<1x8x32xf32> to vector<8x32xf32>
    %5 = vector.extract_strided_slice %0 {offsets = [5, 0, 0], sizes = [1, 8, 32], strides = [1, 1, 1]} : vector<8x8x32xf32> to vector<1x8x32xf32>
    %6 = vector.shape_cast %5 : vector<1x8x32xf32> to vector<8x32xf32>
    %7 = vector.extract_strided_slice %0 {offsets = [4, 0, 0], sizes = [1, 8, 32], strides = [1, 1, 1]} : vector<8x8x32xf32> to vector<1x8x32xf32>
    %8 = vector.shape_cast %7 : vector<1x8x32xf32> to vector<8x32xf32>
    %9 = vector.extract_strided_slice %0 {offsets = [3, 0, 0], sizes = [1, 8, 32], strides = [1, 1, 1]} : vector<8x8x32xf32> to vector<1x8x32xf32>
    %10 = vector.shape_cast %9 : vector<1x8x32xf32> to vector<8x32xf32>
    %11 = vector.extract_strided_slice %0 {offsets = [2, 0, 0], sizes = [1, 8, 32], strides = [1, 1, 1]} : vector<8x8x32xf32> to vector<1x8x32xf32>
    %12 = vector.shape_cast %11 : vector<1x8x32xf32> to vector<8x32xf32>
    %13 = vector.extract_strided_slice %0 {offsets = [1, 0, 0], sizes = [1, 8, 32], strides = [1, 1, 1]} : vector<8x8x32xf32> to vector<1x8x32xf32>
    %14 = vector.shape_cast %13 : vector<1x8x32xf32> to vector<8x32xf32>
    %15 = vector.extract_strided_slice %0 {offsets = [0, 0, 0], sizes = [1, 8, 32], strides = [1, 1, 1]} : vector<8x8x32xf32> to vector<1x8x32xf32>
    %16 = vector.shape_cast %15 : vector<1x8x32xf32> to vector<8x32xf32>
    %17 = vector.shape_cast %2 : vector<8x32xf32> to vector<1x8x32xf32>
    %18 = vector.shape_cast %4 : vector<8x32xf32> to vector<1x8x32xf32>
    %19 = vector.shape_cast %6 : vector<8x32xf32> to vector<1x8x32xf32>
    %20 = vector.shape_cast %8 : vector<8x32xf32> to vector<1x8x32xf32>
    %21 = vector.shape_cast %10 : vector<8x32xf32> to vector<1x8x32xf32>
    %22 = vector.shape_cast %12 : vector<8x32xf32> to vector<1x8x32xf32>
    %23 = vector.shape_cast %14 : vector<8x32xf32> to vector<1x8x32xf32>
    %24 = vector.shape_cast %16 : vector<8x32xf32> to vector<1x8x32xf32>
    %25 = tpu.concatenate %17, %18, %19, %20, %21, %22, %23, %24 in 0 : vector<1x8x32xf32>, vector<1x8x32xf32>, vector<1x8x32xf32>, vector<1x8x32xf32>, vector<1x8x32xf32>, vector<1x8x32xf32>, vector<1x8x32xf32>, vector<1x8x32xf32> -> vector<8x8x32xf32>
    %26 = tpu.concatenate %0, %25 in 2 : vector<8x8x32xf32>, vector<8x8x32xf32> -> vector<8x8x64xf32>
    %27 = vector.shape_cast %26 : vector<8x8x64xf32> to vector<64x64xf32>
    %28 = arith.truncf %27 : vector<64x64xf32> to vector<64x64xbf16>
    %c0_2 = arith.constant 0 : index
    %c0_3 = arith.constant 0 : index
    %c0_4 = arith.constant 0 : index
    %29 = vector.load %arg2[%c0_2, %c0_3, %c0_4] : memref<4x64x32xbf16, #tpu.memory_space<vmem>>, vector<1x64x32xbf16>
    %30 = vector.shape_cast %29 : vector<1x64x32xbf16> to vector<64x32xbf16>
    %cst = arith.constant dense<0.000000e+00> : vector<64x32xf32>
    %31 = tpu.matmul %28, %30, %cst {dimension_numbers = #tpu.dot_dimension_numbers<[1], [0], [0], [1], [0, 0, 1, 1], [], []>} : vector<64x64xbf16>, vector<64x32xbf16>, vector<64x32xf32> -> vector<64x32xf32>
    %c0_5 = arith.constant 0 : index
    %c0_6 = arith.constant 0 : index
    %c0_7 = arith.constant 0 : index
    %32 = vector.load %arg4[%c0_5, %c0_6, %c0_7] : memref<4x1x32xf32, #tpu.memory_space<vmem>>, vector<1x1x32xf32>
    %33 = vector.shape_cast %32 : vector<1x1x32xf32> to vector<1x32xf32>
    %34 = vector.broadcast %33 : vector<1x32xf32> to vector<64x32xf32>
    %35 = arith.addf %31, %34 : vector<64x32xf32>
    %36 = vector.shape_cast %35 : vector<64x32xf32> to vector<8x8x32xf32>
    %c1 = arith.constant 1 : index
    %c0_8 = arith.constant 0 : index
    %c0_9 = arith.constant 0 : index
    %37 = vector.load %arg2[%c1, %c0_8, %c0_9] : memref<4x64x32xbf16, #tpu.memory_space<vmem>>, vector<1x64x32xbf16>
    %38 = vector.shape_cast %37 : vector<1x64x32xbf16> to vector<64x32xbf16>
    %cst_10 = arith.constant dense<0.000000e+00> : vector<64x32xf32>
    %39 = tpu.matmul %28, %38, %cst_10 {dimension_numbers = #tpu.dot_dimension_numbers<[1], [0], [0], [1], [0, 0, 1, 1], [], []>} : vector<64x64xbf16>, vector<64x32xbf16>, vector<64x32xf32> -> vector<64x32xf32>
    %c1_11 = arith.constant 1 : index
    %c0_12 = arith.constant 0 : index
    %c0_13 = arith.constant 0 : index
    %40 = vector.load %arg4[%c1_11, %c0_12, %c0_13] : memref<4x1x32xf32, #tpu.memory_space<vmem>>, vector<1x1x32xf32>
    %41 = vector.shape_cast %40 : vector<1x1x32xf32> to vector<1x32xf32>
    %42 = vector.broadcast %41 : vector<1x32xf32> to vector<64x32xf32>
    %43 = arith.addf %39, %42 : vector<64x32xf32>
    %44 = vector.shape_cast %43 : vector<64x32xf32> to vector<8x8x32xf32>
    %c2 = arith.constant 2 : index
    %c0_14 = arith.constant 0 : index
    %c0_15 = arith.constant 0 : index
    %45 = vector.load %arg2[%c2, %c0_14, %c0_15] : memref<4x64x32xbf16, #tpu.memory_space<vmem>>, vector<1x64x32xbf16>
    %46 = vector.shape_cast %45 : vector<1x64x32xbf16> to vector<64x32xbf16>
    %cst_16 = arith.constant dense<0.000000e+00> : vector<64x32xf32>
    %47 = tpu.matmul %28, %46, %cst_16 {dimension_numbers = #tpu.dot_dimension_numbers<[1], [0], [0], [1], [0, 0, 1, 1], [], []>} : vector<64x64xbf16>, vector<64x32xbf16>, vector<64x32xf32> -> vector<64x32xf32>
    %c2_17 = arith.constant 2 : index
    %c0_18 = arith.constant 0 : index
    %c0_19 = arith.constant 0 : index
    %48 = vector.load %arg4[%c2_17, %c0_18, %c0_19] : memref<4x1x32xf32, #tpu.memory_space<vmem>>, vector<1x1x32xf32>
    %49 = vector.shape_cast %48 : vector<1x1x32xf32> to vector<1x32xf32>
    %50 = vector.broadcast %49 : vector<1x32xf32> to vector<64x32xf32>
    %51 = arith.addf %47, %50 : vector<64x32xf32>
    %52 = vector.shape_cast %51 : vector<64x32xf32> to vector<8x8x32xf32>
    %c3 = arith.constant 3 : index
    %c0_20 = arith.constant 0 : index
    %c0_21 = arith.constant 0 : index
    %53 = vector.load %arg2[%c3, %c0_20, %c0_21] : memref<4x64x32xbf16, #tpu.memory_space<vmem>>, vector<1x64x32xbf16>
    %54 = vector.shape_cast %53 : vector<1x64x32xbf16> to vector<64x32xbf16>
    %cst_22 = arith.constant dense<0.000000e+00> : vector<64x32xf32>
    %55 = tpu.matmul %28, %54, %cst_22 {dimension_numbers = #tpu.dot_dimension_numbers<[1], [0], [0], [1], [0, 0, 1, 1], [], []>} : vector<64x64xbf16>, vector<64x32xbf16>, vector<64x32xf32> -> vector<64x32xf32>
    %c3_23 = arith.constant 3 : index
    %c0_24 = arith.constant 0 : index
    %c0_25 = arith.constant 0 : index
    %56 = vector.load %arg4[%c3_23, %c0_24, %c0_25] : memref<4x1x32xf32, #tpu.memory_space<vmem>>, vector<1x1x32xf32>
    %57 = vector.shape_cast %56 : vector<1x1x32xf32> to vector<1x32xf32>
    %58 = vector.broadcast %57 : vector<1x32xf32> to vector<64x32xf32>
    %59 = arith.addf %55, %58 : vector<64x32xf32>
    %60 = vector.shape_cast %59 : vector<64x32xf32> to vector<8x8x32xf32>
    %c0_26 = arith.constant 0 : index
    %c0_27 = arith.constant 0 : index
    %c0_28 = arith.constant 0 : index
    %61 = vector.load %arg3[%c0_26, %c0_27, %c0_28] : memref<4x32x32xbf16, #tpu.memory_space<vmem>>, vector<1x32x32xbf16>
    %62 = vector.shape_cast %61 : vector<1x32x32xbf16> to vector<32x32xbf16>
    %c1_29 = arith.constant 1 : index
    %c0_30 = arith.constant 0 : index
    %c0_31 = arith.constant 0 : index
    %63 = vector.load %arg3[%c1_29, %c0_30, %c0_31] : memref<4x32x32xbf16, #tpu.memory_space<vmem>>, vector<1x32x32xbf16>
    %64 = vector.shape_cast %63 : vector<1x32x32xbf16> to vector<32x32xbf16>
    %c2_32 = arith.constant 2 : index
    %c0_33 = arith.constant 0 : index
    %c0_34 = arith.constant 0 : index
    %65 = vector.load %arg3[%c2_32, %c0_33, %c0_34] : memref<4x32x32xbf16, #tpu.memory_space<vmem>>, vector<1x32x32xbf16>
    %66 = vector.shape_cast %65 : vector<1x32x32xbf16> to vector<32x32xbf16>
    %c3_35 = arith.constant 3 : index
    %c0_36 = arith.constant 0 : index
    %c0_37 = arith.constant 0 : index
    %67 = vector.load %arg3[%c3_35, %c0_36, %c0_37] : memref<4x32x32xbf16, #tpu.memory_space<vmem>>, vector<1x32x32xbf16>
    %68 = vector.shape_cast %67 : vector<1x32x32xbf16> to vector<32x32xbf16>
    %cst_38 = arith.constant 0.000000e+00 : f32
    %69 = vector.broadcast %cst_38 : f32 to vector<8x32xf32>
    %cst_39 = arith.constant 0.000000e+00 : f32
    %70 = vector.broadcast %cst_39 : f32 to vector<8x32xf32>
    %71 = arith.truncf %69 : vector<8x32xf32> to vector<8x32xbf16>
    %72 = vector.extract_strided_slice %36 {offsets = [0, 0, 0], sizes = [1, 8, 32], strides = [1, 1, 1]} : vector<8x8x32xf32> to vector<1x8x32xf32>
    %73 = vector.shape_cast %72 : vector<1x8x32xf32> to vector<8x32xf32>
    %cst_40 = arith.constant dense<0.000000e+00> : vector<8x32xf32>
    %74 = tpu.matmul %71, %62, %cst_40 {dimension_numbers = #tpu.dot_dimension_numbers<[1], [0], [0], [1], [0, 0, 1, 1], [], []>} : vector<8x32xbf16>, vector<32x32xbf16>, vector<8x32xf32> -> vector<8x32xf32>
    %75 = arith.addf %73, %74 : vector<8x32xf32>
    %76 = arith.negf %75 : vector<8x32xf32>
    %77 = math.exp %76 : vector<8x32xf32>
    %cst_41 = arith.constant 1.000000e+00 : f32
    %78 = vector.broadcast %cst_41 : f32 to vector<8x32xf32>
    %79 = arith.addf %78, %77 : vector<8x32xf32>
    %80 = arith.divf %78, %79 : vector<8x32xf32>
    %81 = vector.extract_strided_slice %44 {offsets = [0, 0, 0], sizes = [1, 8, 32], strides = [1, 1, 1]} : vector<8x8x32xf32> to vector<1x8x32xf32>
    %82 = vector.shape_cast %81 : vector<1x8x32xf32> to vector<8x32xf32>
    %cst_42 = arith.constant dense<0.000000e+00> : vector<8x32xf32>
    %83 = tpu.matmul %71, %64, %cst_42 {dimension_numbers = #tpu.dot_dimension_numbers<[1], [0], [0], [1], [0, 0, 1, 1], [], []>} : vector<8x32xbf16>, vector<32x32xbf16>, vector<8x32xf32> -> vector<8x32xf32>
    %84 = arith.addf %82, %83 : vector<8x32xf32>
    %85 = arith.negf %84 : vector<8x32xf32>
    %86 = math.exp %85 : vector<8x32xf32>
    %cst_43 = arith.constant 1.000000e+00 : f32
    %87 = vector.broadcast %cst_43 : f32 to vector<8x32xf32>
    %88 = arith.addf %87, %86 : vector<8x32xf32>
    %89 = arith.divf %87, %88 : vector<8x32xf32>
    %90 = vector.extract_strided_slice %52 {offsets = [0, 0, 0], sizes = [1, 8, 32], strides = [1, 1, 1]} : vector<8x8x32xf32> to vector<1x8x32xf32>
    %91 = vector.shape_cast %90 : vector<1x8x32xf32> to vector<8x32xf32>
    %cst_44 = arith.constant dense<0.000000e+00> : vector<8x32xf32>
    %92 = tpu.matmul %71, %66, %cst_44 {dimension_numbers = #tpu.dot_dimension_numbers<[1], [0], [0], [1], [0, 0, 1, 1], [], []>} : vector<8x32xbf16>, vector<32x32xbf16>, vector<8x32xf32> -> vector<8x32xf32>
    %93 = arith.addf %91, %92 : vector<8x32xf32>
    %94 = arith.negf %93 : vector<8x32xf32>
    %95 = math.exp %94 : vector<8x32xf32>
    %cst_45 = arith.constant 1.000000e+00 : f32
    %96 = vector.broadcast %cst_45 : f32 to vector<8x32xf32>
    %97 = arith.addf %96, %95 : vector<8x32xf32>
    %98 = arith.divf %96, %97 : vector<8x32xf32>
    %99 = vector.extract_strided_slice %60 {offsets = [0, 0, 0], sizes = [1, 8, 32], strides = [1, 1, 1]} : vector<8x8x32xf32> to vector<1x8x32xf32>
    %100 = vector.shape_cast %99 : vector<1x8x32xf32> to vector<8x32xf32>
    %cst_46 = arith.constant dense<0.000000e+00> : vector<8x32xf32>
    %101 = tpu.matmul %71, %68, %cst_46 {dimension_numbers = #tpu.dot_dimension_numbers<[1], [0], [0], [1], [0, 0, 1, 1], [], []>} : vector<8x32xbf16>, vector<32x32xbf16>, vector<8x32xf32> -> vector<8x32xf32>
    %102 = arith.addf %100, %101 : vector<8x32xf32>
    %103 = math.tanh %102 : vector<8x32xf32>
    %104 = arith.mulf %89, %70 : vector<8x32xf32>
    %105 = arith.mulf %80, %103 : vector<8x32xf32>
    %106 = arith.addf %104, %105 : vector<8x32xf32>
    %107 = math.tanh %106 : vector<8x32xf32>
    %108 = arith.mulf %98, %107 : vector<8x32xf32>
    %109 = arith.truncf %108 : vector<8x32xf32> to vector<8x32xbf16>
    %110 = vector.extract_strided_slice %36 {offsets = [1, 0, 0], sizes = [1, 8, 32], strides = [1, 1, 1]} : vector<8x8x32xf32> to vector<1x8x32xf32>
    %111 = vector.shape_cast %110 : vector<1x8x32xf32> to vector<8x32xf32>
    %cst_47 = arith.constant dense<0.000000e+00> : vector<8x32xf32>
    %112 = tpu.matmul %109, %62, %cst_47 {dimension_numbers = #tpu.dot_dimension_numbers<[1], [0], [0], [1], [0, 0, 1, 1], [], []>} : vector<8x32xbf16>, vector<32x32xbf16>, vector<8x32xf32> -> vector<8x32xf32>
    %113 = arith.addf %111, %112 : vector<8x32xf32>
    %114 = arith.negf %113 : vector<8x32xf32>
    %115 = math.exp %114 : vector<8x32xf32>
    %cst_48 = arith.constant 1.000000e+00 : f32
    %116 = vector.broadcast %cst_48 : f32 to vector<8x32xf32>
    %117 = arith.addf %116, %115 : vector<8x32xf32>
    %118 = arith.divf %116, %117 : vector<8x32xf32>
    %119 = vector.extract_strided_slice %44 {offsets = [1, 0, 0], sizes = [1, 8, 32], strides = [1, 1, 1]} : vector<8x8x32xf32> to vector<1x8x32xf32>
    %120 = vector.shape_cast %119 : vector<1x8x32xf32> to vector<8x32xf32>
    %cst_49 = arith.constant dense<0.000000e+00> : vector<8x32xf32>
    %121 = tpu.matmul %109, %64, %cst_49 {dimension_numbers = #tpu.dot_dimension_numbers<[1], [0], [0], [1], [0, 0, 1, 1], [], []>} : vector<8x32xbf16>, vector<32x32xbf16>, vector<8x32xf32> -> vector<8x32xf32>
    %122 = arith.addf %120, %121 : vector<8x32xf32>
    %123 = arith.negf %122 : vector<8x32xf32>
    %124 = math.exp %123 : vector<8x32xf32>
    %cst_50 = arith.constant 1.000000e+00 : f32
    %125 = vector.broadcast %cst_50 : f32 to vector<8x32xf32>
    %126 = arith.addf %125, %124 : vector<8x32xf32>
    %127 = arith.divf %125, %126 : vector<8x32xf32>
    %128 = vector.extract_strided_slice %52 {offsets = [1, 0, 0], sizes = [1, 8, 32], strides = [1, 1, 1]} : vector<8x8x32xf32> to vector<1x8x32xf32>
    %129 = vector.shape_cast %128 : vector<1x8x32xf32> to vector<8x32xf32>
    %cst_51 = arith.constant dense<0.000000e+00> : vector<8x32xf32>
    %130 = tpu.matmul %109, %66, %cst_51 {dimension_numbers = #tpu.dot_dimension_numbers<[1], [0], [0], [1], [0, 0, 1, 1], [], []>} : vector<8x32xbf16>, vector<32x32xbf16>, vector<8x32xf32> -> vector<8x32xf32>
    %131 = arith.addf %129, %130 : vector<8x32xf32>
    %132 = arith.negf %131 : vector<8x32xf32>
    %133 = math.exp %132 : vector<8x32xf32>
    %cst_52 = arith.constant 1.000000e+00 : f32
    %134 = vector.broadcast %cst_52 : f32 to vector<8x32xf32>
    %135 = arith.addf %134, %133 : vector<8x32xf32>
    %136 = arith.divf %134, %135 : vector<8x32xf32>
    %137 = vector.extract_strided_slice %60 {offsets = [1, 0, 0], sizes = [1, 8, 32], strides = [1, 1, 1]} : vector<8x8x32xf32> to vector<1x8x32xf32>
    %138 = vector.shape_cast %137 : vector<1x8x32xf32> to vector<8x32xf32>
    %cst_53 = arith.constant dense<0.000000e+00> : vector<8x32xf32>
    %139 = tpu.matmul %109, %68, %cst_53 {dimension_numbers = #tpu.dot_dimension_numbers<[1], [0], [0], [1], [0, 0, 1, 1], [], []>} : vector<8x32xbf16>, vector<32x32xbf16>, vector<8x32xf32> -> vector<8x32xf32>
    %140 = arith.addf %138, %139 : vector<8x32xf32>
    %141 = math.tanh %140 : vector<8x32xf32>
    %142 = arith.mulf %127, %106 : vector<8x32xf32>
    %143 = arith.mulf %118, %141 : vector<8x32xf32>
    %144 = arith.addf %142, %143 : vector<8x32xf32>
    %145 = math.tanh %144 : vector<8x32xf32>
    %146 = arith.mulf %136, %145 : vector<8x32xf32>
    %147 = arith.truncf %146 : vector<8x32xf32> to vector<8x32xbf16>
    %148 = vector.extract_strided_slice %36 {offsets = [2, 0, 0], sizes = [1, 8, 32], strides = [1, 1, 1]} : vector<8x8x32xf32> to vector<1x8x32xf32>
    %149 = vector.shape_cast %148 : vector<1x8x32xf32> to vector<8x32xf32>
    %cst_54 = arith.constant dense<0.000000e+00> : vector<8x32xf32>
    %150 = tpu.matmul %147, %62, %cst_54 {dimension_numbers = #tpu.dot_dimension_numbers<[1], [0], [0], [1], [0, 0, 1, 1], [], []>} : vector<8x32xbf16>, vector<32x32xbf16>, vector<8x32xf32> -> vector<8x32xf32>
    %151 = arith.addf %149, %150 : vector<8x32xf32>
    %152 = arith.negf %151 : vector<8x32xf32>
    %153 = math.exp %152 : vector<8x32xf32>
    %cst_55 = arith.constant 1.000000e+00 : f32
    %154 = vector.broadcast %cst_55 : f32 to vector<8x32xf32>
    %155 = arith.addf %154, %153 : vector<8x32xf32>
    %156 = arith.divf %154, %155 : vector<8x32xf32>
    %157 = vector.extract_strided_slice %44 {offsets = [2, 0, 0], sizes = [1, 8, 32], strides = [1, 1, 1]} : vector<8x8x32xf32> to vector<1x8x32xf32>
    %158 = vector.shape_cast %157 : vector<1x8x32xf32> to vector<8x32xf32>
    %cst_56 = arith.constant dense<0.000000e+00> : vector<8x32xf32>
    %159 = tpu.matmul %147, %64, %cst_56 {dimension_numbers = #tpu.dot_dimension_numbers<[1], [0], [0], [1], [0, 0, 1, 1], [], []>} : vector<8x32xbf16>, vector<32x32xbf16>, vector<8x32xf32> -> vector<8x32xf32>
    %160 = arith.addf %158, %159 : vector<8x32xf32>
    %161 = arith.negf %160 : vector<8x32xf32>
    %162 = math.exp %161 : vector<8x32xf32>
    %cst_57 = arith.constant 1.000000e+00 : f32
    %163 = vector.broadcast %cst_57 : f32 to vector<8x32xf32>
    %164 = arith.addf %163, %162 : vector<8x32xf32>
    %165 = arith.divf %163, %164 : vector<8x32xf32>
    %166 = vector.extract_strided_slice %52 {offsets = [2, 0, 0], sizes = [1, 8, 32], strides = [1, 1, 1]} : vector<8x8x32xf32> to vector<1x8x32xf32>
    %167 = vector.shape_cast %166 : vector<1x8x32xf32> to vector<8x32xf32>
    %cst_58 = arith.constant dense<0.000000e+00> : vector<8x32xf32>
    %168 = tpu.matmul %147, %66, %cst_58 {dimension_numbers = #tpu.dot_dimension_numbers<[1], [0], [0], [1], [0, 0, 1, 1], [], []>} : vector<8x32xbf16>, vector<32x32xbf16>, vector<8x32xf32> -> vector<8x32xf32>
    %169 = arith.addf %167, %168 : vector<8x32xf32>
    %170 = arith.negf %169 : vector<8x32xf32>
    %171 = math.exp %170 : vector<8x32xf32>
    %cst_59 = arith.constant 1.000000e+00 : f32
    %172 = vector.broadcast %cst_59 : f32 to vector<8x32xf32>
    %173 = arith.addf %172, %171 : vector<8x32xf32>
    %174 = arith.divf %172, %173 : vector<8x32xf32>
    %175 = vector.extract_strided_slice %60 {offsets = [2, 0, 0], sizes = [1, 8, 32], strides = [1, 1, 1]} : vector<8x8x32xf32> to vector<1x8x32xf32>
    %176 = vector.shape_cast %175 : vector<1x8x32xf32> to vector<8x32xf32>
    %cst_60 = arith.constant dense<0.000000e+00> : vector<8x32xf32>
    %177 = tpu.matmul %147, %68, %cst_60 {dimension_numbers = #tpu.dot_dimension_numbers<[1], [0], [0], [1], [0, 0, 1, 1], [], []>} : vector<8x32xbf16>, vector<32x32xbf16>, vector<8x32xf32> -> vector<8x32xf32>
    %178 = arith.addf %176, %177 : vector<8x32xf32>
    %179 = math.tanh %178 : vector<8x32xf32>
    %180 = arith.mulf %165, %144 : vector<8x32xf32>
    %181 = arith.mulf %156, %179 : vector<8x32xf32>
    %182 = arith.addf %180, %181 : vector<8x32xf32>
    %183 = math.tanh %182 : vector<8x32xf32>
    %184 = arith.mulf %174, %183 : vector<8x32xf32>
    %185 = arith.truncf %184 : vector<8x32xf32> to vector<8x32xbf16>
    %186 = vector.extract_strided_slice %36 {offsets = [3, 0, 0], sizes = [1, 8, 32], strides = [1, 1, 1]} : vector<8x8x32xf32> to vector<1x8x32xf32>
    %187 = vector.shape_cast %186 : vector<1x8x32xf32> to vector<8x32xf32>
    %cst_61 = arith.constant dense<0.000000e+00> : vector<8x32xf32>
    %188 = tpu.matmul %185, %62, %cst_61 {dimension_numbers = #tpu.dot_dimension_numbers<[1], [0], [0], [1], [0, 0, 1, 1], [], []>} : vector<8x32xbf16>, vector<32x32xbf16>, vector<8x32xf32> -> vector<8x32xf32>
    %189 = arith.addf %187, %188 : vector<8x32xf32>
    %190 = arith.negf %189 : vector<8x32xf32>
    %191 = math.exp %190 : vector<8x32xf32>
    %cst_62 = arith.constant 1.000000e+00 : f32
    %192 = vector.broadcast %cst_62 : f32 to vector<8x32xf32>
    %193 = arith.addf %192, %191 : vector<8x32xf32>
    %194 = arith.divf %192, %193 : vector<8x32xf32>
    %195 = vector.extract_strided_slice %44 {offsets = [3, 0, 0], sizes = [1, 8, 32], strides = [1, 1, 1]} : vector<8x8x32xf32> to vector<1x8x32xf32>
    %196 = vector.shape_cast %195 : vector<1x8x32xf32> to vector<8x32xf32>
    %cst_63 = arith.constant dense<0.000000e+00> : vector<8x32xf32>
    %197 = tpu.matmul %185, %64, %cst_63 {dimension_numbers = #tpu.dot_dimension_numbers<[1], [0], [0], [1], [0, 0, 1, 1], [], []>} : vector<8x32xbf16>, vector<32x32xbf16>, vector<8x32xf32> -> vector<8x32xf32>
    %198 = arith.addf %196, %197 : vector<8x32xf32>
    %199 = arith.negf %198 : vector<8x32xf32>
    %200 = math.exp %199 : vector<8x32xf32>
    %cst_64 = arith.constant 1.000000e+00 : f32
    %201 = vector.broadcast %cst_64 : f32 to vector<8x32xf32>
    %202 = arith.addf %201, %200 : vector<8x32xf32>
    %203 = arith.divf %201, %202 : vector<8x32xf32>
    %204 = vector.extract_strided_slice %52 {offsets = [3, 0, 0], sizes = [1, 8, 32], strides = [1, 1, 1]} : vector<8x8x32xf32> to vector<1x8x32xf32>
    %205 = vector.shape_cast %204 : vector<1x8x32xf32> to vector<8x32xf32>
    %cst_65 = arith.constant dense<0.000000e+00> : vector<8x32xf32>
    %206 = tpu.matmul %185, %66, %cst_65 {dimension_numbers = #tpu.dot_dimension_numbers<[1], [0], [0], [1], [0, 0, 1, 1], [], []>} : vector<8x32xbf16>, vector<32x32xbf16>, vector<8x32xf32> -> vector<8x32xf32>
    %207 = arith.addf %205, %206 : vector<8x32xf32>
    %208 = arith.negf %207 : vector<8x32xf32>
    %209 = math.exp %208 : vector<8x32xf32>
    %cst_66 = arith.constant 1.000000e+00 : f32
    %210 = vector.broadcast %cst_66 : f32 to vector<8x32xf32>
    %211 = arith.addf %210, %209 : vector<8x32xf32>
    %212 = arith.divf %210, %211 : vector<8x32xf32>
    %213 = vector.extract_strided_slice %60 {offsets = [3, 0, 0], sizes = [1, 8, 32], strides = [1, 1, 1]} : vector<8x8x32xf32> to vector<1x8x32xf32>
    %214 = vector.shape_cast %213 : vector<1x8x32xf32> to vector<8x32xf32>
    %cst_67 = arith.constant dense<0.000000e+00> : vector<8x32xf32>
    %215 = tpu.matmul %185, %68, %cst_67 {dimension_numbers = #tpu.dot_dimension_numbers<[1], [0], [0], [1], [0, 0, 1, 1], [], []>} : vector<8x32xbf16>, vector<32x32xbf16>, vector<8x32xf32> -> vector<8x32xf32>
    %216 = arith.addf %214, %215 : vector<8x32xf32>
    %217 = math.tanh %216 : vector<8x32xf32>
    %218 = arith.mulf %203, %182 : vector<8x32xf32>
    %219 = arith.mulf %194, %217 : vector<8x32xf32>
    %220 = arith.addf %218, %219 : vector<8x32xf32>
    %221 = math.tanh %220 : vector<8x32xf32>
    %222 = arith.mulf %212, %221 : vector<8x32xf32>
    %223 = arith.truncf %222 : vector<8x32xf32> to vector<8x32xbf16>
    %224 = vector.extract_strided_slice %36 {offsets = [4, 0, 0], sizes = [1, 8, 32], strides = [1, 1, 1]} : vector<8x8x32xf32> to vector<1x8x32xf32>
    %225 = vector.shape_cast %224 : vector<1x8x32xf32> to vector<8x32xf32>
    %cst_68 = arith.constant dense<0.000000e+00> : vector<8x32xf32>
    %226 = tpu.matmul %223, %62, %cst_68 {dimension_numbers = #tpu.dot_dimension_numbers<[1], [0], [0], [1], [0, 0, 1, 1], [], []>} : vector<8x32xbf16>, vector<32x32xbf16>, vector<8x32xf32> -> vector<8x32xf32>
    %227 = arith.addf %225, %226 : vector<8x32xf32>
    %228 = arith.negf %227 : vector<8x32xf32>
    %229 = math.exp %228 : vector<8x32xf32>
    %cst_69 = arith.constant 1.000000e+00 : f32
    %230 = vector.broadcast %cst_69 : f32 to vector<8x32xf32>
    %231 = arith.addf %230, %229 : vector<8x32xf32>
    %232 = arith.divf %230, %231 : vector<8x32xf32>
    %233 = vector.extract_strided_slice %44 {offsets = [4, 0, 0], sizes = [1, 8, 32], strides = [1, 1, 1]} : vector<8x8x32xf32> to vector<1x8x32xf32>
    %234 = vector.shape_cast %233 : vector<1x8x32xf32> to vector<8x32xf32>
    %cst_70 = arith.constant dense<0.000000e+00> : vector<8x32xf32>
    %235 = tpu.matmul %223, %64, %cst_70 {dimension_numbers = #tpu.dot_dimension_numbers<[1], [0], [0], [1], [0, 0, 1, 1], [], []>} : vector<8x32xbf16>, vector<32x32xbf16>, vector<8x32xf32> -> vector<8x32xf32>
    %236 = arith.addf %234, %235 : vector<8x32xf32>
    %237 = arith.negf %236 : vector<8x32xf32>
    %238 = math.exp %237 : vector<8x32xf32>
    %cst_71 = arith.constant 1.000000e+00 : f32
    %239 = vector.broadcast %cst_71 : f32 to vector<8x32xf32>
    %240 = arith.addf %239, %238 : vector<8x32xf32>
    %241 = arith.divf %239, %240 : vector<8x32xf32>
    %242 = vector.extract_strided_slice %52 {offsets = [4, 0, 0], sizes = [1, 8, 32], strides = [1, 1, 1]} : vector<8x8x32xf32> to vector<1x8x32xf32>
    %243 = vector.shape_cast %242 : vector<1x8x32xf32> to vector<8x32xf32>
    %cst_72 = arith.constant dense<0.000000e+00> : vector<8x32xf32>
    %244 = tpu.matmul %223, %66, %cst_72 {dimension_numbers = #tpu.dot_dimension_numbers<[1], [0], [0], [1], [0, 0, 1, 1], [], []>} : vector<8x32xbf16>, vector<32x32xbf16>, vector<8x32xf32> -> vector<8x32xf32>
    %245 = arith.addf %243, %244 : vector<8x32xf32>
    %246 = arith.negf %245 : vector<8x32xf32>
    %247 = math.exp %246 : vector<8x32xf32>
    %cst_73 = arith.constant 1.000000e+00 : f32
    %248 = vector.broadcast %cst_73 : f32 to vector<8x32xf32>
    %249 = arith.addf %248, %247 : vector<8x32xf32>
    %250 = arith.divf %248, %249 : vector<8x32xf32>
    %251 = vector.extract_strided_slice %60 {offsets = [4, 0, 0], sizes = [1, 8, 32], strides = [1, 1, 1]} : vector<8x8x32xf32> to vector<1x8x32xf32>
    %252 = vector.shape_cast %251 : vector<1x8x32xf32> to vector<8x32xf32>
    %cst_74 = arith.constant dense<0.000000e+00> : vector<8x32xf32>
    %253 = tpu.matmul %223, %68, %cst_74 {dimension_numbers = #tpu.dot_dimension_numbers<[1], [0], [0], [1], [0, 0, 1, 1], [], []>} : vector<8x32xbf16>, vector<32x32xbf16>, vector<8x32xf32> -> vector<8x32xf32>
    %254 = arith.addf %252, %253 : vector<8x32xf32>
    %255 = math.tanh %254 : vector<8x32xf32>
    %256 = arith.mulf %241, %220 : vector<8x32xf32>
    %257 = arith.mulf %232, %255 : vector<8x32xf32>
    %258 = arith.addf %256, %257 : vector<8x32xf32>
    %259 = math.tanh %258 : vector<8x32xf32>
    %260 = arith.mulf %250, %259 : vector<8x32xf32>
    %261 = arith.truncf %260 : vector<8x32xf32> to vector<8x32xbf16>
    %262 = vector.extract_strided_slice %36 {offsets = [5, 0, 0], sizes = [1, 8, 32], strides = [1, 1, 1]} : vector<8x8x32xf32> to vector<1x8x32xf32>
    %263 = vector.shape_cast %262 : vector<1x8x32xf32> to vector<8x32xf32>
    %cst_75 = arith.constant dense<0.000000e+00> : vector<8x32xf32>
    %264 = tpu.matmul %261, %62, %cst_75 {dimension_numbers = #tpu.dot_dimension_numbers<[1], [0], [0], [1], [0, 0, 1, 1], [], []>} : vector<8x32xbf16>, vector<32x32xbf16>, vector<8x32xf32> -> vector<8x32xf32>
    %265 = arith.addf %263, %264 : vector<8x32xf32>
    %266 = arith.negf %265 : vector<8x32xf32>
    %267 = math.exp %266 : vector<8x32xf32>
    %cst_76 = arith.constant 1.000000e+00 : f32
    %268 = vector.broadcast %cst_76 : f32 to vector<8x32xf32>
    %269 = arith.addf %268, %267 : vector<8x32xf32>
    %270 = arith.divf %268, %269 : vector<8x32xf32>
    %271 = vector.extract_strided_slice %44 {offsets = [5, 0, 0], sizes = [1, 8, 32], strides = [1, 1, 1]} : vector<8x8x32xf32> to vector<1x8x32xf32>
    %272 = vector.shape_cast %271 : vector<1x8x32xf32> to vector<8x32xf32>
    %cst_77 = arith.constant dense<0.000000e+00> : vector<8x32xf32>
    %273 = tpu.matmul %261, %64, %cst_77 {dimension_numbers = #tpu.dot_dimension_numbers<[1], [0], [0], [1], [0, 0, 1, 1], [], []>} : vector<8x32xbf16>, vector<32x32xbf16>, vector<8x32xf32> -> vector<8x32xf32>
    %274 = arith.addf %272, %273 : vector<8x32xf32>
    %275 = arith.negf %274 : vector<8x32xf32>
    %276 = math.exp %275 : vector<8x32xf32>
    %cst_78 = arith.constant 1.000000e+00 : f32
    %277 = vector.broadcast %cst_78 : f32 to vector<8x32xf32>
    %278 = arith.addf %277, %276 : vector<8x32xf32>
    %279 = arith.divf %277, %278 : vector<8x32xf32>
    %280 = vector.extract_strided_slice %52 {offsets = [5, 0, 0], sizes = [1, 8, 32], strides = [1, 1, 1]} : vector<8x8x32xf32> to vector<1x8x32xf32>
    %281 = vector.shape_cast %280 : vector<1x8x32xf32> to vector<8x32xf32>
    %cst_79 = arith.constant dense<0.000000e+00> : vector<8x32xf32>
    %282 = tpu.matmul %261, %66, %cst_79 {dimension_numbers = #tpu.dot_dimension_numbers<[1], [0], [0], [1], [0, 0, 1, 1], [], []>} : vector<8x32xbf16>, vector<32x32xbf16>, vector<8x32xf32> -> vector<8x32xf32>
    %283 = arith.addf %281, %282 : vector<8x32xf32>
    %284 = arith.negf %283 : vector<8x32xf32>
    %285 = math.exp %284 : vector<8x32xf32>
    %cst_80 = arith.constant 1.000000e+00 : f32
    %286 = vector.broadcast %cst_80 : f32 to vector<8x32xf32>
    %287 = arith.addf %286, %285 : vector<8x32xf32>
    %288 = arith.divf %286, %287 : vector<8x32xf32>
    %289 = vector.extract_strided_slice %60 {offsets = [5, 0, 0], sizes = [1, 8, 32], strides = [1, 1, 1]} : vector<8x8x32xf32> to vector<1x8x32xf32>
    %290 = vector.shape_cast %289 : vector<1x8x32xf32> to vector<8x32xf32>
    %cst_81 = arith.constant dense<0.000000e+00> : vector<8x32xf32>
    %291 = tpu.matmul %261, %68, %cst_81 {dimension_numbers = #tpu.dot_dimension_numbers<[1], [0], [0], [1], [0, 0, 1, 1], [], []>} : vector<8x32xbf16>, vector<32x32xbf16>, vector<8x32xf32> -> vector<8x32xf32>
    %292 = arith.addf %290, %291 : vector<8x32xf32>
    %293 = math.tanh %292 : vector<8x32xf32>
    %294 = arith.mulf %279, %258 : vector<8x32xf32>
    %295 = arith.mulf %270, %293 : vector<8x32xf32>
    %296 = arith.addf %294, %295 : vector<8x32xf32>
    %297 = math.tanh %296 : vector<8x32xf32>
    %298 = arith.mulf %288, %297 : vector<8x32xf32>
    %299 = arith.truncf %298 : vector<8x32xf32> to vector<8x32xbf16>
    %300 = vector.extract_strided_slice %36 {offsets = [6, 0, 0], sizes = [1, 8, 32], strides = [1, 1, 1]} : vector<8x8x32xf32> to vector<1x8x32xf32>
    %301 = vector.shape_cast %300 : vector<1x8x32xf32> to vector<8x32xf32>
    %cst_82 = arith.constant dense<0.000000e+00> : vector<8x32xf32>
    %302 = tpu.matmul %299, %62, %cst_82 {dimension_numbers = #tpu.dot_dimension_numbers<[1], [0], [0], [1], [0, 0, 1, 1], [], []>} : vector<8x32xbf16>, vector<32x32xbf16>, vector<8x32xf32> -> vector<8x32xf32>
    %303 = arith.addf %301, %302 : vector<8x32xf32>
    %304 = arith.negf %303 : vector<8x32xf32>
    %305 = math.exp %304 : vector<8x32xf32>
    %cst_83 = arith.constant 1.000000e+00 : f32
    %306 = vector.broadcast %cst_83 : f32 to vector<8x32xf32>
    %307 = arith.addf %306, %305 : vector<8x32xf32>
    %308 = arith.divf %306, %307 : vector<8x32xf32>
    %309 = vector.extract_strided_slice %44 {offsets = [6, 0, 0], sizes = [1, 8, 32], strides = [1, 1, 1]} : vector<8x8x32xf32> to vector<1x8x32xf32>
    %310 = vector.shape_cast %309 : vector<1x8x32xf32> to vector<8x32xf32>
    %cst_84 = arith.constant dense<0.000000e+00> : vector<8x32xf32>
    %311 = tpu.matmul %299, %64, %cst_84 {dimension_numbers = #tpu.dot_dimension_numbers<[1], [0], [0], [1], [0, 0, 1, 1], [], []>} : vector<8x32xbf16>, vector<32x32xbf16>, vector<8x32xf32> -> vector<8x32xf32>
    %312 = arith.addf %310, %311 : vector<8x32xf32>
    %313 = arith.negf %312 : vector<8x32xf32>
    %314 = math.exp %313 : vector<8x32xf32>
    %cst_85 = arith.constant 1.000000e+00 : f32
    %315 = vector.broadcast %cst_85 : f32 to vector<8x32xf32>
    %316 = arith.addf %315, %314 : vector<8x32xf32>
    %317 = arith.divf %315, %316 : vector<8x32xf32>
    %318 = vector.extract_strided_slice %52 {offsets = [6, 0, 0], sizes = [1, 8, 32], strides = [1, 1, 1]} : vector<8x8x32xf32> to vector<1x8x32xf32>
    %319 = vector.shape_cast %318 : vector<1x8x32xf32> to vector<8x32xf32>
    %cst_86 = arith.constant dense<0.000000e+00> : vector<8x32xf32>
    %320 = tpu.matmul %299, %66, %cst_86 {dimension_numbers = #tpu.dot_dimension_numbers<[1], [0], [0], [1], [0, 0, 1, 1], [], []>} : vector<8x32xbf16>, vector<32x32xbf16>, vector<8x32xf32> -> vector<8x32xf32>
    %321 = arith.addf %319, %320 : vector<8x32xf32>
    %322 = arith.negf %321 : vector<8x32xf32>
    %323 = math.exp %322 : vector<8x32xf32>
    %cst_87 = arith.constant 1.000000e+00 : f32
    %324 = vector.broadcast %cst_87 : f32 to vector<8x32xf32>
    %325 = arith.addf %324, %323 : vector<8x32xf32>
    %326 = arith.divf %324, %325 : vector<8x32xf32>
    %327 = vector.extract_strided_slice %60 {offsets = [6, 0, 0], sizes = [1, 8, 32], strides = [1, 1, 1]} : vector<8x8x32xf32> to vector<1x8x32xf32>
    %328 = vector.shape_cast %327 : vector<1x8x32xf32> to vector<8x32xf32>
    %cst_88 = arith.constant dense<0.000000e+00> : vector<8x32xf32>
    %329 = tpu.matmul %299, %68, %cst_88 {dimension_numbers = #tpu.dot_dimension_numbers<[1], [0], [0], [1], [0, 0, 1, 1], [], []>} : vector<8x32xbf16>, vector<32x32xbf16>, vector<8x32xf32> -> vector<8x32xf32>
    %330 = arith.addf %328, %329 : vector<8x32xf32>
    %331 = math.tanh %330 : vector<8x32xf32>
    %332 = arith.mulf %317, %296 : vector<8x32xf32>
    %333 = arith.mulf %308, %331 : vector<8x32xf32>
    %334 = arith.addf %332, %333 : vector<8x32xf32>
    %335 = math.tanh %334 : vector<8x32xf32>
    %336 = arith.mulf %326, %335 : vector<8x32xf32>
    %337 = arith.truncf %336 : vector<8x32xf32> to vector<8x32xbf16>
    %338 = vector.extract_strided_slice %36 {offsets = [7, 0, 0], sizes = [1, 8, 32], strides = [1, 1, 1]} : vector<8x8x32xf32> to vector<1x8x32xf32>
    %339 = vector.shape_cast %338 : vector<1x8x32xf32> to vector<8x32xf32>
    %cst_89 = arith.constant dense<0.000000e+00> : vector<8x32xf32>
    %340 = tpu.matmul %337, %62, %cst_89 {dimension_numbers = #tpu.dot_dimension_numbers<[1], [0], [0], [1], [0, 0, 1, 1], [], []>} : vector<8x32xbf16>, vector<32x32xbf16>, vector<8x32xf32> -> vector<8x32xf32>
    %341 = arith.addf %339, %340 : vector<8x32xf32>
    %342 = arith.negf %341 : vector<8x32xf32>
    %343 = math.exp %342 : vector<8x32xf32>
    %cst_90 = arith.constant 1.000000e+00 : f32
    %344 = vector.broadcast %cst_90 : f32 to vector<8x32xf32>
    %345 = arith.addf %344, %343 : vector<8x32xf32>
    %346 = arith.divf %344, %345 : vector<8x32xf32>
    %347 = vector.extract_strided_slice %44 {offsets = [7, 0, 0], sizes = [1, 8, 32], strides = [1, 1, 1]} : vector<8x8x32xf32> to vector<1x8x32xf32>
    %348 = vector.shape_cast %347 : vector<1x8x32xf32> to vector<8x32xf32>
    %cst_91 = arith.constant dense<0.000000e+00> : vector<8x32xf32>
    %349 = tpu.matmul %337, %64, %cst_91 {dimension_numbers = #tpu.dot_dimension_numbers<[1], [0], [0], [1], [0, 0, 1, 1], [], []>} : vector<8x32xbf16>, vector<32x32xbf16>, vector<8x32xf32> -> vector<8x32xf32>
    %350 = arith.addf %348, %349 : vector<8x32xf32>
    %351 = arith.negf %350 : vector<8x32xf32>
    %352 = math.exp %351 : vector<8x32xf32>
    %cst_92 = arith.constant 1.000000e+00 : f32
    %353 = vector.broadcast %cst_92 : f32 to vector<8x32xf32>
    %354 = arith.addf %353, %352 : vector<8x32xf32>
    %355 = arith.divf %353, %354 : vector<8x32xf32>
    %356 = vector.extract_strided_slice %52 {offsets = [7, 0, 0], sizes = [1, 8, 32], strides = [1, 1, 1]} : vector<8x8x32xf32> to vector<1x8x32xf32>
    %357 = vector.shape_cast %356 : vector<1x8x32xf32> to vector<8x32xf32>
    %cst_93 = arith.constant dense<0.000000e+00> : vector<8x32xf32>
    %358 = tpu.matmul %337, %66, %cst_93 {dimension_numbers = #tpu.dot_dimension_numbers<[1], [0], [0], [1], [0, 0, 1, 1], [], []>} : vector<8x32xbf16>, vector<32x32xbf16>, vector<8x32xf32> -> vector<8x32xf32>
    %359 = arith.addf %357, %358 : vector<8x32xf32>
    %360 = arith.negf %359 : vector<8x32xf32>
    %361 = math.exp %360 : vector<8x32xf32>
    %cst_94 = arith.constant 1.000000e+00 : f32
    %362 = vector.broadcast %cst_94 : f32 to vector<8x32xf32>
    %363 = arith.addf %362, %361 : vector<8x32xf32>
    %364 = arith.divf %362, %363 : vector<8x32xf32>
    %365 = vector.extract_strided_slice %60 {offsets = [7, 0, 0], sizes = [1, 8, 32], strides = [1, 1, 1]} : vector<8x8x32xf32> to vector<1x8x32xf32>
    %366 = vector.shape_cast %365 : vector<1x8x32xf32> to vector<8x32xf32>
    %cst_95 = arith.constant dense<0.000000e+00> : vector<8x32xf32>
    %367 = tpu.matmul %337, %68, %cst_95 {dimension_numbers = #tpu.dot_dimension_numbers<[1], [0], [0], [1], [0, 0, 1, 1], [], []>} : vector<8x32xbf16>, vector<32x32xbf16>, vector<8x32xf32> -> vector<8x32xf32>
    %368 = arith.addf %366, %367 : vector<8x32xf32>
    %369 = math.tanh %368 : vector<8x32xf32>
    %370 = arith.mulf %355, %334 : vector<8x32xf32>
    %371 = arith.mulf %346, %369 : vector<8x32xf32>
    %372 = arith.addf %370, %371 : vector<8x32xf32>
    %373 = math.tanh %372 : vector<8x32xf32>
    %374 = arith.mulf %364, %373 : vector<8x32xf32>
    %375 = vector.extract_strided_slice %108 {offsets = [0, 0], sizes = [8, 16], strides = [1, 1]} : vector<8x32xf32> to vector<8x16xf32>
    %376 = vector.extract_strided_slice %374 {offsets = [0, 16], sizes = [8, 16], strides = [1, 1]} : vector<8x32xf32> to vector<8x16xf32>
    %377 = tpu.concatenate %375, %376 in 1 : vector<8x16xf32>, vector<8x16xf32> -> vector<8x32xf32>
    %378 = vector.extract_strided_slice %146 {offsets = [0, 0], sizes = [8, 16], strides = [1, 1]} : vector<8x32xf32> to vector<8x16xf32>
    %379 = vector.extract_strided_slice %336 {offsets = [0, 16], sizes = [8, 16], strides = [1, 1]} : vector<8x32xf32> to vector<8x16xf32>
    %380 = tpu.concatenate %378, %379 in 1 : vector<8x16xf32>, vector<8x16xf32> -> vector<8x32xf32>
    %381 = vector.extract_strided_slice %184 {offsets = [0, 0], sizes = [8, 16], strides = [1, 1]} : vector<8x32xf32> to vector<8x16xf32>
    %382 = vector.extract_strided_slice %298 {offsets = [0, 16], sizes = [8, 16], strides = [1, 1]} : vector<8x32xf32> to vector<8x16xf32>
    %383 = tpu.concatenate %381, %382 in 1 : vector<8x16xf32>, vector<8x16xf32> -> vector<8x32xf32>
    %384 = vector.extract_strided_slice %222 {offsets = [0, 0], sizes = [8, 16], strides = [1, 1]} : vector<8x32xf32> to vector<8x16xf32>
    %385 = vector.extract_strided_slice %260 {offsets = [0, 16], sizes = [8, 16], strides = [1, 1]} : vector<8x32xf32> to vector<8x16xf32>
    %386 = tpu.concatenate %384, %385 in 1 : vector<8x16xf32>, vector<8x16xf32> -> vector<8x32xf32>
    %387 = vector.extract_strided_slice %260 {offsets = [0, 0], sizes = [8, 16], strides = [1, 1]} : vector<8x32xf32> to vector<8x16xf32>
    %388 = vector.extract_strided_slice %222 {offsets = [0, 16], sizes = [8, 16], strides = [1, 1]} : vector<8x32xf32> to vector<8x16xf32>
    %389 = tpu.concatenate %387, %388 in 1 : vector<8x16xf32>, vector<8x16xf32> -> vector<8x32xf32>
    %390 = vector.extract_strided_slice %298 {offsets = [0, 0], sizes = [8, 16], strides = [1, 1]} : vector<8x32xf32> to vector<8x16xf32>
    %391 = vector.extract_strided_slice %184 {offsets = [0, 16], sizes = [8, 16], strides = [1, 1]} : vector<8x32xf32> to vector<8x16xf32>
    %392 = tpu.concatenate %390, %391 in 1 : vector<8x16xf32>, vector<8x16xf32> -> vector<8x32xf32>
    %393 = vector.extract_strided_slice %336 {offsets = [0, 0], sizes = [8, 16], strides = [1, 1]} : vector<8x32xf32> to vector<8x16xf32>
    %394 = vector.extract_strided_slice %146 {offsets = [0, 16], sizes = [8, 16], strides = [1, 1]} : vector<8x32xf32> to vector<8x16xf32>
    %395 = tpu.concatenate %393, %394 in 1 : vector<8x16xf32>, vector<8x16xf32> -> vector<8x32xf32>
    %396 = vector.extract_strided_slice %374 {offsets = [0, 0], sizes = [8, 16], strides = [1, 1]} : vector<8x32xf32> to vector<8x16xf32>
    %397 = vector.extract_strided_slice %108 {offsets = [0, 16], sizes = [8, 16], strides = [1, 1]} : vector<8x32xf32> to vector<8x16xf32>
    %398 = tpu.concatenate %396, %397 in 1 : vector<8x16xf32>, vector<8x16xf32> -> vector<8x32xf32>
    %399 = vector.shape_cast %377 : vector<8x32xf32> to vector<1x8x32xf32>
    %400 = vector.shape_cast %380 : vector<8x32xf32> to vector<1x8x32xf32>
    %401 = vector.shape_cast %383 : vector<8x32xf32> to vector<1x8x32xf32>
    %402 = vector.shape_cast %386 : vector<8x32xf32> to vector<1x8x32xf32>
    %403 = vector.shape_cast %389 : vector<8x32xf32> to vector<1x8x32xf32>
    %404 = vector.shape_cast %392 : vector<8x32xf32> to vector<1x8x32xf32>
    %405 = vector.shape_cast %395 : vector<8x32xf32> to vector<1x8x32xf32>
    %406 = vector.shape_cast %398 : vector<8x32xf32> to vector<1x8x32xf32>
    %407 = tpu.concatenate %399, %400, %401, %402, %403, %404, %405, %406 in 0 : vector<1x8x32xf32>, vector<1x8x32xf32>, vector<1x8x32xf32>, vector<1x8x32xf32>, vector<1x8x32xf32>, vector<1x8x32xf32>, vector<1x8x32xf32>, vector<1x8x32xf32> -> vector<8x8x32xf32>
    %c0_96 = arith.constant 0 : index
    %c0_97 = arith.constant 0 : index
    %c0_98 = arith.constant 0 : index
    %408 = vector.load %arg13[%c0_96, %c0_97, %c0_98] : memref<8x8x32xf32, #tpu.memory_space<vmem>>, vector<8x8x32xf32>
    tpu.vector_store %arg13[%c0_96, %c0_97, %c0_98], %407 {strides = array<i32>} : memref<8x8x32xf32, #tpu.memory_space<vmem>>, vector<8x8x32xf32>,
    %409 = vector.extract_strided_slice %407 {offsets = [7, 0, 0], sizes = [1, 8, 32], strides = [1, 1, 1]} : vector<8x8x32xf32> to vector<1x8x32xf32>
    %410 = vector.shape_cast %409 : vector<1x8x32xf32> to vector<8x32xf32>
    %411 = vector.extract_strided_slice %407 {offsets = [6, 0, 0], sizes = [1, 8, 32], strides = [1, 1, 1]} : vector<8x8x32xf32> to vector<1x8x32xf32>
    %412 = vector.shape_cast %411 : vector<1x8x32xf32> to vector<8x32xf32>
    %413 = vector.extract_strided_slice %407 {offsets = [5, 0, 0], sizes = [1, 8, 32], strides = [1, 1, 1]} : vector<8x8x32xf32> to vector<1x8x32xf32>
    %414 = vector.shape_cast %413 : vector<1x8x32xf32> to vector<8x32xf32>
    %415 = vector.extract_strided_slice %407 {offsets = [4, 0, 0], sizes = [1, 8, 32], strides = [1, 1, 1]} : vector<8x8x32xf32> to vector<1x8x32xf32>
    %416 = vector.shape_cast %415 : vector<1x8x32xf32> to vector<8x32xf32>
    %417 = vector.extract_strided_slice %407 {offsets = [3, 0, 0], sizes = [1, 8, 32], strides = [1, 1, 1]} : vector<8x8x32xf32> to vector<1x8x32xf32>
    %418 = vector.shape_cast %417 : vector<1x8x32xf32> to vector<8x32xf32>
    %419 = vector.extract_strided_slice %407 {offsets = [2, 0, 0], sizes = [1, 8, 32], strides = [1, 1, 1]} : vector<8x8x32xf32> to vector<1x8x32xf32>
    %420 = vector.shape_cast %419 : vector<1x8x32xf32> to vector<8x32xf32>
    %421 = vector.extract_strided_slice %407 {offsets = [1, 0, 0], sizes = [1, 8, 32], strides = [1, 1, 1]} : vector<8x8x32xf32> to vector<1x8x32xf32>
    %422 = vector.shape_cast %421 : vector<1x8x32xf32> to vector<8x32xf32>
    %423 = vector.extract_strided_slice %407 {offsets = [0, 0, 0], sizes = [1, 8, 32], strides = [1, 1, 1]} : vector<8x8x32xf32> to vector<1x8x32xf32>
    %424 = vector.shape_cast %423 : vector<1x8x32xf32> to vector<8x32xf32>
    %425 = vector.shape_cast %410 : vector<8x32xf32> to vector<1x8x32xf32>
    %426 = vector.shape_cast %412 : vector<8x32xf32> to vector<1x8x32xf32>
    %427 = vector.shape_cast %414 : vector<8x32xf32> to vector<1x8x32xf32>
    %428 = vector.shape_cast %416 : vector<8x32xf32> to vector<1x8x32xf32>
    %429 = vector.shape_cast %418 : vector<8x32xf32> to vector<1x8x32xf32>
    %430 = vector.shape_cast %420 : vector<8x32xf32> to vector<1x8x32xf32>
    %431 = vector.shape_cast %422 : vector<8x32xf32> to vector<1x8x32xf32>
    %432 = vector.shape_cast %424 : vector<8x32xf32> to vector<1x8x32xf32>
    %433 = tpu.concatenate %425, %426, %427, %428, %429, %430, %431, %432 in 0 : vector<1x8x32xf32>, vector<1x8x32xf32>, vector<1x8x32xf32>, vector<1x8x32xf32>, vector<1x8x32xf32>, vector<1x8x32xf32>, vector<1x8x32xf32>, vector<1x8x32xf32> -> vector<8x8x32xf32>
    %434 = tpu.concatenate %407, %433 in 2 : vector<8x8x32xf32>, vector<8x8x32xf32> -> vector<8x8x64xf32>
    %435 = vector.shape_cast %434 : vector<8x8x64xf32> to vector<64x64xf32>
    %436 = arith.truncf %435 : vector<64x64xf32> to vector<64x64xbf16>
    %c0_99 = arith.constant 0 : index
    %c0_100 = arith.constant 0 : index
    %c0_101 = arith.constant 0 : index
    %437 = vector.load %arg5[%c0_99, %c0_100, %c0_101] : memref<4x64x32xbf16, #tpu.memory_space<vmem>>, vector<1x64x32xbf16>
    %438 = vector.shape_cast %437 : vector<1x64x32xbf16> to vector<64x32xbf16>
    %cst_102 = arith.constant dense<0.000000e+00> : vector<64x32xf32>
    %439 = tpu.matmul %436, %438, %cst_102 {dimension_numbers = #tpu.dot_dimension_numbers<[1], [0], [0], [1], [0, 0, 1, 1], [], []>} : vector<64x64xbf16>, vector<64x32xbf16>, vector<64x32xf32> -> vector<64x32xf32>
    %c0_103 = arith.constant 0 : index
    %c0_104 = arith.constant 0 : index
    %c0_105 = arith.constant 0 : index
    %440 = vector.load %arg7[%c0_103, %c0_104, %c0_105] : memref<4x1x32xf32, #tpu.memory_space<vmem>>, vector<1x1x32xf32>
    %441 = vector.shape_cast %440 : vector<1x1x32xf32> to vector<1x32xf32>
    %442 = vector.broadcast %441 : vector<1x32xf32> to vector<64x32xf32>
    %443 = arith.addf %439, %442 : vector<64x32xf32>
    %444 = vector.shape_cast %443 : vector<64x32xf32> to vector<8x8x32xf32>
    %c1_106 = arith.constant 1 : index
    %c0_107 = arith.constant 0 : index
    %c0_108 = arith.constant 0 : index
    %445 = vector.load %arg5[%c1_106, %c0_107, %c0_108] : memref<4x64x32xbf16, #tpu.memory_space<vmem>>, vector<1x64x32xbf16>
    %446 = vector.shape_cast %445 : vector<1x64x32xbf16> to vector<64x32xbf16>
    %cst_109 = arith.constant dense<0.000000e+00> : vector<64x32xf32>
    %447 = tpu.matmul %436, %446, %cst_109 {dimension_numbers = #tpu.dot_dimension_numbers<[1], [0], [0], [1], [0, 0, 1, 1], [], []>} : vector<64x64xbf16>, vector<64x32xbf16>, vector<64x32xf32> -> vector<64x32xf32>
    %c1_110 = arith.constant 1 : index
    %c0_111 = arith.constant 0 : index
    %c0_112 = arith.constant 0 : index
    %448 = vector.load %arg7[%c1_110, %c0_111, %c0_112] : memref<4x1x32xf32, #tpu.memory_space<vmem>>, vector<1x1x32xf32>
    %449 = vector.shape_cast %448 : vector<1x1x32xf32> to vector<1x32xf32>
    %450 = vector.broadcast %449 : vector<1x32xf32> to vector<64x32xf32>
    %451 = arith.addf %447, %450 : vector<64x32xf32>
    %452 = vector.shape_cast %451 : vector<64x32xf32> to vector<8x8x32xf32>
    %c2_113 = arith.constant 2 : index
    %c0_114 = arith.constant 0 : index
    %c0_115 = arith.constant 0 : index
    %453 = vector.load %arg5[%c2_113, %c0_114, %c0_115] : memref<4x64x32xbf16, #tpu.memory_space<vmem>>, vector<1x64x32xbf16>
    %454 = vector.shape_cast %453 : vector<1x64x32xbf16> to vector<64x32xbf16>
    %cst_116 = arith.constant dense<0.000000e+00> : vector<64x32xf32>
    %455 = tpu.matmul %436, %454, %cst_116 {dimension_numbers = #tpu.dot_dimension_numbers<[1], [0], [0], [1], [0, 0, 1, 1], [], []>} : vector<64x64xbf16>, vector<64x32xbf16>, vector<64x32xf32> -> vector<64x32xf32>
    %c2_117 = arith.constant 2 : index
    %c0_118 = arith.constant 0 : index
    %c0_119 = arith.constant 0 : index
    %456 = vector.load %arg7[%c2_117, %c0_118, %c0_119] : memref<4x1x32xf32, #tpu.memory_space<vmem>>, vector<1x1x32xf32>
    %457 = vector.shape_cast %456 : vector<1x1x32xf32> to vector<1x32xf32>
    %458 = vector.broadcast %457 : vector<1x32xf32> to vector<64x32xf32>
    %459 = arith.addf %455, %458 : vector<64x32xf32>
    %460 = vector.shape_cast %459 : vector<64x32xf32> to vector<8x8x32xf32>
    %c3_120 = arith.constant 3 : index
    %c0_121 = arith.constant 0 : index
    %c0_122 = arith.constant 0 : index
    %461 = vector.load %arg5[%c3_120, %c0_121, %c0_122] : memref<4x64x32xbf16, #tpu.memory_space<vmem>>, vector<1x64x32xbf16>
    %462 = vector.shape_cast %461 : vector<1x64x32xbf16> to vector<64x32xbf16>
    %cst_123 = arith.constant dense<0.000000e+00> : vector<64x32xf32>
    %463 = tpu.matmul %436, %462, %cst_123 {dimension_numbers = #tpu.dot_dimension_numbers<[1], [0], [0], [1], [0, 0, 1, 1], [], []>} : vector<64x64xbf16>, vector<64x32xbf16>, vector<64x32xf32> -> vector<64x32xf32>
    %c3_124 = arith.constant 3 : index
    %c0_125 = arith.constant 0 : index
    %c0_126 = arith.constant 0 : index
    %464 = vector.load %arg7[%c3_124, %c0_125, %c0_126] : memref<4x1x32xf32, #tpu.memory_space<vmem>>, vector<1x1x32xf32>
    %465 = vector.shape_cast %464 : vector<1x1x32xf32> to vector<1x32xf32>
    %466 = vector.broadcast %465 : vector<1x32xf32> to vector<64x32xf32>
    %467 = arith.addf %463, %466 : vector<64x32xf32>
    %468 = vector.shape_cast %467 : vector<64x32xf32> to vector<8x8x32xf32>
    %c0_127 = arith.constant 0 : index
    %c0_128 = arith.constant 0 : index
    %c0_129 = arith.constant 0 : index
    %469 = vector.load %arg6[%c0_127, %c0_128, %c0_129] : memref<4x32x32xbf16, #tpu.memory_space<vmem>>, vector<1x32x32xbf16>
    %470 = vector.shape_cast %469 : vector<1x32x32xbf16> to vector<32x32xbf16>
    %c1_130 = arith.constant 1 : index
    %c0_131 = arith.constant 0 : index
    %c0_132 = arith.constant 0 : index
    %471 = vector.load %arg6[%c1_130, %c0_131, %c0_132] : memref<4x32x32xbf16, #tpu.memory_space<vmem>>, vector<1x32x32xbf16>
    %472 = vector.shape_cast %471 : vector<1x32x32xbf16> to vector<32x32xbf16>
    %c2_133 = arith.constant 2 : index
    %c0_134 = arith.constant 0 : index
    %c0_135 = arith.constant 0 : index
    %473 = vector.load %arg6[%c2_133, %c0_134, %c0_135] : memref<4x32x32xbf16, #tpu.memory_space<vmem>>, vector<1x32x32xbf16>
    %474 = vector.shape_cast %473 : vector<1x32x32xbf16> to vector<32x32xbf16>
    %c3_136 = arith.constant 3 : index
    %c0_137 = arith.constant 0 : index
    %c0_138 = arith.constant 0 : index
    %475 = vector.load %arg6[%c3_136, %c0_137, %c0_138] : memref<4x32x32xbf16, #tpu.memory_space<vmem>>, vector<1x32x32xbf16>
    %476 = vector.shape_cast %475 : vector<1x32x32xbf16> to vector<32x32xbf16>
    %cst_139 = arith.constant 0.000000e+00 : f32
    %477 = vector.broadcast %cst_139 : f32 to vector<8x32xf32>
    %cst_140 = arith.constant 0.000000e+00 : f32
    %478 = vector.broadcast %cst_140 : f32 to vector<8x32xf32>
    %479 = arith.truncf %477 : vector<8x32xf32> to vector<8x32xbf16>
    %480 = vector.extract_strided_slice %444 {offsets = [0, 0, 0], sizes = [1, 8, 32], strides = [1, 1, 1]} : vector<8x8x32xf32> to vector<1x8x32xf32>
    %481 = vector.shape_cast %480 : vector<1x8x32xf32> to vector<8x32xf32>
    %cst_141 = arith.constant dense<0.000000e+00> : vector<8x32xf32>
    %482 = tpu.matmul %479, %470, %cst_141 {dimension_numbers = #tpu.dot_dimension_numbers<[1], [0], [0], [1], [0, 0, 1, 1], [], []>} : vector<8x32xbf16>, vector<32x32xbf16>, vector<8x32xf32> -> vector<8x32xf32>
    %483 = arith.addf %481, %482 : vector<8x32xf32>
    %484 = arith.negf %483 : vector<8x32xf32>
    %485 = math.exp %484 : vector<8x32xf32>
    %cst_142 = arith.constant 1.000000e+00 : f32
    %486 = vector.broadcast %cst_142 : f32 to vector<8x32xf32>
    %487 = arith.addf %486, %485 : vector<8x32xf32>
    %488 = arith.divf %486, %487 : vector<8x32xf32>
    %489 = vector.extract_strided_slice %452 {offsets = [0, 0, 0], sizes = [1, 8, 32], strides = [1, 1, 1]} : vector<8x8x32xf32> to vector<1x8x32xf32>
    %490 = vector.shape_cast %489 : vector<1x8x32xf32> to vector<8x32xf32>
    %cst_143 = arith.constant dense<0.000000e+00> : vector<8x32xf32>
    %491 = tpu.matmul %479, %472, %cst_143 {dimension_numbers = #tpu.dot_dimension_numbers<[1], [0], [0], [1], [0, 0, 1, 1], [], []>} : vector<8x32xbf16>, vector<32x32xbf16>, vector<8x32xf32> -> vector<8x32xf32>
    %492 = arith.addf %490, %491 : vector<8x32xf32>
    %493 = arith.negf %492 : vector<8x32xf32>
    %494 = math.exp %493 : vector<8x32xf32>
    %cst_144 = arith.constant 1.000000e+00 : f32
    %495 = vector.broadcast %cst_144 : f32 to vector<8x32xf32>
    %496 = arith.addf %495, %494 : vector<8x32xf32>
    %497 = arith.divf %495, %496 : vector<8x32xf32>
    %498 = vector.extract_strided_slice %460 {offsets = [0, 0, 0], sizes = [1, 8, 32], strides = [1, 1, 1]} : vector<8x8x32xf32> to vector<1x8x32xf32>
    %499 = vector.shape_cast %498 : vector<1x8x32xf32> to vector<8x32xf32>
    %cst_145 = arith.constant dense<0.000000e+00> : vector<8x32xf32>
    %500 = tpu.matmul %479, %474, %cst_145 {dimension_numbers = #tpu.dot_dimension_numbers<[1], [0], [0], [1], [0, 0, 1, 1], [], []>} : vector<8x32xbf16>, vector<32x32xbf16>, vector<8x32xf32> -> vector<8x32xf32>
    %501 = arith.addf %499, %500 : vector<8x32xf32>
    %502 = arith.negf %501 : vector<8x32xf32>
    %503 = math.exp %502 : vector<8x32xf32>
    %cst_146 = arith.constant 1.000000e+00 : f32
    %504 = vector.broadcast %cst_146 : f32 to vector<8x32xf32>
    %505 = arith.addf %504, %503 : vector<8x32xf32>
    %506 = arith.divf %504, %505 : vector<8x32xf32>
    %507 = vector.extract_strided_slice %468 {offsets = [0, 0, 0], sizes = [1, 8, 32], strides = [1, 1, 1]} : vector<8x8x32xf32> to vector<1x8x32xf32>
    %508 = vector.shape_cast %507 : vector<1x8x32xf32> to vector<8x32xf32>
    %cst_147 = arith.constant dense<0.000000e+00> : vector<8x32xf32>
    %509 = tpu.matmul %479, %476, %cst_147 {dimension_numbers = #tpu.dot_dimension_numbers<[1], [0], [0], [1], [0, 0, 1, 1], [], []>} : vector<8x32xbf16>, vector<32x32xbf16>, vector<8x32xf32> -> vector<8x32xf32>
    %510 = arith.addf %508, %509 : vector<8x32xf32>
    %511 = math.tanh %510 : vector<8x32xf32>
    %512 = arith.mulf %497, %478 : vector<8x32xf32>
    %513 = arith.mulf %488, %511 : vector<8x32xf32>
    %514 = arith.addf %512, %513 : vector<8x32xf32>
    %515 = math.tanh %514 : vector<8x32xf32>
    %516 = arith.mulf %506, %515 : vector<8x32xf32>
    %517 = arith.truncf %516 : vector<8x32xf32> to vector<8x32xbf16>
    %518 = vector.extract_strided_slice %444 {offsets = [1, 0, 0], sizes = [1, 8, 32], strides = [1, 1, 1]} : vector<8x8x32xf32> to vector<1x8x32xf32>
    %519 = vector.shape_cast %518 : vector<1x8x32xf32> to vector<8x32xf32>
    %cst_148 = arith.constant dense<0.000000e+00> : vector<8x32xf32>
    %520 = tpu.matmul %517, %470, %cst_148 {dimension_numbers = #tpu.dot_dimension_numbers<[1], [0], [0], [1], [0, 0, 1, 1], [], []>} : vector<8x32xbf16>, vector<32x32xbf16>, vector<8x32xf32> -> vector<8x32xf32>
    %521 = arith.addf %519, %520 : vector<8x32xf32>
    %522 = arith.negf %521 : vector<8x32xf32>
    %523 = math.exp %522 : vector<8x32xf32>
    %cst_149 = arith.constant 1.000000e+00 : f32
    %524 = vector.broadcast %cst_149 : f32 to vector<8x32xf32>
    %525 = arith.addf %524, %523 : vector<8x32xf32>
    %526 = arith.divf %524, %525 : vector<8x32xf32>
    %527 = vector.extract_strided_slice %452 {offsets = [1, 0, 0], sizes = [1, 8, 32], strides = [1, 1, 1]} : vector<8x8x32xf32> to vector<1x8x32xf32>
    %528 = vector.shape_cast %527 : vector<1x8x32xf32> to vector<8x32xf32>
    %cst_150 = arith.constant dense<0.000000e+00> : vector<8x32xf32>
    %529 = tpu.matmul %517, %472, %cst_150 {dimension_numbers = #tpu.dot_dimension_numbers<[1], [0], [0], [1], [0, 0, 1, 1], [], []>} : vector<8x32xbf16>, vector<32x32xbf16>, vector<8x32xf32> -> vector<8x32xf32>
    %530 = arith.addf %528, %529 : vector<8x32xf32>
    %531 = arith.negf %530 : vector<8x32xf32>
    %532 = math.exp %531 : vector<8x32xf32>
    %cst_151 = arith.constant 1.000000e+00 : f32
    %533 = vector.broadcast %cst_151 : f32 to vector<8x32xf32>
    %534 = arith.addf %533, %532 : vector<8x32xf32>
    %535 = arith.divf %533, %534 : vector<8x32xf32>
    %536 = vector.extract_strided_slice %460 {offsets = [1, 0, 0], sizes = [1, 8, 32], strides = [1, 1, 1]} : vector<8x8x32xf32> to vector<1x8x32xf32>
    %537 = vector.shape_cast %536 : vector<1x8x32xf32> to vector<8x32xf32>
    %cst_152 = arith.constant dense<0.000000e+00> : vector<8x32xf32>
    %538 = tpu.matmul %517, %474, %cst_152 {dimension_numbers = #tpu.dot_dimension_numbers<[1], [0], [0], [1], [0, 0, 1, 1], [], []>} : vector<8x32xbf16>, vector<32x32xbf16>, vector<8x32xf32> -> vector<8x32xf32>
    %539 = arith.addf %537, %538 : vector<8x32xf32>
    %540 = arith.negf %539 : vector<8x32xf32>
    %541 = math.exp %540 : vector<8x32xf32>
    %cst_153 = arith.constant 1.000000e+00 : f32
    %542 = vector.broadcast %cst_153 : f32 to vector<8x32xf32>
    %543 = arith.addf %542, %541 : vector<8x32xf32>
    %544 = arith.divf %542, %543 : vector<8x32xf32>
    %545 = vector.extract_strided_slice %468 {offsets = [1, 0, 0], sizes = [1, 8, 32], strides = [1, 1, 1]} : vector<8x8x32xf32> to vector<1x8x32xf32>
    %546 = vector.shape_cast %545 : vector<1x8x32xf32> to vector<8x32xf32>
    %cst_154 = arith.constant dense<0.000000e+00> : vector<8x32xf32>
    %547 = tpu.matmul %517, %476, %cst_154 {dimension_numbers = #tpu.dot_dimension_numbers<[1], [0], [0], [1], [0, 0, 1, 1], [], []>} : vector<8x32xbf16>, vector<32x32xbf16>, vector<8x32xf32> -> vector<8x32xf32>
    %548 = arith.addf %546, %547 : vector<8x32xf32>
    %549 = math.tanh %548 : vector<8x32xf32>
    %550 = arith.mulf %535, %514 : vector<8x32xf32>
    %551 = arith.mulf %526, %549 : vector<8x32xf32>
    %552 = arith.addf %550, %551 : vector<8x32xf32>
    %553 = math.tanh %552 : vector<8x32xf32>
    %554 = arith.mulf %544, %553 : vector<8x32xf32>
    %555 = arith.truncf %554 : vector<8x32xf32> to vector<8x32xbf16>
    %556 = vector.extract_strided_slice %444 {offsets = [2, 0, 0], sizes = [1, 8, 32], strides = [1, 1, 1]} : vector<8x8x32xf32> to vector<1x8x32xf32>
    %557 = vector.shape_cast %556 : vector<1x8x32xf32> to vector<8x32xf32>
    %cst_155 = arith.constant dense<0.000000e+00> : vector<8x32xf32>
    %558 = tpu.matmul %555, %470, %cst_155 {dimension_numbers = #tpu.dot_dimension_numbers<[1], [0], [0], [1], [0, 0, 1, 1], [], []>} : vector<8x32xbf16>, vector<32x32xbf16>, vector<8x32xf32> -> vector<8x32xf32>
    %559 = arith.addf %557, %558 : vector<8x32xf32>
    %560 = arith.negf %559 : vector<8x32xf32>
    %561 = math.exp %560 : vector<8x32xf32>
    %cst_156 = arith.constant 1.000000e+00 : f32
    %562 = vector.broadcast %cst_156 : f32 to vector<8x32xf32>
    %563 = arith.addf %562, %561 : vector<8x32xf32>
    %564 = arith.divf %562, %563 : vector<8x32xf32>
    %565 = vector.extract_strided_slice %452 {offsets = [2, 0, 0], sizes = [1, 8, 32], strides = [1, 1, 1]} : vector<8x8x32xf32> to vector<1x8x32xf32>
    %566 = vector.shape_cast %565 : vector<1x8x32xf32> to vector<8x32xf32>
    %cst_157 = arith.constant dense<0.000000e+00> : vector<8x32xf32>
    %567 = tpu.matmul %555, %472, %cst_157 {dimension_numbers = #tpu.dot_dimension_numbers<[1], [0], [0], [1], [0, 0, 1, 1], [], []>} : vector<8x32xbf16>, vector<32x32xbf16>, vector<8x32xf32> -> vector<8x32xf32>
    %568 = arith.addf %566, %567 : vector<8x32xf32>
    %569 = arith.negf %568 : vector<8x32xf32>
    %570 = math.exp %569 : vector<8x32xf32>
    %cst_158 = arith.constant 1.000000e+00 : f32
    %571 = vector.broadcast %cst_158 : f32 to vector<8x32xf32>
    %572 = arith.addf %571, %570 : vector<8x32xf32>
    %573 = arith.divf %571, %572 : vector<8x32xf32>
    %574 = vector.extract_strided_slice %460 {offsets = [2, 0, 0], sizes = [1, 8, 32], strides = [1, 1, 1]} : vector<8x8x32xf32> to vector<1x8x32xf32>
    %575 = vector.shape_cast %574 : vector<1x8x32xf32> to vector<8x32xf32>
    %cst_159 = arith.constant dense<0.000000e+00> : vector<8x32xf32>
    %576 = tpu.matmul %555, %474, %cst_159 {dimension_numbers = #tpu.dot_dimension_numbers<[1], [0], [0], [1], [0, 0, 1, 1], [], []>} : vector<8x32xbf16>, vector<32x32xbf16>, vector<8x32xf32> -> vector<8x32xf32>
    %577 = arith.addf %575, %576 : vector<8x32xf32>
    %578 = arith.negf %577 : vector<8x32xf32>
    %579 = math.exp %578 : vector<8x32xf32>
    %cst_160 = arith.constant 1.000000e+00 : f32
    %580 = vector.broadcast %cst_160 : f32 to vector<8x32xf32>
    %581 = arith.addf %580, %579 : vector<8x32xf32>
    %582 = arith.divf %580, %581 : vector<8x32xf32>
    %583 = vector.extract_strided_slice %468 {offsets = [2, 0, 0], sizes = [1, 8, 32], strides = [1, 1, 1]} : vector<8x8x32xf32> to vector<1x8x32xf32>
    %584 = vector.shape_cast %583 : vector<1x8x32xf32> to vector<8x32xf32>
    %cst_161 = arith.constant dense<0.000000e+00> : vector<8x32xf32>
    %585 = tpu.matmul %555, %476, %cst_161 {dimension_numbers = #tpu.dot_dimension_numbers<[1], [0], [0], [1], [0, 0, 1, 1], [], []>} : vector<8x32xbf16>, vector<32x32xbf16>, vector<8x32xf32> -> vector<8x32xf32>
    %586 = arith.addf %584, %585 : vector<8x32xf32>
    %587 = math.tanh %586 : vector<8x32xf32>
    %588 = arith.mulf %573, %552 : vector<8x32xf32>
    %589 = arith.mulf %564, %587 : vector<8x32xf32>
    %590 = arith.addf %588, %589 : vector<8x32xf32>
    %591 = math.tanh %590 : vector<8x32xf32>
    %592 = arith.mulf %582, %591 : vector<8x32xf32>
    %593 = arith.truncf %592 : vector<8x32xf32> to vector<8x32xbf16>
    %594 = vector.extract_strided_slice %444 {offsets = [3, 0, 0], sizes = [1, 8, 32], strides = [1, 1, 1]} : vector<8x8x32xf32> to vector<1x8x32xf32>
    %595 = vector.shape_cast %594 : vector<1x8x32xf32> to vector<8x32xf32>
    %cst_162 = arith.constant dense<0.000000e+00> : vector<8x32xf32>
    %596 = tpu.matmul %593, %470, %cst_162 {dimension_numbers = #tpu.dot_dimension_numbers<[1], [0], [0], [1], [0, 0, 1, 1], [], []>} : vector<8x32xbf16>, vector<32x32xbf16>, vector<8x32xf32> -> vector<8x32xf32>
    %597 = arith.addf %595, %596 : vector<8x32xf32>
    %598 = arith.negf %597 : vector<8x32xf32>
    %599 = math.exp %598 : vector<8x32xf32>
    %cst_163 = arith.constant 1.000000e+00 : f32
    %600 = vector.broadcast %cst_163 : f32 to vector<8x32xf32>
    %601 = arith.addf %600, %599 : vector<8x32xf32>
    %602 = arith.divf %600, %601 : vector<8x32xf32>
    %603 = vector.extract_strided_slice %452 {offsets = [3, 0, 0], sizes = [1, 8, 32], strides = [1, 1, 1]} : vector<8x8x32xf32> to vector<1x8x32xf32>
    %604 = vector.shape_cast %603 : vector<1x8x32xf32> to vector<8x32xf32>
    %cst_164 = arith.constant dense<0.000000e+00> : vector<8x32xf32>
    %605 = tpu.matmul %593, %472, %cst_164 {dimension_numbers = #tpu.dot_dimension_numbers<[1], [0], [0], [1], [0, 0, 1, 1], [], []>} : vector<8x32xbf16>, vector<32x32xbf16>, vector<8x32xf32> -> vector<8x32xf32>
    %606 = arith.addf %604, %605 : vector<8x32xf32>
    %607 = arith.negf %606 : vector<8x32xf32>
    %608 = math.exp %607 : vector<8x32xf32>
    %cst_165 = arith.constant 1.000000e+00 : f32
    %609 = vector.broadcast %cst_165 : f32 to vector<8x32xf32>
    %610 = arith.addf %609, %608 : vector<8x32xf32>
    %611 = arith.divf %609, %610 : vector<8x32xf32>
    %612 = vector.extract_strided_slice %460 {offsets = [3, 0, 0], sizes = [1, 8, 32], strides = [1, 1, 1]} : vector<8x8x32xf32> to vector<1x8x32xf32>
    %613 = vector.shape_cast %612 : vector<1x8x32xf32> to vector<8x32xf32>
    %cst_166 = arith.constant dense<0.000000e+00> : vector<8x32xf32>
    %614 = tpu.matmul %593, %474, %cst_166 {dimension_numbers = #tpu.dot_dimension_numbers<[1], [0], [0], [1], [0, 0, 1, 1], [], []>} : vector<8x32xbf16>, vector<32x32xbf16>, vector<8x32xf32> -> vector<8x32xf32>
    %615 = arith.addf %613, %614 : vector<8x32xf32>
    %616 = arith.negf %615 : vector<8x32xf32>
    %617 = math.exp %616 : vector<8x32xf32>
    %cst_167 = arith.constant 1.000000e+00 : f32
    %618 = vector.broadcast %cst_167 : f32 to vector<8x32xf32>
    %619 = arith.addf %618, %617 : vector<8x32xf32>
    %620 = arith.divf %618, %619 : vector<8x32xf32>
    %621 = vector.extract_strided_slice %468 {offsets = [3, 0, 0], sizes = [1, 8, 32], strides = [1, 1, 1]} : vector<8x8x32xf32> to vector<1x8x32xf32>
    %622 = vector.shape_cast %621 : vector<1x8x32xf32> to vector<8x32xf32>
    %cst_168 = arith.constant dense<0.000000e+00> : vector<8x32xf32>
    %623 = tpu.matmul %593, %476, %cst_168 {dimension_numbers = #tpu.dot_dimension_numbers<[1], [0], [0], [1], [0, 0, 1, 1], [], []>} : vector<8x32xbf16>, vector<32x32xbf16>, vector<8x32xf32> -> vector<8x32xf32>
    %624 = arith.addf %622, %623 : vector<8x32xf32>
    %625 = math.tanh %624 : vector<8x32xf32>
    %626 = arith.mulf %611, %590 : vector<8x32xf32>
    %627 = arith.mulf %602, %625 : vector<8x32xf32>
    %628 = arith.addf %626, %627 : vector<8x32xf32>
    %629 = math.tanh %628 : vector<8x32xf32>
    %630 = arith.mulf %620, %629 : vector<8x32xf32>
    %631 = arith.truncf %630 : vector<8x32xf32> to vector<8x32xbf16>
    %632 = vector.extract_strided_slice %444 {offsets = [4, 0, 0], sizes = [1, 8, 32], strides = [1, 1, 1]} : vector<8x8x32xf32> to vector<1x8x32xf32>
    %633 = vector.shape_cast %632 : vector<1x8x32xf32> to vector<8x32xf32>
    %cst_169 = arith.constant dense<0.000000e+00> : vector<8x32xf32>
    %634 = tpu.matmul %631, %470, %cst_169 {dimension_numbers = #tpu.dot_dimension_numbers<[1], [0], [0], [1], [0, 0, 1, 1], [], []>} : vector<8x32xbf16>, vector<32x32xbf16>, vector<8x32xf32> -> vector<8x32xf32>
    %635 = arith.addf %633, %634 : vector<8x32xf32>
    %636 = arith.negf %635 : vector<8x32xf32>
    %637 = math.exp %636 : vector<8x32xf32>
    %cst_170 = arith.constant 1.000000e+00 : f32
    %638 = vector.broadcast %cst_170 : f32 to vector<8x32xf32>
    %639 = arith.addf %638, %637 : vector<8x32xf32>
    %640 = arith.divf %638, %639 : vector<8x32xf32>
    %641 = vector.extract_strided_slice %452 {offsets = [4, 0, 0], sizes = [1, 8, 32], strides = [1, 1, 1]} : vector<8x8x32xf32> to vector<1x8x32xf32>
    %642 = vector.shape_cast %641 : vector<1x8x32xf32> to vector<8x32xf32>
    %cst_171 = arith.constant dense<0.000000e+00> : vector<8x32xf32>
    %643 = tpu.matmul %631, %472, %cst_171 {dimension_numbers = #tpu.dot_dimension_numbers<[1], [0], [0], [1], [0, 0, 1, 1], [], []>} : vector<8x32xbf16>, vector<32x32xbf16>, vector<8x32xf32> -> vector<8x32xf32>
    %644 = arith.addf %642, %643 : vector<8x32xf32>
    %645 = arith.negf %644 : vector<8x32xf32>
    %646 = math.exp %645 : vector<8x32xf32>
    %cst_172 = arith.constant 1.000000e+00 : f32
    %647 = vector.broadcast %cst_172 : f32 to vector<8x32xf32>
    %648 = arith.addf %647, %646 : vector<8x32xf32>
    %649 = arith.divf %647, %648 : vector<8x32xf32>
    %650 = vector.extract_strided_slice %460 {offsets = [4, 0, 0], sizes = [1, 8, 32], strides = [1, 1, 1]} : vector<8x8x32xf32> to vector<1x8x32xf32>
    %651 = vector.shape_cast %650 : vector<1x8x32xf32> to vector<8x32xf32>
    %cst_173 = arith.constant dense<0.000000e+00> : vector<8x32xf32>
    %652 = tpu.matmul %631, %474, %cst_173 {dimension_numbers = #tpu.dot_dimension_numbers<[1], [0], [0], [1], [0, 0, 1, 1], [], []>} : vector<8x32xbf16>, vector<32x32xbf16>, vector<8x32xf32> -> vector<8x32xf32>
    %653 = arith.addf %651, %652 : vector<8x32xf32>
    %654 = arith.negf %653 : vector<8x32xf32>
    %655 = math.exp %654 : vector<8x32xf32>
    %cst_174 = arith.constant 1.000000e+00 : f32
    %656 = vector.broadcast %cst_174 : f32 to vector<8x32xf32>
    %657 = arith.addf %656, %655 : vector<8x32xf32>
    %658 = arith.divf %656, %657 : vector<8x32xf32>
    %659 = vector.extract_strided_slice %468 {offsets = [4, 0, 0], sizes = [1, 8, 32], strides = [1, 1, 1]} : vector<8x8x32xf32> to vector<1x8x32xf32>
    %660 = vector.shape_cast %659 : vector<1x8x32xf32> to vector<8x32xf32>
    %cst_175 = arith.constant dense<0.000000e+00> : vector<8x32xf32>
    %661 = tpu.matmul %631, %476, %cst_175 {dimension_numbers = #tpu.dot_dimension_numbers<[1], [0], [0], [1], [0, 0, 1, 1], [], []>} : vector<8x32xbf16>, vector<32x32xbf16>, vector<8x32xf32> -> vector<8x32xf32>
    %662 = arith.addf %660, %661 : vector<8x32xf32>
    %663 = math.tanh %662 : vector<8x32xf32>
    %664 = arith.mulf %649, %628 : vector<8x32xf32>
    %665 = arith.mulf %640, %663 : vector<8x32xf32>
    %666 = arith.addf %664, %665 : vector<8x32xf32>
    %667 = math.tanh %666 : vector<8x32xf32>
    %668 = arith.mulf %658, %667 : vector<8x32xf32>
    %669 = arith.truncf %668 : vector<8x32xf32> to vector<8x32xbf16>
    %670 = vector.extract_strided_slice %444 {offsets = [5, 0, 0], sizes = [1, 8, 32], strides = [1, 1, 1]} : vector<8x8x32xf32> to vector<1x8x32xf32>
    %671 = vector.shape_cast %670 : vector<1x8x32xf32> to vector<8x32xf32>
    %cst_176 = arith.constant dense<0.000000e+00> : vector<8x32xf32>
    %672 = tpu.matmul %669, %470, %cst_176 {dimension_numbers = #tpu.dot_dimension_numbers<[1], [0], [0], [1], [0, 0, 1, 1], [], []>} : vector<8x32xbf16>, vector<32x32xbf16>, vector<8x32xf32> -> vector<8x32xf32>
    %673 = arith.addf %671, %672 : vector<8x32xf32>
    %674 = arith.negf %673 : vector<8x32xf32>
    %675 = math.exp %674 : vector<8x32xf32>
    %cst_177 = arith.constant 1.000000e+00 : f32
    %676 = vector.broadcast %cst_177 : f32 to vector<8x32xf32>
    %677 = arith.addf %676, %675 : vector<8x32xf32>
    %678 = arith.divf %676, %677 : vector<8x32xf32>
    %679 = vector.extract_strided_slice %452 {offsets = [5, 0, 0], sizes = [1, 8, 32], strides = [1, 1, 1]} : vector<8x8x32xf32> to vector<1x8x32xf32>
    %680 = vector.shape_cast %679 : vector<1x8x32xf32> to vector<8x32xf32>
    %cst_178 = arith.constant dense<0.000000e+00> : vector<8x32xf32>
    %681 = tpu.matmul %669, %472, %cst_178 {dimension_numbers = #tpu.dot_dimension_numbers<[1], [0], [0], [1], [0, 0, 1, 1], [], []>} : vector<8x32xbf16>, vector<32x32xbf16>, vector<8x32xf32> -> vector<8x32xf32>
    %682 = arith.addf %680, %681 : vector<8x32xf32>
    %683 = arith.negf %682 : vector<8x32xf32>
    %684 = math.exp %683 : vector<8x32xf32>
    %cst_179 = arith.constant 1.000000e+00 : f32
    %685 = vector.broadcast %cst_179 : f32 to vector<8x32xf32>
    %686 = arith.addf %685, %684 : vector<8x32xf32>
    %687 = arith.divf %685, %686 : vector<8x32xf32>
    %688 = vector.extract_strided_slice %460 {offsets = [5, 0, 0], sizes = [1, 8, 32], strides = [1, 1, 1]} : vector<8x8x32xf32> to vector<1x8x32xf32>
    %689 = vector.shape_cast %688 : vector<1x8x32xf32> to vector<8x32xf32>
    %cst_180 = arith.constant dense<0.000000e+00> : vector<8x32xf32>
    %690 = tpu.matmul %669, %474, %cst_180 {dimension_numbers = #tpu.dot_dimension_numbers<[1], [0], [0], [1], [0, 0, 1, 1], [], []>} : vector<8x32xbf16>, vector<32x32xbf16>, vector<8x32xf32> -> vector<8x32xf32>
    %691 = arith.addf %689, %690 : vector<8x32xf32>
    %692 = arith.negf %691 : vector<8x32xf32>
    %693 = math.exp %692 : vector<8x32xf32>
    %cst_181 = arith.constant 1.000000e+00 : f32
    %694 = vector.broadcast %cst_181 : f32 to vector<8x32xf32>
    %695 = arith.addf %694, %693 : vector<8x32xf32>
    %696 = arith.divf %694, %695 : vector<8x32xf32>
    %697 = vector.extract_strided_slice %468 {offsets = [5, 0, 0], sizes = [1, 8, 32], strides = [1, 1, 1]} : vector<8x8x32xf32> to vector<1x8x32xf32>
    %698 = vector.shape_cast %697 : vector<1x8x32xf32> to vector<8x32xf32>
    %cst_182 = arith.constant dense<0.000000e+00> : vector<8x32xf32>
    %699 = tpu.matmul %669, %476, %cst_182 {dimension_numbers = #tpu.dot_dimension_numbers<[1], [0], [0], [1], [0, 0, 1, 1], [], []>} : vector<8x32xbf16>, vector<32x32xbf16>, vector<8x32xf32> -> vector<8x32xf32>
    %700 = arith.addf %698, %699 : vector<8x32xf32>
    %701 = math.tanh %700 : vector<8x32xf32>
    %702 = arith.mulf %687, %666 : vector<8x32xf32>
    %703 = arith.mulf %678, %701 : vector<8x32xf32>
    %704 = arith.addf %702, %703 : vector<8x32xf32>
    %705 = math.tanh %704 : vector<8x32xf32>
    %706 = arith.mulf %696, %705 : vector<8x32xf32>
    %707 = arith.truncf %706 : vector<8x32xf32> to vector<8x32xbf16>
    %708 = vector.extract_strided_slice %444 {offsets = [6, 0, 0], sizes = [1, 8, 32], strides = [1, 1, 1]} : vector<8x8x32xf32> to vector<1x8x32xf32>
    %709 = vector.shape_cast %708 : vector<1x8x32xf32> to vector<8x32xf32>
    %cst_183 = arith.constant dense<0.000000e+00> : vector<8x32xf32>
    %710 = tpu.matmul %707, %470, %cst_183 {dimension_numbers = #tpu.dot_dimension_numbers<[1], [0], [0], [1], [0, 0, 1, 1], [], []>} : vector<8x32xbf16>, vector<32x32xbf16>, vector<8x32xf32> -> vector<8x32xf32>
    %711 = arith.addf %709, %710 : vector<8x32xf32>
    %712 = arith.negf %711 : vector<8x32xf32>
    %713 = math.exp %712 : vector<8x32xf32>
    %cst_184 = arith.constant 1.000000e+00 : f32
    %714 = vector.broadcast %cst_184 : f32 to vector<8x32xf32>
    %715 = arith.addf %714, %713 : vector<8x32xf32>
    %716 = arith.divf %714, %715 : vector<8x32xf32>
    %717 = vector.extract_strided_slice %452 {offsets = [6, 0, 0], sizes = [1, 8, 32], strides = [1, 1, 1]} : vector<8x8x32xf32> to vector<1x8x32xf32>
    %718 = vector.shape_cast %717 : vector<1x8x32xf32> to vector<8x32xf32>
    %cst_185 = arith.constant dense<0.000000e+00> : vector<8x32xf32>
    %719 = tpu.matmul %707, %472, %cst_185 {dimension_numbers = #tpu.dot_dimension_numbers<[1], [0], [0], [1], [0, 0, 1, 1], [], []>} : vector<8x32xbf16>, vector<32x32xbf16>, vector<8x32xf32> -> vector<8x32xf32>
    %720 = arith.addf %718, %719 : vector<8x32xf32>
    %721 = arith.negf %720 : vector<8x32xf32>
    %722 = math.exp %721 : vector<8x32xf32>
    %cst_186 = arith.constant 1.000000e+00 : f32
    %723 = vector.broadcast %cst_186 : f32 to vector<8x32xf32>
    %724 = arith.addf %723, %722 : vector<8x32xf32>
    %725 = arith.divf %723, %724 : vector<8x32xf32>
    %726 = vector.extract_strided_slice %460 {offsets = [6, 0, 0], sizes = [1, 8, 32], strides = [1, 1, 1]} : vector<8x8x32xf32> to vector<1x8x32xf32>
    %727 = vector.shape_cast %726 : vector<1x8x32xf32> to vector<8x32xf32>
    %cst_187 = arith.constant dense<0.000000e+00> : vector<8x32xf32>
    %728 = tpu.matmul %707, %474, %cst_187 {dimension_numbers = #tpu.dot_dimension_numbers<[1], [0], [0], [1], [0, 0, 1, 1], [], []>} : vector<8x32xbf16>, vector<32x32xbf16>, vector<8x32xf32> -> vector<8x32xf32>
    %729 = arith.addf %727, %728 : vector<8x32xf32>
    %730 = arith.negf %729 : vector<8x32xf32>
    %731 = math.exp %730 : vector<8x32xf32>
    %cst_188 = arith.constant 1.000000e+00 : f32
    %732 = vector.broadcast %cst_188 : f32 to vector<8x32xf32>
    %733 = arith.addf %732, %731 : vector<8x32xf32>
    %734 = arith.divf %732, %733 : vector<8x32xf32>
    %735 = vector.extract_strided_slice %468 {offsets = [6, 0, 0], sizes = [1, 8, 32], strides = [1, 1, 1]} : vector<8x8x32xf32> to vector<1x8x32xf32>
    %736 = vector.shape_cast %735 : vector<1x8x32xf32> to vector<8x32xf32>
    %cst_189 = arith.constant dense<0.000000e+00> : vector<8x32xf32>
    %737 = tpu.matmul %707, %476, %cst_189 {dimension_numbers = #tpu.dot_dimension_numbers<[1], [0], [0], [1], [0, 0, 1, 1], [], []>} : vector<8x32xbf16>, vector<32x32xbf16>, vector<8x32xf32> -> vector<8x32xf32>
    %738 = arith.addf %736, %737 : vector<8x32xf32>
    %739 = math.tanh %738 : vector<8x32xf32>
    %740 = arith.mulf %725, %704 : vector<8x32xf32>
    %741 = arith.mulf %716, %739 : vector<8x32xf32>
    %742 = arith.addf %740, %741 : vector<8x32xf32>
    %743 = math.tanh %742 : vector<8x32xf32>
    %744 = arith.mulf %734, %743 : vector<8x32xf32>
    %745 = arith.truncf %744 : vector<8x32xf32> to vector<8x32xbf16>
    %746 = vector.extract_strided_slice %444 {offsets = [7, 0, 0], sizes = [1, 8, 32], strides = [1, 1, 1]} : vector<8x8x32xf32> to vector<1x8x32xf32>
    %747 = vector.shape_cast %746 : vector<1x8x32xf32> to vector<8x32xf32>
    %cst_190 = arith.constant dense<0.000000e+00> : vector<8x32xf32>
    %748 = tpu.matmul %745, %470, %cst_190 {dimension_numbers = #tpu.dot_dimension_numbers<[1], [0], [0], [1], [0, 0, 1, 1], [], []>} : vector<8x32xbf16>, vector<32x32xbf16>, vector<8x32xf32> -> vector<8x32xf32>
    %749 = arith.addf %747, %748 : vector<8x32xf32>
    %750 = arith.negf %749 : vector<8x32xf32>
    %751 = math.exp %750 : vector<8x32xf32>
    %cst_191 = arith.constant 1.000000e+00 : f32
    %752 = vector.broadcast %cst_191 : f32 to vector<8x32xf32>
    %753 = arith.addf %752, %751 : vector<8x32xf32>
    %754 = arith.divf %752, %753 : vector<8x32xf32>
    %755 = vector.extract_strided_slice %452 {offsets = [7, 0, 0], sizes = [1, 8, 32], strides = [1, 1, 1]} : vector<8x8x32xf32> to vector<1x8x32xf32>
    %756 = vector.shape_cast %755 : vector<1x8x32xf32> to vector<8x32xf32>
    %cst_192 = arith.constant dense<0.000000e+00> : vector<8x32xf32>
    %757 = tpu.matmul %745, %472, %cst_192 {dimension_numbers = #tpu.dot_dimension_numbers<[1], [0], [0], [1], [0, 0, 1, 1], [], []>} : vector<8x32xbf16>, vector<32x32xbf16>, vector<8x32xf32> -> vector<8x32xf32>
    %758 = arith.addf %756, %757 : vector<8x32xf32>
    %759 = arith.negf %758 : vector<8x32xf32>
    %760 = math.exp %759 : vector<8x32xf32>
    %cst_193 = arith.constant 1.000000e+00 : f32
    %761 = vector.broadcast %cst_193 : f32 to vector<8x32xf32>
    %762 = arith.addf %761, %760 : vector<8x32xf32>
    %763 = arith.divf %761, %762 : vector<8x32xf32>
    %764 = vector.extract_strided_slice %460 {offsets = [7, 0, 0], sizes = [1, 8, 32], strides = [1, 1, 1]} : vector<8x8x32xf32> to vector<1x8x32xf32>
    %765 = vector.shape_cast %764 : vector<1x8x32xf32> to vector<8x32xf32>
    %cst_194 = arith.constant dense<0.000000e+00> : vector<8x32xf32>
    %766 = tpu.matmul %745, %474, %cst_194 {dimension_numbers = #tpu.dot_dimension_numbers<[1], [0], [0], [1], [0, 0, 1, 1], [], []>} : vector<8x32xbf16>, vector<32x32xbf16>, vector<8x32xf32> -> vector<8x32xf32>
    %767 = arith.addf %765, %766 : vector<8x32xf32>
    %768 = arith.negf %767 : vector<8x32xf32>
    %769 = math.exp %768 : vector<8x32xf32>
    %cst_195 = arith.constant 1.000000e+00 : f32
    %770 = vector.broadcast %cst_195 : f32 to vector<8x32xf32>
    %771 = arith.addf %770, %769 : vector<8x32xf32>
    %772 = arith.divf %770, %771 : vector<8x32xf32>
    %773 = vector.extract_strided_slice %468 {offsets = [7, 0, 0], sizes = [1, 8, 32], strides = [1, 1, 1]} : vector<8x8x32xf32> to vector<1x8x32xf32>
    %774 = vector.shape_cast %773 : vector<1x8x32xf32> to vector<8x32xf32>
    %cst_196 = arith.constant dense<0.000000e+00> : vector<8x32xf32>
    %775 = tpu.matmul %745, %476, %cst_196 {dimension_numbers = #tpu.dot_dimension_numbers<[1], [0], [0], [1], [0, 0, 1, 1], [], []>} : vector<8x32xbf16>, vector<32x32xbf16>, vector<8x32xf32> -> vector<8x32xf32>
    %776 = arith.addf %774, %775 : vector<8x32xf32>
    %777 = math.tanh %776 : vector<8x32xf32>
    %778 = arith.mulf %763, %742 : vector<8x32xf32>
    %779 = arith.mulf %754, %777 : vector<8x32xf32>
    %780 = arith.addf %778, %779 : vector<8x32xf32>
    %781 = math.tanh %780 : vector<8x32xf32>
    %782 = arith.mulf %772, %781 : vector<8x32xf32>
    %783 = vector.extract_strided_slice %516 {offsets = [0, 0], sizes = [8, 16], strides = [1, 1]} : vector<8x32xf32> to vector<8x16xf32>
    %784 = vector.extract_strided_slice %782 {offsets = [0, 16], sizes = [8, 16], strides = [1, 1]} : vector<8x32xf32> to vector<8x16xf32>
    %785 = tpu.concatenate %783, %784 in 1 : vector<8x16xf32>, vector<8x16xf32> -> vector<8x32xf32>
    %786 = vector.extract_strided_slice %554 {offsets = [0, 0], sizes = [8, 16], strides = [1, 1]} : vector<8x32xf32> to vector<8x16xf32>
    %787 = vector.extract_strided_slice %744 {offsets = [0, 16], sizes = [8, 16], strides = [1, 1]} : vector<8x32xf32> to vector<8x16xf32>
    %788 = tpu.concatenate %786, %787 in 1 : vector<8x16xf32>, vector<8x16xf32> -> vector<8x32xf32>
    %789 = vector.extract_strided_slice %592 {offsets = [0, 0], sizes = [8, 16], strides = [1, 1]} : vector<8x32xf32> to vector<8x16xf32>
    %790 = vector.extract_strided_slice %706 {offsets = [0, 16], sizes = [8, 16], strides = [1, 1]} : vector<8x32xf32> to vector<8x16xf32>
    %791 = tpu.concatenate %789, %790 in 1 : vector<8x16xf32>, vector<8x16xf32> -> vector<8x32xf32>
    %792 = vector.extract_strided_slice %630 {offsets = [0, 0], sizes = [8, 16], strides = [1, 1]} : vector<8x32xf32> to vector<8x16xf32>
    %793 = vector.extract_strided_slice %668 {offsets = [0, 16], sizes = [8, 16], strides = [1, 1]} : vector<8x32xf32> to vector<8x16xf32>
    %794 = tpu.concatenate %792, %793 in 1 : vector<8x16xf32>, vector<8x16xf32> -> vector<8x32xf32>
    %795 = vector.extract_strided_slice %668 {offsets = [0, 0], sizes = [8, 16], strides = [1, 1]} : vector<8x32xf32> to vector<8x16xf32>
    %796 = vector.extract_strided_slice %630 {offsets = [0, 16], sizes = [8, 16], strides = [1, 1]} : vector<8x32xf32> to vector<8x16xf32>
    %797 = tpu.concatenate %795, %796 in 1 : vector<8x16xf32>, vector<8x16xf32> -> vector<8x32xf32>
    %798 = vector.extract_strided_slice %706 {offsets = [0, 0], sizes = [8, 16], strides = [1, 1]} : vector<8x32xf32> to vector<8x16xf32>
    %799 = vector.extract_strided_slice %592 {offsets = [0, 16], sizes = [8, 16], strides = [1, 1]} : vector<8x32xf32> to vector<8x16xf32>
    %800 = tpu.concatenate %798, %799 in 1 : vector<8x16xf32>, vector<8x16xf32> -> vector<8x32xf32>
    %801 = vector.extract_strided_slice %744 {offsets = [0, 0], sizes = [8, 16], strides = [1, 1]} : vector<8x32xf32> to vector<8x16xf32>
    %802 = vector.extract_strided_slice %554 {offsets = [0, 16], sizes = [8, 16], strides = [1, 1]} : vector<8x32xf32> to vector<8x16xf32>
    %803 = tpu.concatenate %801, %802 in 1 : vector<8x16xf32>, vector<8x16xf32> -> vector<8x32xf32>
    %804 = vector.extract_strided_slice %782 {offsets = [0, 0], sizes = [8, 16], strides = [1, 1]} : vector<8x32xf32> to vector<8x16xf32>
    %805 = vector.extract_strided_slice %516 {offsets = [0, 16], sizes = [8, 16], strides = [1, 1]} : vector<8x32xf32> to vector<8x16xf32>
    %806 = tpu.concatenate %804, %805 in 1 : vector<8x16xf32>, vector<8x16xf32> -> vector<8x32xf32>
    %807 = vector.shape_cast %785 : vector<8x32xf32> to vector<1x8x32xf32>
    %808 = vector.shape_cast %788 : vector<8x32xf32> to vector<1x8x32xf32>
    %809 = vector.shape_cast %791 : vector<8x32xf32> to vector<1x8x32xf32>
    %810 = vector.shape_cast %794 : vector<8x32xf32> to vector<1x8x32xf32>
    %811 = vector.shape_cast %797 : vector<8x32xf32> to vector<1x8x32xf32>
    %812 = vector.shape_cast %800 : vector<8x32xf32> to vector<1x8x32xf32>
    %813 = vector.shape_cast %803 : vector<8x32xf32> to vector<1x8x32xf32>
    %814 = vector.shape_cast %806 : vector<8x32xf32> to vector<1x8x32xf32>
    %815 = tpu.concatenate %807, %808, %809, %810, %811, %812, %813, %814 in 0 : vector<1x8x32xf32>, vector<1x8x32xf32>, vector<1x8x32xf32>, vector<1x8x32xf32>, vector<1x8x32xf32>, vector<1x8x32xf32>, vector<1x8x32xf32>, vector<1x8x32xf32> -> vector<8x8x32xf32>
    %c0_197 = arith.constant 0 : index
    %c0_198 = arith.constant 0 : index
    %c0_199 = arith.constant 0 : index
    %816 = vector.load %arg14[%c0_197, %c0_198, %c0_199] : memref<8x8x32xf32, #tpu.memory_space<vmem>>, vector<8x8x32xf32>
    tpu.vector_store %arg14[%c0_197, %c0_198, %c0_199], %815 {strides = array<i32>} : memref<8x8x32xf32, #tpu.memory_space<vmem>>, vector<8x8x32xf32>,
    %817 = vector.extract_strided_slice %815 {offsets = [7, 0, 0], sizes = [1, 8, 32], strides = [1, 1, 1]} : vector<8x8x32xf32> to vector<1x8x32xf32>
    %818 = vector.shape_cast %817 : vector<1x8x32xf32> to vector<8x32xf32>
    %819 = vector.extract_strided_slice %815 {offsets = [6, 0, 0], sizes = [1, 8, 32], strides = [1, 1, 1]} : vector<8x8x32xf32> to vector<1x8x32xf32>
    %820 = vector.shape_cast %819 : vector<1x8x32xf32> to vector<8x32xf32>
    %821 = vector.extract_strided_slice %815 {offsets = [5, 0, 0], sizes = [1, 8, 32], strides = [1, 1, 1]} : vector<8x8x32xf32> to vector<1x8x32xf32>
    %822 = vector.shape_cast %821 : vector<1x8x32xf32> to vector<8x32xf32>
    %823 = vector.extract_strided_slice %815 {offsets = [4, 0, 0], sizes = [1, 8, 32], strides = [1, 1, 1]} : vector<8x8x32xf32> to vector<1x8x32xf32>
    %824 = vector.shape_cast %823 : vector<1x8x32xf32> to vector<8x32xf32>
    %825 = vector.extract_strided_slice %815 {offsets = [3, 0, 0], sizes = [1, 8, 32], strides = [1, 1, 1]} : vector<8x8x32xf32> to vector<1x8x32xf32>
    %826 = vector.shape_cast %825 : vector<1x8x32xf32> to vector<8x32xf32>
    %827 = vector.extract_strided_slice %815 {offsets = [2, 0, 0], sizes = [1, 8, 32], strides = [1, 1, 1]} : vector<8x8x32xf32> to vector<1x8x32xf32>
    %828 = vector.shape_cast %827 : vector<1x8x32xf32> to vector<8x32xf32>
    %829 = vector.extract_strided_slice %815 {offsets = [1, 0, 0], sizes = [1, 8, 32], strides = [1, 1, 1]} : vector<8x8x32xf32> to vector<1x8x32xf32>
    %830 = vector.shape_cast %829 : vector<1x8x32xf32> to vector<8x32xf32>
    %831 = vector.extract_strided_slice %815 {offsets = [0, 0, 0], sizes = [1, 8, 32], strides = [1, 1, 1]} : vector<8x8x32xf32> to vector<1x8x32xf32>
    %832 = vector.shape_cast %831 : vector<1x8x32xf32> to vector<8x32xf32>
    %833 = vector.shape_cast %818 : vector<8x32xf32> to vector<1x8x32xf32>
    %834 = vector.shape_cast %820 : vector<8x32xf32> to vector<1x8x32xf32>
    %835 = vector.shape_cast %822 : vector<8x32xf32> to vector<1x8x32xf32>
    %836 = vector.shape_cast %824 : vector<8x32xf32> to vector<1x8x32xf32>
    %837 = vector.shape_cast %826 : vector<8x32xf32> to vector<1x8x32xf32>
    %838 = vector.shape_cast %828 : vector<8x32xf32> to vector<1x8x32xf32>
    %839 = vector.shape_cast %830 : vector<8x32xf32> to vector<1x8x32xf32>
    %840 = vector.shape_cast %832 : vector<8x32xf32> to vector<1x8x32xf32>
    %841 = tpu.concatenate %833, %834, %835, %836, %837, %838, %839, %840 in 0 : vector<1x8x32xf32>, vector<1x8x32xf32>, vector<1x8x32xf32>, vector<1x8x32xf32>, vector<1x8x32xf32>, vector<1x8x32xf32>, vector<1x8x32xf32>, vector<1x8x32xf32> -> vector<8x8x32xf32>
    %842 = tpu.concatenate %815, %841 in 2 : vector<8x8x32xf32>, vector<8x8x32xf32> -> vector<8x8x64xf32>
    %843 = vector.shape_cast %842 : vector<8x8x64xf32> to vector<64x64xf32>
    %844 = arith.truncf %843 : vector<64x64xf32> to vector<64x64xbf16>
    %c0_200 = arith.constant 0 : index
    %c0_201 = arith.constant 0 : index
    %c0_202 = arith.constant 0 : index
    %845 = vector.load %arg8[%c0_200, %c0_201, %c0_202] : memref<4x64x64xbf16, #tpu.memory_space<vmem>>, vector<1x64x64xbf16>
    %846 = vector.shape_cast %845 : vector<1x64x64xbf16> to vector<64x64xbf16>
    %cst_203 = arith.constant dense<0.000000e+00> : vector<64x64xf32>
    %847 = tpu.matmul %844, %846, %cst_203 {dimension_numbers = #tpu.dot_dimension_numbers<[1], [0], [0], [1], [0, 0, 1, 1], [], []>} : vector<64x64xbf16>, vector<64x64xbf16>, vector<64x64xf32> -> vector<64x64xf32>
    %c0_204 = arith.constant 0 : index
    %c0_205 = arith.constant 0 : index
    %c0_206 = arith.constant 0 : index
    %848 = vector.load %arg10[%c0_204, %c0_205, %c0_206] : memref<4x1x64xf32, #tpu.memory_space<vmem>>, vector<1x1x64xf32>
    %849 = vector.shape_cast %848 : vector<1x1x64xf32> to vector<1x64xf32>
    %850 = vector.broadcast %849 : vector<1x64xf32> to vector<64x64xf32>
    %851 = arith.addf %847, %850 : vector<64x64xf32>
    %852 = vector.shape_cast %851 : vector<64x64xf32> to vector<8x8x64xf32>
    %c1_207 = arith.constant 1 : index
    %c0_208 = arith.constant 0 : index
    %c0_209 = arith.constant 0 : index
    %853 = vector.load %arg8[%c1_207, %c0_208, %c0_209] : memref<4x64x64xbf16, #tpu.memory_space<vmem>>, vector<1x64x64xbf16>
    %854 = vector.shape_cast %853 : vector<1x64x64xbf16> to vector<64x64xbf16>
    %cst_210 = arith.constant dense<0.000000e+00> : vector<64x64xf32>
    %855 = tpu.matmul %844, %854, %cst_210 {dimension_numbers = #tpu.dot_dimension_numbers<[1], [0], [0], [1], [0, 0, 1, 1], [], []>} : vector<64x64xbf16>, vector<64x64xbf16>, vector<64x64xf32> -> vector<64x64xf32>
    %c1_211 = arith.constant 1 : index
    %c0_212 = arith.constant 0 : index
    %c0_213 = arith.constant 0 : index
    %856 = vector.load %arg10[%c1_211, %c0_212, %c0_213] : memref<4x1x64xf32, #tpu.memory_space<vmem>>, vector<1x1x64xf32>
    %857 = vector.shape_cast %856 : vector<1x1x64xf32> to vector<1x64xf32>
    %858 = vector.broadcast %857 : vector<1x64xf32> to vector<64x64xf32>
    %859 = arith.addf %855, %858 : vector<64x64xf32>
    %860 = vector.shape_cast %859 : vector<64x64xf32> to vector<8x8x64xf32>
    %c2_214 = arith.constant 2 : index
    %c0_215 = arith.constant 0 : index
    %c0_216 = arith.constant 0 : index
    %861 = vector.load %arg8[%c2_214, %c0_215, %c0_216] : memref<4x64x64xbf16, #tpu.memory_space<vmem>>, vector<1x64x64xbf16>
    %862 = vector.shape_cast %861 : vector<1x64x64xbf16> to vector<64x64xbf16>
    %cst_217 = arith.constant dense<0.000000e+00> : vector<64x64xf32>
    %863 = tpu.matmul %844, %862, %cst_217 {dimension_numbers = #tpu.dot_dimension_numbers<[1], [0], [0], [1], [0, 0, 1, 1], [], []>} : vector<64x64xbf16>, vector<64x64xbf16>, vector<64x64xf32> -> vector<64x64xf32>
    %c2_218 = arith.constant 2 : index
    %c0_219 = arith.constant 0 : index
    %c0_220 = arith.constant 0 : index
    %864 = vector.load %arg10[%c2_218, %c0_219, %c0_220] : memref<4x1x64xf32, #tpu.memory_space<vmem>>, vector<1x1x64xf32>
    %865 = vector.shape_cast %864 : vector<1x1x64xf32> to vector<1x64xf32>
    %866 = vector.broadcast %865 : vector<1x64xf32> to vector<64x64xf32>
    %867 = arith.addf %863, %866 : vector<64x64xf32>
    %868 = vector.shape_cast %867 : vector<64x64xf32> to vector<8x8x64xf32>
    %c3_221 = arith.constant 3 : index
    %c0_222 = arith.constant 0 : index
    %c0_223 = arith.constant 0 : index
    %869 = vector.load %arg8[%c3_221, %c0_222, %c0_223] : memref<4x64x64xbf16, #tpu.memory_space<vmem>>, vector<1x64x64xbf16>
    %870 = vector.shape_cast %869 : vector<1x64x64xbf16> to vector<64x64xbf16>
    %cst_224 = arith.constant dense<0.000000e+00> : vector<64x64xf32>
    %871 = tpu.matmul %844, %870, %cst_224 {dimension_numbers = #tpu.dot_dimension_numbers<[1], [0], [0], [1], [0, 0, 1, 1], [], []>} : vector<64x64xbf16>, vector<64x64xbf16>, vector<64x64xf32> -> vector<64x64xf32>
    %c3_225 = arith.constant 3 : index
    %c0_226 = arith.constant 0 : index
    %c0_227 = arith.constant 0 : index
    %872 = vector.load %arg10[%c3_225, %c0_226, %c0_227] : memref<4x1x64xf32, #tpu.memory_space<vmem>>, vector<1x1x64xf32>
    %873 = vector.shape_cast %872 : vector<1x1x64xf32> to vector<1x64xf32>
    %874 = vector.broadcast %873 : vector<1x64xf32> to vector<64x64xf32>
    %875 = arith.addf %871, %874 : vector<64x64xf32>
    %876 = vector.shape_cast %875 : vector<64x64xf32> to vector<8x8x64xf32>
    %c0_228 = arith.constant 0 : index
    %c0_229 = arith.constant 0 : index
    %c0_230 = arith.constant 0 : index
    %877 = vector.load %arg9[%c0_228, %c0_229, %c0_230] : memref<4x64x64xbf16, #tpu.memory_space<vmem>>, vector<1x64x64xbf16>
    %878 = vector.shape_cast %877 : vector<1x64x64xbf16> to vector<64x64xbf16>
    %c1_231 = arith.constant 1 : index
    %c0_232 = arith.constant 0 : index
    %c0_233 = arith.constant 0 : index
    %879 = vector.load %arg9[%c1_231, %c0_232, %c0_233] : memref<4x64x64xbf16, #tpu.memory_space<vmem>>, vector<1x64x64xbf16>
    %880 = vector.shape_cast %879 : vector<1x64x64xbf16> to vector<64x64xbf16>
    %c2_234 = arith.constant 2 : index
    %c0_235 = arith.constant 0 : index
    %c0_236 = arith.constant 0 : index
    %881 = vector.load %arg9[%c2_234, %c0_235, %c0_236] : memref<4x64x64xbf16, #tpu.memory_space<vmem>>, vector<1x64x64xbf16>
    %882 = vector.shape_cast %881 : vector<1x64x64xbf16> to vector<64x64xbf16>
    %c3_237 = arith.constant 3 : index
    %c0_238 = arith.constant 0 : index
    %c0_239 = arith.constant 0 : index
    %883 = vector.load %arg9[%c3_237, %c0_238, %c0_239] : memref<4x64x64xbf16, #tpu.memory_space<vmem>>, vector<1x64x64xbf16>
    %884 = vector.shape_cast %883 : vector<1x64x64xbf16> to vector<64x64xbf16>
    %cst_240 = arith.constant 0.000000e+00 : f32
    %885 = vector.broadcast %cst_240 : f32 to vector<8x64xf32>
    %cst_241 = arith.constant 0.000000e+00 : f32
    %886 = vector.broadcast %cst_241 : f32 to vector<8x64xf32>
    %887 = arith.truncf %885 : vector<8x64xf32> to vector<8x64xbf16>
    %888 = vector.extract_strided_slice %852 {offsets = [0, 0, 0], sizes = [1, 8, 64], strides = [1, 1, 1]} : vector<8x8x64xf32> to vector<1x8x64xf32>
    %889 = vector.shape_cast %888 : vector<1x8x64xf32> to vector<8x64xf32>
    %cst_242 = arith.constant dense<0.000000e+00> : vector<8x64xf32>
    %890 = tpu.matmul %887, %878, %cst_242 {dimension_numbers = #tpu.dot_dimension_numbers<[1], [0], [0], [1], [0, 0, 1, 1], [], []>} : vector<8x64xbf16>, vector<64x64xbf16>, vector<8x64xf32> -> vector<8x64xf32>
    %891 = arith.addf %889, %890 : vector<8x64xf32>
    %892 = arith.negf %891 : vector<8x64xf32>
    %893 = math.exp %892 : vector<8x64xf32>
    %cst_243 = arith.constant 1.000000e+00 : f32
    %894 = vector.broadcast %cst_243 : f32 to vector<8x64xf32>
    %895 = arith.addf %894, %893 : vector<8x64xf32>
    %896 = arith.divf %894, %895 : vector<8x64xf32>
    %897 = vector.extract_strided_slice %860 {offsets = [0, 0, 0], sizes = [1, 8, 64], strides = [1, 1, 1]} : vector<8x8x64xf32> to vector<1x8x64xf32>
    %898 = vector.shape_cast %897 : vector<1x8x64xf32> to vector<8x64xf32>
    %cst_244 = arith.constant dense<0.000000e+00> : vector<8x64xf32>
    %899 = tpu.matmul %887, %880, %cst_244 {dimension_numbers = #tpu.dot_dimension_numbers<[1], [0], [0], [1], [0, 0, 1, 1], [], []>} : vector<8x64xbf16>, vector<64x64xbf16>, vector<8x64xf32> -> vector<8x64xf32>
    %900 = arith.addf %898, %899 : vector<8x64xf32>
    %901 = arith.negf %900 : vector<8x64xf32>
    %902 = math.exp %901 : vector<8x64xf32>
    %cst_245 = arith.constant 1.000000e+00 : f32
    %903 = vector.broadcast %cst_245 : f32 to vector<8x64xf32>
    %904 = arith.addf %903, %902 : vector<8x64xf32>
    %905 = arith.divf %903, %904 : vector<8x64xf32>
    %906 = vector.extract_strided_slice %868 {offsets = [0, 0, 0], sizes = [1, 8, 64], strides = [1, 1, 1]} : vector<8x8x64xf32> to vector<1x8x64xf32>
    %907 = vector.shape_cast %906 : vector<1x8x64xf32> to vector<8x64xf32>
    %cst_246 = arith.constant dense<0.000000e+00> : vector<8x64xf32>
    %908 = tpu.matmul %887, %882, %cst_246 {dimension_numbers = #tpu.dot_dimension_numbers<[1], [0], [0], [1], [0, 0, 1, 1], [], []>} : vector<8x64xbf16>, vector<64x64xbf16>, vector<8x64xf32> -> vector<8x64xf32>
    %909 = arith.addf %907, %908 : vector<8x64xf32>
    %910 = arith.negf %909 : vector<8x64xf32>
    %911 = math.exp %910 : vector<8x64xf32>
    %cst_247 = arith.constant 1.000000e+00 : f32
    %912 = vector.broadcast %cst_247 : f32 to vector<8x64xf32>
    %913 = arith.addf %912, %911 : vector<8x64xf32>
    %914 = arith.divf %912, %913 : vector<8x64xf32>
    %915 = vector.extract_strided_slice %876 {offsets = [0, 0, 0], sizes = [1, 8, 64], strides = [1, 1, 1]} : vector<8x8x64xf32> to vector<1x8x64xf32>
    %916 = vector.shape_cast %915 : vector<1x8x64xf32> to vector<8x64xf32>
    %cst_248 = arith.constant dense<0.000000e+00> : vector<8x64xf32>
    %917 = tpu.matmul %887, %884, %cst_248 {dimension_numbers = #tpu.dot_dimension_numbers<[1], [0], [0], [1], [0, 0, 1, 1], [], []>} : vector<8x64xbf16>, vector<64x64xbf16>, vector<8x64xf32> -> vector<8x64xf32>
    %918 = arith.addf %916, %917 : vector<8x64xf32>
    %919 = math.tanh %918 : vector<8x64xf32>
    %920 = arith.mulf %905, %886 : vector<8x64xf32>
    %921 = arith.mulf %896, %919 : vector<8x64xf32>
    %922 = arith.addf %920, %921 : vector<8x64xf32>
    %923 = math.tanh %922 : vector<8x64xf32>
    %924 = arith.mulf %914, %923 : vector<8x64xf32>
    %925 = arith.truncf %924 : vector<8x64xf32> to vector<8x64xbf16>
    %926 = vector.extract_strided_slice %852 {offsets = [1, 0, 0], sizes = [1, 8, 64], strides = [1, 1, 1]} : vector<8x8x64xf32> to vector<1x8x64xf32>
    %927 = vector.shape_cast %926 : vector<1x8x64xf32> to vector<8x64xf32>
    %cst_249 = arith.constant dense<0.000000e+00> : vector<8x64xf32>
    %928 = tpu.matmul %925, %878, %cst_249 {dimension_numbers = #tpu.dot_dimension_numbers<[1], [0], [0], [1], [0, 0, 1, 1], [], []>} : vector<8x64xbf16>, vector<64x64xbf16>, vector<8x64xf32> -> vector<8x64xf32>
    %929 = arith.addf %927, %928 : vector<8x64xf32>
    %930 = arith.negf %929 : vector<8x64xf32>
    %931 = math.exp %930 : vector<8x64xf32>
    %cst_250 = arith.constant 1.000000e+00 : f32
    %932 = vector.broadcast %cst_250 : f32 to vector<8x64xf32>
    %933 = arith.addf %932, %931 : vector<8x64xf32>
    %934 = arith.divf %932, %933 : vector<8x64xf32>
    %935 = vector.extract_strided_slice %860 {offsets = [1, 0, 0], sizes = [1, 8, 64], strides = [1, 1, 1]} : vector<8x8x64xf32> to vector<1x8x64xf32>
    %936 = vector.shape_cast %935 : vector<1x8x64xf32> to vector<8x64xf32>
    %cst_251 = arith.constant dense<0.000000e+00> : vector<8x64xf32>
    %937 = tpu.matmul %925, %880, %cst_251 {dimension_numbers = #tpu.dot_dimension_numbers<[1], [0], [0], [1], [0, 0, 1, 1], [], []>} : vector<8x64xbf16>, vector<64x64xbf16>, vector<8x64xf32> -> vector<8x64xf32>
    %938 = arith.addf %936, %937 : vector<8x64xf32>
    %939 = arith.negf %938 : vector<8x64xf32>
    %940 = math.exp %939 : vector<8x64xf32>
    %cst_252 = arith.constant 1.000000e+00 : f32
    %941 = vector.broadcast %cst_252 : f32 to vector<8x64xf32>
    %942 = arith.addf %941, %940 : vector<8x64xf32>
    %943 = arith.divf %941, %942 : vector<8x64xf32>
    %944 = vector.extract_strided_slice %868 {offsets = [1, 0, 0], sizes = [1, 8, 64], strides = [1, 1, 1]} : vector<8x8x64xf32> to vector<1x8x64xf32>
    %945 = vector.shape_cast %944 : vector<1x8x64xf32> to vector<8x64xf32>
    %cst_253 = arith.constant dense<0.000000e+00> : vector<8x64xf32>
    %946 = tpu.matmul %925, %882, %cst_253 {dimension_numbers = #tpu.dot_dimension_numbers<[1], [0], [0], [1], [0, 0, 1, 1], [], []>} : vector<8x64xbf16>, vector<64x64xbf16>, vector<8x64xf32> -> vector<8x64xf32>
    %947 = arith.addf %945, %946 : vector<8x64xf32>
    %948 = arith.negf %947 : vector<8x64xf32>
    %949 = math.exp %948 : vector<8x64xf32>
    %cst_254 = arith.constant 1.000000e+00 : f32
    %950 = vector.broadcast %cst_254 : f32 to vector<8x64xf32>
    %951 = arith.addf %950, %949 : vector<8x64xf32>
    %952 = arith.divf %950, %951 : vector<8x64xf32>
    %953 = vector.extract_strided_slice %876 {offsets = [1, 0, 0], sizes = [1, 8, 64], strides = [1, 1, 1]} : vector<8x8x64xf32> to vector<1x8x64xf32>
    %954 = vector.shape_cast %953 : vector<1x8x64xf32> to vector<8x64xf32>
    %cst_255 = arith.constant dense<0.000000e+00> : vector<8x64xf32>
    %955 = tpu.matmul %925, %884, %cst_255 {dimension_numbers = #tpu.dot_dimension_numbers<[1], [0], [0], [1], [0, 0, 1, 1], [], []>} : vector<8x64xbf16>, vector<64x64xbf16>, vector<8x64xf32> -> vector<8x64xf32>
    %956 = arith.addf %954, %955 : vector<8x64xf32>
    %957 = math.tanh %956 : vector<8x64xf32>
    %958 = arith.mulf %943, %922 : vector<8x64xf32>
    %959 = arith.mulf %934, %957 : vector<8x64xf32>
    %960 = arith.addf %958, %959 : vector<8x64xf32>
    %961 = math.tanh %960 : vector<8x64xf32>
    %962 = arith.mulf %952, %961 : vector<8x64xf32>
    %963 = arith.truncf %962 : vector<8x64xf32> to vector<8x64xbf16>
    %964 = vector.extract_strided_slice %852 {offsets = [2, 0, 0], sizes = [1, 8, 64], strides = [1, 1, 1]} : vector<8x8x64xf32> to vector<1x8x64xf32>
    %965 = vector.shape_cast %964 : vector<1x8x64xf32> to vector<8x64xf32>
    %cst_256 = arith.constant dense<0.000000e+00> : vector<8x64xf32>
    %966 = tpu.matmul %963, %878, %cst_256 {dimension_numbers = #tpu.dot_dimension_numbers<[1], [0], [0], [1], [0, 0, 1, 1], [], []>} : vector<8x64xbf16>, vector<64x64xbf16>, vector<8x64xf32> -> vector<8x64xf32>
    %967 = arith.addf %965, %966 : vector<8x64xf32>
    %968 = arith.negf %967 : vector<8x64xf32>
    %969 = math.exp %968 : vector<8x64xf32>
    %cst_257 = arith.constant 1.000000e+00 : f32
    %970 = vector.broadcast %cst_257 : f32 to vector<8x64xf32>
    %971 = arith.addf %970, %969 : vector<8x64xf32>
    %972 = arith.divf %970, %971 : vector<8x64xf32>
    %973 = vector.extract_strided_slice %860 {offsets = [2, 0, 0], sizes = [1, 8, 64], strides = [1, 1, 1]} : vector<8x8x64xf32> to vector<1x8x64xf32>
    %974 = vector.shape_cast %973 : vector<1x8x64xf32> to vector<8x64xf32>
    %cst_258 = arith.constant dense<0.000000e+00> : vector<8x64xf32>
    %975 = tpu.matmul %963, %880, %cst_258 {dimension_numbers = #tpu.dot_dimension_numbers<[1], [0], [0], [1], [0, 0, 1, 1], [], []>} : vector<8x64xbf16>, vector<64x64xbf16>, vector<8x64xf32> -> vector<8x64xf32>
    %976 = arith.addf %974, %975 : vector<8x64xf32>
    %977 = arith.negf %976 : vector<8x64xf32>
    %978 = math.exp %977 : vector<8x64xf32>
    %cst_259 = arith.constant 1.000000e+00 : f32
    %979 = vector.broadcast %cst_259 : f32 to vector<8x64xf32>
    %980 = arith.addf %979, %978 : vector<8x64xf32>
    %981 = arith.divf %979, %980 : vector<8x64xf32>
    %982 = vector.extract_strided_slice %868 {offsets = [2, 0, 0], sizes = [1, 8, 64], strides = [1, 1, 1]} : vector<8x8x64xf32> to vector<1x8x64xf32>
    %983 = vector.shape_cast %982 : vector<1x8x64xf32> to vector<8x64xf32>
    %cst_260 = arith.constant dense<0.000000e+00> : vector<8x64xf32>
    %984 = tpu.matmul %963, %882, %cst_260 {dimension_numbers = #tpu.dot_dimension_numbers<[1], [0], [0], [1], [0, 0, 1, 1], [], []>} : vector<8x64xbf16>, vector<64x64xbf16>, vector<8x64xf32> -> vector<8x64xf32>
    %985 = arith.addf %983, %984 : vector<8x64xf32>
    %986 = arith.negf %985 : vector<8x64xf32>
    %987 = math.exp %986 : vector<8x64xf32>
    %cst_261 = arith.constant 1.000000e+00 : f32
    %988 = vector.broadcast %cst_261 : f32 to vector<8x64xf32>
    %989 = arith.addf %988, %987 : vector<8x64xf32>
    %990 = arith.divf %988, %989 : vector<8x64xf32>
    %991 = vector.extract_strided_slice %876 {offsets = [2, 0, 0], sizes = [1, 8, 64], strides = [1, 1, 1]} : vector<8x8x64xf32> to vector<1x8x64xf32>
    %992 = vector.shape_cast %991 : vector<1x8x64xf32> to vector<8x64xf32>
    %cst_262 = arith.constant dense<0.000000e+00> : vector<8x64xf32>
    %993 = tpu.matmul %963, %884, %cst_262 {dimension_numbers = #tpu.dot_dimension_numbers<[1], [0], [0], [1], [0, 0, 1, 1], [], []>} : vector<8x64xbf16>, vector<64x64xbf16>, vector<8x64xf32> -> vector<8x64xf32>
    %994 = arith.addf %992, %993 : vector<8x64xf32>
    %995 = math.tanh %994 : vector<8x64xf32>
    %996 = arith.mulf %981, %960 : vector<8x64xf32>
    %997 = arith.mulf %972, %995 : vector<8x64xf32>
    %998 = arith.addf %996, %997 : vector<8x64xf32>
    %999 = math.tanh %998 : vector<8x64xf32>
    %1000 = arith.mulf %990, %999 : vector<8x64xf32>
    %1001 = arith.truncf %1000 : vector<8x64xf32> to vector<8x64xbf16>
    %1002 = vector.extract_strided_slice %852 {offsets = [3, 0, 0], sizes = [1, 8, 64], strides = [1, 1, 1]} : vector<8x8x64xf32> to vector<1x8x64xf32>
    %1003 = vector.shape_cast %1002 : vector<1x8x64xf32> to vector<8x64xf32>
    %cst_263 = arith.constant dense<0.000000e+00> : vector<8x64xf32>
    %1004 = tpu.matmul %1001, %878, %cst_263 {dimension_numbers = #tpu.dot_dimension_numbers<[1], [0], [0], [1], [0, 0, 1, 1], [], []>} : vector<8x64xbf16>, vector<64x64xbf16>, vector<8x64xf32> -> vector<8x64xf32>
    %1005 = arith.addf %1003, %1004 : vector<8x64xf32>
    %1006 = arith.negf %1005 : vector<8x64xf32>
    %1007 = math.exp %1006 : vector<8x64xf32>
    %cst_264 = arith.constant 1.000000e+00 : f32
    %1008 = vector.broadcast %cst_264 : f32 to vector<8x64xf32>
    %1009 = arith.addf %1008, %1007 : vector<8x64xf32>
    %1010 = arith.divf %1008, %1009 : vector<8x64xf32>
    %1011 = vector.extract_strided_slice %860 {offsets = [3, 0, 0], sizes = [1, 8, 64], strides = [1, 1, 1]} : vector<8x8x64xf32> to vector<1x8x64xf32>
    %1012 = vector.shape_cast %1011 : vector<1x8x64xf32> to vector<8x64xf32>
    %cst_265 = arith.constant dense<0.000000e+00> : vector<8x64xf32>
    %1013 = tpu.matmul %1001, %880, %cst_265 {dimension_numbers = #tpu.dot_dimension_numbers<[1], [0], [0], [1], [0, 0, 1, 1], [], []>} : vector<8x64xbf16>, vector<64x64xbf16>, vector<8x64xf32> -> vector<8x64xf32>
    %1014 = arith.addf %1012, %1013 : vector<8x64xf32>
    %1015 = arith.negf %1014 : vector<8x64xf32>
    %1016 = math.exp %1015 : vector<8x64xf32>
    %cst_266 = arith.constant 1.000000e+00 : f32
    %1017 = vector.broadcast %cst_266 : f32 to vector<8x64xf32>
    %1018 = arith.addf %1017, %1016 : vector<8x64xf32>
    %1019 = arith.divf %1017, %1018 : vector<8x64xf32>
    %1020 = vector.extract_strided_slice %868 {offsets = [3, 0, 0], sizes = [1, 8, 64], strides = [1, 1, 1]} : vector<8x8x64xf32> to vector<1x8x64xf32>
    %1021 = vector.shape_cast %1020 : vector<1x8x64xf32> to vector<8x64xf32>
    %cst_267 = arith.constant dense<0.000000e+00> : vector<8x64xf32>
    %1022 = tpu.matmul %1001, %882, %cst_267 {dimension_numbers = #tpu.dot_dimension_numbers<[1], [0], [0], [1], [0, 0, 1, 1], [], []>} : vector<8x64xbf16>, vector<64x64xbf16>, vector<8x64xf32> -> vector<8x64xf32>
    %1023 = arith.addf %1021, %1022 : vector<8x64xf32>
    %1024 = arith.negf %1023 : vector<8x64xf32>
    %1025 = math.exp %1024 : vector<8x64xf32>
    %cst_268 = arith.constant 1.000000e+00 : f32
    %1026 = vector.broadcast %cst_268 : f32 to vector<8x64xf32>
    %1027 = arith.addf %1026, %1025 : vector<8x64xf32>
    %1028 = arith.divf %1026, %1027 : vector<8x64xf32>
    %1029 = vector.extract_strided_slice %876 {offsets = [3, 0, 0], sizes = [1, 8, 64], strides = [1, 1, 1]} : vector<8x8x64xf32> to vector<1x8x64xf32>
    %1030 = vector.shape_cast %1029 : vector<1x8x64xf32> to vector<8x64xf32>
    %cst_269 = arith.constant dense<0.000000e+00> : vector<8x64xf32>
    %1031 = tpu.matmul %1001, %884, %cst_269 {dimension_numbers = #tpu.dot_dimension_numbers<[1], [0], [0], [1], [0, 0, 1, 1], [], []>} : vector<8x64xbf16>, vector<64x64xbf16>, vector<8x64xf32> -> vector<8x64xf32>
    %1032 = arith.addf %1030, %1031 : vector<8x64xf32>
    %1033 = math.tanh %1032 : vector<8x64xf32>
    %1034 = arith.mulf %1019, %998 : vector<8x64xf32>
    %1035 = arith.mulf %1010, %1033 : vector<8x64xf32>
    %1036 = arith.addf %1034, %1035 : vector<8x64xf32>
    %1037 = math.tanh %1036 : vector<8x64xf32>
    %1038 = arith.mulf %1028, %1037 : vector<8x64xf32>
    %1039 = arith.truncf %1038 : vector<8x64xf32> to vector<8x64xbf16>
    %1040 = vector.extract_strided_slice %852 {offsets = [4, 0, 0], sizes = [1, 8, 64], strides = [1, 1, 1]} : vector<8x8x64xf32> to vector<1x8x64xf32>
    %1041 = vector.shape_cast %1040 : vector<1x8x64xf32> to vector<8x64xf32>
    %cst_270 = arith.constant dense<0.000000e+00> : vector<8x64xf32>
    %1042 = tpu.matmul %1039, %878, %cst_270 {dimension_numbers = #tpu.dot_dimension_numbers<[1], [0], [0], [1], [0, 0, 1, 1], [], []>} : vector<8x64xbf16>, vector<64x64xbf16>, vector<8x64xf32> -> vector<8x64xf32>
    %1043 = arith.addf %1041, %1042 : vector<8x64xf32>
    %1044 = arith.negf %1043 : vector<8x64xf32>
    %1045 = math.exp %1044 : vector<8x64xf32>
    %cst_271 = arith.constant 1.000000e+00 : f32
    %1046 = vector.broadcast %cst_271 : f32 to vector<8x64xf32>
    %1047 = arith.addf %1046, %1045 : vector<8x64xf32>
    %1048 = arith.divf %1046, %1047 : vector<8x64xf32>
    %1049 = vector.extract_strided_slice %860 {offsets = [4, 0, 0], sizes = [1, 8, 64], strides = [1, 1, 1]} : vector<8x8x64xf32> to vector<1x8x64xf32>
    %1050 = vector.shape_cast %1049 : vector<1x8x64xf32> to vector<8x64xf32>
    %cst_272 = arith.constant dense<0.000000e+00> : vector<8x64xf32>
    %1051 = tpu.matmul %1039, %880, %cst_272 {dimension_numbers = #tpu.dot_dimension_numbers<[1], [0], [0], [1], [0, 0, 1, 1], [], []>} : vector<8x64xbf16>, vector<64x64xbf16>, vector<8x64xf32> -> vector<8x64xf32>
    %1052 = arith.addf %1050, %1051 : vector<8x64xf32>
    %1053 = arith.negf %1052 : vector<8x64xf32>
    %1054 = math.exp %1053 : vector<8x64xf32>
    %cst_273 = arith.constant 1.000000e+00 : f32
    %1055 = vector.broadcast %cst_273 : f32 to vector<8x64xf32>
    %1056 = arith.addf %1055, %1054 : vector<8x64xf32>
    %1057 = arith.divf %1055, %1056 : vector<8x64xf32>
    %1058 = vector.extract_strided_slice %868 {offsets = [4, 0, 0], sizes = [1, 8, 64], strides = [1, 1, 1]} : vector<8x8x64xf32> to vector<1x8x64xf32>
    %1059 = vector.shape_cast %1058 : vector<1x8x64xf32> to vector<8x64xf32>
    %cst_274 = arith.constant dense<0.000000e+00> : vector<8x64xf32>
    %1060 = tpu.matmul %1039, %882, %cst_274 {dimension_numbers = #tpu.dot_dimension_numbers<[1], [0], [0], [1], [0, 0, 1, 1], [], []>} : vector<8x64xbf16>, vector<64x64xbf16>, vector<8x64xf32> -> vector<8x64xf32>
    %1061 = arith.addf %1059, %1060 : vector<8x64xf32>
    %1062 = arith.negf %1061 : vector<8x64xf32>
    %1063 = math.exp %1062 : vector<8x64xf32>
    %cst_275 = arith.constant 1.000000e+00 : f32
    %1064 = vector.broadcast %cst_275 : f32 to vector<8x64xf32>
    %1065 = arith.addf %1064, %1063 : vector<8x64xf32>
    %1066 = arith.divf %1064, %1065 : vector<8x64xf32>
    %1067 = vector.extract_strided_slice %876 {offsets = [4, 0, 0], sizes = [1, 8, 64], strides = [1, 1, 1]} : vector<8x8x64xf32> to vector<1x8x64xf32>
    %1068 = vector.shape_cast %1067 : vector<1x8x64xf32> to vector<8x64xf32>
    %cst_276 = arith.constant dense<0.000000e+00> : vector<8x64xf32>
    %1069 = tpu.matmul %1039, %884, %cst_276 {dimension_numbers = #tpu.dot_dimension_numbers<[1], [0], [0], [1], [0, 0, 1, 1], [], []>} : vector<8x64xbf16>, vector<64x64xbf16>, vector<8x64xf32> -> vector<8x64xf32>
    %1070 = arith.addf %1068, %1069 : vector<8x64xf32>
    %1071 = math.tanh %1070 : vector<8x64xf32>
    %1072 = arith.mulf %1057, %1036 : vector<8x64xf32>
    %1073 = arith.mulf %1048, %1071 : vector<8x64xf32>
    %1074 = arith.addf %1072, %1073 : vector<8x64xf32>
    %1075 = math.tanh %1074 : vector<8x64xf32>
    %1076 = arith.mulf %1066, %1075 : vector<8x64xf32>
    %1077 = arith.truncf %1076 : vector<8x64xf32> to vector<8x64xbf16>
    %1078 = vector.extract_strided_slice %852 {offsets = [5, 0, 0], sizes = [1, 8, 64], strides = [1, 1, 1]} : vector<8x8x64xf32> to vector<1x8x64xf32>
    %1079 = vector.shape_cast %1078 : vector<1x8x64xf32> to vector<8x64xf32>
    %cst_277 = arith.constant dense<0.000000e+00> : vector<8x64xf32>
    %1080 = tpu.matmul %1077, %878, %cst_277 {dimension_numbers = #tpu.dot_dimension_numbers<[1], [0], [0], [1], [0, 0, 1, 1], [], []>} : vector<8x64xbf16>, vector<64x64xbf16>, vector<8x64xf32> -> vector<8x64xf32>
    %1081 = arith.addf %1079, %1080 : vector<8x64xf32>
    %1082 = arith.negf %1081 : vector<8x64xf32>
    %1083 = math.exp %1082 : vector<8x64xf32>
    %cst_278 = arith.constant 1.000000e+00 : f32
    %1084 = vector.broadcast %cst_278 : f32 to vector<8x64xf32>
    %1085 = arith.addf %1084, %1083 : vector<8x64xf32>
    %1086 = arith.divf %1084, %1085 : vector<8x64xf32>
    %1087 = vector.extract_strided_slice %860 {offsets = [5, 0, 0], sizes = [1, 8, 64], strides = [1, 1, 1]} : vector<8x8x64xf32> to vector<1x8x64xf32>
    %1088 = vector.shape_cast %1087 : vector<1x8x64xf32> to vector<8x64xf32>
    %cst_279 = arith.constant dense<0.000000e+00> : vector<8x64xf32>
    %1089 = tpu.matmul %1077, %880, %cst_279 {dimension_numbers = #tpu.dot_dimension_numbers<[1], [0], [0], [1], [0, 0, 1, 1], [], []>} : vector<8x64xbf16>, vector<64x64xbf16>, vector<8x64xf32> -> vector<8x64xf32>
    %1090 = arith.addf %1088, %1089 : vector<8x64xf32>
    %1091 = arith.negf %1090 : vector<8x64xf32>
    %1092 = math.exp %1091 : vector<8x64xf32>
    %cst_280 = arith.constant 1.000000e+00 : f32
    %1093 = vector.broadcast %cst_280 : f32 to vector<8x64xf32>
    %1094 = arith.addf %1093, %1092 : vector<8x64xf32>
    %1095 = arith.divf %1093, %1094 : vector<8x64xf32>
    %1096 = vector.extract_strided_slice %868 {offsets = [5, 0, 0], sizes = [1, 8, 64], strides = [1, 1, 1]} : vector<8x8x64xf32> to vector<1x8x64xf32>
    %1097 = vector.shape_cast %1096 : vector<1x8x64xf32> to vector<8x64xf32>
    %cst_281 = arith.constant dense<0.000000e+00> : vector<8x64xf32>
    %1098 = tpu.matmul %1077, %882, %cst_281 {dimension_numbers = #tpu.dot_dimension_numbers<[1], [0], [0], [1], [0, 0, 1, 1], [], []>} : vector<8x64xbf16>, vector<64x64xbf16>, vector<8x64xf32> -> vector<8x64xf32>
    %1099 = arith.addf %1097, %1098 : vector<8x64xf32>
    %1100 = arith.negf %1099 : vector<8x64xf32>
    %1101 = math.exp %1100 : vector<8x64xf32>
    %cst_282 = arith.constant 1.000000e+00 : f32
    %1102 = vector.broadcast %cst_282 : f32 to vector<8x64xf32>
    %1103 = arith.addf %1102, %1101 : vector<8x64xf32>
    %1104 = arith.divf %1102, %1103 : vector<8x64xf32>
    %1105 = vector.extract_strided_slice %876 {offsets = [5, 0, 0], sizes = [1, 8, 64], strides = [1, 1, 1]} : vector<8x8x64xf32> to vector<1x8x64xf32>
    %1106 = vector.shape_cast %1105 : vector<1x8x64xf32> to vector<8x64xf32>
    %cst_283 = arith.constant dense<0.000000e+00> : vector<8x64xf32>
    %1107 = tpu.matmul %1077, %884, %cst_283 {dimension_numbers = #tpu.dot_dimension_numbers<[1], [0], [0], [1], [0, 0, 1, 1], [], []>} : vector<8x64xbf16>, vector<64x64xbf16>, vector<8x64xf32> -> vector<8x64xf32>
    %1108 = arith.addf %1106, %1107 : vector<8x64xf32>
    %1109 = math.tanh %1108 : vector<8x64xf32>
    %1110 = arith.mulf %1095, %1074 : vector<8x64xf32>
    %1111 = arith.mulf %1086, %1109 : vector<8x64xf32>
    %1112 = arith.addf %1110, %1111 : vector<8x64xf32>
    %1113 = math.tanh %1112 : vector<8x64xf32>
    %1114 = arith.mulf %1104, %1113 : vector<8x64xf32>
    %1115 = arith.truncf %1114 : vector<8x64xf32> to vector<8x64xbf16>
    %1116 = vector.extract_strided_slice %852 {offsets = [6, 0, 0], sizes = [1, 8, 64], strides = [1, 1, 1]} : vector<8x8x64xf32> to vector<1x8x64xf32>
    %1117 = vector.shape_cast %1116 : vector<1x8x64xf32> to vector<8x64xf32>
    %cst_284 = arith.constant dense<0.000000e+00> : vector<8x64xf32>
    %1118 = tpu.matmul %1115, %878, %cst_284 {dimension_numbers = #tpu.dot_dimension_numbers<[1], [0], [0], [1], [0, 0, 1, 1], [], []>} : vector<8x64xbf16>, vector<64x64xbf16>, vector<8x64xf32> -> vector<8x64xf32>
    %1119 = arith.addf %1117, %1118 : vector<8x64xf32>
    %1120 = arith.negf %1119 : vector<8x64xf32>
    %1121 = math.exp %1120 : vector<8x64xf32>
    %cst_285 = arith.constant 1.000000e+00 : f32
    %1122 = vector.broadcast %cst_285 : f32 to vector<8x64xf32>
    %1123 = arith.addf %1122, %1121 : vector<8x64xf32>
    %1124 = arith.divf %1122, %1123 : vector<8x64xf32>
    %1125 = vector.extract_strided_slice %860 {offsets = [6, 0, 0], sizes = [1, 8, 64], strides = [1, 1, 1]} : vector<8x8x64xf32> to vector<1x8x64xf32>
    %1126 = vector.shape_cast %1125 : vector<1x8x64xf32> to vector<8x64xf32>
    %cst_286 = arith.constant dense<0.000000e+00> : vector<8x64xf32>
    %1127 = tpu.matmul %1115, %880, %cst_286 {dimension_numbers = #tpu.dot_dimension_numbers<[1], [0], [0], [1], [0, 0, 1, 1], [], []>} : vector<8x64xbf16>, vector<64x64xbf16>, vector<8x64xf32> -> vector<8x64xf32>
    %1128 = arith.addf %1126, %1127 : vector<8x64xf32>
    %1129 = arith.negf %1128 : vector<8x64xf32>
    %1130 = math.exp %1129 : vector<8x64xf32>
    %cst_287 = arith.constant 1.000000e+00 : f32
    %1131 = vector.broadcast %cst_287 : f32 to vector<8x64xf32>
    %1132 = arith.addf %1131, %1130 : vector<8x64xf32>
    %1133 = arith.divf %1131, %1132 : vector<8x64xf32>
    %1134 = vector.extract_strided_slice %868 {offsets = [6, 0, 0], sizes = [1, 8, 64], strides = [1, 1, 1]} : vector<8x8x64xf32> to vector<1x8x64xf32>
    %1135 = vector.shape_cast %1134 : vector<1x8x64xf32> to vector<8x64xf32>
    %cst_288 = arith.constant dense<0.000000e+00> : vector<8x64xf32>
    %1136 = tpu.matmul %1115, %882, %cst_288 {dimension_numbers = #tpu.dot_dimension_numbers<[1], [0], [0], [1], [0, 0, 1, 1], [], []>} : vector<8x64xbf16>, vector<64x64xbf16>, vector<8x64xf32> -> vector<8x64xf32>
    %1137 = arith.addf %1135, %1136 : vector<8x64xf32>
    %1138 = arith.negf %1137 : vector<8x64xf32>
    %1139 = math.exp %1138 : vector<8x64xf32>
    %cst_289 = arith.constant 1.000000e+00 : f32
    %1140 = vector.broadcast %cst_289 : f32 to vector<8x64xf32>
    %1141 = arith.addf %1140, %1139 : vector<8x64xf32>
    %1142 = arith.divf %1140, %1141 : vector<8x64xf32>
    %1143 = vector.extract_strided_slice %876 {offsets = [6, 0, 0], sizes = [1, 8, 64], strides = [1, 1, 1]} : vector<8x8x64xf32> to vector<1x8x64xf32>
    %1144 = vector.shape_cast %1143 : vector<1x8x64xf32> to vector<8x64xf32>
    %cst_290 = arith.constant dense<0.000000e+00> : vector<8x64xf32>
    %1145 = tpu.matmul %1115, %884, %cst_290 {dimension_numbers = #tpu.dot_dimension_numbers<[1], [0], [0], [1], [0, 0, 1, 1], [], []>} : vector<8x64xbf16>, vector<64x64xbf16>, vector<8x64xf32> -> vector<8x64xf32>
    %1146 = arith.addf %1144, %1145 : vector<8x64xf32>
    %1147 = math.tanh %1146 : vector<8x64xf32>
    %1148 = arith.mulf %1133, %1112 : vector<8x64xf32>
    %1149 = arith.mulf %1124, %1147 : vector<8x64xf32>
    %1150 = arith.addf %1148, %1149 : vector<8x64xf32>
    %1151 = math.tanh %1150 : vector<8x64xf32>
    %1152 = arith.mulf %1142, %1151 : vector<8x64xf32>
    %1153 = arith.truncf %1152 : vector<8x64xf32> to vector<8x64xbf16>
    %1154 = vector.extract_strided_slice %852 {offsets = [7, 0, 0], sizes = [1, 8, 64], strides = [1, 1, 1]} : vector<8x8x64xf32> to vector<1x8x64xf32>
    %1155 = vector.shape_cast %1154 : vector<1x8x64xf32> to vector<8x64xf32>
    %cst_291 = arith.constant dense<0.000000e+00> : vector<8x64xf32>
    %1156 = tpu.matmul %1153, %878, %cst_291 {dimension_numbers = #tpu.dot_dimension_numbers<[1], [0], [0], [1], [0, 0, 1, 1], [], []>} : vector<8x64xbf16>, vector<64x64xbf16>, vector<8x64xf32> -> vector<8x64xf32>
    %1157 = arith.addf %1155, %1156 : vector<8x64xf32>
    %1158 = arith.negf %1157 : vector<8x64xf32>
    %1159 = math.exp %1158 : vector<8x64xf32>
    %cst_292 = arith.constant 1.000000e+00 : f32
    %1160 = vector.broadcast %cst_292 : f32 to vector<8x64xf32>
    %1161 = arith.addf %1160, %1159 : vector<8x64xf32>
    %1162 = arith.divf %1160, %1161 : vector<8x64xf32>
    %1163 = vector.extract_strided_slice %860 {offsets = [7, 0, 0], sizes = [1, 8, 64], strides = [1, 1, 1]} : vector<8x8x64xf32> to vector<1x8x64xf32>
    %1164 = vector.shape_cast %1163 : vector<1x8x64xf32> to vector<8x64xf32>
    %cst_293 = arith.constant dense<0.000000e+00> : vector<8x64xf32>
    %1165 = tpu.matmul %1153, %880, %cst_293 {dimension_numbers = #tpu.dot_dimension_numbers<[1], [0], [0], [1], [0, 0, 1, 1], [], []>} : vector<8x64xbf16>, vector<64x64xbf16>, vector<8x64xf32> -> vector<8x64xf32>
    %1166 = arith.addf %1164, %1165 : vector<8x64xf32>
    %1167 = arith.negf %1166 : vector<8x64xf32>
    %1168 = math.exp %1167 : vector<8x64xf32>
    %cst_294 = arith.constant 1.000000e+00 : f32
    %1169 = vector.broadcast %cst_294 : f32 to vector<8x64xf32>
    %1170 = arith.addf %1169, %1168 : vector<8x64xf32>
    %1171 = arith.divf %1169, %1170 : vector<8x64xf32>
    %1172 = vector.extract_strided_slice %868 {offsets = [7, 0, 0], sizes = [1, 8, 64], strides = [1, 1, 1]} : vector<8x8x64xf32> to vector<1x8x64xf32>
    %1173 = vector.shape_cast %1172 : vector<1x8x64xf32> to vector<8x64xf32>
    %cst_295 = arith.constant dense<0.000000e+00> : vector<8x64xf32>
    %1174 = tpu.matmul %1153, %882, %cst_295 {dimension_numbers = #tpu.dot_dimension_numbers<[1], [0], [0], [1], [0, 0, 1, 1], [], []>} : vector<8x64xbf16>, vector<64x64xbf16>, vector<8x64xf32> -> vector<8x64xf32>
    %1175 = arith.addf %1173, %1174 : vector<8x64xf32>
    %1176 = arith.negf %1175 : vector<8x64xf32>
    %1177 = math.exp %1176 : vector<8x64xf32>
    %cst_296 = arith.constant 1.000000e+00 : f32
    %1178 = vector.broadcast %cst_296 : f32 to vector<8x64xf32>
    %1179 = arith.addf %1178, %1177 : vector<8x64xf32>
    %1180 = arith.divf %1178, %1179 : vector<8x64xf32>
    %1181 = vector.extract_strided_slice %876 {offsets = [7, 0, 0], sizes = [1, 8, 64], strides = [1, 1, 1]} : vector<8x8x64xf32> to vector<1x8x64xf32>
    %1182 = vector.shape_cast %1181 : vector<1x8x64xf32> to vector<8x64xf32>
    %cst_297 = arith.constant dense<0.000000e+00> : vector<8x64xf32>
    %1183 = tpu.matmul %1153, %884, %cst_297 {dimension_numbers = #tpu.dot_dimension_numbers<[1], [0], [0], [1], [0, 0, 1, 1], [], []>} : vector<8x64xbf16>, vector<64x64xbf16>, vector<8x64xf32> -> vector<8x64xf32>
    %1184 = arith.addf %1182, %1183 : vector<8x64xf32>
    %1185 = math.tanh %1184 : vector<8x64xf32>
    %1186 = arith.mulf %1171, %1150 : vector<8x64xf32>
    %1187 = arith.mulf %1162, %1185 : vector<8x64xf32>
    %1188 = arith.addf %1186, %1187 : vector<8x64xf32>
    %1189 = math.tanh %1188 : vector<8x64xf32>
    %1190 = arith.mulf %1180, %1189 : vector<8x64xf32>
    %1191 = vector.extract_strided_slice %924 {offsets = [0, 0], sizes = [8, 32], strides = [1, 1]} : vector<8x64xf32> to vector<8x32xf32>
    %1192 = vector.extract_strided_slice %1190 {offsets = [0, 32], sizes = [8, 32], strides = [1, 1]} : vector<8x64xf32> to vector<8x32xf32>
    %1193 = tpu.concatenate %1191, %1192 in 1 : vector<8x32xf32>, vector<8x32xf32> -> vector<8x64xf32>
    %1194 = vector.extract_strided_slice %962 {offsets = [0, 0], sizes = [8, 32], strides = [1, 1]} : vector<8x64xf32> to vector<8x32xf32>
    %1195 = vector.extract_strided_slice %1152 {offsets = [0, 32], sizes = [8, 32], strides = [1, 1]} : vector<8x64xf32> to vector<8x32xf32>
    %1196 = tpu.concatenate %1194, %1195 in 1 : vector<8x32xf32>, vector<8x32xf32> -> vector<8x64xf32>
    %1197 = vector.extract_strided_slice %1000 {offsets = [0, 0], sizes = [8, 32], strides = [1, 1]} : vector<8x64xf32> to vector<8x32xf32>
    %1198 = vector.extract_strided_slice %1114 {offsets = [0, 32], sizes = [8, 32], strides = [1, 1]} : vector<8x64xf32> to vector<8x32xf32>
    %1199 = tpu.concatenate %1197, %1198 in 1 : vector<8x32xf32>, vector<8x32xf32> -> vector<8x64xf32>
    %1200 = vector.extract_strided_slice %1038 {offsets = [0, 0], sizes = [8, 32], strides = [1, 1]} : vector<8x64xf32> to vector<8x32xf32>
    %1201 = vector.extract_strided_slice %1076 {offsets = [0, 32], sizes = [8, 32], strides = [1, 1]} : vector<8x64xf32> to vector<8x32xf32>
    %1202 = tpu.concatenate %1200, %1201 in 1 : vector<8x32xf32>, vector<8x32xf32> -> vector<8x64xf32>
    %1203 = vector.extract_strided_slice %1076 {offsets = [0, 0], sizes = [8, 32], strides = [1, 1]} : vector<8x64xf32> to vector<8x32xf32>
    %1204 = vector.extract_strided_slice %1038 {offsets = [0, 32], sizes = [8, 32], strides = [1, 1]} : vector<8x64xf32> to vector<8x32xf32>
    %1205 = tpu.concatenate %1203, %1204 in 1 : vector<8x32xf32>, vector<8x32xf32> -> vector<8x64xf32>
    %1206 = vector.extract_strided_slice %1114 {offsets = [0, 0], sizes = [8, 32], strides = [1, 1]} : vector<8x64xf32> to vector<8x32xf32>
    %1207 = vector.extract_strided_slice %1000 {offsets = [0, 32], sizes = [8, 32], strides = [1, 1]} : vector<8x64xf32> to vector<8x32xf32>
    %1208 = tpu.concatenate %1206, %1207 in 1 : vector<8x32xf32>, vector<8x32xf32> -> vector<8x64xf32>
    %1209 = vector.extract_strided_slice %1152 {offsets = [0, 0], sizes = [8, 32], strides = [1, 1]} : vector<8x64xf32> to vector<8x32xf32>
    %1210 = vector.extract_strided_slice %962 {offsets = [0, 32], sizes = [8, 32], strides = [1, 1]} : vector<8x64xf32> to vector<8x32xf32>
    %1211 = tpu.concatenate %1209, %1210 in 1 : vector<8x32xf32>, vector<8x32xf32> -> vector<8x64xf32>
    %1212 = vector.extract_strided_slice %1190 {offsets = [0, 0], sizes = [8, 32], strides = [1, 1]} : vector<8x64xf32> to vector<8x32xf32>
    %1213 = vector.extract_strided_slice %924 {offsets = [0, 32], sizes = [8, 32], strides = [1, 1]} : vector<8x64xf32> to vector<8x32xf32>
    %1214 = tpu.concatenate %1212, %1213 in 1 : vector<8x32xf32>, vector<8x32xf32> -> vector<8x64xf32>
    %1215 = vector.shape_cast %1193 : vector<8x64xf32> to vector<1x8x64xf32>
    %1216 = vector.shape_cast %1196 : vector<8x64xf32> to vector<1x8x64xf32>
    %1217 = vector.shape_cast %1199 : vector<8x64xf32> to vector<1x8x64xf32>
    %1218 = vector.shape_cast %1202 : vector<8x64xf32> to vector<1x8x64xf32>
    %1219 = vector.shape_cast %1205 : vector<8x64xf32> to vector<1x8x64xf32>
    %1220 = vector.shape_cast %1208 : vector<8x64xf32> to vector<1x8x64xf32>
    %1221 = vector.shape_cast %1211 : vector<8x64xf32> to vector<1x8x64xf32>
    %1222 = vector.shape_cast %1214 : vector<8x64xf32> to vector<1x8x64xf32>
    %1223 = tpu.concatenate %1215, %1216, %1217, %1218, %1219, %1220, %1221, %1222 in 0 : vector<1x8x64xf32>, vector<1x8x64xf32>, vector<1x8x64xf32>, vector<1x8x64xf32>, vector<1x8x64xf32>, vector<1x8x64xf32>, vector<1x8x64xf32>, vector<1x8x64xf32> -> vector<8x8x64xf32>
    %c0_298 = arith.constant 0 : index
    %c0_299 = arith.constant 0 : index
    %c0_300 = arith.constant 0 : index
    %1224 = vector.load %arg15[%c0_298, %c0_299, %c0_300] : memref<8x8x64xf32, #tpu.memory_space<vmem>>, vector<8x8x64xf32>
    tpu.vector_store %arg15[%c0_298, %c0_299, %c0_300], %1223 {strides = array<i32>} : memref<8x8x64xf32, #tpu.memory_space<vmem>>, vector<8x8x64xf32>,
    %1225 = vector.shape_cast %1223 : vector<8x8x64xf32> to vector<64x64xf32>
    %1226 = arith.truncf %1225 : vector<64x64xf32> to vector<64x64xbf16>
    %c0_301 = arith.constant 0 : index
    %c0_302 = arith.constant 0 : index
    %1227 = vector.load %arg11[%c0_301, %c0_302] : memref<64x128xbf16, #tpu.memory_space<vmem>>, vector<64x128xbf16>
    %cst_303 = arith.constant dense<0.000000e+00> : vector<64x128xf32>
    %1228 = tpu.matmul %1226, %1227, %cst_303 {dimension_numbers = #tpu.dot_dimension_numbers<[1], [0], [0], [1], [0, 0, 1, 1], [], []>} : vector<64x64xbf16>, vector<64x128xbf16>, vector<64x128xf32> -> vector<64x128xf32>
    %c0_304 = arith.constant 0 : index
    %c0_305 = arith.constant 0 : index
    %1229 = vector.load %arg12[%c0_304, %c0_305] : memref<1x128xf32, #tpu.memory_space<vmem>>, vector<1x128xf32>
    %1230 = vector.broadcast %1229 : vector<1x128xf32> to vector<64x128xf32>
    %1231 = arith.addf %1228, %1230 : vector<64x128xf32>
    %1232 = vector.shape_cast %1231 : vector<64x128xf32> to vector<8x8x128xf32>
    %c0_306 = arith.constant 0 : index
    %c0_307 = arith.constant 0 : index
    %c0_308 = arith.constant 0 : index
    %1233 = vector.load %arg16[%c0_306, %c0_307, %c0_308] : memref<8x8x128xf32, #tpu.memory_space<vmem>>, vector<8x8x128xf32>
    tpu.vector_store %arg16[%c0_306, %c0_307, %c0_308], %1232 {strides = array<i32>} : memref<8x8x128xf32, #tpu.memory_space<vmem>>, vector<8x8x128xf32>,
    return
  }
  func.func @transform_0(%arg0: i32) -> (i32, i32, i32) {
    %c0_i32 = arith.constant 0 : i32
    %c0_i32_0 = arith.constant 0 : i32
    %c0_i32_1 = arith.constant 0 : i32
    return %c0_i32, %arg0, %c0_i32_0 : i32, i32, i32
  }
  func.func @transform_1(%arg0: i32) -> (i32, i32, i32) {
    %c0_i32 = arith.constant 0 : i32
    %c0_i32_0 = arith.constant 0 : i32
    %c0_i32_1 = arith.constant 0 : i32
    %c0_i32_2 = arith.constant 0 : i32
    return %c0_i32, %c0_i32_0, %c0_i32_1 : i32, i32, i32
  }
  func.func @transform_2(%arg0: i32) -> (i32, i32, i32) {
    %c0_i32 = arith.constant 0 : i32
    %c0_i32_0 = arith.constant 0 : i32
    %c0_i32_1 = arith.constant 0 : i32
    %c0_i32_2 = arith.constant 0 : i32
    return %c0_i32, %c0_i32_0, %c0_i32_1 : i32, i32, i32
  }
  func.func @transform_3(%arg0: i32) -> (i32, i32, i32) {
    %c0_i32 = arith.constant 0 : i32
    %c0_i32_0 = arith.constant 0 : i32
    %c0_i32_1 = arith.constant 0 : i32
    %c0_i32_2 = arith.constant 0 : i32
    return %c0_i32, %c0_i32_0, %c0_i32_1 : i32, i32, i32
  }
  func.func @transform_4(%arg0: i32) -> (i32, i32, i32) {
    %c0_i32 = arith.constant 0 : i32
    %c0_i32_0 = arith.constant 0 : i32
    %c0_i32_1 = arith.constant 0 : i32
    %c0_i32_2 = arith.constant 0 : i32
    return %c0_i32, %c0_i32_0, %c0_i32_1 : i32, i32, i32
  }
  func.func @transform_5(%arg0: i32) -> (i32, i32, i32) {
    %c0_i32 = arith.constant 0 : i32
    %c0_i32_0 = arith.constant 0 : i32
    %c0_i32_1 = arith.constant 0 : i32
    %c0_i32_2 = arith.constant 0 : i32
    return %c0_i32, %c0_i32_0, %c0_i32_1 : i32, i32, i32
  }
  func.func @transform_6(%arg0: i32) -> (i32, i32, i32) {
    %c0_i32 = arith.constant 0 : i32
    %c0_i32_0 = arith.constant 0 : i32
    %c0_i32_1 = arith.constant 0 : i32
    %c0_i32_2 = arith.constant 0 : i32
    return %c0_i32, %c0_i32_0, %c0_i32_1 : i32, i32, i32
  }
  func.func @transform_7(%arg0: i32) -> (i32, i32, i32) {
    %c0_i32 = arith.constant 0 : i32
    %c0_i32_0 = arith.constant 0 : i32
    %c0_i32_1 = arith.constant 0 : i32
    %c0_i32_2 = arith.constant 0 : i32
    return %c0_i32, %c0_i32_0, %c0_i32_1 : i32, i32, i32
  }
  func.func @transform_8(%arg0: i32) -> (i32, i32, i32) {
    %c0_i32 = arith.constant 0 : i32
    %c0_i32_0 = arith.constant 0 : i32
    %c0_i32_1 = arith.constant 0 : i32
    %c0_i32_2 = arith.constant 0 : i32
    return %c0_i32, %c0_i32_0, %c0_i32_1 : i32, i32, i32
  }
  func.func @transform_9(%arg0: i32) -> (i32, i32, i32) {
    %c0_i32 = arith.constant 0 : i32
    %c0_i32_0 = arith.constant 0 : i32
    %c0_i32_1 = arith.constant 0 : i32
    %c0_i32_2 = arith.constant 0 : i32
    return %c0_i32, %c0_i32_0, %c0_i32_1 : i32, i32, i32
  }
  func.func @transform_10(%arg0: i32) -> (i32, i32) {
    %c0_i32 = arith.constant 0 : i32
    %c0_i32_0 = arith.constant 0 : i32
    %c0_i32_1 = arith.constant 0 : i32
    return %c0_i32, %c0_i32_0 : i32, i32
  }
  func.func @transform_11(%arg0: i32) -> (i32, i32) {
    %c0_i32 = arith.constant 0 : i32
    %c0_i32_0 = arith.constant 0 : i32
    %c0_i32_1 = arith.constant 0 : i32
    return %c0_i32, %c0_i32_0 : i32, i32
  }
  func.func @transform_12(%arg0: i32) -> (i32, i32, i32) {
    %c0_i32 = arith.constant 0 : i32
    %c0_i32_0 = arith.constant 0 : i32
    %c0_i32_1 = arith.constant 0 : i32
    return %c0_i32, %arg0, %c0_i32_0 : i32, i32, i32
  }
  func.func @transform_13(%arg0: i32) -> (i32, i32, i32) {
    %c0_i32 = arith.constant 0 : i32
    %c0_i32_0 = arith.constant 0 : i32
    %c0_i32_1 = arith.constant 0 : i32
    return %c0_i32, %arg0, %c0_i32_0 : i32, i32, i32
  }
  func.func @transform_14(%arg0: i32) -> (i32, i32, i32) {
    %c0_i32 = arith.constant 0 : i32
    %c0_i32_0 = arith.constant 0 : i32
    %c0_i32_1 = arith.constant 0 : i32
    return %c0_i32, %arg0, %c0_i32_0 : i32, i32, i32
  }
  func.func @transform_15(%arg0: i32) -> (i32, i32, i32) {
    %c0_i32 = arith.constant 0 : i32
    %c0_i32_0 = arith.constant 0 : i32
    %c0_i32_1 = arith.constant 0 : i32
    return %c0_i32, %arg0, %c0_i32_0 : i32, i32, i32
  }
}

</mosaic_0001>

<llo_original>
// kernel: tpu_custom_call.1
$region0: #{tpu_custom_call.1}
  #allocation0 [shape = 'u32[]', space=smem, size = 0x4, offset = 0x4, fixed_abs, tag = 'smem constant byte address 0x4 - core index']
  #allocation1 [shape = 'u32[144,128]{1,0:T(1,128)}', space=vmem, size = 0x12000, scoped, tag = 'internal scratch']
  %s0 = inlined_call_operand.vmem [shape: f32[8,8,32], index: 0, kind: input, shape index: {}]
  %s1 = inlined_call_operand.vmem [shape: bf16[4,64,32], index: 1, kind: input, shape index: {}]
  %s2 = inlined_call_operand.hbm [shape: bf16[4,32,32], index: 2, kind: input, shape index: {}]
  %s3 = inlined_call_operand.vmem [shape: f32[4,1,32], index: 3, kind: input, shape index: {}]
  %s4 = inlined_call_operand.vmem [shape: bf16[4,64,32], index: 4, kind: input, shape index: {}]
  %s5 = inlined_call_operand.hbm [shape: bf16[4,32,32], index: 5, kind: input, shape index: {}]
  %s6 = inlined_call_operand.vmem [shape: f32[4,1,32], index: 6, kind: input, shape index: {}]
  %s7 = inlined_call_operand.vmem [shape: bf16[4,64,64], index: 7, kind: input, shape index: {}]
  %s8 = inlined_call_operand.vmem [shape: bf16[4,64,64], index: 8, kind: input, shape index: {}]
  %s9 = inlined_call_operand.vmem [shape: f32[4,1,64], index: 9, kind: input, shape index: {}]
  %s10 = inlined_call_operand.hbm [shape: bf16[64,128], index: 10, kind: input, shape index: {}]
  %s11 = inlined_call_operand.vmem [shape: f32[1,128], index: 11, kind: input, shape index: {}]
  %s12 = inlined_call_operand.hbm [shape: f32[8,8,32], index: 12, kind: output, shape index: {0}]
  %s13 = inlined_call_operand.hbm [shape: f32[8,8,32], index: 13, kind: output, shape index: {1}]
  %s14 = inlined_call_operand.hbm [shape: f32[8,8,64], index: 14, kind: output, shape index: {2}]
  %s15 = inlined_call_operand.hbm [shape: f32[8,8,128], index: 15, kind: output, shape index: {3}]
  %16 = xla_tuple %s12, %s13, %s14, %s15
  %s17 = sld [smem:[#allocation0]]
  $region94: #{tpu_custom_call.1} parent=0
    _
  %s19 = ssub.s32 1, %s17
  %s20 = scalar_select 0, %s19, %s17
  $region1: #{tpu_custom_call.1} parent=0
    #allocation2 [shape = 'u8[32768]{0}', space=vmem, size = 0x8000, scoped, tag = 'input window, operand 2, single buffered']
    #allocation3 [shape = 's32[1]{0}', space=sflag, size = 0x4, scoped, tag = 'scoped memory for tpu_custom_call.1']
    #allocation4 [shape = 's32[1]{0}', space=sflag, size = 0x4, scoped, tag = 'scoped memory for tpu_custom_call.1']
    #allocation5 [shape = 'u8[32768]{0}', space=vmem, size = 0x8000, scoped, tag = 'input window, operand 5, single buffered']
    #allocation6 [shape = 's32[1]{0}', space=sflag, size = 0x4, scoped, tag = 'scoped memory for tpu_custom_call.1']
    #allocation7 [shape = 'u8[16384]{0}', space=vmem, size = 0x4000, scoped, tag = 'input window, operand 10, single buffered']
    #allocation8 [shape = 'u8[32768]{0}', space=vmem, size = 0x8000, scoped, tag = 'output window, operand 0, single buffered']
    #allocation9 [shape = 'u8[32768]{0}', space=vmem, size = 0x8000, scoped, tag = 'output window, operand 1, single buffered']
    #allocation10 [shape = 's32[1]{0}', space=sflag, size = 0x4, scoped, tag = 'scoped memory for tpu_custom_call.1']
    #allocation11 [shape = 'u8[32768]{0}', space=vmem, size = 0x8000, scoped, tag = 'output window, operand 2, single buffered']
    #allocation12 [shape = 'u8[32768]{0}', space=vmem, size = 0x8000, scoped, tag = 'output window, operand 3, single buffered']
    #allocation13 [shape = 's32[1]{0}', space=sflag, size = 0x4, scoped, tag = 'scoped memory for tpu_custom_call.1']
    %21 = vsyncpa [#allocation3], 0
    %22 = vsyncpa [#allocation6], 0
    %23 = vsyncpa [#allocation4], 0
    %24 = vsyncpa [#allocation10], 0
    %25 = vsyncpa [#allocation13], 0
    // Predicated region
    $region2: #{tpu_custom_call.1} parent=1 // pred_check
      _
    $region3: #{tpu_custom_call.1} parent=1 // pred_check_branch
      %27 = sbr.rel (0) target = $region5
    $region4: #{tpu_custom_call.1} parent=1 // pred_region
      _
    $region5: #{tpu_custom_call.1} parent=1 // pred_fallthru
      _
    // Predicated region
    $region6: #{tpu_custom_call.1} parent=1 // pred_check
      _
    $region7: #{tpu_custom_call.1} parent=1 // pred_check_branch
      %29 = sbr.rel (0) target = $region9
    $region8: #{tpu_custom_call.1} parent=1 // pred_region
      _
    $region9: #{tpu_custom_call.1} parent=1 // pred_fallthru
      _
    // Predicated region
    $region10: #{tpu_custom_call.1} parent=1 // pred_check
      _
    $region11: #{tpu_custom_call.1} parent=1 // pred_check_branch
      %31 = sbr.rel (0) target = $region13
    $region12: #{tpu_custom_call.1} parent=1 // pred_region
      %s33 = ssub.s32 1024, 1024
      %34 = vsyncadd [#allocation3], %s33
      %s35 = sshll.u32 [#allocation2], 4
      %s36 = int_to_ptr.vmem [resolvable:$true] %s35
      %41 = dma.hbm_to_vmem [thread:$0]  %s2, 1024, %s36, [#allocation3], 64, 64, 4
    $region13: #{tpu_custom_call.1} parent=1 // pred_fallthru
      _
    // Predicated region
    $region14: #{tpu_custom_call.1} parent=1 // pred_check
      _
    $region15: #{tpu_custom_call.1} parent=1 // pred_check_branch
      %43 = sbr.rel (0) target = $region17
    $region16: #{tpu_custom_call.1} parent=1 // pred_region
      _
    $region17: #{tpu_custom_call.1} parent=1 // pred_fallthru
      _
    // Predicated region
    $region18: #{tpu_custom_call.1} parent=1 // pred_check
      _
    $region19: #{tpu_custom_call.1} parent=1 // pred_check_branch
      %45 = sbr.rel (0) target = $region21
    $region20: #{tpu_custom_call.1} parent=1 // pred_region
      _
    $region21: #{tpu_custom_call.1} parent=1 // pred_fallthru
      _
    // Predicated region
    $region22: #{tpu_custom_call.1} parent=1 // pred_check
      _
    $region23: #{tpu_custom_call.1} parent=1 // pred_check_branch
      %47 = sbr.rel (0) target = $region25
    $region24: #{tpu_custom_call.1} parent=1 // pred_region
      %s49 = ssub.s32 1024, 1024
      %50 = vsyncadd [#allocation6], %s49
      %s51 = sshll.u32 [#allocation5], 4
      %s52 = int_to_ptr.vmem [resolvable:$true] %s51
      %57 = dma.hbm_to_vmem [thread:$0]  %s5, 1024, %s52, [#allocation6], 64, 64, 4
    $region25: #{tpu_custom_call.1} parent=1 // pred_fallthru
      _
    // Predicated region
    $region26: #{tpu_custom_call.1} parent=1 // pred_check
      _
    $region27: #{tpu_custom_call.1} parent=1 // pred_check_branch
      %59 = sbr.rel (0) target = $region29
    $region28: #{tpu_custom_call.1} parent=1 // pred_region
      _
    $region29: #{tpu_custom_call.1} parent=1 // pred_fallthru
      _
    // Predicated region
    $region30: #{tpu_custom_call.1} parent=1 // pred_check
      _
    $region31: #{tpu_custom_call.1} parent=1 // pred_check_branch
      %61 = sbr.rel (0) target = $region33
    $region32: #{tpu_custom_call.1} parent=1 // pred_region
      _
    $region33: #{tpu_custom_call.1} parent=1 // pred_fallthru
      _
    // Predicated region
    $region34: #{tpu_custom_call.1} parent=1 // pred_check
      _
    $region35: #{tpu_custom_call.1} parent=1 // pred_check_branch
      %63 = sbr.rel (0) target = $region37
    $region36: #{tpu_custom_call.1} parent=1 // pred_region
      _
    $region37: #{tpu_custom_call.1} parent=1 // pred_fallthru
      _
    // Predicated region
    $region38: #{tpu_custom_call.1} parent=1 // pred_check
      _
    $region39: #{tpu_custom_call.1} parent=1 // pred_check_branch
      %65 = sbr.rel (0) target = $region41
    $region40: #{tpu_custom_call.1} parent=1 // pred_region
      _
    $region41: #{tpu_custom_call.1} parent=1 // pred_fallthru
      _
    // Predicated region
    $region42: #{tpu_custom_call.1} parent=1 // pred_check
      _
    $region43: #{tpu_custom_call.1} parent=1 // pred_check_branch
      %67 = sbr.rel (0) target = $region45
    $region44: #{tpu_custom_call.1} parent=1 // pred_region
      %s69 = ssub.s32 512, 512
      %70 = vsyncadd [#allocation6], %s69
      %s71 = sshll.u32 [#allocation7], 4
      %s72 = int_to_ptr.vmem [resolvable:$true] %s71
      %77 = dma.hbm_to_vmem [thread:$0]  %s10, 512, %s72, [#allocation6], 64, 64, 4
    $region45: #{tpu_custom_call.1} parent=1 // pred_fallthru
      _
    // Predicated region
    $region46: #{tpu_custom_call.1} parent=1 // pred_check
      _
    $region47: #{tpu_custom_call.1} parent=1 // pred_check_branch
      %79 = sbr.rel (0) target = $region49
    $region48: #{tpu_custom_call.1} parent=1 // pred_region
      _
    $region49: #{tpu_custom_call.1} parent=1 // pred_fallthru
      _
    // Predicated region
    $region50: #{tpu_custom_call.1} parent=1 // pred_check
      _
    $region51: #{tpu_custom_call.1} parent=1 // pred_check_branch
      %81 = sbr.rel (0) target = $region53
    $region52: #{tpu_custom_call.1} parent=1 // pred_region
      %82 = dma.done [#allocation3], 1024
    $region53: #{tpu_custom_call.1} parent=1 // pred_fallthru
      _
    // Predicated region
    $region54: #{tpu_custom_call.1} parent=1 // pred_check
      _
    $region55: #{tpu_custom_call.1} parent=1 // pred_check_branch
      %84 = sbr.rel (0) target = $region57
    $region56: #{tpu_custom_call.1} parent=1 // pred_region
      %85 = dma.done [#allocation6], 1024
    $region57: #{tpu_custom_call.1} parent=1 // pred_fallthru
      _
    // Predicated region
    $region58: #{tpu_custom_call.1} parent=1 // pred_check
      _
    $region59: #{tpu_custom_call.1} parent=1 // pred_check_branch
      %87 = sbr.rel (0) target = $region61
    $region60: #{tpu_custom_call.1} parent=1 // pred_region
      %88 = dma.done [#allocation6], 512
    $region61: #{tpu_custom_call.1} parent=1 // pred_fallthru
      _
    %v90 = vld [vmem:[%s0] sm:$0xff]
    %v91 = vld [vmem:[%s0 + $0x8] sm:$0xff]
    %v92 = vld [vmem:[%s0 + $0x10] sm:$0xff]
    %v93 = vld [vmem:[%s0 + $0x18] sm:$0xff]
    %v94 = vld [vmem:[%s0 + $0x20] sm:$0xff]
    %v95 = vld [vmem:[%s0 + $0x28] sm:$0xff]
    %v96 = vld [vmem:[%s0 + $0x30] sm:$0xff]
    %v97 = vld [vmem:[%s0 + $0x38] sm:$0xff]
    %106 = vrot.lane.b32.xlu0 %v97, 32
    %v107 = vpop.permute.xlu0 %106
    %108 = vrot.lane.b32.xlu0 %v96, 32
    %v109 = vpop.permute.xlu0 %108
    %110 = vrot.lane.b32.xlu0 %v95, 32
    %v111 = vpop.permute.xlu0 %110
    %112 = vrot.lane.b32.xlu0 %v94, 32
    %v113 = vpop.permute.xlu0 %112
    %114 = vrot.lane.b32.xlu0 %v93, 32
    %v115 = vpop.permute.xlu0 %114
    %116 = vrot.lane.b32.xlu0 %v92, 32
    %v117 = vpop.permute.xlu0 %116
    %118 = vrot.lane.b32.xlu0 %v91, 32
    %v119 = vpop.permute.xlu0 %118
    %120 = vrot.lane.b32.xlu0 %v90, 32
    %v121 = vpop.permute.xlu0 %120
    %vm130 = vcmask 261120
    %v131 = vsel %vm130, %v90, %v107
    %v132 = vsel %vm130, %v91, %v109
    %v133 = vsel %vm130, %v92, %v111
    %v134 = vsel %vm130, %v93, %v113
    %v135 = vsel %vm130, %v94, %v115
    %v136 = vsel %vm130, %v95, %v117
    %v137 = vsel %vm130, %v96, %v119
    %v138 = vsel %vm130, %v97, %v121
    %v139 = vpack.c.bf16 %v132, %v131
    %v140 = vpack.c.bf16 %v134, %v133
    %v141 = vpack.c.bf16 %v136, %v135
    %v142 = vpack.c.bf16 %v138, %v137
    %v143 = vld [vmem:[%s1] sm:$0xf]
    %v144 = vld [vmem:[%s1 + $0x4] sm:$0xf]
    %v145 = vld [vmem:[%s1 + $0x8] sm:$0xf]
    %v146 = vld [vmem:[%s1 + $0xc] sm:$0xf]
    %v147 = vld [vmem:[%s1 + $0x10] sm:$0xf]
    %v148 = vld [vmem:[%s1 + $0x14] sm:$0xf]
    %v149 = vld [vmem:[%s1 + $0x18] sm:$0xf]
    %v150 = vld [vmem:[%s1 + $0x1c] sm:$0xf]
    %v151 = vld [vmem:[%s3] sm:$0x1]
    %v153 = vlaneseq
    %v154 = vshrl.u32 %v153, 7
    %v155 = vsub.s32 0, %v154
    %v156 = vrot.slane %v151, %v155
    %v166 = vunpack.c.l.b16 %v143
    %v167 = vunpack.c.l.b16 %v144
    %v168 = vunpack.c.l.b16 %v145
    %v169 = vunpack.c.l.b16 %v146
    %v170 = vunpack.c.l.b16 %v147
    %v171 = vunpack.c.l.b16 %v148
    %v172 = vunpack.c.l.b16 %v149
    %v173 = vunpack.c.l.b16 %v150
    %v174 = vpack.c.b16 %v167, %v166
    %v175 = vpack.c.b16 %v169, %v168
    %v176 = vpack.c.b16 %v171, %v170
    %v177 = vpack.c.b16 %v173, %v172
    %vm182 = vcmask 523264
    %v184 = vsel %vm182, %v139, 0
    %v187 = vsel %vm182, %v140, 0
    %v190 = vsel %vm182, %v141, 0
    %v193 = vsel %vm182, %v142, 0
    %195 = vmatprep.subr.bf16.mxu0 0
    %196 = vmatpush1.bf16.msra.mxu0 0
    %197 = vmatprep.subr.bf16.mxu0 0
    %198 = vmatpush1.bf16.msra.mxu0 0
    %199 = vmatprep.subr.bf16.mxu0 0
    %200 = vmatpush1.bf16.msra.mxu0 0
    %201 = vmatprep.subr.bf16.mxu0 0
    %202 = vmatpush1.bf16.msra.mxu0 0
    %203 = vmatprep.subr.bf16.mxu0 0
    %204 = vmatpush1.bf16.msra.mxu0 %v177
    %205 = vmatprep.subr.bf16.mxu0 0
    %206 = vmatpush1.bf16.msra.mxu0 %v176
    %207 = vmatprep.subr.bf16.mxu0 0
    %208 = vmatpush1.bf16.msra.mxu0 %v175
    %209 = vmatprep.subr.bf16.mxu0 0
    %210 = vmatpush1.bf16.msra.mxu0 %v174
    %211 = vmatprep.subr.bf16.mxu0 0
    %212 = vmatpush2.bf16.msra.mxu0 0
    %213 = vmatprep.subr.bf16.mxu0 0
    %214 = vmatpush2.bf16.msra.mxu0 0
    %215 = vmatprep.subr.bf16.mxu0 0
    %216 = vmatpush2.bf16.msra.mxu0 0
    %217 = vmatprep.subr.bf16.mxu0 0
    %218 = vmatpush2.bf16.msra.mxu0 0
    %219 = vmatprep.subr.bf16.mxu0 0
    %220 = vmatpush2.bf16.msra.mxu0 0
    %221 = vmatprep.subr.bf16.mxu0 0
    %222 = vmatpush2.bf16.msra.mxu0 0
    %223 = vmatprep.subr.bf16.mxu0 0
    %224 = vmatpush2.bf16.msra.mxu0 0
    %225 = vmatprep.subr.bf16.mxu0 0
    %226 = vmatpush2.bf16.msra.mxu0 0
    %227 = vmatprep.mubr.bf16.mxu0 0
    %228 = vmatmul.mubr.bf16.gmra.mxu0 %v184
    %v229 = vpop.f32.mrf.mxu0
    %v230 = vadd.f32 %v156, %v229
    %v231 = vpop.f32.mrf.mxu0
    %v232 = vpop.f32.mrf.mxu0
    %v233 = vadd.f32 %v156, %v232
    %v234 = vpop.f32.mrf.mxu0
    %235 = vmatprep.mubr.bf16.mxu0 0
    %236 = vmatmul.mubr.bf16.gmra.mxu0 %v187
    %v237 = vpop.f32.mrf.mxu0
    %v238 = vadd.f32 %v156, %v237
    %v239 = vpop.f32.mrf.mxu0
    %v240 = vpop.f32.mrf.mxu0
    %v241 = vadd.f32 %v156, %v240
    %v242 = vpop.f32.mrf.mxu0
    %243 = vmatprep.mubr.bf16.mxu0 0
    %244 = vmatmul.mubr.bf16.gmra.mxu0 %v190
    %v245 = vpop.f32.mrf.mxu0
    %v246 = vadd.f32 %v156, %v245
    %v247 = vpop.f32.mrf.mxu0
    %v248 = vpop.f32.mrf.mxu0
    %v249 = vadd.f32 %v156, %v248
    %v250 = vpop.f32.mrf.mxu0
    %251 = vmatprep.mubr.bf16.mxu0 0
    %252 = vmatmul.mubr.bf16.gmra.mxu0 %v193
    %v253 = vpop.f32.mrf.mxu0
    %v254 = vadd.f32 %v156, %v253
    %v255 = vpop.f32.mrf.mxu0
    %v256 = vpop.f32.mrf.mxu0
    %v257 = vadd.f32 %v156, %v256
    %v258 = vpop.f32.mrf.mxu0
    %259 = vdwg.mxu0
    %s260 = scalar_lea.vmem %s1, 32
    %v261 = vld [vmem:[%s260] sm:$0xf]
    %v262 = vld [vmem:[%s260 + $0x4] sm:$0xf]
    %v263 = vld [vmem:[%s260 + $0x8] sm:$0xf]
    %v264 = vld [vmem:[%s260 + $0xc] sm:$0xf]
    %v265 = vld [vmem:[%s260 + $0x10] sm:$0xf]
    %v266 = vld [vmem:[%s260 + $0x14] sm:$0xf]
    %v267 = vld [vmem:[%s260 + $0x18] sm:$0xf]
    %v268 = vld [vmem:[%s260 + $0x1c] sm:$0xf]
    %s269 = scalar_lea.vmem %s3, 1
    %v270 = vld [vmem:[%s269] sm:$0x1]
    %v272 = vlaneseq
    %v273 = vshrl.u32 %v272, 7
    %v274 = vsub.s32 0, %v273
    %v275 = vrot.slane %v270, %v274
    %v285 = vunpack.c.l.b16 %v261
    %v286 = vunpack.c.l.b16 %v262
    %v287 = vunpack.c.l.b16 %v263
    %v288 = vunpack.c.l.b16 %v264
    %v289 = vunpack.c.l.b16 %v265
    %v290 = vunpack.c.l.b16 %v266
    %v291 = vunpack.c.l.b16 %v267
    %v292 = vunpack.c.l.b16 %v268
    %v293 = vpack.c.b16 %v286, %v285
    %v294 = vpack.c.b16 %v288, %v287
    %v295 = vpack.c.b16 %v290, %v289
    %v296 = vpack.c.b16 %v292, %v291
    %301 = vmatprep.subr.bf16.mxu0 0
    %302 = vmatpush1.bf16.msra.mxu0 0
    %303 = vmatprep.subr.bf16.mxu0 0
    %304 = vmatpush1.bf16.msra.mxu0 0
    %305 = vmatprep.subr.bf16.mxu0 0
    %306 = vmatpush1.bf16.msra.mxu0 0
    %307 = vmatprep.subr.bf16.mxu0 0
    %308 = vmatpush1.bf16.msra.mxu0 0
    %309 = vmatprep.subr.bf16.mxu0 0
    %310 = vmatpush1.bf16.msra.mxu0 %v296
    %311 = vmatprep.subr.bf16.mxu0 0
    %312 = vmatpush1.bf16.msra.mxu0 %v295
    %313 = vmatprep.subr.bf16.mxu0 0
    %314 = vmatpush1.bf16.msra.mxu0 %v294
    %315 = vmatprep.subr.bf16.mxu0 0
    %316 = vmatpush1.bf16.msra.mxu0 %v293
    %317 = vmatprep.subr.bf16.mxu0 0
    %318 = vmatpush2.bf16.msra.mxu0 0
    %319 = vmatprep.subr.bf16.mxu0 0
    %320 = vmatpush2.bf16.msra.mxu0 0
    %321 = vmatprep.subr.bf16.mxu0 0
    %322 = vmatpush2.bf16.msra.mxu0 0
    %323 = vmatprep.subr.bf16.mxu0 0
    %324 = vmatpush2.bf16.msra.mxu0 0
    %325 = vmatprep.subr.bf16.mxu0 0
    %326 = vmatpush2.bf16.msra.mxu0 0
    %327 = vmatprep.subr.bf16.mxu0 0
    %328 = vmatpush2.bf16.msra.mxu0 0
    %329 = vmatprep.subr.bf16.mxu0 0
    %330 = vmatpush2.bf16.msra.mxu0 0
    %331 = vmatprep.subr.bf16.mxu0 0
    %332 = vmatpush2.bf16.msra.mxu0 0
    %333 = vmatprep.mubr.bf16.mxu0 0
    %334 = vmatmul.mubr.bf16.gmra.mxu0 %v184
    %v335 = vpop.f32.mrf.mxu0
    %v336 = vadd.f32 %v275, %v335
    %v337 = vpop.f32.mrf.mxu0
    %v338 = vpop.f32.mrf.mxu0
    %v339 = vadd.f32 %v275, %v338
    %v340 = vpop.f32.mrf.mxu0
    %341 = vmatprep.mubr.bf16.mxu0 0
    %342 = vmatmul.mubr.bf16.gmra.mxu0 %v187
    %v343 = vpop.f32.mrf.mxu0
    %v344 = vadd.f32 %v275, %v343
    %v345 = vpop.f32.mrf.mxu0
    %v346 = vpop.f32.mrf.mxu0
    %v347 = vadd.f32 %v275, %v346
    %v348 = vpop.f32.mrf.mxu0
    %349 = vmatprep.mubr.bf16.mxu0 0
    %350 = vmatmul.mubr.bf16.gmra.mxu0 %v190
    %v351 = vpop.f32.mrf.mxu0
    %v352 = vadd.f32 %v275, %v351
    %v353 = vpop.f32.mrf.mxu0
    %v354 = vpop.f32.mrf.mxu0
    %v355 = vadd.f32 %v275, %v354
    %v356 = vpop.f32.mrf.mxu0
    %357 = vmatprep.mubr.bf16.mxu0 0
    %358 = vmatmul.mubr.bf16.gmra.mxu0 %v193
    %v359 = vpop.f32.mrf.mxu0
    %v360 = vadd.f32 %v275, %v359
    %v361 = vpop.f32.mrf.mxu0
    %v362 = vpop.f32.mrf.mxu0
    %v363 = vadd.f32 %v275, %v362
    %v364 = vpop.f32.mrf.mxu0
    %365 = vdwg.mxu0
    %s366 = scalar_lea.vmem %s1, 64
    %v367 = vld [vmem:[%s366] sm:$0xf]
    %v368 = vld [vmem:[%s366 + $0x4] sm:$0xf]
    %v369 = vld [vmem:[%s366 + $0x8] sm:$0xf]
    %v370 = vld [vmem:[%s366 + $0xc] sm:$0xf]
    %v371 = vld [vmem:[%s366 + $0x10] sm:$0xf]
    %v372 = vld [vmem:[%s366 + $0x14] sm:$0xf]
    %v373 = vld [vmem:[%s366 + $0x18] sm:$0xf]
    %v374 = vld [vmem:[%s366 + $0x1c] sm:$0xf]
    %s375 = scalar_lea.vmem %s3, 2
    %v376 = vld [vmem:[%s375] sm:$0x1]
    %v378 = vlaneseq
    %v379 = vshrl.u32 %v378, 7
    %v380 = vsub.s32 0, %v379
    %v381 = vrot.slane %v376, %v380
    %v391 = vunpack.c.l.b16 %v367
    %v392 = vunpack.c.l.b16 %v368
    %v393 = vunpack.c.l.b16 %v369
    %v394 = vunpack.c.l.b16 %v370
    %v395 = vunpack.c.l.b16 %v371
    %v396 = vunpack.c.l.b16 %v372
    %v397 = vunpack.c.l.b16 %v373
    %v398 = vunpack.c.l.b16 %v374
    %v399 = vpack.c.b16 %v392, %v391
    %v400 = vpack.c.b16 %v394, %v393
    %v401 = vpack.c.b16 %v396, %v395
    %v402 = vpack.c.b16 %v398, %v397
    %407 = vmatprep.subr.bf16.mxu0 0
    %408 = vmatpush1.bf16.msra.mxu0 0
    %409 = vmatprep.subr.bf16.mxu0 0
    %410 = vmatpush1.bf16.msra.mxu0 0
    %411 = vmatprep.subr.bf16.mxu0 0
    %412 = vmatpush1.bf16.msra.mxu0 0
    %413 = vmatprep.subr.bf16.mxu0 0
    %414 = vmatpush1.bf16.msra.mxu0 0
    %415 = vmatprep.subr.bf16.mxu0 0
    %416 = vmatpush1.bf16.msra.mxu0 %v402
    %417 = vmatprep.subr.bf16.mxu0 0
    %418 = vmatpush1.bf16.msra.mxu0 %v401
    %419 = vmatprep.subr.bf16.mxu0 0
    %420 = vmatpush1.bf16.msra.mxu0 %v400
    %421 = vmatprep.subr.bf16.mxu0 0
    %422 = vmatpush1.bf16.msra.mxu0 %v399
    %423 = vmatprep.subr.bf16.mxu0 0
    %424 = vmatpush2.bf16.msra.mxu0 0
    %425 = vmatprep.subr.bf16.mxu0 0
    %426 = vmatpush2.bf16.msra.mxu0 0
    %427 = vmatprep.subr.bf16.mxu0 0
    %428 = vmatpush2.bf16.msra.mxu0 0
    %429 = vmatprep.subr.bf16.mxu0 0
    %430 = vmatpush2.bf16.msra.mxu0 0
    %431 = vmatprep.subr.bf16.mxu0 0
    %432 = vmatpush2.bf16.msra.mxu0 0
    %433 = vmatprep.subr.bf16.mxu0 0
    %434 = vmatpush2.bf16.msra.mxu0 0
    %435 = vmatprep.subr.bf16.mxu0 0
    %436 = vmatpush2.bf16.msra.mxu0 0
    %437 = vmatprep.subr.bf16.mxu0 0
    %438 = vmatpush2.bf16.msra.mxu0 0
    %439 = vmatprep.mubr.bf16.mxu0 0
    %440 = vmatmul.mubr.bf16.gmra.mxu0 %v184
    %v441 = vpop.f32.mrf.mxu0
    %v442 = vadd.f32 %v381, %v441
    %v443 = vpop.f32.mrf.mxu0
    %v444 = vpop.f32.mrf.mxu0
    %v445 = vadd.f32 %v381, %v444
    %v446 = vpop.f32.mrf.mxu0
    %447 = vmatprep.mubr.bf16.mxu0 0
    %448 = vmatmul.mubr.bf16.gmra.mxu0 %v187
    %v449 = vpop.f32.mrf.mxu0
    %v450 = vadd.f32 %v381, %v449
    %v451 = vpop.f32.mrf.mxu0
    %v452 = vpop.f32.mrf.mxu0
    %v453 = vadd.f32 %v381, %v452
    %v454 = vpop.f32.mrf.mxu0
    %455 = vmatprep.mubr.bf16.mxu0 0
    %456 = vmatmul.mubr.bf16.gmra.mxu0 %v190
    %v457 = vpop.f32.mrf.mxu0
    %v458 = vadd.f32 %v381, %v457
    %v459 = vpop.f32.mrf.mxu0
    %v460 = vpop.f32.mrf.mxu0
    %v461 = vadd.f32 %v381, %v460
    %v462 = vpop.f32.mrf.mxu0
    %463 = vmatprep.mubr.bf16.mxu0 0
    %464 = vmatmul.mubr.bf16.gmra.mxu0 %v193
    %v465 = vpop.f32.mrf.mxu0
    %v466 = vadd.f32 %v381, %v465
    %v467 = vpop.f32.mrf.mxu0
    %v468 = vpop.f32.mrf.mxu0
    %v469 = vadd.f32 %v381, %v468
    %v470 = vpop.f32.mrf.mxu0
    %471 = vdwg.mxu0
    %s472 = scalar_lea.vmem %s1, 96
    %v473 = vld [vmem:[%s472] sm:$0xf]
    %v474 = vld [vmem:[%s472 + $0x4] sm:$0xf]
    %v475 = vld [vmem:[%s472 + $0x8] sm:$0xf]
    %v476 = vld [vmem:[%s472 + $0xc] sm:$0xf]
    %v477 = vld [vmem:[%s472 + $0x10] sm:$0xf]
    %v478 = vld [vmem:[%s472 + $0x14] sm:$0xf]
    %v479 = vld [vmem:[%s472 + $0x18] sm:$0xf]
    %v480 = vld [vmem:[%s472 + $0x1c] sm:$0xf]
    %s481 = scalar_lea.vmem %s3, 3
    %v482 = vld [vmem:[%s481] sm:$0x1]
    %v484 = vlaneseq
    %v485 = vshrl.u32 %v484, 7
    %v486 = vsub.s32 0, %v485
    %v487 = vrot.slane %v482, %v486
    %v497 = vunpack.c.l.b16 %v473
    %v498 = vunpack.c.l.b16 %v474
    %v499 = vunpack.c.l.b16 %v475
    %v500 = vunpack.c.l.b16 %v476
    %v501 = vunpack.c.l.b16 %v477
    %v502 = vunpack.c.l.b16 %v478
    %v503 = vunpack.c.l.b16 %v479
    %v504 = vunpack.c.l.b16 %v480
    %v505 = vpack.c.b16 %v498, %v497
    %v506 = vpack.c.b16 %v500, %v499
    %v507 = vpack.c.b16 %v502, %v501
    %v508 = vpack.c.b16 %v504, %v503
    %513 = vmatprep.subr.bf16.mxu0 0
    %514 = vmatpush1.bf16.msra.mxu0 0
    %515 = vmatprep.subr.bf16.mxu0 0
    %516 = vmatpush1.bf16.msra.mxu0 0
    %517 = vmatprep.subr.bf16.mxu0 0
    %518 = vmatpush1.bf16.msra.mxu0 0
    %519 = vmatprep.subr.bf16.mxu0 0
    %520 = vmatpush1.bf16.msra.mxu0 0
    %521 = vmatprep.subr.bf16.mxu0 0
    %522 = vmatpush1.bf16.msra.mxu0 %v508
    %523 = vmatprep.subr.bf16.mxu0 0
    %524 = vmatpush1.bf16.msra.mxu0 %v507
    %525 = vmatprep.subr.bf16.mxu0 0
    %526 = vmatpush1.bf16.msra.mxu0 %v506
    %527 = vmatprep.subr.bf16.mxu0 0
    %528 = vmatpush1.bf16.msra.mxu0 %v505
    %529 = vmatprep.subr.bf16.mxu0 0
    %530 = vmatpush2.bf16.msra.mxu0 0
    %531 = vmatprep.subr.bf16.mxu0 0
    %532 = vmatpush2.bf16.msra.mxu0 0
    %533 = vmatprep.subr.bf16.mxu0 0
    %534 = vmatpush2.bf16.msra.mxu0 0
    %535 = vmatprep.subr.bf16.mxu0 0
    %536 = vmatpush2.bf16.msra.mxu0 0
    %537 = vmatprep.subr.bf16.mxu0 0
    %538 = vmatpush2.bf16.msra.mxu0 0
    %539 = vmatprep.subr.bf16.mxu0 0
    %540 = vmatpush2.bf16.msra.mxu0 0
    %541 = vmatprep.subr.bf16.mxu0 0
    %542 = vmatpush2.bf16.msra.mxu0 0
    %543 = vmatprep.subr.bf16.mxu0 0
    %544 = vmatpush2.bf16.msra.mxu0 0
    %545 = vmatprep.mubr.bf16.mxu0 0
    %546 = vmatmul.mubr.bf16.gmra.mxu0 %v184
    %v547 = vpop.f32.mrf.mxu0
    %v548 = vadd.f32 %v487, %v547
    %v549 = vpop.f32.mrf.mxu0
    %v550 = vpop.f32.mrf.mxu0
    %v551 = vadd.f32 %v487, %v550
    %v552 = vpop.f32.mrf.mxu0
    %553 = vmatprep.mubr.bf16.mxu0 0
    %554 = vmatmul.mubr.bf16.gmra.mxu0 %v187
    %v555 = vpop.f32.mrf.mxu0
    %v556 = vadd.f32 %v487, %v555
    %v557 = vpop.f32.mrf.mxu0
    %v558 = vpop.f32.mrf.mxu0
    %v559 = vadd.f32 %v487, %v558
    %v560 = vpop.f32.mrf.mxu0
    %561 = vmatprep.mubr.bf16.mxu0 0
    %562 = vmatmul.mubr.bf16.gmra.mxu0 %v190
    %v563 = vpop.f32.mrf.mxu0
    %v564 = vadd.f32 %v487, %v563
    %v565 = vpop.f32.mrf.mxu0
    %v566 = vpop.f32.mrf.mxu0
    %v567 = vadd.f32 %v487, %v566
    %v568 = vpop.f32.mrf.mxu0
    %569 = vmatprep.mubr.bf16.mxu0 0
    %570 = vmatmul.mubr.bf16.gmra.mxu0 %v193
    %v571 = vpop.f32.mrf.mxu0
    %v572 = vadd.f32 %v487, %v571
    %v573 = vpop.f32.mrf.mxu0
    %v574 = vpop.f32.mrf.mxu0
    %v575 = vadd.f32 %v487, %v574
    %v576 = vpop.f32.mrf.mxu0
    %577 = vdwg.mxu0
    %v578 = vld [vmem:[#allocation2] sm:$0xf]
    %v579 = vld [vmem:[#allocation2 + $0x4] sm:$0xf]
    %v580 = vld [vmem:[#allocation2 + $0x8] sm:$0xf]
    %v581 = vld [vmem:[#allocation2 + $0xc] sm:$0xf]
    %s582 = scalar_lea.vmem [#allocation2], 16
    %v583 = vld [vmem:[%s582] sm:$0xf]
    %v584 = vld [vmem:[%s582 + $0x4] sm:$0xf]
    %v585 = vld [vmem:[%s582 + $0x8] sm:$0xf]
    %v586 = vld [vmem:[%s582 + $0xc] sm:$0xf]
    %s587 = scalar_lea.vmem [#allocation2], 32
    %v588 = vld [vmem:[%s587] sm:$0xf]
    %v589 = vld [vmem:[%s587 + $0x4] sm:$0xf]
    %v590 = vld [vmem:[%s587 + $0x8] sm:$0xf]
    %v591 = vld [vmem:[%s587 + $0xc] sm:$0xf]
    %s592 = scalar_lea.vmem [#allocation2], 48
    %v593 = vld [vmem:[%s592] sm:$0xf]
    %v594 = vld [vmem:[%s592 + $0x4] sm:$0xf]
    %v595 = vld [vmem:[%s592 + $0x8] sm:$0xf]
    %v596 = vld [vmem:[%s592 + $0xc] sm:$0xf]
    %v601 = vunpack.c.l.b16 %v578
    %v602 = vunpack.c.l.b16 %v579
    %v603 = vunpack.c.l.b16 %v580
    %v604 = vunpack.c.l.b16 %v581
    %v605 = vpack.c.b16 %v602, %v601
    %v606 = vpack.c.b16 %v604, %v603
    %v610 = vsel %vm130, 0, 0
    %612 = vmatprep.subr.bf16.mxu0 0
    %613 = vmatpush1.bf16.msra.mxu0 0
    %614 = vmatprep.subr.bf16.mxu0 0
    %615 = vmatpush1.bf16.msra.mxu0 0
    %616 = vmatprep.subr.bf16.mxu0 0
    %617 = vmatpush1.bf16.msra.mxu0 0
    %618 = vmatprep.subr.bf16.mxu0 0
    %619 = vmatpush1.bf16.msra.mxu0 0
    %620 = vmatprep.subr.bf16.mxu0 0
    %621 = vmatpush1.bf16.msra.mxu0 0
    %622 = vmatprep.subr.bf16.mxu0 0
    %623 = vmatpush1.bf16.msra.mxu0 0
    %624 = vmatprep.subr.bf16.mxu0 0
    %625 = vmatpush1.bf16.msra.mxu0 %v606
    %626 = vmatprep.subr.bf16.mxu0 0
    %627 = vmatpush1.bf16.msra.mxu0 %v605
    %628 = vmatprep.subr.bf16.mxu0 0
    %629 = vmatpush2.bf16.msra.mxu0 0
    %630 = vmatprep.subr.bf16.mxu0 0
    %631 = vmatpush2.bf16.msra.mxu0 0
    %632 = vmatprep.subr.bf16.mxu0 0
    %633 = vmatpush2.bf16.msra.mxu0 0
    %634 = vmatprep.subr.bf16.mxu0 0
    %635 = vmatpush2.bf16.msra.mxu0 0
    %636 = vmatprep.subr.bf16.mxu0 0
    %637 = vmatpush2.bf16.msra.mxu0 0
    %638 = vmatprep.subr.bf16.mxu0 0
    %639 = vmatpush2.bf16.msra.mxu0 0
    %640 = vmatprep.subr.bf16.mxu0 0
    %641 = vmatpush2.bf16.msra.mxu0 0
    %642 = vmatprep.subr.bf16.mxu0 0
    %643 = vmatpush2.bf16.msra.mxu0 0
    %644 = vmatprep.mubr.bf16.mxu0 0
    %645 = vmatmul.mubr.bf16.gmra.mxu0 %v610
    %v646 = vpop.f32.mrf.mxu0
    %v647 = vadd.f32 0.0, %v646
    %v648 = vpop.f32.mrf.mxu0
    %v649 = vpop.f32.mrf.mxu0
    %v650 = vpop.f32.mrf.mxu0
    %651 = vdwg.mxu0
    %v652 = vadd.f32 %v230, %v647
    %v653 = vxor.u32 %v652, 2147483648
    %v654 = vmul.f32 %v653, 1.442695
    %v655 = vpow.pop %v654
    %v656 = vadd.f32 %v655, 1.0
    %v657 = vrcp.pop %v656
    %v658 = vmul.f32 1.0, %v657
    %v663 = vunpack.c.l.b16 %v583
    %v664 = vunpack.c.l.b16 %v584
    %v665 = vunpack.c.l.b16 %v585
    %v666 = vunpack.c.l.b16 %v586
    %v667 = vpack.c.b16 %v664, %v663
    %v668 = vpack.c.b16 %v666, %v665
    %671 = vmatprep.subr.bf16.mxu0 0
    %672 = vmatpush1.bf16.msra.mxu0 0
    %673 = vmatprep.subr.bf16.mxu0 0
    %674 = vmatpush1.bf16.msra.mxu0 0
    %675 = vmatprep.subr.bf16.mxu0 0
    %676 = vmatpush1.bf16.msra.mxu0 0
    %677 = vmatprep.subr.bf16.mxu0 0
    %678 = vmatpush1.bf16.msra.mxu0 0
    %679 = vmatprep.subr.bf16.mxu0 0
    %680 = vmatpush1.bf16.msra.mxu0 0
    %681 = vmatprep.subr.bf16.mxu0 0
    %682 = vmatpush1.bf16.msra.mxu0 0
    %683 = vmatprep.subr.bf16.mxu0 0
    %684 = vmatpush1.bf16.msra.mxu0 %v668
    %685 = vmatprep.subr.bf16.mxu0 0
    %686 = vmatpush1.bf16.msra.mxu0 %v667
    %687 = vmatprep.subr.bf16.mxu0 0
    %688 = vmatpush2.bf16.msra.mxu0 0
    %689 = vmatprep.subr.bf16.mxu0 0
    %690 = vmatpush2.bf16.msra.mxu0 0
    %691 = vmatprep.subr.bf16.mxu0 0
    %692 = vmatpush2.bf16.msra.mxu0 0
    %693 = vmatprep.subr.bf16.mxu0 0
    %694 = vmatpush2.bf16.msra.mxu0 0
    %695 = vmatprep.subr.bf16.mxu0 0
    %696 = vmatpush2.bf16.msra.mxu0 0
    %697 = vmatprep.subr.bf16.mxu0 0
    %698 = vmatpush2.bf16.msra.mxu0 0
    %699 = vmatprep.subr.bf16.mxu0 0
    %700 = vmatpush2.bf16.msra.mxu0 0
    %701 = vmatprep.subr.bf16.mxu0 0
    %702 = vmatpush2.bf16.msra.mxu0 0
    %703 = vmatprep.mubr.bf16.mxu0 0
    %704 = vmatmul.mubr.bf16.gmra.mxu0 %v610
    %v705 = vpop.f32.mrf.mxu0
    %v706 = vadd.f32 0.0, %v705
    %v707 = vpop.f32.mrf.mxu0
    %v708 = vpop.f32.mrf.mxu0
    %v709 = vpop.f32.mrf.mxu0
    %710 = vdwg.mxu0
    %v711 = vadd.f32 %v336, %v706
    %v712 = vxor.u32 %v711, 2147483648
    %v713 = vmul.f32 %v712, 1.442695
    %v714 = vpow.pop %v713
    %v715 = vadd.f32 %v714, 1.0
    %v716 = vrcp.pop %v715
    %v717 = vmul.f32 1.0, %v716
    %v722 = vunpack.c.l.b16 %v588
    %v723 = vunpack.c.l.b16 %v589
    %v724 = vunpack.c.l.b16 %v590
    %v725 = vunpack.c.l.b16 %v591
    %v726 = vpack.c.b16 %v723, %v722
    %v727 = vpack.c.b16 %v725, %v724
    %730 = vmatprep.subr.bf16.mxu0 0
    %731 = vmatpush1.bf16.msra.mxu0 0
    %732 = vmatprep.subr.bf16.mxu0 0
    %733 = vmatpush1.bf16.msra.mxu0 0
    %734 = vmatprep.subr.bf16.mxu0 0
    %735 = vmatpush1.bf16.msra.mxu0 0
    %736 = vmatprep.subr.bf16.mxu0 0
    %737 = vmatpush1.bf16.msra.mxu0 0
    %738 = vmatprep.subr.bf16.mxu0 0
    %739 = vmatpush1.bf16.msra.mxu0 0
    %740 = vmatprep.subr.bf16.mxu0 0
    %741 = vmatpush1.bf16.msra.mxu0 0
    %742 = vmatprep.subr.bf16.mxu0 0
    %743 = vmatpush1.bf16.msra.mxu0 %v727
    %744 = vmatprep.subr.bf16.mxu0 0
    %745 = vmatpush1.bf16.msra.mxu0 %v726
    %746 = vmatprep.subr.bf16.mxu0 0
    %747 = vmatpush2.bf16.msra.mxu0 0
    %748 = vmatprep.subr.bf16.mxu0 0
    %749 = vmatpush2.bf16.msra.mxu0 0
    %750 = vmatprep.subr.bf16.mxu0 0
    %751 = vmatpush2.bf16.msra.mxu0 0
    %752 = vmatprep.subr.bf16.mxu0 0
    %753 = vmatpush2.bf16.msra.mxu0 0
    %754 = vmatprep.subr.bf16.mxu0 0
    %755 = vmatpush2.bf16.msra.mxu0 0
    %756 = vmatprep.subr.bf16.mxu0 0
    %757 = vmatpush2.bf16.msra.mxu0 0
    %758 = vmatprep.subr.bf16.mxu0 0
    %759 = vmatpush2.bf16.msra.mxu0 0
    %760 = vmatprep.subr.bf16.mxu0 0
    %761 = vmatpush2.bf16.msra.mxu0 0
    %762 = vmatprep.mubr.bf16.mxu0 0
    %763 = vmatmul.mubr.bf16.gmra.mxu0 %v610
    %v764 = vpop.f32.mrf.mxu0
    %v765 = vadd.f32 0.0, %v764
    %v766 = vpop.f32.mrf.mxu0
    %v767 = vpop.f32.mrf.mxu0
    %v768 = vpop.f32.mrf.mxu0
    %769 = vdwg.mxu0
    %v770 = vadd.f32 %v442, %v765
    %v771 = vxor.u32 %v770, 2147483648
    %v772 = vmul.f32 %v771, 1.442695
    %v773 = vpow.pop %v772
    %v774 = vadd.f32 %v773, 1.0
    %v775 = vrcp.pop %v774
    %v776 = vmul.f32 1.0, %v775
    %v781 = vunpack.c.l.b16 %v593
    %v782 = vunpack.c.l.b16 %v594
    %v783 = vunpack.c.l.b16 %v595
    %v784 = vunpack.c.l.b16 %v596
    %v785 = vpack.c.b16 %v782, %v781
    %v786 = vpack.c.b16 %v784, %v783
    %789 = vmatprep.subr.bf16.mxu0 0
    %790 = vmatpush1.bf16.msra.mxu0 0
    %791 = vmatprep.subr.bf16.mxu0 0
    %792 = vmatpush1.bf16.msra.mxu0 0
    %793 = vmatprep.subr.bf16.mxu0 0
    %794 = vmatpush1.bf16.msra.mxu0 0
    %795 = vmatprep.subr.bf16.mxu0 0
    %796 = vmatpush1.bf16.msra.mxu0 0
    %797 = vmatprep.subr.bf16.mxu0 0
    %798 = vmatpush1.bf16.msra.mxu0 0
    %799 = vmatprep.subr.bf16.mxu0 0
    %800 = vmatpush1.bf16.msra.mxu0 0
    %801 = vmatprep.subr.bf16.mxu0 0
    %802 = vmatpush1.bf16.msra.mxu0 %v786
    %803 = vmatprep.subr.bf16.mxu0 0
    %804 = vmatpush1.bf16.msra.mxu0 %v785
    %805 = vmatprep.subr.bf16.mxu0 0
    %806 = vmatpush2.bf16.msra.mxu0 0
    %807 = vmatprep.subr.bf16.mxu0 0
    %808 = vmatpush2.bf16.msra.mxu0 0
    %809 = vmatprep.subr.bf16.mxu0 0
    %810 = vmatpush2.bf16.msra.mxu0 0
    %811 = vmatprep.subr.bf16.mxu0 0
    %812 = vmatpush2.bf16.msra.mxu0 0
    %813 = vmatprep.subr.bf16.mxu0 0
    %814 = vmatpush2.bf16.msra.mxu0 0
    %815 = vmatprep.subr.bf16.mxu0 0
    %816 = vmatpush2.bf16.msra.mxu0 0
    %817 = vmatprep.subr.bf16.mxu0 0
    %818 = vmatpush2.bf16.msra.mxu0 0
    %819 = vmatprep.subr.bf16.mxu0 0
    %820 = vmatpush2.bf16.msra.mxu0 0
    %821 = vmatprep.mubr.bf16.mxu0 0
    %822 = vmatmul.mubr.bf16.gmra.mxu0 %v610
    %v823 = vpop.f32.mrf.mxu0
    %v824 = vadd.f32 0.0, %v823
    %v825 = vpop.f32.mrf.mxu0
    %v826 = vpop.f32.mrf.mxu0
    %v827 = vpop.f32.mrf.mxu0
    %828 = vdwg.mxu0
    %v829 = vadd.f32 %v548, %v824
    %v830 = vtanh.pop %v829
    %v831 = vmul.f32 %v717, 0.0
    %v832 = vmul.f32 %v658, %v830
    %v833 = vadd.f32 %v831, %v832
    %v834 = vtanh.pop %v833
    %v835 = vmul.f32 %v776, %v834
    %v836 = vpack.c.bf16 %v835, %v835
    %v838 = vsel %vm130, %v836, 0
    %840 = vmatprep.subr.bf16.mxu0 0
    %841 = vmatpush1.bf16.msra.mxu0 0
    %842 = vmatprep.subr.bf16.mxu0 0
    %843 = vmatpush1.bf16.msra.mxu0 0
    %844 = vmatprep.subr.bf16.mxu0 0
    %845 = vmatpush1.bf16.msra.mxu0 0
    %846 = vmatprep.subr.bf16.mxu0 0
    %847 = vmatpush1.bf16.msra.mxu0 0
    %848 = vmatprep.subr.bf16.mxu0 0
    %849 = vmatpush1.bf16.msra.mxu0 0
    %850 = vmatprep.subr.bf16.mxu0 0
    %851 = vmatpush1.bf16.msra.mxu0 0
    %852 = vmatprep.subr.bf16.mxu0 0
    %853 = vmatpush1.bf16.msra.mxu0 %v606
    %854 = vmatprep.subr.bf16.mxu0 0
    %855 = vmatpush1.bf16.msra.mxu0 %v605
    %856 = vmatprep.subr.bf16.mxu0 0
    %857 = vmatpush2.bf16.msra.mxu0 0
    %858 = vmatprep.subr.bf16.mxu0 0
    %859 = vmatpush2.bf16.msra.mxu0 0
    %860 = vmatprep.subr.bf16.mxu0 0
    %861 = vmatpush2.bf16.msra.mxu0 0
    %862 = vmatprep.subr.bf16.mxu0 0
    %863 = vmatpush2.bf16.msra.mxu0 0
    %864 = vmatprep.subr.bf16.mxu0 0
    %865 = vmatpush2.bf16.msra.mxu0 0
    %866 = vmatprep.subr.bf16.mxu0 0
    %867 = vmatpush2.bf16.msra.mxu0 0
    %868 = vmatprep.subr.bf16.mxu0 0
    %869 = vmatpush2.bf16.msra.mxu0 0
    %870 = vmatprep.subr.bf16.mxu0 0
    %871 = vmatpush2.bf16.msra.mxu0 0
    %872 = vmatprep.mubr.bf16.mxu0 0
    %873 = vmatmul.mubr.bf16.gmra.mxu0 %v838
    %v874 = vpop.f32.mrf.mxu0
    %v875 = vadd.f32 0.0, %v874
    %v876 = vpop.f32.mrf.mxu0
    %v877 = vpop.f32.mrf.mxu0
    %v878 = vpop.f32.mrf.mxu0
    %879 = vdwg.mxu0
    %v880 = vadd.f32 %v233, %v875
    %v881 = vxor.u32 %v880, 2147483648
    %v882 = vmul.f32 %v881, 1.442695
    %v883 = vpow.pop %v882
    %v884 = vadd.f32 %v883, 1.0
    %v885 = vrcp.pop %v884
    %v886 = vmul.f32 1.0, %v885
    %887 = vmatprep.subr.bf16.mxu0 0
    %888 = vmatpush1.bf16.msra.mxu0 0
    %889 = vmatprep.subr.bf16.mxu0 0
    %890 = vmatpush1.bf16.msra.mxu0 0
    %891 = vmatprep.subr.bf16.mxu0 0
    %892 = vmatpush1.bf16.msra.mxu0 0
    %893 = vmatprep.subr.bf16.mxu0 0
    %894 = vmatpush1.bf16.msra.mxu0 0
    %895 = vmatprep.subr.bf16.mxu0 0
    %896 = vmatpush1.bf16.msra.mxu0 0
    %897 = vmatprep.subr.bf16.mxu0 0
    %898 = vmatpush1.bf16.msra.mxu0 0
    %899 = vmatprep.subr.bf16.mxu0 0
    %900 = vmatpush1.bf16.msra.mxu0 %v668
    %901 = vmatprep.subr.bf16.mxu0 0
    %902 = vmatpush1.bf16.msra.mxu0 %v667
    %903 = vmatprep.subr.bf16.mxu0 0
    %904 = vmatpush2.bf16.msra.mxu0 0
    %905 = vmatprep.subr.bf16.mxu0 0
    %906 = vmatpush2.bf16.msra.mxu0 0
    %907 = vmatprep.subr.bf16.mxu0 0
    %908 = vmatpush2.bf16.msra.mxu0 0
    %909 = vmatprep.subr.bf16.mxu0 0
    %910 = vmatpush2.bf16.msra.mxu0 0
    %911 = vmatprep.subr.bf16.mxu0 0
    %912 = vmatpush2.bf16.msra.mxu0 0
    %913 = vmatprep.subr.bf16.mxu0 0
    %914 = vmatpush2.bf16.msra.mxu0 0
    %915 = vmatprep.subr.bf16.mxu0 0
    %916 = vmatpush2.bf16.msra.mxu0 0
    %917 = vmatprep.subr.bf16.mxu0 0
    %918 = vmatpush2.bf16.msra.mxu0 0
    %919 = vmatprep.mubr.bf16.mxu0 0
    %920 = vmatmul.mubr.bf16.gmra.mxu0 %v838
    %v921 = vpop.f32.mrf.mxu0
    %v922 = vadd.f32 0.0, %v921
    %v923 = vpop.f32.mrf.mxu0
    %v924 = vpop.f32.mrf.mxu0
    %v925 = vpop.f32.mrf.mxu0
    %926 = vdwg.mxu0
    %v927 = vadd.f32 %v339, %v922
    %v928 = vxor.u32 %v927, 2147483648
    %v929 = vmul.f32 %v928, 1.442695
    %v930 = vpow.pop %v929
    %v931 = vadd.f32 %v930, 1.0
    %v932 = vrcp.pop %v931
    %v933 = vmul.f32 1.0, %v932
    %934 = vmatprep.subr.bf16.mxu0 0
    %935 = vmatpush1.bf16.msra.mxu0 0
    %936 = vmatprep.subr.bf16.mxu0 0
    %937 = vmatpush1.bf16.msra.mxu0 0
    %938 = vmatprep.subr.bf16.mxu0 0
    %939 = vmatpush1.bf16.msra.mxu0 0
    %940 = vmatprep.subr.bf16.mxu0 0
    %941 = vmatpush1.bf16.msra.mxu0 0
    %942 = vmatprep.subr.bf16.mxu0 0
    %943 = vmatpush1.bf16.msra.mxu0 0
    %944 = vmatprep.subr.bf16.mxu0 0
    %945 = vmatpush1.bf16.msra.mxu0 0
    %946 = vmatprep.subr.bf16.mxu0 0
    %947 = vmatpush1.bf16.msra.mxu0 %v727
    %948 = vmatprep.subr.bf16.mxu0 0
    %949 = vmatpush1.bf16.msra.mxu0 %v726
    %950 = vmatprep.subr.bf16.mxu0 0
    %951 = vmatpush2.bf16.msra.mxu0 0
    %952 = vmatprep.subr.bf16.mxu0 0
    %953 = vmatpush2.bf16.msra.mxu0 0
    %954 = vmatprep.subr.bf16.mxu0 0
    %955 = vmatpush2.bf16.msra.mxu0 0
    %956 = vmatprep.subr.bf16.mxu0 0
    %957 = vmatpush2.bf16.msra.mxu0 0
    %958 = vmatprep.subr.bf16.mxu0 0
    %959 = vmatpush2.bf16.msra.mxu0 0
    %960 = vmatprep.subr.bf16.mxu0 0
    %961 = vmatpush2.bf16.msra.mxu0 0
    %962 = vmatprep.subr.bf16.mxu0 0
    %963 = vmatpush2.bf16.msra.mxu0 0
    %964 = vmatprep.subr.bf16.mxu0 0
    %965 = vmatpush2.bf16.msra.mxu0 0
    %966 = vmatprep.mubr.bf16.mxu0 0
    %967 = vmatmul.mubr.bf16.gmra.mxu0 %v838
    %v968 = vpop.f32.mrf.mxu0
    %v969 = vadd.f32 0.0, %v968
    %v970 = vpop.f32.mrf.mxu0
    %v971 = vpop.f32.mrf.mxu0
    %v972 = vpop.f32.mrf.mxu0
    %973 = vdwg.mxu0
    %v974 = vadd.f32 %v445, %v969
    %v975 = vxor.u32 %v974, 2147483648
    %v976 = vmul.f32 %v975, 1.442695
    %v977 = vpow.pop %v976
    %v978 = vadd.f32 %v977, 1.0
    %v979 = vrcp.pop %v978
    %v980 = vmul.f32 1.0, %v979
    %981 = vmatprep.subr.bf16.mxu0 0
    %982 = vmatpush1.bf16.msra.mxu0 0
    %983 = vmatprep.subr.bf16.mxu0 0
    %984 = vmatpush1.bf16.msra.mxu0 0
    %985 = vmatprep.subr.bf16.mxu0 0
    %986 = vmatpush1.bf16.msra.mxu0 0
    %987 = vmatprep.subr.bf16.mxu0 0
    %988 = vmatpush1.bf16.msra.mxu0 0
    %989 = vmatprep.subr.bf16.mxu0 0
    %990 = vmatpush1.bf16.msra.mxu0 0
    %991 = vmatprep.subr.bf16.mxu0 0
    %992 = vmatpush1.bf16.msra.mxu0 0
    %993 = vmatprep.subr.bf16.mxu0 0
    %994 = vmatpush1.bf16.msra.mxu0 %v786
    %995 = vmatprep.subr.bf16.mxu0 0
    %996 = vmatpush1.bf16.msra.mxu0 %v785
    %997 = vmatprep.subr.bf16.mxu0 0
    %998 = vmatpush2.bf16.msra.mxu0 0
    %999 = vmatprep.subr.bf16.mxu0 0
    %1000 = vmatpush2.bf16.msra.mxu0 0
    %1001 = vmatprep.subr.bf16.mxu0 0
    %1002 = vmatpush2.bf16.msra.mxu0 0
    %1003 = vmatprep.subr.bf16.mxu0 0
    %1004 = vmatpush2.bf16.msra.mxu0 0
    %1005 = vmatprep.subr.bf16.mxu0 0
    %1006 = vmatpush2.bf16.msra.mxu0 0
    %1007 = vmatprep.subr.bf16.mxu0 0
    %1008 = vmatpush2.bf16.msra.mxu0 0
    %1009 = vmatprep.subr.bf16.mxu0 0
    %1010 = vmatpush2.bf16.msra.mxu0 0
    %1011 = vmatprep.subr.bf16.mxu0 0
    %1012 = vmatpush2.bf16.msra.mxu0 0
    %1013 = vmatprep.mubr.bf16.mxu0 0
    %1014 = vmatmul.mubr.bf16.gmra.mxu0 %v838
    %v1015 = vpop.f32.mrf.mxu0
    %v1016 = vadd.f32 0.0, %v1015
    %v1017 = vpop.f32.mrf.mxu0
    %v1018 = vpop.f32.mrf.mxu0
    %v1019 = vpop.f32.mrf.mxu0
    %1020 = vdwg.mxu0
    %v1021 = vadd.f32 %v551, %v1016
    %v1022 = vtanh.pop %v1021
    %v1023 = vmul.f32 %v933, %v833
    %v1024 = vmul.f32 %v886, %v1022
    %v1025 = vadd.f32 %v1023, %v1024
    %v1026 = vtanh.pop %v1025
    %v1027 = vmul.f32 %v980, %v1026
    %v1028 = vpack.c.bf16 %v1027, %v1027
    %v1030 = vsel %vm130, %v1028, 0
    %1032 = vmatprep.subr.bf16.mxu0 0
    %1033 = vmatpush1.bf16.msra.mxu0 0
    %1034 = vmatprep.subr.bf16.mxu0 0
    %1035 = vmatpush1.bf16.msra.mxu0 0
    %1036 = vmatprep.subr.bf16.mxu0 0
    %1037 = vmatpush1.bf16.msra.mxu0 0
    %1038 = vmatprep.subr.bf16.mxu0 0
    %1039 = vmatpush1.bf16.msra.mxu0 0
    %1040 = vmatprep.subr.bf16.mxu0 0
    %1041 = vmatpush1.bf16.msra.mxu0 0
    %1042 = vmatprep.subr.bf16.mxu0 0
    %1043 = vmatpush1.bf16.msra.mxu0 0
    %1044 = vmatprep.subr.bf16.mxu0 0
    %1045 = vmatpush1.bf16.msra.mxu0 %v606
    %1046 = vmatprep.subr.bf16.mxu0 0
    %1047 = vmatpush1.bf16.msra.mxu0 %v605
    %1048 = vmatprep.subr.bf16.mxu0 0
    %1049 = vmatpush2.bf16.msra.mxu0 0
    %1050 = vmatprep.subr.bf16.mxu0 0
    %1051 = vmatpush2.bf16.msra.mxu0 0
    %1052 = vmatprep.subr.bf16.mxu0 0
    %1053 = vmatpush2.bf16.msra.mxu0 0
    %1054 = vmatprep.subr.bf16.mxu0 0
    %1055 = vmatpush2.bf16.msra.mxu0 0
    %1056 = vmatprep.subr.bf16.mxu0 0
    %1057 = vmatpush2.bf16.msra.mxu0 0
    %1058 = vmatprep.subr.bf16.mxu0 0
    %1059 = vmatpush2.bf16.msra.mxu0 0
    %1060 = vmatprep.subr.bf16.mxu0 0
    %1061 = vmatpush2.bf16.msra.mxu0 0
    %1062 = vmatprep.subr.bf16.mxu0 0
    %1063 = vmatpush2.bf16.msra.mxu0 0
    %1064 = vmatprep.mubr.bf16.mxu0 0
    %1065 = vmatmul.mubr.bf16.gmra.mxu0 %v1030
    %v1066 = vpop.f32.mrf.mxu0
    %v1067 = vadd.f32 0.0, %v1066
    %v1068 = vpop.f32.mrf.mxu0
    %v1069 = vpop.f32.mrf.mxu0
    %v1070 = vpop.f32.mrf.mxu0
    %1071 = vdwg.mxu0
    %v1072 = vadd.f32 %v238, %v1067
    %v1073 = vxor.u32 %v1072, 2147483648
    %v1074 = vmul.f32 %v1073, 1.442695
    %v1075 = vpow.pop %v1074
    %v1076 = vadd.f32 %v1075, 1.0
    %v1077 = vrcp.pop %v1076
    %v1078 = vmul.f32 1.0, %v1077
    %1079 = vmatprep.subr.bf16.mxu0 0
    %1080 = vmatpush1.bf16.msra.mxu0 0
    %1081 = vmatprep.subr.bf16.mxu0 0
    %1082 = vmatpush1.bf16.msra.mxu0 0
    %1083 = vmatprep.subr.bf16.mxu0 0
    %1084 = vmatpush1.bf16.msra.mxu0 0
    %1085 = vmatprep.subr.bf16.mxu0 0
    %1086 = vmatpush1.bf16.msra.mxu0 0
    %1087 = vmatprep.subr.bf16.mxu0 0
    %1088 = vmatpush1.bf16.msra.mxu0 0
    %1089 = vmatprep.subr.bf16.mxu0 0
    %1090 = vmatpush1.bf16.msra.mxu0 0
    %1091 = vmatprep.subr.bf16.mxu0 0
    %1092 = vmatpush1.bf16.msra.mxu0 %v668
    %1093 = vmatprep.subr.bf16.mxu0 0
    %1094 = vmatpush1.bf16.msra.mxu0 %v667
    %1095 = vmatprep.subr.bf16.mxu0 0
    %1096 = vmatpush2.bf16.msra.mxu0 0
    %1097 = vmatprep.subr.bf16.mxu0 0
    %1098 = vmatpush2.bf16.msra.mxu0 0
    %1099 = vmatprep.subr.bf16.mxu0 0
    %1100 = vmatpush2.bf16.msra.mxu0 0
    %1101 = vmatprep.subr.bf16.mxu0 0
    %1102 = vmatpush2.bf16.msra.mxu0 0
    %1103 = vmatprep.subr.bf16.mxu0 0
    %1104 = vmatpush2.bf16.msra.mxu0 0
    %1105 = vmatprep.subr.bf16.mxu0 0
    %1106 = vmatpush2.bf16.msra.mxu0 0
    %1107 = vmatprep.subr.bf16.mxu0 0
    %1108 = vmatpush2.bf16.msra.mxu0 0
    %1109 = vmatprep.subr.bf16.mxu0 0
    %1110 = vmatpush2.bf16.msra.mxu0 0
    %1111 = vmatprep.mubr.bf16.mxu0 0
    %1112 = vmatmul.mubr.bf16.gmra.mxu0 %v1030
    %v1113 = vpop.f32.mrf.mxu0
    %v1114 = vadd.f32 0.0, %v1113
    %v1115 = vpop.f32.mrf.mxu0
    %v1116 = vpop.f32.mrf.mxu0
    %v1117 = vpop.f32.mrf.mxu0
    %1118 = vdwg.mxu0
    %v1119 = vadd.f32 %v344, %v1114
    %v1120 = vxor.u32 %v1119, 2147483648
    %v1121 = vmul.f32 %v1120, 1.442695
    %v1122 = vpow.pop %v1121
    %v1123 = vadd.f32 %v1122, 1.0
    %v1124 = vrcp.pop %v1123
    %v1125 = vmul.f32 1.0, %v1124
    %1126 = vmatprep.subr.bf16.mxu0 0
    %1127 = vmatpush1.bf16.msra.mxu0 0
    %1128 = vmatprep.subr.bf16.mxu0 0
    %1129 = vmatpush1.bf16.msra.mxu0 0
    %1130 = vmatprep.subr.bf16.mxu0 0
    %1131 = vmatpush1.bf16.msra.mxu0 0
    %1132 = vmatprep.subr.bf16.mxu0 0
    %1133 = vmatpush1.bf16.msra.mxu0 0
    %1134 = vmatprep.subr.bf16.mxu0 0
    %1135 = vmatpush1.bf16.msra.mxu0 0
    %1136 = vmatprep.subr.bf16.mxu0 0
    %1137 = vmatpush1.bf16.msra.mxu0 0
    %1138 = vmatprep.subr.bf16.mxu0 0
    %1139 = vmatpush1.bf16.msra.mxu0 %v727
    %1140 = vmatprep.subr.bf16.mxu0 0
    %1141 = vmatpush1.bf16.msra.mxu0 %v726
    %1142 = vmatprep.subr.bf16.mxu0 0
    %1143 = vmatpush2.bf16.msra.mxu0 0
    %1144 = vmatprep.subr.bf16.mxu0 0
    %1145 = vmatpush2.bf16.msra.mxu0 0
    %1146 = vmatprep.subr.bf16.mxu0 0
    %1147 = vmatpush2.bf16.msra.mxu0 0
    %1148 = vmatprep.subr.bf16.mxu0 0
    %1149 = vmatpush2.bf16.msra.mxu0 0
    %1150 = vmatprep.subr.bf16.mxu0 0
    %1151 = vmatpush2.bf16.msra.mxu0 0
    %1152 = vmatprep.subr.bf16.mxu0 0
    %1153 = vmatpush2.bf16.msra.mxu0 0
    %1154 = vmatprep.subr.bf16.mxu0 0
    %1155 = vmatpush2.bf16.msra.mxu0 0
    %1156 = vmatprep.subr.bf16.mxu0 0
    %1157 = vmatpush2.bf16.msra.mxu0 0
    %1158 = vmatprep.mubr.bf16.mxu0 0
    %1159 = vmatmul.mubr.bf16.gmra.mxu0 %v1030
    %v1160 = vpop.f32.mrf.mxu0
    %v1161 = vadd.f32 0.0, %v1160
    %v1162 = vpop.f32.mrf.mxu0
    %v1163 = vpop.f32.mrf.mxu0
    %v1164 = vpop.f32.mrf.mxu0
    %1165 = vdwg.mxu0
    %v1166 = vadd.f32 %v450, %v1161
    %v1167 = vxor.u32 %v1166, 2147483648
    %v1168 = vmul.f32 %v1167, 1.442695
    %v1169 = vpow.pop %v1168
    %v1170 = vadd.f32 %v1169, 1.0
    %v1171 = vrcp.pop %v1170
    %v1172 = vmul.f32 1.0, %v1171
    %1173 = vmatprep.subr.bf16.mxu0 0
    %1174 = vmatpush1.bf16.msra.mxu0 0
    %1175 = vmatprep.subr.bf16.mxu0 0
    %1176 = vmatpush1.bf16.msra.mxu0 0
    %1177 = vmatprep.subr.bf16.mxu0 0
    %1178 = vmatpush1.bf16.msra.mxu0 0
    %1179 = vmatprep.subr.bf16.mxu0 0
    %1180 = vmatpush1.bf16.msra.mxu0 0
    %1181 = vmatprep.subr.bf16.mxu0 0
    %1182 = vmatpush1.bf16.msra.mxu0 0
    %1183 = vmatprep.subr.bf16.mxu0 0
    %1184 = vmatpush1.bf16.msra.mxu0 0
    %1185 = vmatprep.subr.bf16.mxu0 0
    %1186 = vmatpush1.bf16.msra.mxu0 %v786
    %1187 = vmatprep.subr.bf16.mxu0 0
    %1188 = vmatpush1.bf16.msra.mxu0 %v785
    %1189 = vmatprep.subr.bf16.mxu0 0
    %1190 = vmatpush2.bf16.msra.mxu0 0
    %1191 = vmatprep.subr.bf16.mxu0 0
    %1192 = vmatpush2.bf16.msra.mxu0 0
    %1193 = vmatprep.subr.bf16.mxu0 0
    %1194 = vmatpush2.bf16.msra.mxu0 0
    %1195 = vmatprep.subr.bf16.mxu0 0
    %1196 = vmatpush2.bf16.msra.mxu0 0
    %1197 = vmatprep.subr.bf16.mxu0 0
    %1198 = vmatpush2.bf16.msra.mxu0 0
    %1199 = vmatprep.subr.bf16.mxu0 0
    %1200 = vmatpush2.bf16.msra.mxu0 0
    %1201 = vmatprep.subr.bf16.mxu0 0
    %1202 = vmatpush2.bf16.msra.mxu0 0
    %1203 = vmatprep.subr.bf16.mxu0 0
    %1204 = vmatpush2.bf16.msra.mxu0 0
    %1205 = vmatprep.mubr.bf16.mxu0 0
    %1206 = vmatmul.mubr.bf16.gmra.mxu0 %v1030
    %v1207 = vpop.f32.mrf.mxu0
    %v1208 = vadd.f32 0.0, %v1207
    %v1209 = vpop.f32.mrf.mxu0
    %v1210 = vpop.f32.mrf.mxu0
    %v1211 = vpop.f32.mrf.mxu0
    %1212 = vdwg.mxu0
    %v1213 = vadd.f32 %v556, %v1208
    %v1214 = vtanh.pop %v1213
    %v1215 = vmul.f32 %v1125, %v1025
    %v1216 = vmul.f32 %v1078, %v1214
    %v1217 = vadd.f32 %v1215, %v1216
    %v1218 = vtanh.pop %v1217
    %v1219 = vmul.f32 %v1172, %v1218
    %v1220 = vpack.c.bf16 %v1219, %v1219
    %v1222 = vsel %vm130, %v1220, 0
    %1224 = vmatprep.subr.bf16.mxu0 0
    %1225 = vmatpush1.bf16.msra.mxu0 0
    %1226 = vmatprep.subr.bf16.mxu0 0
    %1227 = vmatpush1.bf16.msra.mxu0 0
    %1228 = vmatprep.subr.bf16.mxu0 0
    %1229 = vmatpush1.bf16.msra.mxu0 0
    %1230 = vmatprep.subr.bf16.mxu0 0
    %1231 = vmatpush1.bf16.msra.mxu0 0
    %1232 = vmatprep.subr.bf16.mxu0 0
    %1233 = vmatpush1.bf16.msra.mxu0 0
    %1234 = vmatprep.subr.bf16.mxu0 0
    %1235 = vmatpush1.bf16.msra.mxu0 0
    %1236 = vmatprep.subr.bf16.mxu0 0
    %1237 = vmatpush1.bf16.msra.mxu0 %v606
    %1238 = vmatprep.subr.bf16.mxu0 0
    %1239 = vmatpush1.bf16.msra.mxu0 %v605
    %1240 = vmatprep.subr.bf16.mxu0 0
    %1241 = vmatpush2.bf16.msra.mxu0 0
    %1242 = vmatprep.subr.bf16.mxu0 0
    %1243 = vmatpush2.bf16.msra.mxu0 0
    %1244 = vmatprep.subr.bf16.mxu0 0
    %1245 = vmatpush2.bf16.msra.mxu0 0
    %1246 = vmatprep.subr.bf16.mxu0 0
    %1247 = vmatpush2.bf16.msra.mxu0 0
    %1248 = vmatprep.subr.bf16.mxu0 0
    %1249 = vmatpush2.bf16.msra.mxu0 0
    %1250 = vmatprep.subr.bf16.mxu0 0
    %1251 = vmatpush2.bf16.msra.mxu0 0
    %1252 = vmatprep.subr.bf16.mxu0 0
    %1253 = vmatpush2.bf16.msra.mxu0 0
    %1254 = vmatprep.subr.bf16.mxu0 0
    %1255 = vmatpush2.bf16.msra.mxu0 0
    %1256 = vmatprep.mubr.bf16.mxu0 0
    %1257 = vmatmul.mubr.bf16.gmra.mxu0 %v1222
    %v1258 = vpop.f32.mrf.mxu0
    %v1259 = vadd.f32 0.0, %v1258
    %v1260 = vpop.f32.mrf.mxu0
    %v1261 = vpop.f32.mrf.mxu0
    %v1262 = vpop.f32.mrf.mxu0
    %1263 = vdwg.mxu0
    %v1264 = vadd.f32 %v241, %v1259
    %v1265 = vxor.u32 %v1264, 2147483648
    %v1266 = vmul.f32 %v1265, 1.442695
    %v1267 = vpow.pop %v1266
    %v1268 = vadd.f32 %v1267, 1.0
    %v1269 = vrcp.pop %v1268
    %v1270 = vmul.f32 1.0, %v1269
    %1271 = vmatprep.subr.bf16.mxu0 0
    %1272 = vmatpush1.bf16.msra.mxu0 0
    %1273 = vmatprep.subr.bf16.mxu0 0
    %1274 = vmatpush1.bf16.msra.mxu0 0
    %1275 = vmatprep.subr.bf16.mxu0 0
    %1276 = vmatpush1.bf16.msra.mxu0 0
    %1277 = vmatprep.subr.bf16.mxu0 0
    %1278 = vmatpush1.bf16.msra.mxu0 0
    %1279 = vmatprep.subr.bf16.mxu0 0
    %1280 = vmatpush1.bf16.msra.mxu0 0
    %1281 = vmatprep.subr.bf16.mxu0 0
    %1282 = vmatpush1.bf16.msra.mxu0 0
    %1283 = vmatprep.subr.bf16.mxu0 0
    %1284 = vmatpush1.bf16.msra.mxu0 %v668
    %1285 = vmatprep.subr.bf16.mxu0 0
    %1286 = vmatpush1.bf16.msra.mxu0 %v667
    %1287 = vmatprep.subr.bf16.mxu0 0
    %1288 = vmatpush2.bf16.msra.mxu0 0
    %1289 = vmatprep.subr.bf16.mxu0 0
    %1290 = vmatpush2.bf16.msra.mxu0 0
    %1291 = vmatprep.subr.bf16.mxu0 0
    %1292 = vmatpush2.bf16.msra.mxu0 0
    %1293 = vmatprep.subr.bf16.mxu0 0
    %1294 = vmatpush2.bf16.msra.mxu0 0
    %1295 = vmatprep.subr.bf16.mxu0 0
    %1296 = vmatpush2.bf16.msra.mxu0 0
    %1297 = vmatprep.subr.bf16.mxu0 0
    %1298 = vmatpush2.bf16.msra.mxu0 0
    %1299 = vmatprep.subr.bf16.mxu0 0
    %1300 = vmatpush2.bf16.msra.mxu0 0
    %1301 = vmatprep.subr.bf16.mxu0 0
    %1302 = vmatpush2.bf16.msra.mxu0 0
    %1303 = vmatprep.mubr.bf16.mxu0 0
    %1304 = vmatmul.mubr.bf16.gmra.mxu0 %v1222
    %v1305 = vpop.f32.mrf.mxu0
    %v1306 = vadd.f32 0.0, %v1305
    %v1307 = vpop.f32.mrf.mxu0
    %v1308 = vpop.f32.mrf.mxu0
    %v1309 = vpop.f32.mrf.mxu0
    %1310 = vdwg.mxu0
    %v1311 = vadd.f32 %v347, %v1306
    %v1312 = vxor.u32 %v1311, 2147483648
    %v1313 = vmul.f32 %v1312, 1.442695
    %v1314 = vpow.pop %v1313
    %v1315 = vadd.f32 %v1314, 1.0
    %v1316 = vrcp.pop %v1315
    %v1317 = vmul.f32 1.0, %v1316
    %1318 = vmatprep.subr.bf16.mxu0 0
    %1319 = vmatpush1.bf16.msra.mxu0 0
    %1320 = vmatprep.subr.bf16.mxu0 0
    %1321 = vmatpush1.bf16.msra.mxu0 0
    %1322 = vmatprep.subr.bf16.mxu0 0
    %1323 = vmatpush1.bf16.msra.mxu0 0
    %1324 = vmatprep.subr.bf16.mxu0 0
    %1325 = vmatpush1.bf16.msra.mxu0 0
    %1326 = vmatprep.subr.bf16.mxu0 0
    %1327 = vmatpush1.bf16.msra.mxu0 0
    %1328 = vmatprep.subr.bf16.mxu0 0
    %1329 = vmatpush1.bf16.msra.mxu0 0
    %1330 = vmatprep.subr.bf16.mxu0 0
    %1331 = vmatpush1.bf16.msra.mxu0 %v727
    %1332 = vmatprep.subr.bf16.mxu0 0
    %1333 = vmatpush1.bf16.msra.mxu0 %v726
    %1334 = vmatprep.subr.bf16.mxu0 0
    %1335 = vmatpush2.bf16.msra.mxu0 0
    %1336 = vmatprep.subr.bf16.mxu0 0
    %1337 = vmatpush2.bf16.msra.mxu0 0
    %1338 = vmatprep.subr.bf16.mxu0 0
    %1339 = vmatpush2.bf16.msra.mxu0 0
    %1340 = vmatprep.subr.bf16.mxu0 0
    %1341 = vmatpush2.bf16.msra.mxu0 0
    %1342 = vmatprep.subr.bf16.mxu0 0
    %1343 = vmatpush2.bf16.msra.mxu0 0
    %1344 = vmatprep.subr.bf16.mxu0 0
    %1345 = vmatpush2.bf16.msra.mxu0 0
    %1346 = vmatprep.subr.bf16.mxu0 0
    %1347 = vmatpush2.bf16.msra.mxu0 0
    %1348 = vmatprep.subr.bf16.mxu0 0
    %1349 = vmatpush2.bf16.msra.mxu0 0
    %1350 = vmatprep.mubr.bf16.mxu0 0
    %1351 = vmatmul.mubr.bf16.gmra.mxu0 %v1222
    %v1352 = vpop.f32.mrf.mxu0
    %v1353 = vadd.f32 0.0, %v1352
    %v1354 = vpop.f32.mrf.mxu0
    %v1355 = vpop.f32.mrf.mxu0
    %v1356 = vpop.f32.mrf.mxu0
    %1357 = vdwg.mxu0
    %v1358 = vadd.f32 %v453, %v1353
    %v1359 = vxor.u32 %v1358, 2147483648
    %v1360 = vmul.f32 %v1359, 1.442695
    %v1361 = vpow.pop %v1360
    %v1362 = vadd.f32 %v1361, 1.0
    %v1363 = vrcp.pop %v1362
    %v1364 = vmul.f32 1.0, %v1363
    %1365 = vmatprep.subr.bf16.mxu0 0
    %1366 = vmatpush1.bf16.msra.mxu0 0
    %1367 = vmatprep.subr.bf16.mxu0 0
    %1368 = vmatpush1.bf16.msra.mxu0 0
    %1369 = vmatprep.subr.bf16.mxu0 0
    %1370 = vmatpush1.bf16.msra.mxu0 0
    %1371 = vmatprep.subr.bf16.mxu0 0
    %1372 = vmatpush1.bf16.msra.mxu0 0
    %1373 = vmatprep.subr.bf16.mxu0 0
    %1374 = vmatpush1.bf16.msra.mxu0 0
    %1375 = vmatprep.subr.bf16.mxu0 0
    %1376 = vmatpush1.bf16.msra.mxu0 0
    %1377 = vmatprep.subr.bf16.mxu0 0
    %1378 = vmatpush1.bf16.msra.mxu0 %v786
    %1379 = vmatprep.subr.bf16.mxu0 0
    %1380 = vmatpush1.bf16.msra.mxu0 %v785
    %1381 = vmatprep.subr.bf16.mxu0 0
    %1382 = vmatpush2.bf16.msra.mxu0 0
    %1383 = vmatprep.subr.bf16.mxu0 0
    %1384 = vmatpush2.bf16.msra.mxu0 0
    %1385 = vmatprep.subr.bf16.mxu0 0
    %1386 = vmatpush2.bf16.msra.mxu0 0
    %1387 = vmatprep.subr.bf16.mxu0 0
    %1388 = vmatpush2.bf16.msra.mxu0 0
    %1389 = vmatprep.subr.bf16.mxu0 0
    %1390 = vmatpush2.bf16.msra.mxu0 0
    %1391 = vmatprep.subr.bf16.mxu0 0
    %1392 = vmatpush2.bf16.msra.mxu0 0
    %1393 = vmatprep.subr.bf16.mxu0 0
    %1394 = vmatpush2.bf16.msra.mxu0 0
    %1395 = vmatprep.subr.bf16.mxu0 0
    %1396 = vmatpush2.bf16.msra.mxu0 0
    %1397 = vmatprep.mubr.bf16.mxu0 0
    %1398 = vmatmul.mubr.bf16.gmra.mxu0 %v1222
    %v1399 = vpop.f32.mrf.mxu0
    %v1400 = vadd.f32 0.0, %v1399
    %v1401 = vpop.f32.mrf.mxu0
    %v1402 = vpop.f32.mrf.mxu0
    %v1403 = vpop.f32.mrf.mxu0
    %1404 = vdwg.mxu0
    %v1405 = vadd.f32 %v559, %v1400
    %v1406 = vtanh.pop %v1405
    %v1407 = vmul.f32 %v1317, %v1217
    %v1408 = vmul.f32 %v1270, %v1406
    %v1409 = vadd.f32 %v1407, %v1408
    %v1410 = vtanh.pop %v1409
    %v1411 = vmul.f32 %v1364, %v1410
    %v1412 = vpack.c.bf16 %v1411, %v1411
    %v1414 = vsel %vm130, %v1412, 0
    %1416 = vmatprep.subr.bf16.mxu0 0
    %1417 = vmatpush1.bf16.msra.mxu0 0
    %1418 = vmatprep.subr.bf16.mxu0 0
    %1419 = vmatpush1.bf16.msra.mxu0 0
    %1420 = vmatprep.subr.bf16.mxu0 0
    %1421 = vmatpush1.bf16.msra.mxu0 0
    %1422 = vmatprep.subr.bf16.mxu0 0
    %1423 = vmatpush1.bf16.msra.mxu0 0
    %1424 = vmatprep.subr.bf16.mxu0 0
    %1425 = vmatpush1.bf16.msra.mxu0 0
    %1426 = vmatprep.subr.bf16.mxu0 0
    %1427 = vmatpush1.bf16.msra.mxu0 0
    %1428 = vmatprep.subr.bf16.mxu0 0
    %1429 = vmatpush1.bf16.msra.mxu0 %v606
    %1430 = vmatprep.subr.bf16.mxu0 0
    %1431 = vmatpush1.bf16.msra.mxu0 %v605
    %1432 = vmatprep.subr.bf16.mxu0 0
    %1433 = vmatpush2.bf16.msra.mxu0 0
    %1434 = vmatprep.subr.bf16.mxu0 0
    %1435 = vmatpush2.bf16.msra.mxu0 0
    %1436 = vmatprep.subr.bf16.mxu0 0
    %1437 = vmatpush2.bf16.msra.mxu0 0
    %1438 = vmatprep.subr.bf16.mxu0 0
    %1439 = vmatpush2.bf16.msra.mxu0 0
    %1440 = vmatprep.subr.bf16.mxu0 0
    %1441 = vmatpush2.bf16.msra.mxu0 0
    %1442 = vmatprep.subr.bf16.mxu0 0
    %1443 = vmatpush2.bf16.msra.mxu0 0
    %1444 = vmatprep.subr.bf16.mxu0 0
    %1445 = vmatpush2.bf16.msra.mxu0 0
    %1446 = vmatprep.subr.bf16.mxu0 0
    %1447 = vmatpush2.bf16.msra.mxu0 0
    %1448 = vmatprep.mubr.bf16.mxu0 0
    %1449 = vmatmul.mubr.bf16.gmra.mxu0 %v1414
    %v1450 = vpop.f32.mrf.mxu0
    %v1451 = vadd.f32 0.0, %v1450
    %v1452 = vpop.f32.mrf.mxu0
    %v1453 = vpop.f32.mrf.mxu0
    %v1454 = vpop.f32.mrf.mxu0
    %1455 = vdwg.mxu0
    %v1456 = vadd.f32 %v246, %v1451
    %v1457 = vxor.u32 %v1456, 2147483648
    %v1458 = vmul.f32 %v1457, 1.442695
    %v1459 = vpow.pop %v1458
    %v1460 = vadd.f32 %v1459, 1.0
    %v1461 = vrcp.pop %v1460
    %v1462 = vmul.f32 1.0, %v1461
    %1463 = vmatprep.subr.bf16.mxu0 0
    %1464 = vmatpush1.bf16.msra.mxu0 0
    %1465 = vmatprep.subr.bf16.mxu0 0
    %1466 = vmatpush1.bf16.msra.mxu0 0
    %1467 = vmatprep.subr.bf16.mxu0 0
    %1468 = vmatpush1.bf16.msra.mxu0 0
    %1469 = vmatprep.subr.bf16.mxu0 0
    %1470 = vmatpush1.bf16.msra.mxu0 0
    %1471 = vmatprep.subr.bf16.mxu0 0
    %1472 = vmatpush1.bf16.msra.mxu0 0
    %1473 = vmatprep.subr.bf16.mxu0 0
    %1474 = vmatpush1.bf16.msra.mxu0 0
    %1475 = vmatprep.subr.bf16.mxu0 0
    %1476 = vmatpush1.bf16.msra.mxu0 %v668
    %1477 = vmatprep.subr.bf16.mxu0 0
    %1478 = vmatpush1.bf16.msra.mxu0 %v667
    %1479 = vmatprep.subr.bf16.mxu0 0
    %1480 = vmatpush2.bf16.msra.mxu0 0
    %1481 = vmatprep.subr.bf16.mxu0 0
    %1482 = vmatpush2.bf16.msra.mxu0 0
    %1483 = vmatprep.subr.bf16.mxu0 0
    %1484 = vmatpush2.bf16.msra.mxu0 0
    %1485 = vmatprep.subr.bf16.mxu0 0
    %1486 = vmatpush2.bf16.msra.mxu0 0
    %1487 = vmatprep.subr.bf16.mxu0 0
    %1488 = vmatpush2.bf16.msra.mxu0 0
    %1489 = vmatprep.subr.bf16.mxu0 0
    %1490 = vmatpush2.bf16.msra.mxu0 0
    %1491 = vmatprep.subr.bf16.mxu0 0
    %1492 = vmatpush2.bf16.msra.mxu0 0
    %1493 = vmatprep.subr.bf16.mxu0 0
    %1494 = vmatpush2.bf16.msra.mxu0 0
    %1495 = vmatprep.mubr.bf16.mxu0 0
    %1496 = vmatmul.mubr.bf16.gmra.mxu0 %v1414
    %v1497 = vpop.f32.mrf.mxu0
    %v1498 = vadd.f32 0.0, %v1497
    %v1499 = vpop.f32.mrf.mxu0
    %v1500 = vpop.f32.mrf.mxu0
    %v1501 = vpop.f32.mrf.mxu0
    %1502 = vdwg.mxu0
    %v1503 = vadd.f32 %v352, %v1498
    %v1504 = vxor.u32 %v1503, 2147483648
    %v1505 = vmul.f32 %v1504, 1.442695
    %v1506 = vpow.pop %v1505
    %v1507 = vadd.f32 %v1506, 1.0
    %v1508 = vrcp.pop %v1507
    %v1509 = vmul.f32 1.0, %v1508
    %1510 = vmatprep.subr.bf16.mxu0 0
    %1511 = vmatpush1.bf16.msra.mxu0 0
    %1512 = vmatprep.subr.bf16.mxu0 0
    %1513 = vmatpush1.bf16.msra.mxu0 0
    %1514 = vmatprep.subr.bf16.mxu0 0
    %1515 = vmatpush1.bf16.msra.mxu0 0
    %1516 = vmatprep.subr.bf16.mxu0 0
    %1517 = vmatpush1.bf16.msra.mxu0 0
    %1518 = vmatprep.subr.bf16.mxu0 0
    %1519 = vmatpush1.bf16.msra.mxu0 0
    %1520 = vmatprep.subr.bf16.mxu0 0
    %1521 = vmatpush1.bf16.msra.mxu0 0
    %1522 = vmatprep.subr.bf16.mxu0 0
    %1523 = vmatpush1.bf16.msra.mxu0 %v727
    %1524 = vmatprep.subr.bf16.mxu0 0
    %1525 = vmatpush1.bf16.msra.mxu0 %v726
    %1526 = vmatprep.subr.bf16.mxu0 0
    %1527 = vmatpush2.bf16.msra.mxu0 0
    %1528 = vmatprep.subr.bf16.mxu0 0
    %1529 = vmatpush2.bf16.msra.mxu0 0
    %1530 = vmatprep.subr.bf16.mxu0 0
    %1531 = vmatpush2.bf16.msra.mxu0 0
    %1532 = vmatprep.subr.bf16.mxu0 0
    %1533 = vmatpush2.bf16.msra.mxu0 0
    %1534 = vmatprep.subr.bf16.mxu0 0
    %1535 = vmatpush2.bf16.msra.mxu0 0
    %1536 = vmatprep.subr.bf16.mxu0 0
    %1537 = vmatpush2.bf16.msra.mxu0 0
    %1538 = vmatprep.subr.bf16.mxu0 0
    %1539 = vmatpush2.bf16.msra.mxu0 0
    %1540 = vmatprep.subr.bf16.mxu0 0
    %1541 = vmatpush2.bf16.msra.mxu0 0
    %1542 = vmatprep.mubr.bf16.mxu0 0
    %1543 = vmatmul.mubr.bf16.gmra.mxu0 %v1414
    %v1544 = vpop.f32.mrf.mxu0
    %v1545 = vadd.f32 0.0, %v1544
    %v1546 = vpop.f32.mrf.mxu0
    %v1547 = vpop.f32.mrf.mxu0
    %v1548 = vpop.f32.mrf.mxu0
    %1549 = vdwg.mxu0
    %v1550 = vadd.f32 %v458, %v1545
    %v1551 = vxor.u32 %v1550, 2147483648
    %v1552 = vmul.f32 %v1551, 1.442695
    %v1553 = vpow.pop %v1552
    %v1554 = vadd.f32 %v1553, 1.0
    %v1555 = vrcp.pop %v1554
    %v1556 = vmul.f32 1.0, %v1555
    %1557 = vmatprep.subr.bf16.mxu0 0
    %1558 = vmatpush1.bf16.msra.mxu0 0
    %1559 = vmatprep.subr.bf16.mxu0 0
    %1560 = vmatpush1.bf16.msra.mxu0 0
    %1561 = vmatprep.subr.bf16.mxu0 0
    %1562 = vmatpush1.bf16.msra.mxu0 0
    %1563 = vmatprep.subr.bf16.mxu0 0
    %1564 = vmatpush1.bf16.msra.mxu0 0
    %1565 = vmatprep.subr.bf16.mxu0 0
    %1566 = vmatpush1.bf16.msra.mxu0 0
    %1567 = vmatprep.subr.bf16.mxu0 0
    %1568 = vmatpush1.bf16.msra.mxu0 0
    %1569 = vmatprep.subr.bf16.mxu0 0
    %1570 = vmatpush1.bf16.msra.mxu0 %v786
    %1571 = vmatprep.subr.bf16.mxu0 0
    %1572 = vmatpush1.bf16.msra.mxu0 %v785
    %1573 = vmatprep.subr.bf16.mxu0 0
    %1574 = vmatpush2.bf16.msra.mxu0 0
    %1575 = vmatprep.subr.bf16.mxu0 0
    %1576 = vmatpush2.bf16.msra.mxu0 0
    %1577 = vmatprep.subr.bf16.mxu0 0
    %1578 = vmatpush2.bf16.msra.mxu0 0
    %1579 = vmatprep.subr.bf16.mxu0 0
    %1580 = vmatpush2.bf16.msra.mxu0 0
    %1581 = vmatprep.subr.bf16.mxu0 0
    %1582 = vmatpush2.bf16.msra.mxu0 0
    %1583 = vmatprep.subr.bf16.mxu0 0
    %1584 = vmatpush2.bf16.msra.mxu0 0
    %1585 = vmatprep.subr.bf16.mxu0 0
    %1586 = vmatpush2.bf16.msra.mxu0 0
    %1587 = vmatprep.subr.bf16.mxu0 0
    %1588 = vmatpush2.bf16.msra.mxu0 0
    %1589 = vmatprep.mubr.bf16.mxu0 0
    %1590 = vmatmul.mubr.bf16.gmra.mxu0 %v1414
    %v1591 = vpop.f32.mrf.mxu0
    %v1592 = vadd.f32 0.0, %v1591
    %v1593 = vpop.f32.mrf.mxu0
    %v1594 = vpop.f32.mrf.mxu0
    %v1595 = vpop.f32.mrf.mxu0
    %1596 = vdwg.mxu0
    %v1597 = vadd.f32 %v564, %v1592
    %v1598 = vtanh.pop %v1597
    %v1599 = vmul.f32 %v1509, %v1409
    %v1600 = vmul.f32 %v1462, %v1598
    %v1601 = vadd.f32 %v1599, %v1600
    %v1602 = vtanh.pop %v1601
    %v1603 = vmul.f32 %v1556, %v1602
    %v1604 = vpack.c.bf16 %v1603, %v1603
    %v1606 = vsel %vm130, %v1604, 0
    %1608 = vmatprep.subr.bf16.mxu0 0
    %1609 = vmatpush1.bf16.msra.mxu0 0
    %1610 = vmatprep.subr.bf16.mxu0 0
    %1611 = vmatpush1.bf16.msra.mxu0 0
    %1612 = vmatprep.subr.bf16.mxu0 0
    %1613 = vmatpush1.bf16.msra.mxu0 0
    %1614 = vmatprep.subr.bf16.mxu0 0
    %1615 = vmatpush1.bf16.msra.mxu0 0
    %1616 = vmatprep.subr.bf16.mxu0 0
    %1617 = vmatpush1.bf16.msra.mxu0 0
    %1618 = vmatprep.subr.bf16.mxu0 0
    %1619 = vmatpush1.bf16.msra.mxu0 0
    %1620 = vmatprep.subr.bf16.mxu0 0
    %1621 = vmatpush1.bf16.msra.mxu0 %v606
    %1622 = vmatprep.subr.bf16.mxu0 0
    %1623 = vmatpush1.bf16.msra.mxu0 %v605
    %1624 = vmatprep.subr.bf16.mxu0 0
    %1625 = vmatpush2.bf16.msra.mxu0 0
    %1626 = vmatprep.subr.bf16.mxu0 0
    %1627 = vmatpush2.bf16.msra.mxu0 0
    %1628 = vmatprep.subr.bf16.mxu0 0
    %1629 = vmatpush2.bf16.msra.mxu0 0
    %1630 = vmatprep.subr.bf16.mxu0 0
    %1631 = vmatpush2.bf16.msra.mxu0 0
    %1632 = vmatprep.subr.bf16.mxu0 0
    %1633 = vmatpush2.bf16.msra.mxu0 0
    %1634 = vmatprep.subr.bf16.mxu0 0
    %1635 = vmatpush2.bf16.msra.mxu0 0
    %1636 = vmatprep.subr.bf16.mxu0 0
    %1637 = vmatpush2.bf16.msra.mxu0 0
    %1638 = vmatprep.subr.bf16.mxu0 0
    %1639 = vmatpush2.bf16.msra.mxu0 0
    %1640 = vmatprep.mubr.bf16.mxu0 0
    %1641 = vmatmul.mubr.bf16.gmra.mxu0 %v1606
    %v1642 = vpop.f32.mrf.mxu0
    %v1643 = vadd.f32 0.0, %v1642
    %v1644 = vpop.f32.mrf.mxu0
    %v1645 = vpop.f32.mrf.mxu0
    %v1646 = vpop.f32.mrf.mxu0
    %1647 = vdwg.mxu0
    %v1648 = vadd.f32 %v249, %v1643
    %v1649 = vxor.u32 %v1648, 2147483648
    %v1650 = vmul.f32 %v1649, 1.442695
    %v1651 = vpow.pop %v1650
    %v1652 = vadd.f32 %v1651, 1.0
    %v1653 = vrcp.pop %v1652
    %v1654 = vmul.f32 1.0, %v1653
    %1655 = vmatprep.subr.bf16.mxu0 0
    %1656 = vmatpush1.bf16.msra.mxu0 0
    %1657 = vmatprep.subr.bf16.mxu0 0
    %1658 = vmatpush1.bf16.msra.mxu0 0
    %1659 = vmatprep.subr.bf16.mxu0 0
    %1660 = vmatpush1.bf16.msra.mxu0 0
    %1661 = vmatprep.subr.bf16.mxu0 0
    %1662 = vmatpush1.bf16.msra.mxu0 0
    %1663 = vmatprep.subr.bf16.mxu0 0
    %1664 = vmatpush1.bf16.msra.mxu0 0
    %1665 = vmatprep.subr.bf16.mxu0 0
    %1666 = vmatpush1.bf16.msra.mxu0 0
    %1667 = vmatprep.subr.bf16.mxu0 0
    %1668 = vmatpush1.bf16.msra.mxu0 %v668
    %1669 = vmatprep.subr.bf16.mxu0 0
    %1670 = vmatpush1.bf16.msra.mxu0 %v667
    %1671 = vmatprep.subr.bf16.mxu0 0
    %1672 = vmatpush2.bf16.msra.mxu0 0
    %1673 = vmatprep.subr.bf16.mxu0 0
    %1674 = vmatpush2.bf16.msra.mxu0 0
    %1675 = vmatprep.subr.bf16.mxu0 0
    %1676 = vmatpush2.bf16.msra.mxu0 0
    %1677 = vmatprep.subr.bf16.mxu0 0
    %1678 = vmatpush2.bf16.msra.mxu0 0
    %1679 = vmatprep.subr.bf16.mxu0 0
    %1680 = vmatpush2.bf16.msra.mxu0 0
    %1681 = vmatprep.subr.bf16.mxu0 0
    %1682 = vmatpush2.bf16.msra.mxu0 0
    %1683 = vmatprep.subr.bf16.mxu0 0
    %1684 = vmatpush2.bf16.msra.mxu0 0
    %1685 = vmatprep.subr.bf16.mxu0 0
    %1686 = vmatpush2.bf16.msra.mxu0 0
    %1687 = vmatprep.mubr.bf16.mxu0 0
    %1688 = vmatmul.mubr.bf16.gmra.mxu0 %v1606
    %v1689 = vpop.f32.mrf.mxu0
    %v1690 = vadd.f32 0.0, %v1689
    %v1691 = vpop.f32.mrf.mxu0
    %v1692 = vpop.f32.mrf.mxu0
    %v1693 = vpop.f32.mrf.mxu0
    %1694 = vdwg.mxu0
    %v1695 = vadd.f32 %v355, %v1690
    %v1696 = vxor.u32 %v1695, 2147483648
    %v1697 = vmul.f32 %v1696, 1.442695
    %v1698 = vpow.pop %v1697
    %v1699 = vadd.f32 %v1698, 1.0
    %v1700 = vrcp.pop %v1699
    %v1701 = vmul.f32 1.0, %v1700
    %1702 = vmatprep.subr.bf16.mxu0 0
    %1703 = vmatpush1.bf16.msra.mxu0 0
    %1704 = vmatprep.subr.bf16.mxu0 0
    %1705 = vmatpush1.bf16.msra.mxu0 0
    %1706 = vmatprep.subr.bf16.mxu0 0
    %1707 = vmatpush1.bf16.msra.mxu0 0
    %1708 = vmatprep.subr.bf16.mxu0 0
    %1709 = vmatpush1.bf16.msra.mxu0 0
    %1710 = vmatprep.subr.bf16.mxu0 0
    %1711 = vmatpush1.bf16.msra.mxu0 0
    %1712 = vmatprep.subr.bf16.mxu0 0
    %1713 = vmatpush1.bf16.msra.mxu0 0
    %1714 = vmatprep.subr.bf16.mxu0 0
    %1715 = vmatpush1.bf16.msra.mxu0 %v727
    %1716 = vmatprep.subr.bf16.mxu0 0
    %1717 = vmatpush1.bf16.msra.mxu0 %v726
    %1718 = vmatprep.subr.bf16.mxu0 0
    %1719 = vmatpush2.bf16.msra.mxu0 0
    %1720 = vmatprep.subr.bf16.mxu0 0
    %1721 = vmatpush2.bf16.msra.mxu0 0
    %1722 = vmatprep.subr.bf16.mxu0 0
    %1723 = vmatpush2.bf16.msra.mxu0 0
    %1724 = vmatprep.subr.bf16.mxu0 0
    %1725 = vmatpush2.bf16.msra.mxu0 0
    %1726 = vmatprep.subr.bf16.mxu0 0
    %1727 = vmatpush2.bf16.msra.mxu0 0
    %1728 = vmatprep.subr.bf16.mxu0 0
    %1729 = vmatpush2.bf16.msra.mxu0 0
    %1730 = vmatprep.subr.bf16.mxu0 0
    %1731 = vmatpush2.bf16.msra.mxu0 0
    %1732 = vmatprep.subr.bf16.mxu0 0
    %1733 = vmatpush2.bf16.msra.mxu0 0
    %1734 = vmatprep.mubr.bf16.mxu0 0
    %1735 = vmatmul.mubr.bf16.gmra.mxu0 %v1606
    %v1736 = vpop.f32.mrf.mxu0
    %v1737 = vadd.f32 0.0, %v1736
    %v1738 = vpop.f32.mrf.mxu0
    %v1739 = vpop.f32.mrf.mxu0
    %v1740 = vpop.f32.mrf.mxu0
    %1741 = vdwg.mxu0
    %v1742 = vadd.f32 %v461, %v1737
    %v1743 = vxor.u32 %v1742, 2147483648
    %v1744 = vmul.f32 %v1743, 1.442695
    %v1745 = vpow.pop %v1744
    %v1746 = vadd.f32 %v1745, 1.0
    %v1747 = vrcp.pop %v1746
    %v1748 = vmul.f32 1.0, %v1747
    %1749 = vmatprep.subr.bf16.mxu0 0
    %1750 = vmatpush1.bf16.msra.mxu0 0
    %1751 = vmatprep.subr.bf16.mxu0 0
    %1752 = vmatpush1.bf16.msra.mxu0 0
    %1753 = vmatprep.subr.bf16.mxu0 0
    %1754 = vmatpush1.bf16.msra.mxu0 0
    %1755 = vmatprep.subr.bf16.mxu0 0
    %1756 = vmatpush1.bf16.msra.mxu0 0
    %1757 = vmatprep.subr.bf16.mxu0 0
    %1758 = vmatpush1.bf16.msra.mxu0 0
    %1759 = vmatprep.subr.bf16.mxu0 0
    %1760 = vmatpush1.bf16.msra.mxu0 0
    %1761 = vmatprep.subr.bf16.mxu0 0
    %1762 = vmatpush1.bf16.msra.mxu0 %v786
    %1763 = vmatprep.subr.bf16.mxu0 0
    %1764 = vmatpush1.bf16.msra.mxu0 %v785
    %1765 = vmatprep.subr.bf16.mxu0 0
    %1766 = vmatpush2.bf16.msra.mxu0 0
    %1767 = vmatprep.subr.bf16.mxu0 0
    %1768 = vmatpush2.bf16.msra.mxu0 0
    %1769 = vmatprep.subr.bf16.mxu0 0
    %1770 = vmatpush2.bf16.msra.mxu0 0
    %1771 = vmatprep.subr.bf16.mxu0 0
    %1772 = vmatpush2.bf16.msra.mxu0 0
    %1773 = vmatprep.subr.bf16.mxu0 0
    %1774 = vmatpush2.bf16.msra.mxu0 0
    %1775 = vmatprep.subr.bf16.mxu0 0
    %1776 = vmatpush2.bf16.msra.mxu0 0
    %1777 = vmatprep.subr.bf16.mxu0 0
    %1778 = vmatpush2.bf16.msra.mxu0 0
    %1779 = vmatprep.subr.bf16.mxu0 0
    %1780 = vmatpush2.bf16.msra.mxu0 0
    %1781 = vmatprep.mubr.bf16.mxu0 0
    %1782 = vmatmul.mubr.bf16.gmra.mxu0 %v1606
    %v1783 = vpop.f32.mrf.mxu0
    %v1784 = vadd.f32 0.0, %v1783
    %v1785 = vpop.f32.mrf.mxu0
    %v1786 = vpop.f32.mrf.mxu0
    %v1787 = vpop.f32.mrf.mxu0
    %1788 = vdwg.mxu0
    %v1789 = vadd.f32 %v567, %v1784
    %v1790 = vtanh.pop %v1789
    %v1791 = vmul.f32 %v1701, %v1601
    %v1792 = vmul.f32 %v1654, %v1790
    %v1793 = vadd.f32 %v1791, %v1792
    %v1794 = vtanh.pop %v1793
    %v1795 = vmul.f32 %v1748, %v1794
    %v1796 = vpack.c.bf16 %v1795, %v1795
    %v1798 = vsel %vm130, %v1796, 0
    %1800 = vmatprep.subr.bf16.mxu0 0
    %1801 = vmatpush1.bf16.msra.mxu0 0
    %1802 = vmatprep.subr.bf16.mxu0 0
    %1803 = vmatpush1.bf16.msra.mxu0 0
    %1804 = vmatprep.subr.bf16.mxu0 0
    %1805 = vmatpush1.bf16.msra.mxu0 0
    %1806 = vmatprep.subr.bf16.mxu0 0
    %1807 = vmatpush1.bf16.msra.mxu0 0
    %1808 = vmatprep.subr.bf16.mxu0 0
    %1809 = vmatpush1.bf16.msra.mxu0 0
    %1810 = vmatprep.subr.bf16.mxu0 0
    %1811 = vmatpush1.bf16.msra.mxu0 0
    %1812 = vmatprep.subr.bf16.mxu0 0
    %1813 = vmatpush1.bf16.msra.mxu0 %v606
    %1814 = vmatprep.subr.bf16.mxu0 0
    %1815 = vmatpush1.bf16.msra.mxu0 %v605
    %1816 = vmatprep.subr.bf16.mxu0 0
    %1817 = vmatpush2.bf16.msra.mxu0 0
    %1818 = vmatprep.subr.bf16.mxu0 0
    %1819 = vmatpush2.bf16.msra.mxu0 0
    %1820 = vmatprep.subr.bf16.mxu0 0
    %1821 = vmatpush2.bf16.msra.mxu0 0
    %1822 = vmatprep.subr.bf16.mxu0 0
    %1823 = vmatpush2.bf16.msra.mxu0 0
    %1824 = vmatprep.subr.bf16.mxu0 0
    %1825 = vmatpush2.bf16.msra.mxu0 0
    %1826 = vmatprep.subr.bf16.mxu0 0
    %1827 = vmatpush2.bf16.msra.mxu0 0
    %1828 = vmatprep.subr.bf16.mxu0 0
    %1829 = vmatpush2.bf16.msra.mxu0 0
    %1830 = vmatprep.subr.bf16.mxu0 0
    %1831 = vmatpush2.bf16.msra.mxu0 0
    %1832 = vmatprep.mubr.bf16.mxu0 0
    %1833 = vmatmul.mubr.bf16.gmra.mxu0 %v1798
    %v1834 = vpop.f32.mrf.mxu0
    %v1835 = vadd.f32 0.0, %v1834
    %v1836 = vpop.f32.mrf.mxu0
    %v1837 = vpop.f32.mrf.mxu0
    %v1838 = vpop.f32.mrf.mxu0
    %1839 = vdwg.mxu0
    %v1840 = vadd.f32 %v254, %v1835
    %v1841 = vxor.u32 %v1840, 2147483648
    %v1842 = vmul.f32 %v1841, 1.442695
    %v1843 = vpow.pop %v1842
    %v1844 = vadd.f32 %v1843, 1.0
    %v1845 = vrcp.pop %v1844
    %v1846 = vmul.f32 1.0, %v1845
    %1847 = vmatprep.subr.bf16.mxu0 0
    %1848 = vmatpush1.bf16.msra.mxu0 0
    %1849 = vmatprep.subr.bf16.mxu0 0
    %1850 = vmatpush1.bf16.msra.mxu0 0
    %1851 = vmatprep.subr.bf16.mxu0 0
    %1852 = vmatpush1.bf16.msra.mxu0 0
    %1853 = vmatprep.subr.bf16.mxu0 0
    %1854 = vmatpush1.bf16.msra.mxu0 0
    %1855 = vmatprep.subr.bf16.mxu0 0
    %1856 = vmatpush1.bf16.msra.mxu0 0
    %1857 = vmatprep.subr.bf16.mxu0 0
    %1858 = vmatpush1.bf16.msra.mxu0 0
    %1859 = vmatprep.subr.bf16.mxu0 0
    %1860 = vmatpush1.bf16.msra.mxu0 %v668
    %1861 = vmatprep.subr.bf16.mxu0 0
    %1862 = vmatpush1.bf16.msra.mxu0 %v667
    %1863 = vmatprep.subr.bf16.mxu0 0
    %1864 = vmatpush2.bf16.msra.mxu0 0
    %1865 = vmatprep.subr.bf16.mxu0 0
    %1866 = vmatpush2.bf16.msra.mxu0 0
    %1867 = vmatprep.subr.bf16.mxu0 0
    %1868 = vmatpush2.bf16.msra.mxu0 0
    %1869 = vmatprep.subr.bf16.mxu0 0
    %1870 = vmatpush2.bf16.msra.mxu0 0
    %1871 = vmatprep.subr.bf16.mxu0 0
    %1872 = vmatpush2.bf16.msra.mxu0 0
    %1873 = vmatprep.subr.bf16.mxu0 0
    %1874 = vmatpush2.bf16.msra.mxu0 0
    %1875 = vmatprep.subr.bf16.mxu0 0
    %1876 = vmatpush2.bf16.msra.mxu0 0
    %1877 = vmatprep.subr.bf16.mxu0 0
    %1878 = vmatpush2.bf16.msra.mxu0 0
    %1879 = vmatprep.mubr.bf16.mxu0 0
    %1880 = vmatmul.mubr.bf16.gmra.mxu0 %v1798
    %v1881 = vpop.f32.mrf.mxu0
    %v1882 = vadd.f32 0.0, %v1881
    %v1883 = vpop.f32.mrf.mxu0
    %v1884 = vpop.f32.mrf.mxu0
    %v1885 = vpop.f32.mrf.mxu0
    %1886 = vdwg.mxu0
    %v1887 = vadd.f32 %v360, %v1882
    %v1888 = vxor.u32 %v1887, 2147483648
    %v1889 = vmul.f32 %v1888, 1.442695
    %v1890 = vpow.pop %v1889
    %v1891 = vadd.f32 %v1890, 1.0
    %v1892 = vrcp.pop %v1891
    %v1893 = vmul.f32 1.0, %v1892
    %1894 = vmatprep.subr.bf16.mxu0 0
    %1895 = vmatpush1.bf16.msra.mxu0 0
    %1896 = vmatprep.subr.bf16.mxu0 0
    %1897 = vmatpush1.bf16.msra.mxu0 0
    %1898 = vmatprep.subr.bf16.mxu0 0
    %1899 = vmatpush1.bf16.msra.mxu0 0
    %1900 = vmatprep.subr.bf16.mxu0 0
    %1901 = vmatpush1.bf16.msra.mxu0 0
    %1902 = vmatprep.subr.bf16.mxu0 0
    %1903 = vmatpush1.bf16.msra.mxu0 0
    %1904 = vmatprep.subr.bf16.mxu0 0
    %1905 = vmatpush1.bf16.msra.mxu0 0
    %1906 = vmatprep.subr.bf16.mxu0 0
    %1907 = vmatpush1.bf16.msra.mxu0 %v727
    %1908 = vmatprep.subr.bf16.mxu0 0
    %1909 = vmatpush1.bf16.msra.mxu0 %v726
    %1910 = vmatprep.subr.bf16.mxu0 0
    %1911 = vmatpush2.bf16.msra.mxu0 0
    %1912 = vmatprep.subr.bf16.mxu0 0
    %1913 = vmatpush2.bf16.msra.mxu0 0
    %1914 = vmatprep.subr.bf16.mxu0 0
    %1915 = vmatpush2.bf16.msra.mxu0 0
    %1916 = vmatprep.subr.bf16.mxu0 0
    %1917 = vmatpush2.bf16.msra.mxu0 0
    %1918 = vmatprep.subr.bf16.mxu0 0
    %1919 = vmatpush2.bf16.msra.mxu0 0
    %1920 = vmatprep.subr.bf16.mxu0 0
    %1921 = vmatpush2.bf16.msra.mxu0 0
    %1922 = vmatprep.subr.bf16.mxu0 0
    %1923 = vmatpush2.bf16.msra.mxu0 0
    %1924 = vmatprep.subr.bf16.mxu0 0
    %1925 = vmatpush2.bf16.msra.mxu0 0
    %1926 = vmatprep.mubr.bf16.mxu0 0
    %1927 = vmatmul.mubr.bf16.gmra.mxu0 %v1798
    %v1928 = vpop.f32.mrf.mxu0
    %v1929 = vadd.f32 0.0, %v1928
    %v1930 = vpop.f32.mrf.mxu0
    %v1931 = vpop.f32.mrf.mxu0
    %v1932 = vpop.f32.mrf.mxu0
    %1933 = vdwg.mxu0
    %v1934 = vadd.f32 %v466, %v1929
    %v1935 = vxor.u32 %v1934, 2147483648
    %v1936 = vmul.f32 %v1935, 1.442695
    %v1937 = vpow.pop %v1936
    %v1938 = vadd.f32 %v1937, 1.0
    %v1939 = vrcp.pop %v1938
    %v1940 = vmul.f32 1.0, %v1939
    %1941 = vmatprep.subr.bf16.mxu0 0
    %1942 = vmatpush1.bf16.msra.mxu0 0
    %1943 = vmatprep.subr.bf16.mxu0 0
    %1944 = vmatpush1.bf16.msra.mxu0 0
    %1945 = vmatprep.subr.bf16.mxu0 0
    %1946 = vmatpush1.bf16.msra.mxu0 0
    %1947 = vmatprep.subr.bf16.mxu0 0
    %1948 = vmatpush1.bf16.msra.mxu0 0
    %1949 = vmatprep.subr.bf16.mxu0 0
    %1950 = vmatpush1.bf16.msra.mxu0 0
    %1951 = vmatprep.subr.bf16.mxu0 0
    %1952 = vmatpush1.bf16.msra.mxu0 0
    %1953 = vmatprep.subr.bf16.mxu0 0
    %1954 = vmatpush1.bf16.msra.mxu0 %v786
    %1955 = vmatprep.subr.bf16.mxu0 0
    %1956 = vmatpush1.bf16.msra.mxu0 %v785
    %1957 = vmatprep.subr.bf16.mxu0 0
    %1958 = vmatpush2.bf16.msra.mxu0 0
    %1959 = vmatprep.subr.bf16.mxu0 0
    %1960 = vmatpush2.bf16.msra.mxu0 0
    %1961 = vmatprep.subr.bf16.mxu0 0
    %1962 = vmatpush2.bf16.msra.mxu0 0
    %1963 = vmatprep.subr.bf16.mxu0 0
    %1964 = vmatpush2.bf16.msra.mxu0 0
    %1965 = vmatprep.subr.bf16.mxu0 0
    %1966 = vmatpush2.bf16.msra.mxu0 0
    %1967 = vmatprep.subr.bf16.mxu0 0
    %1968 = vmatpush2.bf16.msra.mxu0 0
    %1969 = vmatprep.subr.bf16.mxu0 0
    %1970 = vmatpush2.bf16.msra.mxu0 0
    %1971 = vmatprep.subr.bf16.mxu0 0
    %1972 = vmatpush2.bf16.msra.mxu0 0
    %1973 = vmatprep.mubr.bf16.mxu0 0
    %1974 = vmatmul.mubr.bf16.gmra.mxu0 %v1798
    %v1975 = vpop.f32.mrf.mxu0
    %v1976 = vadd.f32 0.0, %v1975
    %v1977 = vpop.f32.mrf.mxu0
    %v1978 = vpop.f32.mrf.mxu0
    %v1979 = vpop.f32.mrf.mxu0
    %1980 = vdwg.mxu0
    %v1981 = vadd.f32 %v572, %v1976
    %v1982 = vtanh.pop %v1981
    %v1983 = vmul.f32 %v1893, %v1793
    %v1984 = vmul.f32 %v1846, %v1982
    %v1985 = vadd.f32 %v1983, %v1984
    %v1986 = vtanh.pop %v1985
    %v1987 = vmul.f32 %v1940, %v1986
    %v1988 = vpack.c.bf16 %v1987, %v1987
    %v1990 = vsel %vm130, %v1988, 0
    %1992 = vmatprep.subr.bf16.mxu0 0
    %1993 = vmatpush1.bf16.msra.mxu0 0
    %1994 = vmatprep.subr.bf16.mxu0 0
    %1995 = vmatpush1.bf16.msra.mxu0 0
    %1996 = vmatprep.subr.bf16.mxu0 0
    %1997 = vmatpush1.bf16.msra.mxu0 0
    %1998 = vmatprep.subr.bf16.mxu0 0
    %1999 = vmatpush1.bf16.msra.mxu0 0
    %2000 = vmatprep.subr.bf16.mxu0 0
    %2001 = vmatpush1.bf16.msra.mxu0 0
    %2002 = vmatprep.subr.bf16.mxu0 0
    %2003 = vmatpush1.bf16.msra.mxu0 0
    %2004 = vmatprep.subr.bf16.mxu0 0
    %2005 = vmatpush1.bf16.msra.mxu0 %v606
    %2006 = vmatprep.subr.bf16.mxu0 0
    %2007 = vmatpush1.bf16.msra.mxu0 %v605
    %2008 = vmatprep.subr.bf16.mxu0 0
    %2009 = vmatpush2.bf16.msra.mxu0 0
    %2010 = vmatprep.subr.bf16.mxu0 0
    %2011 = vmatpush2.bf16.msra.mxu0 0
    %2012 = vmatprep.subr.bf16.mxu0 0
    %2013 = vmatpush2.bf16.msra.mxu0 0
    %2014 = vmatprep.subr.bf16.mxu0 0
    %2015 = vmatpush2.bf16.msra.mxu0 0
    %2016 = vmatprep.subr.bf16.mxu0 0
    %2017 = vmatpush2.bf16.msra.mxu0 0
    %2018 = vmatprep.subr.bf16.mxu0 0
    %2019 = vmatpush2.bf16.msra.mxu0 0
    %2020 = vmatprep.subr.bf16.mxu0 0
    %2021 = vmatpush2.bf16.msra.mxu0 0
    %2022 = vmatprep.subr.bf16.mxu0 0
    %2023 = vmatpush2.bf16.msra.mxu0 0
    %2024 = vmatprep.mubr.bf16.mxu0 0
    %2025 = vmatmul.mubr.bf16.gmra.mxu0 %v1990
    %v2026 = vpop.f32.mrf.mxu0
    %v2027 = vadd.f32 0.0, %v2026
    %v2028 = vpop.f32.mrf.mxu0
    %v2029 = vpop.f32.mrf.mxu0
    %v2030 = vpop.f32.mrf.mxu0
    %2031 = vdwg.mxu0
    %v2032 = vadd.f32 %v257, %v2027
    %v2033 = vxor.u32 %v2032, 2147483648
    %v2034 = vmul.f32 %v2033, 1.442695
    %v2035 = vpow.pop %v2034
    %v2036 = vadd.f32 %v2035, 1.0
    %v2037 = vrcp.pop %v2036
    %v2038 = vmul.f32 1.0, %v2037
    %2039 = vmatprep.subr.bf16.mxu0 0
    %2040 = vmatpush1.bf16.msra.mxu0 0
    %2041 = vmatprep.subr.bf16.mxu0 0
    %2042 = vmatpush1.bf16.msra.mxu0 0
    %2043 = vmatprep.subr.bf16.mxu0 0
    %2044 = vmatpush1.bf16.msra.mxu0 0
    %2045 = vmatprep.subr.bf16.mxu0 0
    %2046 = vmatpush1.bf16.msra.mxu0 0
    %2047 = vmatprep.subr.bf16.mxu0 0
    %2048 = vmatpush1.bf16.msra.mxu0 0
    %2049 = vmatprep.subr.bf16.mxu0 0
    %2050 = vmatpush1.bf16.msra.mxu0 0
    %2051 = vmatprep.subr.bf16.mxu0 0
    %2052 = vmatpush1.bf16.msra.mxu0 %v668
    %2053 = vmatprep.subr.bf16.mxu0 0
    %2054 = vmatpush1.bf16.msra.mxu0 %v667
    %2055 = vmatprep.subr.bf16.mxu0 0
    %2056 = vmatpush2.bf16.msra.mxu0 0
    %2057 = vmatprep.subr.bf16.mxu0 0
    %2058 = vmatpush2.bf16.msra.mxu0 0
    %2059 = vmatprep.subr.bf16.mxu0 0
    %2060 = vmatpush2.bf16.msra.mxu0 0
    %2061 = vmatprep.subr.bf16.mxu0 0
    %2062 = vmatpush2.bf16.msra.mxu0 0
    %2063 = vmatprep.subr.bf16.mxu0 0
    %2064 = vmatpush2.bf16.msra.mxu0 0
    %2065 = vmatprep.subr.bf16.mxu0 0
    %2066 = vmatpush2.bf16.msra.mxu0 0
    %2067 = vmatprep.subr.bf16.mxu0 0
    %2068 = vmatpush2.bf16.msra.mxu0 0
    %2069 = vmatprep.subr.bf16.mxu0 0
    %2070 = vmatpush2.bf16.msra.mxu0 0
    %2071 = vmatprep.mubr.bf16.mxu0 0
    %2072 = vmatmul.mubr.bf16.gmra.mxu0 %v1990
    %v2073 = vpop.f32.mrf.mxu0
    %v2074 = vadd.f32 0.0, %v2073
    %v2075 = vpop.f32.mrf.mxu0
    %v2076 = vpop.f32.mrf.mxu0
    %v2077 = vpop.f32.mrf.mxu0
    %2078 = vdwg.mxu0
    %v2079 = vadd.f32 %v363, %v2074
    %v2080 = vxor.u32 %v2079, 2147483648
    %v2081 = vmul.f32 %v2080, 1.442695
    %v2082 = vpow.pop %v2081
    %v2083 = vadd.f32 %v2082, 1.0
    %v2084 = vrcp.pop %v2083
    %v2085 = vmul.f32 1.0, %v2084
    %2086 = vmatprep.subr.bf16.mxu0 0
    %2087 = vmatpush1.bf16.msra.mxu0 0
    %2088 = vmatprep.subr.bf16.mxu0 0
    %2089 = vmatpush1.bf16.msra.mxu0 0
    %2090 = vmatprep.subr.bf16.mxu0 0
    %2091 = vmatpush1.bf16.msra.mxu0 0
    %2092 = vmatprep.subr.bf16.mxu0 0
    %2093 = vmatpush1.bf16.msra.mxu0 0
    %2094 = vmatprep.subr.bf16.mxu0 0
    %2095 = vmatpush1.bf16.msra.mxu0 0
    %2096 = vmatprep.subr.bf16.mxu0 0
    %2097 = vmatpush1.bf16.msra.mxu0 0
    %2098 = vmatprep.subr.bf16.mxu0 0
    %2099 = vmatpush1.bf16.msra.mxu0 %v727
    %2100 = vmatprep.subr.bf16.mxu0 0
    %2101 = vmatpush1.bf16.msra.mxu0 %v726
    %2102 = vmatprep.subr.bf16.mxu0 0
    %2103 = vmatpush2.bf16.msra.mxu0 0
    %2104 = vmatprep.subr.bf16.mxu0 0
    %2105 = vmatpush2.bf16.msra.mxu0 0
    %2106 = vmatprep.subr.bf16.mxu0 0
    %2107 = vmatpush2.bf16.msra.mxu0 0
    %2108 = vmatprep.subr.bf16.mxu0 0
    %2109 = vmatpush2.bf16.msra.mxu0 0
    %2110 = vmatprep.subr.bf16.mxu0 0
    %2111 = vmatpush2.bf16.msra.mxu0 0
    %2112 = vmatprep.subr.bf16.mxu0 0
    %2113 = vmatpush2.bf16.msra.mxu0 0
    %2114 = vmatprep.subr.bf16.mxu0 0
    %2115 = vmatpush2.bf16.msra.mxu0 0
    %2116 = vmatprep.subr.bf16.mxu0 0
    %2117 = vmatpush2.bf16.msra.mxu0 0
    %2118 = vmatprep.mubr.bf16.mxu0 0
    %2119 = vmatmul.mubr.bf16.gmra.mxu0 %v1990
    %v2120 = vpop.f32.mrf.mxu0
    %v2121 = vadd.f32 0.0, %v2120
    %v2122 = vpop.f32.mrf.mxu0
    %v2123 = vpop.f32.mrf.mxu0
    %v2124 = vpop.f32.mrf.mxu0
    %2125 = vdwg.mxu0
    %v2126 = vadd.f32 %v469, %v2121
    %v2127 = vxor.u32 %v2126, 2147483648
    %v2128 = vmul.f32 %v2127, 1.442695
    %v2129 = vpow.pop %v2128
    %v2130 = vadd.f32 %v2129, 1.0
    %v2131 = vrcp.pop %v2130
    %v2132 = vmul.f32 1.0, %v2131
    %2133 = vmatprep.subr.bf16.mxu0 0
    %2134 = vmatpush1.bf16.msra.mxu0 0
    %2135 = vmatprep.subr.bf16.mxu0 0
    %2136 = vmatpush1.bf16.msra.mxu0 0
    %2137 = vmatprep.subr.bf16.mxu0 0
    %2138 = vmatpush1.bf16.msra.mxu0 0
    %2139 = vmatprep.subr.bf16.mxu0 0
    %2140 = vmatpush1.bf16.msra.mxu0 0
    %2141 = vmatprep.subr.bf16.mxu0 0
    %2142 = vmatpush1.bf16.msra.mxu0 0
    %2143 = vmatprep.subr.bf16.mxu0 0
    %2144 = vmatpush1.bf16.msra.mxu0 0
    %2145 = vmatprep.subr.bf16.mxu0 0
    %2146 = vmatpush1.bf16.msra.mxu0 %v786
    %2147 = vmatprep.subr.bf16.mxu0 0
    %2148 = vmatpush1.bf16.msra.mxu0 %v785
    %2149 = vmatprep.subr.bf16.mxu0 0
    %2150 = vmatpush2.bf16.msra.mxu0 0
    %2151 = vmatprep.subr.bf16.mxu0 0
    %2152 = vmatpush2.bf16.msra.mxu0 0
    %2153 = vmatprep.subr.bf16.mxu0 0
    %2154 = vmatpush2.bf16.msra.mxu0 0
    %2155 = vmatprep.subr.bf16.mxu0 0
    %2156 = vmatpush2.bf16.msra.mxu0 0
    %2157 = vmatprep.subr.bf16.mxu0 0
    %2158 = vmatpush2.bf16.msra.mxu0 0
    %2159 = vmatprep.subr.bf16.mxu0 0
    %2160 = vmatpush2.bf16.msra.mxu0 0
    %2161 = vmatprep.subr.bf16.mxu0 0
    %2162 = vmatpush2.bf16.msra.mxu0 0
    %2163 = vmatprep.subr.bf16.mxu0 0
    %2164 = vmatpush2.bf16.msra.mxu0 0
    %2165 = vmatprep.mubr.bf16.mxu0 0
    %2166 = vmatmul.mubr.bf16.gmra.mxu0 %v1990
    %v2167 = vpop.f32.mrf.mxu0
    %v2168 = vadd.f32 0.0, %v2167
    %v2169 = vpop.f32.mrf.mxu0
    %v2170 = vpop.f32.mrf.mxu0
    %v2171 = vpop.f32.mrf.mxu0
    %2172 = vdwg.mxu0
    %v2173 = vadd.f32 %v575, %v2168
    %v2174 = vtanh.pop %v2173
    %v2175 = vmul.f32 %v2085, %v1985
    %v2176 = vmul.f32 %v2038, %v2174
    %v2177 = vadd.f32 %v2175, %v2176
    %v2178 = vtanh.pop %v2177
    %v2179 = vmul.f32 %v2132, %v2178
    %vm2180 = vcmask 130048
    %v2181 = vsel %vm2180, %v835, %v2179
    %v2182 = vsel %vm2180, %v1027, %v1987
    %v2183 = vsel %vm2180, %v1219, %v1795
    %v2184 = vsel %vm2180, %v1411, %v1603
    %v2185 = vsel %vm2180, %v1603, %v1411
    %v2186 = vsel %vm2180, %v1795, %v1219
    %v2187 = vsel %vm2180, %v1987, %v1027
    %v2188 = vsel %vm2180, %v2179, %v835
    %2189 = vst.msk [vmem:[#allocation8] sm:$0xff] %vm130, %v2181
    %2190 = vst.msk [vmem:[#allocation8 + $0x8] sm:$0xff] %vm130, %v2182
    %2191 = vst.msk [vmem:[#allocation8 + $0x10] sm:$0xff] %vm130, %v2183
    %2192 = vst.msk [vmem:[#allocation8 + $0x18] sm:$0xff] %vm130, %v2184
    %2193 = vst.msk [vmem:[#allocation8 + $0x20] sm:$0xff] %vm130, %v2185
    %2194 = vst.msk [vmem:[#allocation8 + $0x28] sm:$0xff] %vm130, %v2186
    %2195 = vst.msk [vmem:[#allocation8 + $0x30] sm:$0xff] %vm130, %v2187
    %2196 = vst.msk [vmem:[#allocation8 + $0x38] sm:$0xff] %vm130, %v2188
    %2205 = vrot.lane.b32.xlu0 %v2188, 32
    %v2206 = vpop.permute.xlu0 %2205
    %2207 = vrot.lane.b32.xlu0 %v2187, 32
    %v2208 = vpop.permute.xlu0 %2207
    %2209 = vrot.lane.b32.xlu0 %v2186, 32
    %v2210 = vpop.permute.xlu0 %2209
    %2211 = vrot.lane.b32.xlu0 %v2185, 32
    %v2212 = vpop.permute.xlu0 %2211
    %2213 = vrot.lane.b32.xlu0 %v2184, 32
    %v2214 = vpop.permute.xlu0 %2213
    %2215 = vrot.lane.b32.xlu0 %v2183, 32
    %v2216 = vpop.permute.xlu0 %2215
    %2217 = vrot.lane.b32.xlu0 %v2182, 32
    %v2218 = vpop.permute.xlu0 %2217
    %2219 = vrot.lane.b32.xlu0 %v2181, 32
    %v2220 = vpop.permute.xlu0 %2219
    %v2229 = vsel %vm130, %v2181, %v2206
    %v2230 = vsel %vm130, %v2182, %v2208
    %v2231 = vsel %vm130, %v2183, %v2210
    %v2232 = vsel %vm130, %v2184, %v2212
    %v2233 = vsel %vm130, %v2185, %v2214
    %v2234 = vsel %vm130, %v2186, %v2216
    %v2235 = vsel %vm130, %v2187, %v2218
    %v2236 = vsel %vm130, %v2188, %v2220
    %v2237 = vpack.c.bf16 %v2230, %v2229
    %v2238 = vpack.c.bf16 %v2232, %v2231
    %v2239 = vpack.c.bf16 %v2234, %v2233
    %v2240 = vpack.c.bf16 %v2236, %v2235
    %v2241 = vld [vmem:[%s4] sm:$0xf]
    %v2242 = vld [vmem:[%s4 + $0x4] sm:$0xf]
    %v2243 = vld [vmem:[%s4 + $0x8] sm:$0xf]
    %v2244 = vld [vmem:[%s4 + $0xc] sm:$0xf]
    %v2245 = vld [vmem:[%s4 + $0x10] sm:$0xf]
    %v2246 = vld [vmem:[%s4 + $0x14] sm:$0xf]
    %v2247 = vld [vmem:[%s4 + $0x18] sm:$0xf]
    %v2248 = vld [vmem:[%s4 + $0x1c] sm:$0xf]
    %v2249 = vld [vmem:[%s6] sm:$0x1]
    %v2251 = vlaneseq
    %v2252 = vshrl.u32 %v2251, 7
    %v2253 = vsub.s32 0, %v2252
    %v2254 = vrot.slane %v2249, %v2253
    %v2264 = vunpack.c.l.b16 %v2241
    %v2265 = vunpack.c.l.b16 %v2242
    %v2266 = vunpack.c.l.b16 %v2243
    %v2267 = vunpack.c.l.b16 %v2244
    %v2268 = vunpack.c.l.b16 %v2245
    %v2269 = vunpack.c.l.b16 %v2246
    %v2270 = vunpack.c.l.b16 %v2247
    %v2271 = vunpack.c.l.b16 %v2248
    %v2272 = vpack.c.b16 %v2265, %v2264
    %v2273 = vpack.c.b16 %v2267, %v2266
    %v2274 = vpack.c.b16 %v2269, %v2268
    %v2275 = vpack.c.b16 %v2271, %v2270
    %v2281 = vsel %vm182, %v2237, 0
    %v2284 = vsel %vm182, %v2238, 0
    %v2287 = vsel %vm182, %v2239, 0
    %v2290 = vsel %vm182, %v2240, 0
    %2292 = vmatprep.subr.bf16.mxu0 0
    %2293 = vmatpush1.bf16.msra.mxu0 0
    %2294 = vmatprep.subr.bf16.mxu0 0
    %2295 = vmatpush1.bf16.msra.mxu0 0
    %2296 = vmatprep.subr.bf16.mxu0 0
    %2297 = vmatpush1.bf16.msra.mxu0 0
    %2298 = vmatprep.subr.bf16.mxu0 0
    %2299 = vmatpush1.bf16.msra.mxu0 0
    %2300 = vmatprep.subr.bf16.mxu0 0
    %2301 = vmatpush1.bf16.msra.mxu0 %v2275
    %2302 = vmatprep.subr.bf16.mxu0 0
    %2303 = vmatpush1.bf16.msra.mxu0 %v2274
    %2304 = vmatprep.subr.bf16.mxu0 0
    %2305 = vmatpush1.bf16.msra.mxu0 %v2273
    %2306 = vmatprep.subr.bf16.mxu0 0
    %2307 = vmatpush1.bf16.msra.mxu0 %v2272
    %2308 = vmatprep.subr.bf16.mxu0 0
    %2309 = vmatpush2.bf16.msra.mxu0 0
    %2310 = vmatprep.subr.bf16.mxu0 0
    %2311 = vmatpush2.bf16.msra.mxu0 0
    %2312 = vmatprep.subr.bf16.mxu0 0
    %2313 = vmatpush2.bf16.msra.mxu0 0
    %2314 = vmatprep.subr.bf16.mxu0 0
    %2315 = vmatpush2.bf16.msra.mxu0 0
    %2316 = vmatprep.subr.bf16.mxu0 0
    %2317 = vmatpush2.bf16.msra.mxu0 0
    %2318 = vmatprep.subr.bf16.mxu0 0
    %2319 = vmatpush2.bf16.msra.mxu0 0
    %2320 = vmatprep.subr.bf16.mxu0 0
    %2321 = vmatpush2.bf16.msra.mxu0 0
    %2322 = vmatprep.subr.bf16.mxu0 0
    %2323 = vmatpush2.bf16.msra.mxu0 0
    %2324 = vmatprep.mubr.bf16.mxu0 0
    %2325 = vmatmul.mubr.bf16.gmra.mxu0 %v2281
    %v2326 = vpop.f32.mrf.mxu0
    %v2327 = vadd.f32 %v2254, %v2326
    %v2328 = vpop.f32.mrf.mxu0
    %v2329 = vpop.f32.mrf.mxu0
    %v2330 = vadd.f32 %v2254, %v2329
    %v2331 = vpop.f32.mrf.mxu0
    %2332 = vmatprep.mubr.bf16.mxu0 0
    %2333 = vmatmul.mubr.bf16.gmra.mxu0 %v2284
    %v2334 = vpop.f32.mrf.mxu0
    %v2335 = vadd.f32 %v2254, %v2334
    %v2336 = vpop.f32.mrf.mxu0
    %v2337 = vpop.f32.mrf.mxu0
    %v2338 = vadd.f32 %v2254, %v2337
    %v2339 = vpop.f32.mrf.mxu0
    %2340 = vmatprep.mubr.bf16.mxu0 0
    %2341 = vmatmul.mubr.bf16.gmra.mxu0 %v2287
    %v2342 = vpop.f32.mrf.mxu0
    %v2343 = vadd.f32 %v2254, %v2342
    %v2344 = vpop.f32.mrf.mxu0
    %v2345 = vpop.f32.mrf.mxu0
    %v2346 = vadd.f32 %v2254, %v2345
    %v2347 = vpop.f32.mrf.mxu0
    %2348 = vmatprep.mubr.bf16.mxu0 0
    %2349 = vmatmul.mubr.bf16.gmra.mxu0 %v2290
    %v2350 = vpop.f32.mrf.mxu0
    %v2351 = vadd.f32 %v2254, %v2350
    %v2352 = vpop.f32.mrf.mxu0
    %v2353 = vpop.f32.mrf.mxu0
    %v2354 = vadd.f32 %v2254, %v2353
    %v2355 = vpop.f32.mrf.mxu0
    %2356 = vdwg.mxu0
    %s2357 = scalar_lea.vmem %s4, 32
    %v2358 = vld [vmem:[%s2357] sm:$0xf]
    %v2359 = vld [vmem:[%s2357 + $0x4] sm:$0xf]
    %v2360 = vld [vmem:[%s2357 + $0x8] sm:$0xf]
    %v2361 = vld [vmem:[%s2357 + $0xc] sm:$0xf]
    %v2362 = vld [vmem:[%s2357 + $0x10] sm:$0xf]
    %v2363 = vld [vmem:[%s2357 + $0x14] sm:$0xf]
    %v2364 = vld [vmem:[%s2357 + $0x18] sm:$0xf]
    %v2365 = vld [vmem:[%s2357 + $0x1c] sm:$0xf]
    %s2366 = scalar_lea.vmem %s6, 1
    %v2367 = vld [vmem:[%s2366] sm:$0x1]
    %v2369 = vlaneseq
    %v2370 = vshrl.u32 %v2369, 7
    %v2371 = vsub.s32 0, %v2370
    %v2372 = vrot.slane %v2367, %v2371
    %v2382 = vunpack.c.l.b16 %v2358
    %v2383 = vunpack.c.l.b16 %v2359
    %v2384 = vunpack.c.l.b16 %v2360
    %v2385 = vunpack.c.l.b16 %v2361
    %v2386 = vunpack.c.l.b16 %v2362
    %v2387 = vunpack.c.l.b16 %v2363
    %v2388 = vunpack.c.l.b16 %v2364
    %v2389 = vunpack.c.l.b16 %v2365
    %v2390 = vpack.c.b16 %v2383, %v2382
    %v2391 = vpack.c.b16 %v2385, %v2384
    %v2392 = vpack.c.b16 %v2387, %v2386
    %v2393 = vpack.c.b16 %v2389, %v2388
    %2398 = vmatprep.subr.bf16.mxu0 0
    %2399 = vmatpush1.bf16.msra.mxu0 0
    %2400 = vmatprep.subr.bf16.mxu0 0
    %2401 = vmatpush1.bf16.msra.mxu0 0
    %2402 = vmatprep.subr.bf16.mxu0 0
    %2403 = vmatpush1.bf16.msra.mxu0 0
    %2404 = vmatprep.subr.bf16.mxu0 0
    %2405 = vmatpush1.bf16.msra.mxu0 0
    %2406 = vmatprep.subr.bf16.mxu0 0
    %2407 = vmatpush1.bf16.msra.mxu0 %v2393
    %2408 = vmatprep.subr.bf16.mxu0 0
    %2409 = vmatpush1.bf16.msra.mxu0 %v2392
    %2410 = vmatprep.subr.bf16.mxu0 0
    %2411 = vmatpush1.bf16.msra.mxu0 %v2391
    %2412 = vmatprep.subr.bf16.mxu0 0
    %2413 = vmatpush1.bf16.msra.mxu0 %v2390
    %2414 = vmatprep.subr.bf16.mxu0 0
    %2415 = vmatpush2.bf16.msra.mxu0 0
    %2416 = vmatprep.subr.bf16.mxu0 0
    %2417 = vmatpush2.bf16.msra.mxu0 0
    %2418 = vmatprep.subr.bf16.mxu0 0
    %2419 = vmatpush2.bf16.msra.mxu0 0
    %2420 = vmatprep.subr.bf16.mxu0 0
    %2421 = vmatpush2.bf16.msra.mxu0 0
    %2422 = vmatprep.subr.bf16.mxu0 0
    %2423 = vmatpush2.bf16.msra.mxu0 0
    %2424 = vmatprep.subr.bf16.mxu0 0
    %2425 = vmatpush2.bf16.msra.mxu0 0
    %2426 = vmatprep.subr.bf16.mxu0 0
    %2427 = vmatpush2.bf16.msra.mxu0 0
    %2428 = vmatprep.subr.bf16.mxu0 0
    %2429 = vmatpush2.bf16.msra.mxu0 0
    %2430 = vmatprep.mubr.bf16.mxu0 0
    %2431 = vmatmul.mubr.bf16.gmra.mxu0 %v2281
    %v2432 = vpop.f32.mrf.mxu0
    %v2433 = vadd.f32 %v2372, %v2432
    %v2434 = vpop.f32.mrf.mxu0
    %v2435 = vpop.f32.mrf.mxu0
    %v2436 = vadd.f32 %v2372, %v2435
    %v2437 = vpop.f32.mrf.mxu0
    %2438 = vmatprep.mubr.bf16.mxu0 0
    %2439 = vmatmul.mubr.bf16.gmra.mxu0 %v2284
    %v2440 = vpop.f32.mrf.mxu0
    %v2441 = vadd.f32 %v2372, %v2440
    %v2442 = vpop.f32.mrf.mxu0
    %v2443 = vpop.f32.mrf.mxu0
    %v2444 = vadd.f32 %v2372, %v2443
    %v2445 = vpop.f32.mrf.mxu0
    %2446 = vmatprep.mubr.bf16.mxu0 0
    %2447 = vmatmul.mubr.bf16.gmra.mxu0 %v2287
    %v2448 = vpop.f32.mrf.mxu0
    %v2449 = vadd.f32 %v2372, %v2448
    %v2450 = vpop.f32.mrf.mxu0
    %v2451 = vpop.f32.mrf.mxu0
    %v2452 = vadd.f32 %v2372, %v2451
    %v2453 = vpop.f32.mrf.mxu0
    %2454 = vmatprep.mubr.bf16.mxu0 0
    %2455 = vmatmul.mubr.bf16.gmra.mxu0 %v2290
    %v2456 = vpop.f32.mrf.mxu0
    %v2457 = vadd.f32 %v2372, %v2456
    %v2458 = vpop.f32.mrf.mxu0
    %v2459 = vpop.f32.mrf.mxu0
    %v2460 = vadd.f32 %v2372, %v2459
    %v2461 = vpop.f32.mrf.mxu0
    %2462 = vdwg.mxu0
    %s2463 = scalar_lea.vmem %s4, 64
    %v2464 = vld [vmem:[%s2463] sm:$0xf]
    %v2465 = vld [vmem:[%s2463 + $0x4] sm:$0xf]
    %v2466 = vld [vmem:[%s2463 + $0x8] sm:$0xf]
    %v2467 = vld [vmem:[%s2463 + $0xc] sm:$0xf]
    %v2468 = vld [vmem:[%s2463 + $0x10] sm:$0xf]
    %v2469 = vld [vmem:[%s2463 + $0x14] sm:$0xf]
    %v2470 = vld [vmem:[%s2463 + $0x18] sm:$0xf]
    %v2471 = vld [vmem:[%s2463 + $0x1c] sm:$0xf]
    %s2472 = scalar_lea.vmem %s6, 2
    %v2473 = vld [vmem:[%s2472] sm:$0x1]
    %v2475 = vlaneseq
    %v2476 = vshrl.u32 %v2475, 7
    %v2477 = vsub.s32 0, %v2476
    %v2478 = vrot.slane %v2473, %v2477
    %v2488 = vunpack.c.l.b16 %v2464
    %v2489 = vunpack.c.l.b16 %v2465
    %v2490 = vunpack.c.l.b16 %v2466
    %v2491 = vunpack.c.l.b16 %v2467
    %v2492 = vunpack.c.l.b16 %v2468
    %v2493 = vunpack.c.l.b16 %v2469
    %v2494 = vunpack.c.l.b16 %v2470
    %v2495 = vunpack.c.l.b16 %v2471
    %v2496 = vpack.c.b16 %v2489, %v2488
    %v2497 = vpack.c.b16 %v2491, %v2490
    %v2498 = vpack.c.b16 %v2493, %v2492
    %v2499 = vpack.c.b16 %v2495, %v2494
    %2504 = vmatprep.subr.bf16.mxu0 0
    %2505 = vmatpush1.bf16.msra.mxu0 0
    %2506 = vmatprep.subr.bf16.mxu0 0
    %2507 = vmatpush1.bf16.msra.mxu0 0
    %2508 = vmatprep.subr.bf16.mxu0 0
    %2509 = vmatpush1.bf16.msra.mxu0 0
    %2510 = vmatprep.subr.bf16.mxu0 0
    %2511 = vmatpush1.bf16.msra.mxu0 0
    %2512 = vmatprep.subr.bf16.mxu0 0
    %2513 = vmatpush1.bf16.msra.mxu0 %v2499
    %2514 = vmatprep.subr.bf16.mxu0 0
    %2515 = vmatpush1.bf16.msra.mxu0 %v2498
    %2516 = vmatprep.subr.bf16.mxu0 0
    %2517 = vmatpush1.bf16.msra.mxu0 %v2497
    %2518 = vmatprep.subr.bf16.mxu0 0
    %2519 = vmatpush1.bf16.msra.mxu0 %v2496
    %2520 = vmatprep.subr.bf16.mxu0 0
    %2521 = vmatpush2.bf16.msra.mxu0 0
    %2522 = vmatprep.subr.bf16.mxu0 0
    %2523 = vmatpush2.bf16.msra.mxu0 0
    %2524 = vmatprep.subr.bf16.mxu0 0
    %2525 = vmatpush2.bf16.msra.mxu0 0
    %2526 = vmatprep.subr.bf16.mxu0 0
    %2527 = vmatpush2.bf16.msra.mxu0 0
    %2528 = vmatprep.subr.bf16.mxu0 0
    %2529 = vmatpush2.bf16.msra.mxu0 0
    %2530 = vmatprep.subr.bf16.mxu0 0
    %2531 = vmatpush2.bf16.msra.mxu0 0
    %2532 = vmatprep.subr.bf16.mxu0 0
    %2533 = vmatpush2.bf16.msra.mxu0 0
    %2534 = vmatprep.subr.bf16.mxu0 0
    %2535 = vmatpush2.bf16.msra.mxu0 0
    %2536 = vmatprep.mubr.bf16.mxu0 0
    %2537 = vmatmul.mubr.bf16.gmra.mxu0 %v2281
    %v2538 = vpop.f32.mrf.mxu0
    %v2539 = vadd.f32 %v2478, %v2538
    %v2540 = vpop.f32.mrf.mxu0
    %v2541 = vpop.f32.mrf.mxu0
    %v2542 = vadd.f32 %v2478, %v2541
    %v2543 = vpop.f32.mrf.mxu0
    %2544 = vmatprep.mubr.bf16.mxu0 0
    %2545 = vmatmul.mubr.bf16.gmra.mxu0 %v2284
    %v2546 = vpop.f32.mrf.mxu0
    %v2547 = vadd.f32 %v2478, %v2546
    %v2548 = vpop.f32.mrf.mxu0
    %v2549 = vpop.f32.mrf.mxu0
    %v2550 = vadd.f32 %v2478, %v2549
    %v2551 = vpop.f32.mrf.mxu0
    %2552 = vmatprep.mubr.bf16.mxu0 0
    %2553 = vmatmul.mubr.bf16.gmra.mxu0 %v2287
    %v2554 = vpop.f32.mrf.mxu0
    %v2555 = vadd.f32 %v2478, %v2554
    %v2556 = vpop.f32.mrf.mxu0
    %v2557 = vpop.f32.mrf.mxu0
    %v2558 = vadd.f32 %v2478, %v2557
    %v2559 = vpop.f32.mrf.mxu0
    %2560 = vmatprep.mubr.bf16.mxu0 0
    %2561 = vmatmul.mubr.bf16.gmra.mxu0 %v2290
    %v2562 = vpop.f32.mrf.mxu0
    %v2563 = vadd.f32 %v2478, %v2562
    %v2564 = vpop.f32.mrf.mxu0
    %v2565 = vpop.f32.mrf.mxu0
    %v2566 = vadd.f32 %v2478, %v2565
    %v2567 = vpop.f32.mrf.mxu0
    %2568 = vdwg.mxu0
    %s2569 = scalar_lea.vmem %s4, 96
    %v2570 = vld [vmem:[%s2569] sm:$0xf]
    %v2571 = vld [vmem:[%s2569 + $0x4] sm:$0xf]
    %v2572 = vld [vmem:[%s2569 + $0x8] sm:$0xf]
    %v2573 = vld [vmem:[%s2569 + $0xc] sm:$0xf]
    %v2574 = vld [vmem:[%s2569 + $0x10] sm:$0xf]
    %v2575 = vld [vmem:[%s2569 + $0x14] sm:$0xf]
    %v2576 = vld [vmem:[%s2569 + $0x18] sm:$0xf]
    %v2577 = vld [vmem:[%s2569 + $0x1c] sm:$0xf]
    %s2578 = scalar_lea.vmem %s6, 3
    %v2579 = vld [vmem:[%s2578] sm:$0x1]
    %v2581 = vlaneseq
    %v2582 = vshrl.u32 %v2581, 7
    %v2583 = vsub.s32 0, %v2582
    %v2584 = vrot.slane %v2579, %v2583
    %v2594 = vunpack.c.l.b16 %v2570
    %v2595 = vunpack.c.l.b16 %v2571
    %v2596 = vunpack.c.l.b16 %v2572
    %v2597 = vunpack.c.l.b16 %v2573
    %v2598 = vunpack.c.l.b16 %v2574
    %v2599 = vunpack.c.l.b16 %v2575
    %v2600 = vunpack.c.l.b16 %v2576
    %v2601 = vunpack.c.l.b16 %v2577
    %v2602 = vpack.c.b16 %v2595, %v2594
    %v2603 = vpack.c.b16 %v2597, %v2596
    %v2604 = vpack.c.b16 %v2599, %v2598
    %v2605 = vpack.c.b16 %v2601, %v2600
    %2610 = vmatprep.subr.bf16.mxu0 0
    %2611 = vmatpush1.bf16.msra.mxu0 0
    %2612 = vmatprep.subr.bf16.mxu0 0
    %2613 = vmatpush1.bf16.msra.mxu0 0
    %2614 = vmatprep.subr.bf16.mxu0 0
    %2615 = vmatpush1.bf16.msra.mxu0 0
    %2616 = vmatprep.subr.bf16.mxu0 0
    %2617 = vmatpush1.bf16.msra.mxu0 0
    %2618 = vmatprep.subr.bf16.mxu0 0
    %2619 = vmatpush1.bf16.msra.mxu0 %v2605
    %2620 = vmatprep.subr.bf16.mxu0 0
    %2621 = vmatpush1.bf16.msra.mxu0 %v2604
    %2622 = vmatprep.subr.bf16.mxu0 0
    %2623 = vmatpush1.bf16.msra.mxu0 %v2603
    %2624 = vmatprep.subr.bf16.mxu0 0
    %2625 = vmatpush1.bf16.msra.mxu0 %v2602
    %2626 = vmatprep.subr.bf16.mxu0 0
    %2627 = vmatpush2.bf16.msra.mxu0 0
    %2628 = vmatprep.subr.bf16.mxu0 0
    %2629 = vmatpush2.bf16.msra.mxu0 0
    %2630 = vmatprep.subr.bf16.mxu0 0
    %2631 = vmatpush2.bf16.msra.mxu0 0
    %2632 = vmatprep.subr.bf16.mxu0 0
    %2633 = vmatpush2.bf16.msra.mxu0 0
    %2634 = vmatprep.subr.bf16.mxu0 0
    %2635 = vmatpush2.bf16.msra.mxu0 0
    %2636 = vmatprep.subr.bf16.mxu0 0
    %2637 = vmatpush2.bf16.msra.mxu0 0
    %2638 = vmatprep.subr.bf16.mxu0 0
    %2639 = vmatpush2.bf16.msra.mxu0 0
    %2640 = vmatprep.subr.bf16.mxu0 0
    %2641 = vmatpush2.bf16.msra.mxu0 0
    %2642 = vmatprep.mubr.bf16.mxu0 0
    %2643 = vmatmul.mubr.bf16.gmra.mxu0 %v2281
    %v2644 = vpop.f32.mrf.mxu0
    %v2645 = vadd.f32 %v2584, %v2644
    %v2646 = vpop.f32.mrf.mxu0
    %v2647 = vpop.f32.mrf.mxu0
    %v2648 = vadd.f32 %v2584, %v2647
    %v2649 = vpop.f32.mrf.mxu0
    %2650 = vmatprep.mubr.bf16.mxu0 0
    %2651 = vmatmul.mubr.bf16.gmra.mxu0 %v2284
    %v2652 = vpop.f32.mrf.mxu0
    %v2653 = vadd.f32 %v2584, %v2652
    %v2654 = vpop.f32.mrf.mxu0
    %v2655 = vpop.f32.mrf.mxu0
    %v2656 = vadd.f32 %v2584, %v2655
    %v2657 = vpop.f32.mrf.mxu0
    %2658 = vmatprep.mubr.bf16.mxu0 0
    %2659 = vmatmul.mubr.bf16.gmra.mxu0 %v2287
    %v2660 = vpop.f32.mrf.mxu0
    %v2661 = vadd.f32 %v2584, %v2660
    %v2662 = vpop.f32.mrf.mxu0
    %v2663 = vpop.f32.mrf.mxu0
    %v2664 = vadd.f32 %v2584, %v2663
    %v2665 = vpop.f32.mrf.mxu0
    %2666 = vmatprep.mubr.bf16.mxu0 0
    %2667 = vmatmul.mubr.bf16.gmra.mxu0 %v2290
    %v2668 = vpop.f32.mrf.mxu0
    %v2669 = vadd.f32 %v2584, %v2668
    %v2670 = vpop.f32.mrf.mxu0
    %v2671 = vpop.f32.mrf.mxu0
    %v2672 = vadd.f32 %v2584, %v2671
    %v2673 = vpop.f32.mrf.mxu0
    %2674 = vdwg.mxu0
    %v2675 = vld [vmem:[#allocation5] sm:$0xf]
    %v2676 = vld [vmem:[#allocation5 + $0x4] sm:$0xf]
    %v2677 = vld [vmem:[#allocation5 + $0x8] sm:$0xf]
    %v2678 = vld [vmem:[#allocation5 + $0xc] sm:$0xf]
    %s2679 = scalar_lea.vmem [#allocation5], 16
    %v2680 = vld [vmem:[%s2679] sm:$0xf]
    %v2681 = vld [vmem:[%s2679 + $0x4] sm:$0xf]
    %v2682 = vld [vmem:[%s2679 + $0x8] sm:$0xf]
    %v2683 = vld [vmem:[%s2679 + $0xc] sm:$0xf]
    %s2684 = scalar_lea.vmem [#allocation5], 32
    %v2685 = vld [vmem:[%s2684] sm:$0xf]
    %v2686 = vld [vmem:[%s2684 + $0x4] sm:$0xf]
    %v2687 = vld [vmem:[%s2684 + $0x8] sm:$0xf]
    %v2688 = vld [vmem:[%s2684 + $0xc] sm:$0xf]
    %s2689 = scalar_lea.vmem [#allocation5], 48
    %v2690 = vld [vmem:[%s2689] sm:$0xf]
    %v2691 = vld [vmem:[%s2689 + $0x4] sm:$0xf]
    %v2692 = vld [vmem:[%s2689 + $0x8] sm:$0xf]
    %v2693 = vld [vmem:[%s2689 + $0xc] sm:$0xf]
    %v2698 = vunpack.c.l.b16 %v2675
    %v2699 = vunpack.c.l.b16 %v2676
    %v2700 = vunpack.c.l.b16 %v2677
    %v2701 = vunpack.c.l.b16 %v2678
    %v2702 = vpack.c.b16 %v2699, %v2698
    %v2703 = vpack.c.b16 %v2701, %v2700
    %2706 = vmatprep.subr.bf16.mxu0 0
    %2707 = vmatpush1.bf16.msra.mxu0 0
    %2708 = vmatprep.subr.bf16.mxu0 0
    %2709 = vmatpush1.bf16.msra.mxu0 0
    %2710 = vmatprep.subr.bf16.mxu0 0
    %2711 = vmatpush1.bf16.msra.mxu0 0
    %2712 = vmatprep.subr.bf16.mxu0 0
    %2713 = vmatpush1.bf16.msra.mxu0 0
    %2714 = vmatprep.subr.bf16.mxu0 0
    %2715 = vmatpush1.bf16.msra.mxu0 0
    %2716 = vmatprep.subr.bf16.mxu0 0
    %2717 = vmatpush1.bf16.msra.mxu0 0
    %2718 = vmatprep.subr.bf16.mxu0 0
    %2719 = vmatpush1.bf16.msra.mxu0 %v2703
    %2720 = vmatprep.subr.bf16.mxu0 0
    %2721 = vmatpush1.bf16.msra.mxu0 %v2702
    %2722 = vmatprep.subr.bf16.mxu0 0
    %2723 = vmatpush2.bf16.msra.mxu0 0
    %2724 = vmatprep.subr.bf16.mxu0 0
    %2725 = vmatpush2.bf16.msra.mxu0 0
    %2726 = vmatprep.subr.bf16.mxu0 0
    %2727 = vmatpush2.bf16.msra.mxu0 0
    %2728 = vmatprep.subr.bf16.mxu0 0
    %2729 = vmatpush2.bf16.msra.mxu0 0
    %2730 = vmatprep.subr.bf16.mxu0 0
    %2731 = vmatpush2.bf16.msra.mxu0 0
    %2732 = vmatprep.subr.bf16.mxu0 0
    %2733 = vmatpush2.bf16.msra.mxu0 0
    %2734 = vmatprep.subr.bf16.mxu0 0
    %2735 = vmatpush2.bf16.msra.mxu0 0
    %2736 = vmatprep.subr.bf16.mxu0 0
    %2737 = vmatpush2.bf16.msra.mxu0 0
    %2738 = vmatprep.mubr.bf16.mxu0 0
    %2739 = vmatmul.mubr.bf16.gmra.mxu0 %v610
    %v2740 = vpop.f32.mrf.mxu0
    %v2741 = vadd.f32 0.0, %v2740
    %v2742 = vpop.f32.mrf.mxu0
    %v2743 = vpop.f32.mrf.mxu0
    %v2744 = vpop.f32.mrf.mxu0
    %2745 = vdwg.mxu0
    %v2746 = vadd.f32 %v2327, %v2741
    %v2747 = vxor.u32 %v2746, 2147483648
    %v2748 = vmul.f32 %v2747, 1.442695
    %v2749 = vpow.pop %v2748
    %v2750 = vadd.f32 %v2749, 1.0
    %v2751 = vrcp.pop %v2750
    %v2752 = vmul.f32 1.0, %v2751
    %v2757 = vunpack.c.l.b16 %v2680
    %v2758 = vunpack.c.l.b16 %v2681
    %v2759 = vunpack.c.l.b16 %v2682
    %v2760 = vunpack.c.l.b16 %v2683
    %v2761 = vpack.c.b16 %v2758, %v2757
    %v2762 = vpack.c.b16 %v2760, %v2759
    %2765 = vmatprep.subr.bf16.mxu0 0
    %2766 = vmatpush1.bf16.msra.mxu0 0
    %2767 = vmatprep.subr.bf16.mxu0 0
    %2768 = vmatpush1.bf16.msra.mxu0 0
    %2769 = vmatprep.subr.bf16.mxu0 0
    %2770 = vmatpush1.bf16.msra.mxu0 0
    %2771 = vmatprep.subr.bf16.mxu0 0
    %2772 = vmatpush1.bf16.msra.mxu0 0
    %2773 = vmatprep.subr.bf16.mxu0 0
    %2774 = vmatpush1.bf16.msra.mxu0 0
    %2775 = vmatprep.subr.bf16.mxu0 0
    %2776 = vmatpush1.bf16.msra.mxu0 0
    %2777 = vmatprep.subr.bf16.mxu0 0
    %2778 = vmatpush1.bf16.msra.mxu0 %v2762
    %2779 = vmatprep.subr.bf16.mxu0 0
    %2780 = vmatpush1.bf16.msra.mxu0 %v2761
    %2781 = vmatprep.subr.bf16.mxu0 0
    %2782 = vmatpush2.bf16.msra.mxu0 0
    %2783 = vmatprep.subr.bf16.mxu0 0
    %2784 = vmatpush2.bf16.msra.mxu0 0
    %2785 = vmatprep.subr.bf16.mxu0 0
    %2786 = vmatpush2.bf16.msra.mxu0 0
    %2787 = vmatprep.subr.bf16.mxu0 0
    %2788 = vmatpush2.bf16.msra.mxu0 0
    %2789 = vmatprep.subr.bf16.mxu0 0
    %2790 = vmatpush2.bf16.msra.mxu0 0
    %2791 = vmatprep.subr.bf16.mxu0 0
    %2792 = vmatpush2.bf16.msra.mxu0 0
    %2793 = vmatprep.subr.bf16.mxu0 0
    %2794 = vmatpush2.bf16.msra.mxu0 0
    %2795 = vmatprep.subr.bf16.mxu0 0
    %2796 = vmatpush2.bf16.msra.mxu0 0
    %2797 = vmatprep.mubr.bf16.mxu0 0
    %2798 = vmatmul.mubr.bf16.gmra.mxu0 %v610
    %v2799 = vpop.f32.mrf.mxu0
    %v2800 = vadd.f32 0.0, %v2799
    %v2801 = vpop.f32.mrf.mxu0
    %v2802 = vpop.f32.mrf.mxu0
    %v2803 = vpop.f32.mrf.mxu0
    %2804 = vdwg.mxu0
    %v2805 = vadd.f32 %v2433, %v2800
    %v2806 = vxor.u32 %v2805, 2147483648
    %v2807 = vmul.f32 %v2806, 1.442695
    %v2808 = vpow.pop %v2807
    %v2809 = vadd.f32 %v2808, 1.0
    %v2810 = vrcp.pop %v2809
    %v2811 = vmul.f32 1.0, %v2810
    %v2816 = vunpack.c.l.b16 %v2685
    %v2817 = vunpack.c.l.b16 %v2686
    %v2818 = vunpack.c.l.b16 %v2687
    %v2819 = vunpack.c.l.b16 %v2688
    %v2820 = vpack.c.b16 %v2817, %v2816
    %v2821 = vpack.c.b16 %v2819, %v2818
    %2824 = vmatprep.subr.bf16.mxu0 0
    %2825 = vmatpush1.bf16.msra.mxu0 0
    %2826 = vmatprep.subr.bf16.mxu0 0
    %2827 = vmatpush1.bf16.msra.mxu0 0
    %2828 = vmatprep.subr.bf16.mxu0 0
    %2829 = vmatpush1.bf16.msra.mxu0 0
    %2830 = vmatprep.subr.bf16.mxu0 0
    %2831 = vmatpush1.bf16.msra.mxu0 0
    %2832 = vmatprep.subr.bf16.mxu0 0
    %2833 = vmatpush1.bf16.msra.mxu0 0
    %2834 = vmatprep.subr.bf16.mxu0 0
    %2835 = vmatpush1.bf16.msra.mxu0 0
    %2836 = vmatprep.subr.bf16.mxu0 0
    %2837 = vmatpush1.bf16.msra.mxu0 %v2821
    %2838 = vmatprep.subr.bf16.mxu0 0
    %2839 = vmatpush1.bf16.msra.mxu0 %v2820
    %2840 = vmatprep.subr.bf16.mxu0 0
    %2841 = vmatpush2.bf16.msra.mxu0 0
    %2842 = vmatprep.subr.bf16.mxu0 0
    %2843 = vmatpush2.bf16.msra.mxu0 0
    %2844 = vmatprep.subr.bf16.mxu0 0
    %2845 = vmatpush2.bf16.msra.mxu0 0
    %2846 = vmatprep.subr.bf16.mxu0 0
    %2847 = vmatpush2.bf16.msra.mxu0 0
    %2848 = vmatprep.subr.bf16.mxu0 0
    %2849 = vmatpush2.bf16.msra.mxu0 0
    %2850 = vmatprep.subr.bf16.mxu0 0
    %2851 = vmatpush2.bf16.msra.mxu0 0
    %2852 = vmatprep.subr.bf16.mxu0 0
    %2853 = vmatpush2.bf16.msra.mxu0 0
    %2854 = vmatprep.subr.bf16.mxu0 0
    %2855 = vmatpush2.bf16.msra.mxu0 0
    %2856 = vmatprep.mubr.bf16.mxu0 0
    %2857 = vmatmul.mubr.bf16.gmra.mxu0 %v610
    %v2858 = vpop.f32.mrf.mxu0
    %v2859 = vadd.f32 0.0, %v2858
    %v2860 = vpop.f32.mrf.mxu0
    %v2861 = vpop.f32.mrf.mxu0
    %v2862 = vpop.f32.mrf.mxu0
    %2863 = vdwg.mxu0
    %v2864 = vadd.f32 %v2539, %v2859
    %v2865 = vxor.u32 %v2864, 2147483648
    %v2866 = vmul.f32 %v2865, 1.442695
    %v2867 = vpow.pop %v2866
    %v2868 = vadd.f32 %v2867, 1.0
    %v2869 = vrcp.pop %v2868
    %v2870 = vmul.f32 1.0, %v2869
    %v2875 = vunpack.c.l.b16 %v2690
    %v2876 = vunpack.c.l.b16 %v2691
    %v2877 = vunpack.c.l.b16 %v2692
    %v2878 = vunpack.c.l.b16 %v2693
    %v2879 = vpack.c.b16 %v2876, %v2875
    %v2880 = vpack.c.b16 %v2878, %v2877
    %2883 = vmatprep.subr.bf16.mxu0 0
    %2884 = vmatpush1.bf16.msra.mxu0 0
    %2885 = vmatprep.subr.bf16.mxu0 0
    %2886 = vmatpush1.bf16.msra.mxu0 0
    %2887 = vmatprep.subr.bf16.mxu0 0
    %2888 = vmatpush1.bf16.msra.mxu0 0
    %2889 = vmatprep.subr.bf16.mxu0 0
    %2890 = vmatpush1.bf16.msra.mxu0 0
    %2891 = vmatprep.subr.bf16.mxu0 0
    %2892 = vmatpush1.bf16.msra.mxu0 0
    %2893 = vmatprep.subr.bf16.mxu0 0
    %2894 = vmatpush1.bf16.msra.mxu0 0
    %2895 = vmatprep.subr.bf16.mxu0 0
    %2896 = vmatpush1.bf16.msra.mxu0 %v2880
    %2897 = vmatprep.subr.bf16.mxu0 0
    %2898 = vmatpush1.bf16.msra.mxu0 %v2879
    %2899 = vmatprep.subr.bf16.mxu0 0
    %2900 = vmatpush2.bf16.msra.mxu0 0
    %2901 = vmatprep.subr.bf16.mxu0 0
    %2902 = vmatpush2.bf16.msra.mxu0 0
    %2903 = vmatprep.subr.bf16.mxu0 0
    %2904 = vmatpush2.bf16.msra.mxu0 0
    %2905 = vmatprep.subr.bf16.mxu0 0
    %2906 = vmatpush2.bf16.msra.mxu0 0
    %2907 = vmatprep.subr.bf16.mxu0 0
    %2908 = vmatpush2.bf16.msra.mxu0 0
    %2909 = vmatprep.subr.bf16.mxu0 0
    %2910 = vmatpush2.bf16.msra.mxu0 0
    %2911 = vmatprep.subr.bf16.mxu0 0
    %2912 = vmatpush2.bf16.msra.mxu0 0
    %2913 = vmatprep.subr.bf16.mxu0 0
    %2914 = vmatpush2.bf16.msra.mxu0 0
    %2915 = vmatprep.mubr.bf16.mxu0 0
    %2916 = vmatmul.mubr.bf16.gmra.mxu0 %v610
    %v2917 = vpop.f32.mrf.mxu0
    %v2918 = vadd.f32 0.0, %v2917
    %v2919 = vpop.f32.mrf.mxu0
    %v2920 = vpop.f32.mrf.mxu0
    %v2921 = vpop.f32.mrf.mxu0
    %2922 = vdwg.mxu0
    %v2923 = vadd.f32 %v2645, %v2918
    %v2924 = vtanh.pop %v2923
    %v2925 = vmul.f32 %v2811, 0.0
    %v2926 = vmul.f32 %v2752, %v2924
    %v2927 = vadd.f32 %v2925, %v2926
    %v2928 = vtanh.pop %v2927
    %v2929 = vmul.f32 %v2870, %v2928
    %v2930 = vpack.c.bf16 %v2929, %v2929
    %v2932 = vsel %vm130, %v2930, 0
    %2934 = vmatprep.subr.bf16.mxu0 0
    %2935 = vmatpush1.bf16.msra.mxu0 0
    %2936 = vmatprep.subr.bf16.mxu0 0
    %2937 = vmatpush1.bf16.msra.mxu0 0
    %2938 = vmatprep.subr.bf16.mxu0 0
    %2939 = vmatpush1.bf16.msra.mxu0 0
    %2940 = vmatprep.subr.bf16.mxu0 0
    %2941 = vmatpush1.bf16.msra.mxu0 0
    %2942 = vmatprep.subr.bf16.mxu0 0
    %2943 = vmatpush1.bf16.msra.mxu0 0
    %2944 = vmatprep.subr.bf16.mxu0 0
    %2945 = vmatpush1.bf16.msra.mxu0 0
    %2946 = vmatprep.subr.bf16.mxu0 0
    %2947 = vmatpush1.bf16.msra.mxu0 %v2703
    %2948 = vmatprep.subr.bf16.mxu0 0
    %2949 = vmatpush1.bf16.msra.mxu0 %v2702
    %2950 = vmatprep.subr.bf16.mxu0 0
    %2951 = vmatpush2.bf16.msra.mxu0 0
    %2952 = vmatprep.subr.bf16.mxu0 0
    %2953 = vmatpush2.bf16.msra.mxu0 0
    %2954 = vmatprep.subr.bf16.mxu0 0
    %2955 = vmatpush2.bf16.msra.mxu0 0
    %2956 = vmatprep.subr.bf16.mxu0 0
    %2957 = vmatpush2.bf16.msra.mxu0 0
    %2958 = vmatprep.subr.bf16.mxu0 0
    %2959 = vmatpush2.bf16.msra.mxu0 0
    %2960 = vmatprep.subr.bf16.mxu0 0
    %2961 = vmatpush2.bf16.msra.mxu0 0
    %2962 = vmatprep.subr.bf16.mxu0 0
    %2963 = vmatpush2.bf16.msra.mxu0 0
    %2964 = vmatprep.subr.bf16.mxu0 0
    %2965 = vmatpush2.bf16.msra.mxu0 0
    %2966 = vmatprep.mubr.bf16.mxu0 0
    %2967 = vmatmul.mubr.bf16.gmra.mxu0 %v2932
    %v2968 = vpop.f32.mrf.mxu0
    %v2969 = vadd.f32 0.0, %v2968
    %v2970 = vpop.f32.mrf.mxu0
    %v2971 = vpop.f32.mrf.mxu0
    %v2972 = vpop.f32.mrf.mxu0
    %2973 = vdwg.mxu0
    %v2974 = vadd.f32 %v2330, %v2969
    %v2975 = vxor.u32 %v2974, 2147483648
    %v2976 = vmul.f32 %v2975, 1.442695
    %v2977 = vpow.pop %v2976
    %v2978 = vadd.f32 %v2977, 1.0
    %v2979 = vrcp.pop %v2978
    %v2980 = vmul.f32 1.0, %v2979
    %2981 = vmatprep.subr.bf16.mxu0 0
    %2982 = vmatpush1.bf16.msra.mxu0 0
    %2983 = vmatprep.subr.bf16.mxu0 0
    %2984 = vmatpush1.bf16.msra.mxu0 0
    %2985 = vmatprep.subr.bf16.mxu0 0
    %2986 = vmatpush1.bf16.msra.mxu0 0
    %2987 = vmatprep.subr.bf16.mxu0 0
    %2988 = vmatpush1.bf16.msra.mxu0 0
    %2989 = vmatprep.subr.bf16.mxu0 0
    %2990 = vmatpush1.bf16.msra.mxu0 0
    %2991 = vmatprep.subr.bf16.mxu0 0
    %2992 = vmatpush1.bf16.msra.mxu0 0
    %2993 = vmatprep.subr.bf16.mxu0 0
    %2994 = vmatpush1.bf16.msra.mxu0 %v2762
    %2995 = vmatprep.subr.bf16.mxu0 0
    %2996 = vmatpush1.bf16.msra.mxu0 %v2761
    %2997 = vmatprep.subr.bf16.mxu0 0
    %2998 = vmatpush2.bf16.msra.mxu0 0
    %2999 = vmatprep.subr.bf16.mxu0 0
    %3000 = vmatpush2.bf16.msra.mxu0 0
    %3001 = vmatprep.subr.bf16.mxu0 0
    %3002 = vmatpush2.bf16.msra.mxu0 0
    %3003 = vmatprep.subr.bf16.mxu0 0
    %3004 = vmatpush2.bf16.msra.mxu0 0
    %3005 = vmatprep.subr.bf16.mxu0 0
    %3006 = vmatpush2.bf16.msra.mxu0 0
    %3007 = vmatprep.subr.bf16.mxu0 0
    %3008 = vmatpush2.bf16.msra.mxu0 0
    %3009 = vmatprep.subr.bf16.mxu0 0
    %3010 = vmatpush2.bf16.msra.mxu0 0
    %3011 = vmatprep.subr.bf16.mxu0 0
    %3012 = vmatpush2.bf16.msra.mxu0 0
    %3013 = vmatprep.mubr.bf16.mxu0 0
    %3014 = vmatmul.mubr.bf16.gmra.mxu0 %v2932
    %v3015 = vpop.f32.mrf.mxu0
    %v3016 = vadd.f32 0.0, %v3015
    %v3017 = vpop.f32.mrf.mxu0
    %v3018 = vpop.f32.mrf.mxu0
    %v3019 = vpop.f32.mrf.mxu0
    %3020 = vdwg.mxu0
    %v3021 = vadd.f32 %v2436, %v3016
    %v3022 = vxor.u32 %v3021, 2147483648
    %v3023 = vmul.f32 %v3022, 1.442695
    %v3024 = vpow.pop %v3023
    %v3025 = vadd.f32 %v3024, 1.0
    %v3026 = vrcp.pop %v3025
    %v3027 = vmul.f32 1.0, %v3026
    %3028 = vmatprep.subr.bf16.mxu0 0
    %3029 = vmatpush1.bf16.msra.mxu0 0
    %3030 = vmatprep.subr.bf16.mxu0 0
    %3031 = vmatpush1.bf16.msra.mxu0 0
    %3032 = vmatprep.subr.bf16.mxu0 0
    %3033 = vmatpush1.bf16.msra.mxu0 0
    %3034 = vmatprep.subr.bf16.mxu0 0
    %3035 = vmatpush1.bf16.msra.mxu0 0
    %3036 = vmatprep.subr.bf16.mxu0 0
    %3037 = vmatpush1.bf16.msra.mxu0 0
    %3038 = vmatprep.subr.bf16.mxu0 0
    %3039 = vmatpush1.bf16.msra.mxu0 0
    %3040 = vmatprep.subr.bf16.mxu0 0
    %3041 = vmatpush1.bf16.msra.mxu0 %v2821
    %3042 = vmatprep.subr.bf16.mxu0 0
    %3043 = vmatpush1.bf16.msra.mxu0 %v2820
    %3044 = vmatprep.subr.bf16.mxu0 0
    %3045 = vmatpush2.bf16.msra.mxu0 0
    %3046 = vmatprep.subr.bf16.mxu0 0
    %3047 = vmatpush2.bf16.msra.mxu0 0
    %3048 = vmatprep.subr.bf16.mxu0 0
    %3049 = vmatpush2.bf16.msra.mxu0 0
    %3050 = vmatprep.subr.bf16.mxu0 0
    %3051 = vmatpush2.bf16.msra.mxu0 0
    %3052 = vmatprep.subr.bf16.mxu0 0
    %3053 = vmatpush2.bf16.msra.mxu0 0
    %3054 = vmatprep.subr.bf16.mxu0 0
    %3055 = vmatpush2.bf16.msra.mxu0 0
    %3056 = vmatprep.subr.bf16.mxu0 0
    %3057 = vmatpush2.bf16.msra.mxu0 0
    %3058 = vmatprep.subr.bf16.mxu0 0
    %3059 = vmatpush2.bf16.msra.mxu0 0
    %3060 = vmatprep.mubr.bf16.mxu0 0
    %3061 = vmatmul.mubr.bf16.gmra.mxu0 %v2932
    %v3062 = vpop.f32.mrf.mxu0
    %v3063 = vadd.f32 0.0, %v3062
    %v3064 = vpop.f32.mrf.mxu0
    %v3065 = vpop.f32.mrf.mxu0
    %v3066 = vpop.f32.mrf.mxu0
    %3067 = vdwg.mxu0
    %v3068 = vadd.f32 %v2542, %v3063
    %v3069 = vxor.u32 %v3068, 2147483648
    %v3070 = vmul.f32 %v3069, 1.442695
    %v3071 = vpow.pop %v3070
    %v3072 = vadd.f32 %v3071, 1.0
    %v3073 = vrcp.pop %v3072
    %v3074 = vmul.f32 1.0, %v3073
    %3075 = vmatprep.subr.bf16.mxu0 0
    %3076 = vmatpush1.bf16.msra.mxu0 0
    %3077 = vmatprep.subr.bf16.mxu0 0
    %3078 = vmatpush1.bf16.msra.mxu0 0
    %3079 = vmatprep.subr.bf16.mxu0 0
    %3080 = vmatpush1.bf16.msra.mxu0 0
    %3081 = vmatprep.subr.bf16.mxu0 0
    %3082 = vmatpush1.bf16.msra.mxu0 0
    %3083 = vmatprep.subr.bf16.mxu0 0
    %3084 = vmatpush1.bf16.msra.mxu0 0
    %3085 = vmatprep.subr.bf16.mxu0 0
    %3086 = vmatpush1.bf16.msra.mxu0 0
    %3087 = vmatprep.subr.bf16.mxu0 0
    %3088 = vmatpush1.bf16.msra.mxu0 %v2880
    %3089 = vmatprep.subr.bf16.mxu0 0
    %3090 = vmatpush1.bf16.msra.mxu0 %v2879
    %3091 = vmatprep.subr.bf16.mxu0 0
    %3092 = vmatpush2.bf16.msra.mxu0 0
    %3093 = vmatprep.subr.bf16.mxu0 0
    %3094 = vmatpush2.bf16.msra.mxu0 0
    %3095 = vmatprep.subr.bf16.mxu0 0
    %3096 = vmatpush2.bf16.msra.mxu0 0
    %3097 = vmatprep.subr.bf16.mxu0 0
    %3098 = vmatpush2.bf16.msra.mxu0 0
    %3099 = vmatprep.subr.bf16.mxu0 0
    %3100 = vmatpush2.bf16.msra.mxu0 0
    %3101 = vmatprep.subr.bf16.mxu0 0
    %3102 = vmatpush2.bf16.msra.mxu0 0
    %3103 = vmatprep.subr.bf16.mxu0 0
    %3104 = vmatpush2.bf16.msra.mxu0 0
    %3105 = vmatprep.subr.bf16.mxu0 0
    %3106 = vmatpush2.bf16.msra.mxu0 0
    %3107 = vmatprep.mubr.bf16.mxu0 0
    %3108 = vmatmul.mubr.bf16.gmra.mxu0 %v2932
    %v3109 = vpop.f32.mrf.mxu0
    %v3110 = vadd.f32 0.0, %v3109
    %v3111 = vpop.f32.mrf.mxu0
    %v3112 = vpop.f32.mrf.mxu0
    %v3113 = vpop.f32.mrf.mxu0
    %3114 = vdwg.mxu0
    %v3115 = vadd.f32 %v2648, %v3110
    %v3116 = vtanh.pop %v3115
    %v3117 = vmul.f32 %v3027, %v2927
    %v3118 = vmul.f32 %v2980, %v3116
    %v3119 = vadd.f32 %v3117, %v3118
    %v3120 = vtanh.pop %v3119
    %v3121 = vmul.f32 %v3074, %v3120
    %v3122 = vpack.c.bf16 %v3121, %v3121
    %v3124 = vsel %vm130, %v3122, 0
    %3126 = vmatprep.subr.bf16.mxu0 0
    %3127 = vmatpush1.bf16.msra.mxu0 0
    %3128 = vmatprep.subr.bf16.mxu0 0
    %3129 = vmatpush1.bf16.msra.mxu0 0
    %3130 = vmatprep.subr.bf16.mxu0 0
    %3131 = vmatpush1.bf16.msra.mxu0 0
    %3132 = vmatprep.subr.bf16.mxu0 0
    %3133 = vmatpush1.bf16.msra.mxu0 0
    %3134 = vmatprep.subr.bf16.mxu0 0
    %3135 = vmatpush1.bf16.msra.mxu0 0
    %3136 = vmatprep.subr.bf16.mxu0 0
    %3137 = vmatpush1.bf16.msra.mxu0 0
    %3138 = vmatprep.subr.bf16.mxu0 0
    %3139 = vmatpush1.bf16.msra.mxu0 %v2703
    %3140 = vmatprep.subr.bf16.mxu0 0
    %3141 = vmatpush1.bf16.msra.mxu0 %v2702
    %3142 = vmatprep.subr.bf16.mxu0 0
    %3143 = vmatpush2.bf16.msra.mxu0 0
    %3144 = vmatprep.subr.bf16.mxu0 0
    %3145 = vmatpush2.bf16.msra.mxu0 0
    %3146 = vmatprep.subr.bf16.mxu0 0
    %3147 = vmatpush2.bf16.msra.mxu0 0
    %3148 = vmatprep.subr.bf16.mxu0 0
    %3149 = vmatpush2.bf16.msra.mxu0 0
    %3150 = vmatprep.subr.bf16.mxu0 0
    %3151 = vmatpush2.bf16.msra.mxu0 0
    %3152 = vmatprep.subr.bf16.mxu0 0
    %3153 = vmatpush2.bf16.msra.mxu0 0
    %3154 = vmatprep.subr.bf16.mxu0 0
    %3155 = vmatpush2.bf16.msra.mxu0 0
    %3156 = vmatprep.subr.bf16.mxu0 0
    %3157 = vmatpush2.bf16.msra.mxu0 0
    %3158 = vmatprep.mubr.bf16.mxu0 0
    %3159 = vmatmul.mubr.bf16.gmra.mxu0 %v3124
    %v3160 = vpop.f32.mrf.mxu0
    %v3161 = vadd.f32 0.0, %v3160
    %v3162 = vpop.f32.mrf.mxu0
    %v3163 = vpop.f32.mrf.mxu0
    %v3164 = vpop.f32.mrf.mxu0
    %3165 = vdwg.mxu0
    %v3166 = vadd.f32 %v2335, %v3161
    %v3167 = vxor.u32 %v3166, 2147483648
    %v3168 = vmul.f32 %v3167, 1.442695
    %v3169 = vpow.pop %v3168
    %v3170 = vadd.f32 %v3169, 1.0
    %v3171 = vrcp.pop %v3170
    %v3172 = vmul.f32 1.0, %v3171
    %3173 = vmatprep.subr.bf16.mxu0 0
    %3174 = vmatpush1.bf16.msra.mxu0 0
    %3175 = vmatprep.subr.bf16.mxu0 0
    %3176 = vmatpush1.bf16.msra.mxu0 0
    %3177 = vmatprep.subr.bf16.mxu0 0
    %3178 = vmatpush1.bf16.msra.mxu0 0
    %3179 = vmatprep.subr.bf16.mxu0 0
    %3180 = vmatpush1.bf16.msra.mxu0 0
    %3181 = vmatprep.subr.bf16.mxu0 0
    %3182 = vmatpush1.bf16.msra.mxu0 0
    %3183 = vmatprep.subr.bf16.mxu0 0
    %3184 = vmatpush1.bf16.msra.mxu0 0
    %3185 = vmatprep.subr.bf16.mxu0 0
    %3186 = vmatpush1.bf16.msra.mxu0 %v2762
    %3187 = vmatprep.subr.bf16.mxu0 0
    %3188 = vmatpush1.bf16.msra.mxu0 %v2761
    %3189 = vmatprep.subr.bf16.mxu0 0
    %3190 = vmatpush2.bf16.msra.mxu0 0
    %3191 = vmatprep.subr.bf16.mxu0 0
    %3192 = vmatpush2.bf16.msra.mxu0 0
    %3193 = vmatprep.subr.bf16.mxu0 0
    %3194 = vmatpush2.bf16.msra.mxu0 0
    %3195 = vmatprep.subr.bf16.mxu0 0
    %3196 = vmatpush2.bf16.msra.mxu0 0
    %3197 = vmatprep.subr.bf16.mxu0 0
    %3198 = vmatpush2.bf16.msra.mxu0 0
    %3199 = vmatprep.subr.bf16.mxu0 0
    %3200 = vmatpush2.bf16.msra.mxu0 0
    %3201 = vmatprep.subr.bf16.mxu0 0
    %3202 = vmatpush2.bf16.msra.mxu0 0
    %3203 = vmatprep.subr.bf16.mxu0 0
    %3204 = vmatpush2.bf16.msra.mxu0 0
    %3205 = vmatprep.mubr.bf16.mxu0 0
    %3206 = vmatmul.mubr.bf16.gmra.mxu0 %v3124
    %v3207 = vpop.f32.mrf.mxu0
    %v3208 = vadd.f32 0.0, %v3207
    %v3209 = vpop.f32.mrf.mxu0
    %v3210 = vpop.f32.mrf.mxu0
    %v3211 = vpop.f32.mrf.mxu0
    %3212 = vdwg.mxu0
    %v3213 = vadd.f32 %v2441, %v3208
    %v3214 = vxor.u32 %v3213, 2147483648
    %v3215 = vmul.f32 %v3214, 1.442695
    %v3216 = vpow.pop %v3215
    %v3217 = vadd.f32 %v3216, 1.0
    %v3218 = vrcp.pop %v3217
    %v3219 = vmul.f32 1.0, %v3218
    %3220 = vmatprep.subr.bf16.mxu0 0
    %3221 = vmatpush1.bf16.msra.mxu0 0
    %3222 = vmatprep.subr.bf16.mxu0 0
    %3223 = vmatpush1.bf16.msra.mxu0 0
    %3224 = vmatprep.subr.bf16.mxu0 0
    %3225 = vmatpush1.bf16.msra.mxu0 0
    %3226 = vmatprep.subr.bf16.mxu0 0
    %3227 = vmatpush1.bf16.msra.mxu0 0
    %3228 = vmatprep.subr.bf16.mxu0 0
    %3229 = vmatpush1.bf16.msra.mxu0 0
    %3230 = vmatprep.subr.bf16.mxu0 0
    %3231 = vmatpush1.bf16.msra.mxu0 0
    %3232 = vmatprep.subr.bf16.mxu0 0
    %3233 = vmatpush1.bf16.msra.mxu0 %v2821
    %3234 = vmatprep.subr.bf16.mxu0 0
    %3235 = vmatpush1.bf16.msra.mxu0 %v2820
    %3236 = vmatprep.subr.bf16.mxu0 0
    %3237 = vmatpush2.bf16.msra.mxu0 0
    %3238 = vmatprep.subr.bf16.mxu0 0
    %3239 = vmatpush2.bf16.msra.mxu0 0
    %3240 = vmatprep.subr.bf16.mxu0 0
    %3241 = vmatpush2.bf16.msra.mxu0 0
    %3242 = vmatprep.subr.bf16.mxu0 0
    %3243 = vmatpush2.bf16.msra.mxu0 0
    %3244 = vmatprep.subr.bf16.mxu0 0
    %3245 = vmatpush2.bf16.msra.mxu0 0
    %3246 = vmatprep.subr.bf16.mxu0 0
    %3247 = vmatpush2.bf16.msra.mxu0 0
    %3248 = vmatprep.subr.bf16.mxu0 0
    %3249 = vmatpush2.bf16.msra.mxu0 0
    %3250 = vmatprep.subr.bf16.mxu0 0
    %3251 = vmatpush2.bf16.msra.mxu0 0
    %3252 = vmatprep.mubr.bf16.mxu0 0
    %3253 = vmatmul.mubr.bf16.gmra.mxu0 %v3124
    %v3254 = vpop.f32.mrf.mxu0
    %v3255 = vadd.f32 0.0, %v3254
    %v3256 = vpop.f32.mrf.mxu0
    %v3257 = vpop.f32.mrf.mxu0
    %v3258 = vpop.f32.mrf.mxu0
    %3259 = vdwg.mxu0
    %v3260 = vadd.f32 %v2547, %v3255
    %v3261 = vxor.u32 %v3260, 2147483648
    %v3262 = vmul.f32 %v3261, 1.442695
    %v3263 = vpow.pop %v3262
    %v3264 = vadd.f32 %v3263, 1.0
    %v3265 = vrcp.pop %v3264
    %v3266 = vmul.f32 1.0, %v3265
    %3267 = vmatprep.subr.bf16.mxu0 0
    %3268 = vmatpush1.bf16.msra.mxu0 0
    %3269 = vmatprep.subr.bf16.mxu0 0
    %3270 = vmatpush1.bf16.msra.mxu0 0
    %3271 = vmatprep.subr.bf16.mxu0 0
    %3272 = vmatpush1.bf16.msra.mxu0 0
    %3273 = vmatprep.subr.bf16.mxu0 0
    %3274 = vmatpush1.bf16.msra.mxu0 0
    %3275 = vmatprep.subr.bf16.mxu0 0
    %3276 = vmatpush1.bf16.msra.mxu0 0
    %3277 = vmatprep.subr.bf16.mxu0 0
    %3278 = vmatpush1.bf16.msra.mxu0 0
    %3279 = vmatprep.subr.bf16.mxu0 0
    %3280 = vmatpush1.bf16.msra.mxu0 %v2880
    %3281 = vmatprep.subr.bf16.mxu0 0
    %3282 = vmatpush1.bf16.msra.mxu0 %v2879
    %3283 = vmatprep.subr.bf16.mxu0 0
    %3284 = vmatpush2.bf16.msra.mxu0 0
    %3285 = vmatprep.subr.bf16.mxu0 0
    %3286 = vmatpush2.bf16.msra.mxu0 0
    %3287 = vmatprep.subr.bf16.mxu0 0
    %3288 = vmatpush2.bf16.msra.mxu0 0
    %3289 = vmatprep.subr.bf16.mxu0 0
    %3290 = vmatpush2.bf16.msra.mxu0 0
    %3291 = vmatprep.subr.bf16.mxu0 0
    %3292 = vmatpush2.bf16.msra.mxu0 0
    %3293 = vmatprep.subr.bf16.mxu0 0
    %3294 = vmatpush2.bf16.msra.mxu0 0
    %3295 = vmatprep.subr.bf16.mxu0 0
    %3296 = vmatpush2.bf16.msra.mxu0 0
    %3297 = vmatprep.subr.bf16.mxu0 0
    %3298 = vmatpush2.bf16.msra.mxu0 0
    %3299 = vmatprep.mubr.bf16.mxu0 0
    %3300 = vmatmul.mubr.bf16.gmra.mxu0 %v3124
    %v3301 = vpop.f32.mrf.mxu0
    %v3302 = vadd.f32 0.0, %v3301
    %v3303 = vpop.f32.mrf.mxu0
    %v3304 = vpop.f32.mrf.mxu0
    %v3305 = vpop.f32.mrf.mxu0
    %3306 = vdwg.mxu0
    %v3307 = vadd.f32 %v2653, %v3302
    %v3308 = vtanh.pop %v3307
    %v3309 = vmul.f32 %v3219, %v3119
    %v3310 = vmul.f32 %v3172, %v3308
    %v3311 = vadd.f32 %v3309, %v3310
    %v3312 = vtanh.pop %v3311
    %v3313 = vmul.f32 %v3266, %v3312
    %v3314 = vpack.c.bf16 %v3313, %v3313
    %v3316 = vsel %vm130, %v3314, 0
    %3318 = vmatprep.subr.bf16.mxu0 0
    %3319 = vmatpush1.bf16.msra.mxu0 0
    %3320 = vmatprep.subr.bf16.mxu0 0
    %3321 = vmatpush1.bf16.msra.mxu0 0
    %3322 = vmatprep.subr.bf16.mxu0 0
    %3323 = vmatpush1.bf16.msra.mxu0 0
    %3324 = vmatprep.subr.bf16.mxu0 0
    %3325 = vmatpush1.bf16.msra.mxu0 0
    %3326 = vmatprep.subr.bf16.mxu0 0
    %3327 = vmatpush1.bf16.msra.mxu0 0
    %3328 = vmatprep.subr.bf16.mxu0 0
    %3329 = vmatpush1.bf16.msra.mxu0 0
    %3330 = vmatprep.subr.bf16.mxu0 0
    %3331 = vmatpush1.bf16.msra.mxu0 %v2703
    %3332 = vmatprep.subr.bf16.mxu0 0
    %3333 = vmatpush1.bf16.msra.mxu0 %v2702
    %3334 = vmatprep.subr.bf16.mxu0 0
    %3335 = vmatpush2.bf16.msra.mxu0 0
    %3336 = vmatprep.subr.bf16.mxu0 0
    %3337 = vmatpush2.bf16.msra.mxu0 0
    %3338 = vmatprep.subr.bf16.mxu0 0
    %3339 = vmatpush2.bf16.msra.mxu0 0
    %3340 = vmatprep.subr.bf16.mxu0 0
    %3341 = vmatpush2.bf16.msra.mxu0 0
    %3342 = vmatprep.subr.bf16.mxu0 0
    %3343 = vmatpush2.bf16.msra.mxu0 0
    %3344 = vmatprep.subr.bf16.mxu0 0
    %3345 = vmatpush2.bf16.msra.mxu0 0
    %3346 = vmatprep.subr.bf16.mxu0 0
    %3347 = vmatpush2.bf16.msra.mxu0 0
    %3348 = vmatprep.subr.bf16.mxu0 0
    %3349 = vmatpush2.bf16.msra.mxu0 0
    %3350 = vmatprep.mubr.bf16.mxu0 0
    %3351 = vmatmul.mubr.bf16.gmra.mxu0 %v3316
    %v3352 = vpop.f32.mrf.mxu0
    %v3353 = vadd.f32 0.0, %v3352
    %v3354 = vpop.f32.mrf.mxu0
    %v3355 = vpop.f32.mrf.mxu0
    %v3356 = vpop.f32.mrf.mxu0
    %3357 = vdwg.mxu0
    %v3358 = vadd.f32 %v2338, %v3353
    %v3359 = vxor.u32 %v3358, 2147483648
    %v3360 = vmul.f32 %v3359, 1.442695
    %v3361 = vpow.pop %v3360
    %v3362 = vadd.f32 %v3361, 1.0
    %v3363 = vrcp.pop %v3362
    %v3364 = vmul.f32 1.0, %v3363
    %3365 = vmatprep.subr.bf16.mxu0 0
    %3366 = vmatpush1.bf16.msra.mxu0 0
    %3367 = vmatprep.subr.bf16.mxu0 0
    %3368 = vmatpush1.bf16.msra.mxu0 0
    %3369 = vmatprep.subr.bf16.mxu0 0
    %3370 = vmatpush1.bf16.msra.mxu0 0
    %3371 = vmatprep.subr.bf16.mxu0 0
    %3372 = vmatpush1.bf16.msra.mxu0 0
    %3373 = vmatprep.subr.bf16.mxu0 0
    %3374 = vmatpush1.bf16.msra.mxu0 0
    %3375 = vmatprep.subr.bf16.mxu0 0
    %3376 = vmatpush1.bf16.msra.mxu0 0
    %3377 = vmatprep.subr.bf16.mxu0 0
    %3378 = vmatpush1.bf16.msra.mxu0 %v2762
    %3379 = vmatprep.subr.bf16.mxu0 0
    %3380 = vmatpush1.bf16.msra.mxu0 %v2761
    %3381 = vmatprep.subr.bf16.mxu0 0
    %3382 = vmatpush2.bf16.msra.mxu0 0
    %3383 = vmatprep.subr.bf16.mxu0 0
    %3384 = vmatpush2.bf16.msra.mxu0 0
    %3385 = vmatprep.subr.bf16.mxu0 0
    %3386 = vmatpush2.bf16.msra.mxu0 0
    %3387 = vmatprep.subr.bf16.mxu0 0
    %3388 = vmatpush2.bf16.msra.mxu0 0
    %3389 = vmatprep.subr.bf16.mxu0 0
    %3390 = vmatpush2.bf16.msra.mxu0 0
    %3391 = vmatprep.subr.bf16.mxu0 0
    %3392 = vmatpush2.bf16.msra.mxu0 0
    %3393 = vmatprep.subr.bf16.mxu0 0
    %3394 = vmatpush2.bf16.msra.mxu0 0
    %3395 = vmatprep.subr.bf16.mxu0 0
    %3396 = vmatpush2.bf16.msra.mxu0 0
    %3397 = vmatprep.mubr.bf16.mxu0 0
    %3398 = vmatmul.mubr.bf16.gmra.mxu0 %v3316
    %v3399 = vpop.f32.mrf.mxu0
    %v3400 = vadd.f32 0.0, %v3399
    %v3401 = vpop.f32.mrf.mxu0
    %v3402 = vpop.f32.mrf.mxu0
    %v3403 = vpop.f32.mrf.mxu0
    %3404 = vdwg.mxu0
    %v3405 = vadd.f32 %v2444, %v3400
    %v3406 = vxor.u32 %v3405, 2147483648
    %v3407 = vmul.f32 %v3406, 1.442695
    %v3408 = vpow.pop %v3407
    %v3409 = vadd.f32 %v3408, 1.0
    %v3410 = vrcp.pop %v3409
    %v3411 = vmul.f32 1.0, %v3410
    %3412 = vmatprep.subr.bf16.mxu0 0
    %3413 = vmatpush1.bf16.msra.mxu0 0
    %3414 = vmatprep.subr.bf16.mxu0 0
    %3415 = vmatpush1.bf16.msra.mxu0 0
    %3416 = vmatprep.subr.bf16.mxu0 0
    %3417 = vmatpush1.bf16.msra.mxu0 0
    %3418 = vmatprep.subr.bf16.mxu0 0
    %3419 = vmatpush1.bf16.msra.mxu0 0
    %3420 = vmatprep.subr.bf16.mxu0 0
    %3421 = vmatpush1.bf16.msra.mxu0 0
    %3422 = vmatprep.subr.bf16.mxu0 0
    %3423 = vmatpush1.bf16.msra.mxu0 0
    %3424 = vmatprep.subr.bf16.mxu0 0
    %3425 = vmatpush1.bf16.msra.mxu0 %v2821
    %3426 = vmatprep.subr.bf16.mxu0 0
    %3427 = vmatpush1.bf16.msra.mxu0 %v2820
    %3428 = vmatprep.subr.bf16.mxu0 0
    %3429 = vmatpush2.bf16.msra.mxu0 0
    %3430 = vmatprep.subr.bf16.mxu0 0
    %3431 = vmatpush2.bf16.msra.mxu0 0
    %3432 = vmatprep.subr.bf16.mxu0 0
    %3433 = vmatpush2.bf16.msra.mxu0 0
    %3434 = vmatprep.subr.bf16.mxu0 0
    %3435 = vmatpush2.bf16.msra.mxu0 0
    %3436 = vmatprep.subr.bf16.mxu0 0
    %3437 = vmatpush2.bf16.msra.mxu0 0
    %3438 = vmatprep.subr.bf16.mxu0 0
    %3439 = vmatpush2.bf16.msra.mxu0 0
    %3440 = vmatprep.subr.bf16.mxu0 0
    %3441 = vmatpush2.bf16.msra.mxu0 0
    %3442 = vmatprep.subr.bf16.mxu0 0
    %3443 = vmatpush2.bf16.msra.mxu0 0
    %3444 = vmatprep.mubr.bf16.mxu0 0
    %3445 = vmatmul.mubr.bf16.gmra.mxu0 %v3316
    %v3446 = vpop.f32.mrf.mxu0
    %v3447 = vadd.f32 0.0, %v3446
    %v3448 = vpop.f32.mrf.mxu0
    %v3449 = vpop.f32.mrf.mxu0
    %v3450 = vpop.f32.mrf.mxu0
    %3451 = vdwg.mxu0
    %v3452 = vadd.f32 %v2550, %v3447
    %v3453 = vxor.u32 %v3452, 2147483648
    %v3454 = vmul.f32 %v3453, 1.442695
    %v3455 = vpow.pop %v3454
    %v3456 = vadd.f32 %v3455, 1.0
    %v3457 = vrcp.pop %v3456
    %v3458 = vmul.f32 1.0, %v3457
    %3459 = vmatprep.subr.bf16.mxu0 0
    %3460 = vmatpush1.bf16.msra.mxu0 0
    %3461 = vmatprep.subr.bf16.mxu0 0
    %3462 = vmatpush1.bf16.msra.mxu0 0
    %3463 = vmatprep.subr.bf16.mxu0 0
    %3464 = vmatpush1.bf16.msra.mxu0 0
    %3465 = vmatprep.subr.bf16.mxu0 0
    %3466 = vmatpush1.bf16.msra.mxu0 0
    %3467 = vmatprep.subr.bf16.mxu0 0
    %3468 = vmatpush1.bf16.msra.mxu0 0
    %3469 = vmatprep.subr.bf16.mxu0 0
    %3470 = vmatpush1.bf16.msra.mxu0 0
    %3471 = vmatprep.subr.bf16.mxu0 0
    %3472 = vmatpush1.bf16.msra.mxu0 %v2880
    %3473 = vmatprep.subr.bf16.mxu0 0
    %3474 = vmatpush1.bf16.msra.mxu0 %v2879
    %3475 = vmatprep.subr.bf16.mxu0 0
    %3476 = vmatpush2.bf16.msra.mxu0 0
    %3477 = vmatprep.subr.bf16.mxu0 0
    %3478 = vmatpush2.bf16.msra.mxu0 0
    %3479 = vmatprep.subr.bf16.mxu0 0
    %3480 = vmatpush2.bf16.msra.mxu0 0
    %3481 = vmatprep.subr.bf16.mxu0 0
    %3482 = vmatpush2.bf16.msra.mxu0 0
    %3483 = vmatprep.subr.bf16.mxu0 0
    %3484 = vmatpush2.bf16.msra.mxu0 0
    %3485 = vmatprep.subr.bf16.mxu0 0
    %3486 = vmatpush2.bf16.msra.mxu0 0
    %3487 = vmatprep.subr.bf16.mxu0 0
    %3488 = vmatpush2.bf16.msra.mxu0 0
    %3489 = vmatprep.subr.bf16.mxu0 0
    %3490 = vmatpush2.bf16.msra.mxu0 0
    %3491 = vmatprep.mubr.bf16.mxu0 0
    %3492 = vmatmul.mubr.bf16.gmra.mxu0 %v3316
    %v3493 = vpop.f32.mrf.mxu0
    %v3494 = vadd.f32 0.0, %v3493
    %v3495 = vpop.f32.mrf.mxu0
    %v3496 = vpop.f32.mrf.mxu0
    %v3497 = vpop.f32.mrf.mxu0
    %3498 = vdwg.mxu0
    %v3499 = vadd.f32 %v2656, %v3494
    %v3500 = vtanh.pop %v3499
    %v3501 = vmul.f32 %v3411, %v3311
    %v3502 = vmul.f32 %v3364, %v3500
    %v3503 = vadd.f32 %v3501, %v3502
    %v3504 = vtanh.pop %v3503
    %v3505 = vmul.f32 %v3458, %v3504
    %v3506 = vpack.c.bf16 %v3505, %v3505
    %v3508 = vsel %vm130, %v3506, 0
    %3510 = vmatprep.subr.bf16.mxu0 0
    %3511 = vmatpush1.bf16.msra.mxu0 0
    %3512 = vmatprep.subr.bf16.mxu0 0
    %3513 = vmatpush1.bf16.msra.mxu0 0
    %3514 = vmatprep.subr.bf16.mxu0 0
    %3515 = vmatpush1.bf16.msra.mxu0 0
    %3516 = vmatprep.subr.bf16.mxu0 0
    %3517 = vmatpush1.bf16.msra.mxu0 0
    %3518 = vmatprep.subr.bf16.mxu0 0
    %3519 = vmatpush1.bf16.msra.mxu0 0
    %3520 = vmatprep.subr.bf16.mxu0 0
    %3521 = vmatpush1.bf16.msra.mxu0 0
    %3522 = vmatprep.subr.bf16.mxu0 0
    %3523 = vmatpush1.bf16.msra.mxu0 %v2703
    %3524 = vmatprep.subr.bf16.mxu0 0
    %3525 = vmatpush1.bf16.msra.mxu0 %v2702
    %3526 = vmatprep.subr.bf16.mxu0 0
    %3527 = vmatpush2.bf16.msra.mxu0 0
    %3528 = vmatprep.subr.bf16.mxu0 0
    %3529 = vmatpush2.bf16.msra.mxu0 0
    %3530 = vmatprep.subr.bf16.mxu0 0
    %3531 = vmatpush2.bf16.msra.mxu0 0
    %3532 = vmatprep.subr.bf16.mxu0 0
    %3533 = vmatpush2.bf16.msra.mxu0 0
    %3534 = vmatprep.subr.bf16.mxu0 0
    %3535 = vmatpush2.bf16.msra.mxu0 0
    %3536 = vmatprep.subr.bf16.mxu0 0
    %3537 = vmatpush2.bf16.msra.mxu0 0
    %3538 = vmatprep.subr.bf16.mxu0 0
    %3539 = vmatpush2.bf16.msra.mxu0 0
    %3540 = vmatprep.subr.bf16.mxu0 0
    %3541 = vmatpush2.bf16.msra.mxu0 0
    %3542 = vmatprep.mubr.bf16.mxu0 0
    %3543 = vmatmul.mubr.bf16.gmra.mxu0 %v3508
    %v3544 = vpop.f32.mrf.mxu0
    %v3545 = vadd.f32 0.0, %v3544
    %v3546 = vpop.f32.mrf.mxu0
    %v3547 = vpop.f32.mrf.mxu0
    %v3548 = vpop.f32.mrf.mxu0
    %3549 = vdwg.mxu0
    %v3550 = vadd.f32 %v2343, %v3545
    %v3551 = vxor.u32 %v3550, 2147483648
    %v3552 = vmul.f32 %v3551, 1.442695
    %v3553 = vpow.pop %v3552
    %v3554 = vadd.f32 %v3553, 1.0
    %v3555 = vrcp.pop %v3554
    %v3556 = vmul.f32 1.0, %v3555
    %3557 = vmatprep.subr.bf16.mxu0 0
    %3558 = vmatpush1.bf16.msra.mxu0 0
    %3559 = vmatprep.subr.bf16.mxu0 0
    %3560 = vmatpush1.bf16.msra.mxu0 0
    %3561 = vmatprep.subr.bf16.mxu0 0
    %3562 = vmatpush1.bf16.msra.mxu0 0
    %3563 = vmatprep.subr.bf16.mxu0 0
    %3564 = vmatpush1.bf16.msra.mxu0 0
    %3565 = vmatprep.subr.bf16.mxu0 0
    %3566 = vmatpush1.bf16.msra.mxu0 0
    %3567 = vmatprep.subr.bf16.mxu0 0
    %3568 = vmatpush1.bf16.msra.mxu0 0
    %3569 = vmatprep.subr.bf16.mxu0 0
    %3570 = vmatpush1.bf16.msra.mxu0 %v2762
    %3571 = vmatprep.subr.bf16.mxu0 0
    %3572 = vmatpush1.bf16.msra.mxu0 %v2761
    %3573 = vmatprep.subr.bf16.mxu0 0
    %3574 = vmatpush2.bf16.msra.mxu0 0
    %3575 = vmatprep.subr.bf16.mxu0 0
    %3576 = vmatpush2.bf16.msra.mxu0 0
    %3577 = vmatprep.subr.bf16.mxu0 0
    %3578 = vmatpush2.bf16.msra.mxu0 0
    %3579 = vmatprep.subr.bf16.mxu0 0
    %3580 = vmatpush2.bf16.msra.mxu0 0
    %3581 = vmatprep.subr.bf16.mxu0 0
    %3582 = vmatpush2.bf16.msra.mxu0 0
    %3583 = vmatprep.subr.bf16.mxu0 0
    %3584 = vmatpush2.bf16.msra.mxu0 0
    %3585 = vmatprep.subr.bf16.mxu0 0
    %3586 = vmatpush2.bf16.msra.mxu0 0
    %3587 = vmatprep.subr.bf16.mxu0 0
    %3588 = vmatpush2.bf16.msra.mxu0 0
    %3589 = vmatprep.mubr.bf16.mxu0 0
    %3590 = vmatmul.mubr.bf16.gmra.mxu0 %v3508
    %v3591 = vpop.f32.mrf.mxu0
    %v3592 = vadd.f32 0.0, %v3591
    %v3593 = vpop.f32.mrf.mxu0
    %v3594 = vpop.f32.mrf.mxu0
    %v3595 = vpop.f32.mrf.mxu0
    %3596 = vdwg.mxu0
    %v3597 = vadd.f32 %v2449, %v3592
    %v3598 = vxor.u32 %v3597, 2147483648
    %v3599 = vmul.f32 %v3598, 1.442695
    %v3600 = vpow.pop %v3599
    %v3601 = vadd.f32 %v3600, 1.0
    %v3602 = vrcp.pop %v3601
    %v3603 = vmul.f32 1.0, %v3602
    %3604 = vmatprep.subr.bf16.mxu0 0
    %3605 = vmatpush1.bf16.msra.mxu0 0
    %3606 = vmatprep.subr.bf16.mxu0 0
    %3607 = vmatpush1.bf16.msra.mxu0 0
    %3608 = vmatprep.subr.bf16.mxu0 0
    %3609 = vmatpush1.bf16.msra.mxu0 0
    %3610 = vmatprep.subr.bf16.mxu0 0
    %3611 = vmatpush1.bf16.msra.mxu0 0
    %3612 = vmatprep.subr.bf16.mxu0 0
    %3613 = vmatpush1.bf16.msra.mxu0 0
    %3614 = vmatprep.subr.bf16.mxu0 0
    %3615 = vmatpush1.bf16.msra.mxu0 0
    %3616 = vmatprep.subr.bf16.mxu0 0
    %3617 = vmatpush1.bf16.msra.mxu0 %v2821
    %3618 = vmatprep.subr.bf16.mxu0 0
    %3619 = vmatpush1.bf16.msra.mxu0 %v2820
    %3620 = vmatprep.subr.bf16.mxu0 0
    %3621 = vmatpush2.bf16.msra.mxu0 0
    %3622 = vmatprep.subr.bf16.mxu0 0
    %3623 = vmatpush2.bf16.msra.mxu0 0
    %3624 = vmatprep.subr.bf16.mxu0 0
    %3625 = vmatpush2.bf16.msra.mxu0 0
    %3626 = vmatprep.subr.bf16.mxu0 0
    %3627 = vmatpush2.bf16.msra.mxu0 0
    %3628 = vmatprep.subr.bf16.mxu0 0
    %3629 = vmatpush2.bf16.msra.mxu0 0
    %3630 = vmatprep.subr.bf16.mxu0 0
    %3631 = vmatpush2.bf16.msra.mxu0 0
    %3632 = vmatprep.subr.bf16.mxu0 0
    %3633 = vmatpush2.bf16.msra.mxu0 0
    %3634 = vmatprep.subr.bf16.mxu0 0
    %3635 = vmatpush2.bf16.msra.mxu0 0
    %3636 = vmatprep.mubr.bf16.mxu0 0
    %3637 = vmatmul.mubr.bf16.gmra.mxu0 %v3508
    %v3638 = vpop.f32.mrf.mxu0
    %v3639 = vadd.f32 0.0, %v3638
    %v3640 = vpop.f32.mrf.mxu0
    %v3641 = vpop.f32.mrf.mxu0
    %v3642 = vpop.f32.mrf.mxu0
    %3643 = vdwg.mxu0
    %v3644 = vadd.f32 %v2555, %v3639
    %v3645 = vxor.u32 %v3644, 2147483648
    %v3646 = vmul.f32 %v3645, 1.442695
    %v3647 = vpow.pop %v3646
    %v3648 = vadd.f32 %v3647, 1.0
    %v3649 = vrcp.pop %v3648
    %v3650 = vmul.f32 1.0, %v3649
    %3651 = vmatprep.subr.bf16.mxu0 0
    %3652 = vmatpush1.bf16.msra.mxu0 0
    %3653 = vmatprep.subr.bf16.mxu0 0
    %3654 = vmatpush1.bf16.msra.mxu0 0
    %3655 = vmatprep.subr.bf16.mxu0 0
    %3656 = vmatpush1.bf16.msra.mxu0 0
    %3657 = vmatprep.subr.bf16.mxu0 0
    %3658 = vmatpush1.bf16.msra.mxu0 0
    %3659 = vmatprep.subr.bf16.mxu0 0
    %3660 = vmatpush1.bf16.msra.mxu0 0
    %3661 = vmatprep.subr.bf16.mxu0 0
    %3662 = vmatpush1.bf16.msra.mxu0 0
    %3663 = vmatprep.subr.bf16.mxu0 0
    %3664 = vmatpush1.bf16.msra.mxu0 %v2880
    %3665 = vmatprep.subr.bf16.mxu0 0
    %3666 = vmatpush1.bf16.msra.mxu0 %v2879
    %3667 = vmatprep.subr.bf16.mxu0 0
    %3668 = vmatpush2.bf16.msra.mxu0 0
    %3669 = vmatprep.subr.bf16.mxu0 0
    %3670 = vmatpush2.bf16.msra.mxu0 0
    %3671 = vmatprep.subr.bf16.mxu0 0
    %3672 = vmatpush2.bf16.msra.mxu0 0
    %3673 = vmatprep.subr.bf16.mxu0 0
    %3674 = vmatpush2.bf16.msra.mxu0 0
    %3675 = vmatprep.subr.bf16.mxu0 0
    %3676 = vmatpush2.bf16.msra.mxu0 0
    %3677 = vmatprep.subr.bf16.mxu0 0
    %3678 = vmatpush2.bf16.msra.mxu0 0
    %3679 = vmatprep.subr.bf16.mxu0 0
    %3680 = vmatpush2.bf16.msra.mxu0 0
    %3681 = vmatprep.subr.bf16.mxu0 0
    %3682 = vmatpush2.bf16.msra.mxu0 0
    %3683 = vmatprep.mubr.bf16.mxu0 0
    %3684 = vmatmul.mubr.bf16.gmra.mxu0 %v3508
    %v3685 = vpop.f32.mrf.mxu0
    %v3686 = vadd.f32 0.0, %v3685
    %v3687 = vpop.f32.mrf.mxu0
    %v3688 = vpop.f32.mrf.mxu0
    %v3689 = vpop.f32.mrf.mxu0
    %3690 = vdwg.mxu0
    %v3691 = vadd.f32 %v2661, %v3686
    %v3692 = vtanh.pop %v3691
    %v3693 = vmul.f32 %v3603, %v3503
    %v3694 = vmul.f32 %v3556, %v3692
    %v3695 = vadd.f32 %v3693, %v3694
    %v3696 = vtanh.pop %v3695
    %v3697 = vmul.f32 %v3650, %v3696
    %v3698 = vpack.c.bf16 %v3697, %v3697
    %v3700 = vsel %vm130, %v3698, 0
    %3702 = vmatprep.subr.bf16.mxu0 0
    %3703 = vmatpush1.bf16.msra.mxu0 0
    %3704 = vmatprep.subr.bf16.mxu0 0
    %3705 = vmatpush1.bf16.msra.mxu0 0
    %3706 = vmatprep.subr.bf16.mxu0 0
    %3707 = vmatpush1.bf16.msra.mxu0 0
    %3708 = vmatprep.subr.bf16.mxu0 0
    %3709 = vmatpush1.bf16.msra.mxu0 0
    %3710 = vmatprep.subr.bf16.mxu0 0
    %3711 = vmatpush1.bf16.msra.mxu0 0
    %3712 = vmatprep.subr.bf16.mxu0 0
    %3713 = vmatpush1.bf16.msra.mxu0 0
    %3714 = vmatprep.subr.bf16.mxu0 0
    %3715 = vmatpush1.bf16.msra.mxu0 %v2703
    %3716 = vmatprep.subr.bf16.mxu0 0
    %3717 = vmatpush1.bf16.msra.mxu0 %v2702
    %3718 = vmatprep.subr.bf16.mxu0 0
    %3719 = vmatpush2.bf16.msra.mxu0 0
    %3720 = vmatprep.subr.bf16.mxu0 0
    %3721 = vmatpush2.bf16.msra.mxu0 0
    %3722 = vmatprep.subr.bf16.mxu0 0
    %3723 = vmatpush2.bf16.msra.mxu0 0
    %3724 = vmatprep.subr.bf16.mxu0 0
    %3725 = vmatpush2.bf16.msra.mxu0 0
    %3726 = vmatprep.subr.bf16.mxu0 0
    %3727 = vmatpush2.bf16.msra.mxu0 0
    %3728 = vmatprep.subr.bf16.mxu0 0
    %3729 = vmatpush2.bf16.msra.mxu0 0
    %3730 = vmatprep.subr.bf16.mxu0 0
    %3731 = vmatpush2.bf16.msra.mxu0 0
    %3732 = vmatprep.subr.bf16.mxu0 0
    %3733 = vmatpush2.bf16.msra.mxu0 0
    %3734 = vmatprep.mubr.bf16.mxu0 0
    %3735 = vmatmul.mubr.bf16.gmra.mxu0 %v3700
    %v3736 = vpop.f32.mrf.mxu0
    %v3737 = vadd.f32 0.0, %v3736
    %v3738 = vpop.f32.mrf.mxu0
    %v3739 = vpop.f32.mrf.mxu0
    %v3740 = vpop.f32.mrf.mxu0
    %3741 = vdwg.mxu0
    %v3742 = vadd.f32 %v2346, %v3737
    %v3743 = vxor.u32 %v3742, 2147483648
    %v3744 = vmul.f32 %v3743, 1.442695
    %v3745 = vpow.pop %v3744
    %v3746 = vadd.f32 %v3745, 1.0
    %v3747 = vrcp.pop %v3746
    %v3748 = vmul.f32 1.0, %v3747
    %3749 = vmatprep.subr.bf16.mxu0 0
    %3750 = vmatpush1.bf16.msra.mxu0 0
    %3751 = vmatprep.subr.bf16.mxu0 0
    %3752 = vmatpush1.bf16.msra.mxu0 0
    %3753 = vmatprep.subr.bf16.mxu0 0
    %3754 = vmatpush1.bf16.msra.mxu0 0
    %3755 = vmatprep.subr.bf16.mxu0 0
    %3756 = vmatpush1.bf16.msra.mxu0 0
    %3757 = vmatprep.subr.bf16.mxu0 0
    %3758 = vmatpush1.bf16.msra.mxu0 0
    %3759 = vmatprep.subr.bf16.mxu0 0
    %3760 = vmatpush1.bf16.msra.mxu0 0
    %3761 = vmatprep.subr.bf16.mxu0 0
    %3762 = vmatpush1.bf16.msra.mxu0 %v2762
    %3763 = vmatprep.subr.bf16.mxu0 0
    %3764 = vmatpush1.bf16.msra.mxu0 %v2761
    %3765 = vmatprep.subr.bf16.mxu0 0
    %3766 = vmatpush2.bf16.msra.mxu0 0
    %3767 = vmatprep.subr.bf16.mxu0 0
    %3768 = vmatpush2.bf16.msra.mxu0 0
    %3769 = vmatprep.subr.bf16.mxu0 0
    %3770 = vmatpush2.bf16.msra.mxu0 0
    %3771 = vmatprep.subr.bf16.mxu0 0
    %3772 = vmatpush2.bf16.msra.mxu0 0
    %3773 = vmatprep.subr.bf16.mxu0 0
    %3774 = vmatpush2.bf16.msra.mxu0 0
    %3775 = vmatprep.subr.bf16.mxu0 0
    %3776 = vmatpush2.bf16.msra.mxu0 0
    %3777 = vmatprep.subr.bf16.mxu0 0
    %3778 = vmatpush2.bf16.msra.mxu0 0
    %3779 = vmatprep.subr.bf16.mxu0 0
    %3780 = vmatpush2.bf16.msra.mxu0 0
    %3781 = vmatprep.mubr.bf16.mxu0 0
    %3782 = vmatmul.mubr.bf16.gmra.mxu0 %v3700
    %v3783 = vpop.f32.mrf.mxu0
    %v3784 = vadd.f32 0.0, %v3783
    %v3785 = vpop.f32.mrf.mxu0
    %v3786 = vpop.f32.mrf.mxu0
    %v3787 = vpop.f32.mrf.mxu0
    %3788 = vdwg.mxu0
    %v3789 = vadd.f32 %v2452, %v3784
    %v3790 = vxor.u32 %v3789, 2147483648
    %v3791 = vmul.f32 %v3790, 1.442695
    %v3792 = vpow.pop %v3791
    %v3793 = vadd.f32 %v3792, 1.0
    %v3794 = vrcp.pop %v3793
    %v3795 = vmul.f32 1.0, %v3794
    %3796 = vmatprep.subr.bf16.mxu0 0
    %3797 = vmatpush1.bf16.msra.mxu0 0
    %3798 = vmatprep.subr.bf16.mxu0 0
    %3799 = vmatpush1.bf16.msra.mxu0 0
    %3800 = vmatprep.subr.bf16.mxu0 0
    %3801 = vmatpush1.bf16.msra.mxu0 0
    %3802 = vmatprep.subr.bf16.mxu0 0
    %3803 = vmatpush1.bf16.msra.mxu0 0
    %3804 = vmatprep.subr.bf16.mxu0 0
    %3805 = vmatpush1.bf16.msra.mxu0 0
    %3806 = vmatprep.subr.bf16.mxu0 0
    %3807 = vmatpush1.bf16.msra.mxu0 0
    %3808 = vmatprep.subr.bf16.mxu0 0
    %3809 = vmatpush1.bf16.msra.mxu0 %v2821
    %3810 = vmatprep.subr.bf16.mxu0 0
    %3811 = vmatpush1.bf16.msra.mxu0 %v2820
    %3812 = vmatprep.subr.bf16.mxu0 0
    %3813 = vmatpush2.bf16.msra.mxu0 0
    %3814 = vmatprep.subr.bf16.mxu0 0
    %3815 = vmatpush2.bf16.msra.mxu0 0
    %3816 = vmatprep.subr.bf16.mxu0 0
    %3817 = vmatpush2.bf16.msra.mxu0 0
    %3818 = vmatprep.subr.bf16.mxu0 0
    %3819 = vmatpush2.bf16.msra.mxu0 0
    %3820 = vmatprep.subr.bf16.mxu0 0
    %3821 = vmatpush2.bf16.msra.mxu0 0
    %3822 = vmatprep.subr.bf16.mxu0 0
    %3823 = vmatpush2.bf16.msra.mxu0 0
    %3824 = vmatprep.subr.bf16.mxu0 0
    %3825 = vmatpush2.bf16.msra.mxu0 0
    %3826 = vmatprep.subr.bf16.mxu0 0
    %3827 = vmatpush2.bf16.msra.mxu0 0
    %3828 = vmatprep.mubr.bf16.mxu0 0
    %3829 = vmatmul.mubr.bf16.gmra.mxu0 %v3700
    %v3830 = vpop.f32.mrf.mxu0
    %v3831 = vadd.f32 0.0, %v3830
    %v3832 = vpop.f32.mrf.mxu0
    %v3833 = vpop.f32.mrf.mxu0
    %v3834 = vpop.f32.mrf.mxu0
    %3835 = vdwg.mxu0
    %v3836 = vadd.f32 %v2558, %v3831
    %v3837 = vxor.u32 %v3836, 2147483648
    %v3838 = vmul.f32 %v3837, 1.442695
    %v3839 = vpow.pop %v3838
    %v3840 = vadd.f32 %v3839, 1.0
    %v3841 = vrcp.pop %v3840
    %v3842 = vmul.f32 1.0, %v3841
    %3843 = vmatprep.subr.bf16.mxu0 0
    %3844 = vmatpush1.bf16.msra.mxu0 0
    %3845 = vmatprep.subr.bf16.mxu0 0
    %3846 = vmatpush1.bf16.msra.mxu0 0
    %3847 = vmatprep.subr.bf16.mxu0 0
    %3848 = vmatpush1.bf16.msra.mxu0 0
    %3849 = vmatprep.subr.bf16.mxu0 0
    %3850 = vmatpush1.bf16.msra.mxu0 0
    %3851 = vmatprep.subr.bf16.mxu0 0
    %3852 = vmatpush1.bf16.msra.mxu0 0
    %3853 = vmatprep.subr.bf16.mxu0 0
    %3854 = vmatpush1.bf16.msra.mxu0 0
    %3855 = vmatprep.subr.bf16.mxu0 0
    %3856 = vmatpush1.bf16.msra.mxu0 %v2880
    %3857 = vmatprep.subr.bf16.mxu0 0
    %3858 = vmatpush1.bf16.msra.mxu0 %v2879
    %3859 = vmatprep.subr.bf16.mxu0 0
    %3860 = vmatpush2.bf16.msra.mxu0 0
    %3861 = vmatprep.subr.bf16.mxu0 0
    %3862 = vmatpush2.bf16.msra.mxu0 0
    %3863 = vmatprep.subr.bf16.mxu0 0
    %3864 = vmatpush2.bf16.msra.mxu0 0
    %3865 = vmatprep.subr.bf16.mxu0 0
    %3866 = vmatpush2.bf16.msra.mxu0 0
    %3867 = vmatprep.subr.bf16.mxu0 0
    %3868 = vmatpush2.bf16.msra.mxu0 0
    %3869 = vmatprep.subr.bf16.mxu0 0
    %3870 = vmatpush2.bf16.msra.mxu0 0
    %3871 = vmatprep.subr.bf16.mxu0 0
    %3872 = vmatpush2.bf16.msra.mxu0 0
    %3873 = vmatprep.subr.bf16.mxu0 0
    %3874 = vmatpush2.bf16.msra.mxu0 0
    %3875 = vmatprep.mubr.bf16.mxu0 0
    %3876 = vmatmul.mubr.bf16.gmra.mxu0 %v3700
    %v3877 = vpop.f32.mrf.mxu0
    %v3878 = vadd.f32 0.0, %v3877
    %v3879 = vpop.f32.mrf.mxu0
    %v3880 = vpop.f32.mrf.mxu0
    %v3881 = vpop.f32.mrf.mxu0
    %3882 = vdwg.mxu0
    %v3883 = vadd.f32 %v2664, %v3878
    %v3884 = vtanh.pop %v3883
    %v3885 = vmul.f32 %v3795, %v3695
    %v3886 = vmul.f32 %v3748, %v3884
    %v3887 = vadd.f32 %v3885, %v3886
    %v3888 = vtanh.pop %v3887
    %v3889 = vmul.f32 %v3842, %v3888
    %v3890 = vpack.c.bf16 %v3889, %v3889
    %v3892 = vsel %vm130, %v3890, 0
    %3894 = vmatprep.subr.bf16.mxu0 0
    %3895 = vmatpush1.bf16.msra.mxu0 0
    %3896 = vmatprep.subr.bf16.mxu0 0
    %3897 = vmatpush1.bf16.msra.mxu0 0
    %3898 = vmatprep.subr.bf16.mxu0 0
    %3899 = vmatpush1.bf16.msra.mxu0 0
    %3900 = vmatprep.subr.bf16.mxu0 0
    %3901 = vmatpush1.bf16.msra.mxu0 0
    %3902 = vmatprep.subr.bf16.mxu0 0
    %3903 = vmatpush1.bf16.msra.mxu0 0
    %3904 = vmatprep.subr.bf16.mxu0 0
    %3905 = vmatpush1.bf16.msra.mxu0 0
    %3906 = vmatprep.subr.bf16.mxu0 0
    %3907 = vmatpush1.bf16.msra.mxu0 %v2703
    %3908 = vmatprep.subr.bf16.mxu0 0
    %3909 = vmatpush1.bf16.msra.mxu0 %v2702
    %3910 = vmatprep.subr.bf16.mxu0 0
    %3911 = vmatpush2.bf16.msra.mxu0 0
    %3912 = vmatprep.subr.bf16.mxu0 0
    %3913 = vmatpush2.bf16.msra.mxu0 0
    %3914 = vmatprep.subr.bf16.mxu0 0
    %3915 = vmatpush2.bf16.msra.mxu0 0
    %3916 = vmatprep.subr.bf16.mxu0 0
    %3917 = vmatpush2.bf16.msra.mxu0 0
    %3918 = vmatprep.subr.bf16.mxu0 0
    %3919 = vmatpush2.bf16.msra.mxu0 0
    %3920 = vmatprep.subr.bf16.mxu0 0
    %3921 = vmatpush2.bf16.msra.mxu0 0
    %3922 = vmatprep.subr.bf16.mxu0 0
    %3923 = vmatpush2.bf16.msra.mxu0 0
    %3924 = vmatprep.subr.bf16.mxu0 0
    %3925 = vmatpush2.bf16.msra.mxu0 0
    %3926 = vmatprep.mubr.bf16.mxu0 0
    %3927 = vmatmul.mubr.bf16.gmra.mxu0 %v3892
    %v3928 = vpop.f32.mrf.mxu0
    %v3929 = vadd.f32 0.0, %v3928
    %v3930 = vpop.f32.mrf.mxu0
    %v3931 = vpop.f32.mrf.mxu0
    %v3932 = vpop.f32.mrf.mxu0
    %3933 = vdwg.mxu0
    %v3934 = vadd.f32 %v2351, %v3929
    %v3935 = vxor.u32 %v3934, 2147483648
    %v3936 = vmul.f32 %v3935, 1.442695
    %v3937 = vpow.pop %v3936
    %v3938 = vadd.f32 %v3937, 1.0
    %v3939 = vrcp.pop %v3938
    %v3940 = vmul.f32 1.0, %v3939
    %3941 = vmatprep.subr.bf16.mxu0 0
    %3942 = vmatpush1.bf16.msra.mxu0 0
    %3943 = vmatprep.subr.bf16.mxu0 0
    %3944 = vmatpush1.bf16.msra.mxu0 0
    %3945 = vmatprep.subr.bf16.mxu0 0
    %3946 = vmatpush1.bf16.msra.mxu0 0
    %3947 = vmatprep.subr.bf16.mxu0 0
    %3948 = vmatpush1.bf16.msra.mxu0 0
    %3949 = vmatprep.subr.bf16.mxu0 0
    %3950 = vmatpush1.bf16.msra.mxu0 0
    %3951 = vmatprep.subr.bf16.mxu0 0
    %3952 = vmatpush1.bf16.msra.mxu0 0
    %3953 = vmatprep.subr.bf16.mxu0 0
    %3954 = vmatpush1.bf16.msra.mxu0 %v2762
    %3955 = vmatprep.subr.bf16.mxu0 0
    %3956 = vmatpush1.bf16.msra.mxu0 %v2761
    %3957 = vmatprep.subr.bf16.mxu0 0
    %3958 = vmatpush2.bf16.msra.mxu0 0
    %3959 = vmatprep.subr.bf16.mxu0 0
    %3960 = vmatpush2.bf16.msra.mxu0 0
    %3961 = vmatprep.subr.bf16.mxu0 0
    %3962 = vmatpush2.bf16.msra.mxu0 0
    %3963 = vmatprep.subr.bf16.mxu0 0
    %3964 = vmatpush2.bf16.msra.mxu0 0
    %3965 = vmatprep.subr.bf16.mxu0 0
    %3966 = vmatpush2.bf16.msra.mxu0 0
    %3967 = vmatprep.subr.bf16.mxu0 0
    %3968 = vmatpush2.bf16.msra.mxu0 0
    %3969 = vmatprep.subr.bf16.mxu0 0
    %3970 = vmatpush2.bf16.msra.mxu0 0
    %3971 = vmatprep.subr.bf16.mxu0 0
    %3972 = vmatpush2.bf16.msra.mxu0 0
    %3973 = vmatprep.mubr.bf16.mxu0 0
    %3974 = vmatmul.mubr.bf16.gmra.mxu0 %v3892
    %v3975 = vpop.f32.mrf.mxu0
    %v3976 = vadd.f32 0.0, %v3975
    %v3977 = vpop.f32.mrf.mxu0
    %v3978 = vpop.f32.mrf.mxu0
    %v3979 = vpop.f32.mrf.mxu0
    %3980 = vdwg.mxu0
    %v3981 = vadd.f32 %v2457, %v3976
    %v3982 = vxor.u32 %v3981, 2147483648
    %v3983 = vmul.f32 %v3982, 1.442695
    %v3984 = vpow.pop %v3983
    %v3985 = vadd.f32 %v3984, 1.0
    %v3986 = vrcp.pop %v3985
    %v3987 = vmul.f32 1.0, %v3986
    %3988 = vmatprep.subr.bf16.mxu0 0
    %3989 = vmatpush1.bf16.msra.mxu0 0
    %3990 = vmatprep.subr.bf16.mxu0 0
    %3991 = vmatpush1.bf16.msra.mxu0 0
    %3992 = vmatprep.subr.bf16.mxu0 0
    %3993 = vmatpush1.bf16.msra.mxu0 0
    %3994 = vmatprep.subr.bf16.mxu0 0
    %3995 = vmatpush1.bf16.msra.mxu0 0
    %3996 = vmatprep.subr.bf16.mxu0 0
    %3997 = vmatpush1.bf16.msra.mxu0 0
    %3998 = vmatprep.subr.bf16.mxu0 0
    %3999 = vmatpush1.bf16.msra.mxu0 0
    %4000 = vmatprep.subr.bf16.mxu0 0
    %4001 = vmatpush1.bf16.msra.mxu0 %v2821
    %4002 = vmatprep.subr.bf16.mxu0 0
    %4003 = vmatpush1.bf16.msra.mxu0 %v2820
    %4004 = vmatprep.subr.bf16.mxu0 0
    %4005 = vmatpush2.bf16.msra.mxu0 0
    %4006 = vmatprep.subr.bf16.mxu0 0
    %4007 = vmatpush2.bf16.msra.mxu0 0
    %4008 = vmatprep.subr.bf16.mxu0 0
    %4009 = vmatpush2.bf16.msra.mxu0 0
    %4010 = vmatprep.subr.bf16.mxu0 0
    %4011 = vmatpush2.bf16.msra.mxu0 0
    %4012 = vmatprep.subr.bf16.mxu0 0
    %4013 = vmatpush2.bf16.msra.mxu0 0
    %4014 = vmatprep.subr.bf16.mxu0 0
    %4015 = vmatpush2.bf16.msra.mxu0 0
    %4016 = vmatprep.subr.bf16.mxu0 0
    %4017 = vmatpush2.bf16.msra.mxu0 0
    %4018 = vmatprep.subr.bf16.mxu0 0
    %4019 = vmatpush2.bf16.msra.mxu0 0
    %4020 = vmatprep.mubr.bf16.mxu0 0
    %4021 = vmatmul.mubr.bf16.gmra.mxu0 %v3892
    %v4022 = vpop.f32.mrf.mxu0
    %v4023 = vadd.f32 0.0, %v4022
    %v4024 = vpop.f32.mrf.mxu0
    %v4025 = vpop.f32.mrf.mxu0
    %v4026 = vpop.f32.mrf.mxu0
    %4027 = vdwg.mxu0
    %v4028 = vadd.f32 %v2563, %v4023
    %v4029 = vxor.u32 %v4028, 2147483648
    %v4030 = vmul.f32 %v4029, 1.442695
    %v4031 = vpow.pop %v4030
    %v4032 = vadd.f32 %v4031, 1.0
    %v4033 = vrcp.pop %v4032
    %v4034 = vmul.f32 1.0, %v4033
    %4035 = vmatprep.subr.bf16.mxu0 0
    %4036 = vmatpush1.bf16.msra.mxu0 0
    %4037 = vmatprep.subr.bf16.mxu0 0
    %4038 = vmatpush1.bf16.msra.mxu0 0
    %4039 = vmatprep.subr.bf16.mxu0 0
    %4040 = vmatpush1.bf16.msra.mxu0 0
    %4041 = vmatprep.subr.bf16.mxu0 0
    %4042 = vmatpush1.bf16.msra.mxu0 0
    %4043 = vmatprep.subr.bf16.mxu0 0
    %4044 = vmatpush1.bf16.msra.mxu0 0
    %4045 = vmatprep.subr.bf16.mxu0 0
    %4046 = vmatpush1.bf16.msra.mxu0 0
    %4047 = vmatprep.subr.bf16.mxu0 0
    %4048 = vmatpush1.bf16.msra.mxu0 %v2880
    %4049 = vmatprep.subr.bf16.mxu0 0
    %4050 = vmatpush1.bf16.msra.mxu0 %v2879
    %4051 = vmatprep.subr.bf16.mxu0 0
    %4052 = vmatpush2.bf16.msra.mxu0 0
    %4053 = vmatprep.subr.bf16.mxu0 0
    %4054 = vmatpush2.bf16.msra.mxu0 0
    %4055 = vmatprep.subr.bf16.mxu0 0
    %4056 = vmatpush2.bf16.msra.mxu0 0
    %4057 = vmatprep.subr.bf16.mxu0 0
    %4058 = vmatpush2.bf16.msra.mxu0 0
    %4059 = vmatprep.subr.bf16.mxu0 0
    %4060 = vmatpush2.bf16.msra.mxu0 0
    %4061 = vmatprep.subr.bf16.mxu0 0
    %4062 = vmatpush2.bf16.msra.mxu0 0
    %4063 = vmatprep.subr.bf16.mxu0 0
    %4064 = vmatpush2.bf16.msra.mxu0 0
    %4065 = vmatprep.subr.bf16.mxu0 0
    %4066 = vmatpush2.bf16.msra.mxu0 0
    %4067 = vmatprep.mubr.bf16.mxu0 0
    %4068 = vmatmul.mubr.bf16.gmra.mxu0 %v3892
    %v4069 = vpop.f32.mrf.mxu0
    %v4070 = vadd.f32 0.0, %v4069
    %v4071 = vpop.f32.mrf.mxu0
    %v4072 = vpop.f32.mrf.mxu0
    %v4073 = vpop.f32.mrf.mxu0
    %4074 = vdwg.mxu0
    %v4075 = vadd.f32 %v2669, %v4070
    %v4076 = vtanh.pop %v4075
    %v4077 = vmul.f32 %v3987, %v3887
    %v4078 = vmul.f32 %v3940, %v4076
    %v4079 = vadd.f32 %v4077, %v4078
    %v4080 = vtanh.pop %v4079
    %v4081 = vmul.f32 %v4034, %v4080
    %v4082 = vpack.c.bf16 %v4081, %v4081
    %v4084 = vsel %vm130, %v4082, 0
    %4086 = vmatprep.subr.bf16.mxu0 0
    %4087 = vmatpush1.bf16.msra.mxu0 0
    %4088 = vmatprep.subr.bf16.mxu0 0
    %4089 = vmatpush1.bf16.msra.mxu0 0
    %4090 = vmatprep.subr.bf16.mxu0 0
    %4091 = vmatpush1.bf16.msra.mxu0 0
    %4092 = vmatprep.subr.bf16.mxu0 0
    %4093 = vmatpush1.bf16.msra.mxu0 0
    %4094 = vmatprep.subr.bf16.mxu0 0
    %4095 = vmatpush1.bf16.msra.mxu0 0
    %4096 = vmatprep.subr.bf16.mxu0 0
    %4097 = vmatpush1.bf16.msra.mxu0 0
    %4098 = vmatprep.subr.bf16.mxu0 0
    %4099 = vmatpush1.bf16.msra.mxu0 %v2703
    %4100 = vmatprep.subr.bf16.mxu0 0
    %4101 = vmatpush1.bf16.msra.mxu0 %v2702
    %4102 = vmatprep.subr.bf16.mxu0 0
    %4103 = vmatpush2.bf16.msra.mxu0 0
    %4104 = vmatprep.subr.bf16.mxu0 0
    %4105 = vmatpush2.bf16.msra.mxu0 0
    %4106 = vmatprep.subr.bf16.mxu0 0
    %4107 = vmatpush2.bf16.msra.mxu0 0
    %4108 = vmatprep.subr.bf16.mxu0 0
    %4109 = vmatpush2.bf16.msra.mxu0 0
    %4110 = vmatprep.subr.bf16.mxu0 0
    %4111 = vmatpush2.bf16.msra.mxu0 0
    %4112 = vmatprep.subr.bf16.mxu0 0
    %4113 = vmatpush2.bf16.msra.mxu0 0
    %4114 = vmatprep.subr.bf16.mxu0 0
    %4115 = vmatpush2.bf16.msra.mxu0 0
    %4116 = vmatprep.subr.bf16.mxu0 0
    %4117 = vmatpush2.bf16.msra.mxu0 0
    %4118 = vmatprep.mubr.bf16.mxu0 0
    %4119 = vmatmul.mubr.bf16.gmra.mxu0 %v4084
    %v4120 = vpop.f32.mrf.mxu0
    %v4121 = vadd.f32 0.0, %v4120
    %v4122 = vpop.f32.mrf.mxu0
    %v4123 = vpop.f32.mrf.mxu0
    %v4124 = vpop.f32.mrf.mxu0
    %4125 = vdwg.mxu0
    %v4126 = vadd.f32 %v2354, %v4121
    %v4127 = vxor.u32 %v4126, 2147483648
    %v4128 = vmul.f32 %v4127, 1.442695
    %v4129 = vpow.pop %v4128
    %v4130 = vadd.f32 %v4129, 1.0
    %v4131 = vrcp.pop %v4130
    %v4132 = vmul.f32 1.0, %v4131
    %4133 = vmatprep.subr.bf16.mxu0 0
    %4134 = vmatpush1.bf16.msra.mxu0 0
    %4135 = vmatprep.subr.bf16.mxu0 0
    %4136 = vmatpush1.bf16.msra.mxu0 0
    %4137 = vmatprep.subr.bf16.mxu0 0
    %4138 = vmatpush1.bf16.msra.mxu0 0
    %4139 = vmatprep.subr.bf16.mxu0 0
    %4140 = vmatpush1.bf16.msra.mxu0 0
    %4141 = vmatprep.subr.bf16.mxu0 0
    %4142 = vmatpush1.bf16.msra.mxu0 0
    %4143 = vmatprep.subr.bf16.mxu0 0
    %4144 = vmatpush1.bf16.msra.mxu0 0
    %4145 = vmatprep.subr.bf16.mxu0 0
    %4146 = vmatpush1.bf16.msra.mxu0 %v2762
    %4147 = vmatprep.subr.bf16.mxu0 0
    %4148 = vmatpush1.bf16.msra.mxu0 %v2761
    %4149 = vmatprep.subr.bf16.mxu0 0
    %4150 = vmatpush2.bf16.msra.mxu0 0
    %4151 = vmatprep.subr.bf16.mxu0 0
    %4152 = vmatpush2.bf16.msra.mxu0 0
    %4153 = vmatprep.subr.bf16.mxu0 0
    %4154 = vmatpush2.bf16.msra.mxu0 0
    %4155 = vmatprep.subr.bf16.mxu0 0
    %4156 = vmatpush2.bf16.msra.mxu0 0
    %4157 = vmatprep.subr.bf16.mxu0 0
    %4158 = vmatpush2.bf16.msra.mxu0 0
    %4159 = vmatprep.subr.bf16.mxu0 0
    %4160 = vmatpush2.bf16.msra.mxu0 0
    %4161 = vmatprep.subr.bf16.mxu0 0
    %4162 = vmatpush2.bf16.msra.mxu0 0
    %4163 = vmatprep.subr.bf16.mxu0 0
    %4164 = vmatpush2.bf16.msra.mxu0 0
    %4165 = vmatprep.mubr.bf16.mxu0 0
    %4166 = vmatmul.mubr.bf16.gmra.mxu0 %v4084
    %v4167 = vpop.f32.mrf.mxu0
    %v4168 = vadd.f32 0.0, %v4167
    %v4169 = vpop.f32.mrf.mxu0
    %v4170 = vpop.f32.mrf.mxu0
    %v4171 = vpop.f32.mrf.mxu0
    %4172 = vdwg.mxu0
    %v4173 = vadd.f32 %v2460, %v4168
    %v4174 = vxor.u32 %v4173, 2147483648
    %v4175 = vmul.f32 %v4174, 1.442695
    %v4176 = vpow.pop %v4175
    %v4177 = vadd.f32 %v4176, 1.0
    %v4178 = vrcp.pop %v4177
    %v4179 = vmul.f32 1.0, %v4178
    %4180 = vmatprep.subr.bf16.mxu0 0
    %4181 = vmatpush1.bf16.msra.mxu0 0
    %4182 = vmatprep.subr.bf16.mxu0 0
    %4183 = vmatpush1.bf16.msra.mxu0 0
    %4184 = vmatprep.subr.bf16.mxu0 0
    %4185 = vmatpush1.bf16.msra.mxu0 0
    %4186 = vmatprep.subr.bf16.mxu0 0
    %4187 = vmatpush1.bf16.msra.mxu0 0
    %4188 = vmatprep.subr.bf16.mxu0 0
    %4189 = vmatpush1.bf16.msra.mxu0 0
    %4190 = vmatprep.subr.bf16.mxu0 0
    %4191 = vmatpush1.bf16.msra.mxu0 0
    %4192 = vmatprep.subr.bf16.mxu0 0
    %4193 = vmatpush1.bf16.msra.mxu0 %v2821
    %4194 = vmatprep.subr.bf16.mxu0 0
    %4195 = vmatpush1.bf16.msra.mxu0 %v2820
    %4196 = vmatprep.subr.bf16.mxu0 0
    %4197 = vmatpush2.bf16.msra.mxu0 0
    %4198 = vmatprep.subr.bf16.mxu0 0
    %4199 = vmatpush2.bf16.msra.mxu0 0
    %4200 = vmatprep.subr.bf16.mxu0 0
    %4201 = vmatpush2.bf16.msra.mxu0 0
    %4202 = vmatprep.subr.bf16.mxu0 0
    %4203 = vmatpush2.bf16.msra.mxu0 0
    %4204 = vmatprep.subr.bf16.mxu0 0
    %4205 = vmatpush2.bf16.msra.mxu0 0
    %4206 = vmatprep.subr.bf16.mxu0 0
    %4207 = vmatpush2.bf16.msra.mxu0 0
    %4208 = vmatprep.subr.bf16.mxu0 0
    %4209 = vmatpush2.bf16.msra.mxu0 0
    %4210 = vmatprep.subr.bf16.mxu0 0
    %4211 = vmatpush2.bf16.msra.mxu0 0
    %4212 = vmatprep.mubr.bf16.mxu0 0
    %4213 = vmatmul.mubr.bf16.gmra.mxu0 %v4084
    %v4214 = vpop.f32.mrf.mxu0
    %v4215 = vadd.f32 0.0, %v4214
    %v4216 = vpop.f32.mrf.mxu0
    %v4217 = vpop.f32.mrf.mxu0
    %v4218 = vpop.f32.mrf.mxu0
    %4219 = vdwg.mxu0
    %v4220 = vadd.f32 %v2566, %v4215
    %v4221 = vxor.u32 %v4220, 2147483648
    %v4222 = vmul.f32 %v4221, 1.442695
    %v4223 = vpow.pop %v4222
    %v4224 = vadd.f32 %v4223, 1.0
    %v4225 = vrcp.pop %v4224
    %v4226 = vmul.f32 1.0, %v4225
    %4227 = vmatprep.subr.bf16.mxu0 0
    %4228 = vmatpush1.bf16.msra.mxu0 0
    %4229 = vmatprep.subr.bf16.mxu0 0
    %4230 = vmatpush1.bf16.msra.mxu0 0
    %4231 = vmatprep.subr.bf16.mxu0 0
    %4232 = vmatpush1.bf16.msra.mxu0 0
    %4233 = vmatprep.subr.bf16.mxu0 0
    %4234 = vmatpush1.bf16.msra.mxu0 0
    %4235 = vmatprep.subr.bf16.mxu0 0
    %4236 = vmatpush1.bf16.msra.mxu0 0
    %4237 = vmatprep.subr.bf16.mxu0 0
    %4238 = vmatpush1.bf16.msra.mxu0 0
    %4239 = vmatprep.subr.bf16.mxu0 0
    %4240 = vmatpush1.bf16.msra.mxu0 %v2880
    %4241 = vmatprep.subr.bf16.mxu0 0
    %4242 = vmatpush1.bf16.msra.mxu0 %v2879
    %4243 = vmatprep.subr.bf16.mxu0 0
    %4244 = vmatpush2.bf16.msra.mxu0 0
    %4245 = vmatprep.subr.bf16.mxu0 0
    %4246 = vmatpush2.bf16.msra.mxu0 0
    %4247 = vmatprep.subr.bf16.mxu0 0
    %4248 = vmatpush2.bf16.msra.mxu0 0
    %4249 = vmatprep.subr.bf16.mxu0 0
    %4250 = vmatpush2.bf16.msra.mxu0 0
    %4251 = vmatprep.subr.bf16.mxu0 0
    %4252 = vmatpush2.bf16.msra.mxu0 0
    %4253 = vmatprep.subr.bf16.mxu0 0
    %4254 = vmatpush2.bf16.msra.mxu0 0
    %4255 = vmatprep.subr.bf16.mxu0 0
    %4256 = vmatpush2.bf16.msra.mxu0 0
    %4257 = vmatprep.subr.bf16.mxu0 0
    %4258 = vmatpush2.bf16.msra.mxu0 0
    %4259 = vmatprep.mubr.bf16.mxu0 0
    %4260 = vmatmul.mubr.bf16.gmra.mxu0 %v4084
    %v4261 = vpop.f32.mrf.mxu0
    %v4262 = vadd.f32 0.0, %v4261
    %v4263 = vpop.f32.mrf.mxu0
    %v4264 = vpop.f32.mrf.mxu0
    %v4265 = vpop.f32.mrf.mxu0
    %4266 = vdwg.mxu0
    %v4267 = vadd.f32 %v2672, %v4262
    %v4268 = vtanh.pop %v4267
    %v4269 = vmul.f32 %v4179, %v4079
    %v4270 = vmul.f32 %v4132, %v4268
    %v4271 = vadd.f32 %v4269, %v4270
    %v4272 = vtanh.pop %v4271
    %v4273 = vmul.f32 %v4226, %v4272
    %v4274 = vsel %vm2180, %v2929, %v4273
    %v4275 = vsel %vm2180, %v3121, %v4081
    %v4276 = vsel %vm2180, %v3313, %v3889
    %v4277 = vsel %vm2180, %v3505, %v3697
    %v4278 = vsel %vm2180, %v3697, %v3505
    %v4279 = vsel %vm2180, %v3889, %v3313
    %v4280 = vsel %vm2180, %v4081, %v3121
    %v4281 = vsel %vm2180, %v4273, %v2929
    %4282 = vst.msk [vmem:[#allocation9] sm:$0xff] %vm130, %v4274
    %4283 = vst.msk [vmem:[#allocation9 + $0x8] sm:$0xff] %vm130, %v4275
    %4284 = vst.msk [vmem:[#allocation9 + $0x10] sm:$0xff] %vm130, %v4276
    %4285 = vst.msk [vmem:[#allocation9 + $0x18] sm:$0xff] %vm130, %v4277
    %4286 = vst.msk [vmem:[#allocation9 + $0x20] sm:$0xff] %vm130, %v4278
    %4287 = vst.msk [vmem:[#allocation9 + $0x28] sm:$0xff] %vm130, %v4279
    %4288 = vst.msk [vmem:[#allocation9 + $0x30] sm:$0xff] %vm130, %v4280
    %4289 = vst.msk [vmem:[#allocation9 + $0x38] sm:$0xff] %vm130, %v4281
    %4298 = vrot.lane.b32.xlu0 %v4281, 32
    %v4299 = vpop.permute.xlu0 %4298
    %4300 = vrot.lane.b32.xlu0 %v4280, 32
    %v4301 = vpop.permute.xlu0 %4300
    %4302 = vrot.lane.b32.xlu0 %v4279, 32
    %v4303 = vpop.permute.xlu0 %4302
    %4304 = vrot.lane.b32.xlu0 %v4278, 32
    %v4305 = vpop.permute.xlu0 %4304
    %4306 = vrot.lane.b32.xlu0 %v4277, 32
    %v4307 = vpop.permute.xlu0 %4306
    %4308 = vrot.lane.b32.xlu0 %v4276, 32
    %v4309 = vpop.permute.xlu0 %4308
    %4310 = vrot.lane.b32.xlu0 %v4275, 32
    %v4311 = vpop.permute.xlu0 %4310
    %4312 = vrot.lane.b32.xlu0 %v4274, 32
    %v4313 = vpop.permute.xlu0 %4312
    %v4322 = vsel %vm130, %v4274, %v4299
    %v4323 = vsel %vm130, %v4275, %v4301
    %v4324 = vsel %vm130, %v4276, %v4303
    %v4325 = vsel %vm130, %v4277, %v4305
    %v4326 = vsel %vm130, %v4278, %v4307
    %v4327 = vsel %vm130, %v4279, %v4309
    %v4328 = vsel %vm130, %v4280, %v4311
    %v4329 = vsel %vm130, %v4281, %v4313
    %v4330 = vpack.c.bf16 %v4323, %v4322
    %v4331 = vpack.c.bf16 %v4325, %v4324
    %v4332 = vpack.c.bf16 %v4327, %v4326
    %v4333 = vpack.c.bf16 %v4329, %v4328
    %v4334 = vld [vmem:[%s7] sm:$0xf]
    %v4335 = vld [vmem:[%s7 + $0x4] sm:$0xf]
    %v4336 = vld [vmem:[%s7 + $0x8] sm:$0xf]
    %v4337 = vld [vmem:[%s7 + $0xc] sm:$0xf]
    %v4338 = vld [vmem:[%s7 + $0x10] sm:$0xf]
    %v4339 = vld [vmem:[%s7 + $0x14] sm:$0xf]
    %v4340 = vld [vmem:[%s7 + $0x18] sm:$0xf]
    %v4341 = vld [vmem:[%s7 + $0x1c] sm:$0xf]
    %v4342 = vld [vmem:[%s9] sm:$0x1]
    %v4344 = vlaneseq
    %v4345 = vshrl.u32 %v4344, 7
    %v4346 = vsub.s32 0, %v4345
    %v4347 = vrot.slane %v4342, %v4346
    %v4357 = vunpack.c.l.b16 %v4334
    %v4358 = vunpack.c.l.b16 %v4335
    %v4359 = vunpack.c.l.b16 %v4336
    %v4360 = vunpack.c.l.b16 %v4337
    %v4361 = vunpack.c.l.b16 %v4338
    %v4362 = vunpack.c.l.b16 %v4339
    %v4363 = vunpack.c.l.b16 %v4340
    %v4364 = vunpack.c.l.b16 %v4341
    %v4365 = vpack.c.b16 %v4358, %v4357
    %v4366 = vpack.c.b16 %v4360, %v4359
    %v4367 = vpack.c.b16 %v4362, %v4361
    %v4368 = vpack.c.b16 %v4364, %v4363
    %v4374 = vsel %vm182, %v4330, 0
    %v4377 = vsel %vm182, %v4331, 0
    %v4380 = vsel %vm182, %v4332, 0
    %v4383 = vsel %vm182, %v4333, 0
    %4385 = vmatprep.subr.bf16.mxu0 0
    %4386 = vmatpush1.bf16.msra.mxu0 0
    %4387 = vmatprep.subr.bf16.mxu0 0
    %4388 = vmatpush1.bf16.msra.mxu0 0
    %4389 = vmatprep.subr.bf16.mxu0 0
    %4390 = vmatpush1.bf16.msra.mxu0 0
    %4391 = vmatprep.subr.bf16.mxu0 0
    %4392 = vmatpush1.bf16.msra.mxu0 0
    %4393 = vmatprep.subr.bf16.mxu0 0
    %4394 = vmatpush1.bf16.msra.mxu0 %v4368
    %4395 = vmatprep.subr.bf16.mxu0 0
    %4396 = vmatpush1.bf16.msra.mxu0 %v4367
    %4397 = vmatprep.subr.bf16.mxu0 0
    %4398 = vmatpush1.bf16.msra.mxu0 %v4366
    %4399 = vmatprep.subr.bf16.mxu0 0
    %4400 = vmatpush1.bf16.msra.mxu0 %v4365
    %4401 = vmatprep.subr.bf16.mxu0 0
    %4402 = vmatpush2.bf16.msra.mxu0 0
    %4403 = vmatprep.subr.bf16.mxu0 0
    %4404 = vmatpush2.bf16.msra.mxu0 0
    %4405 = vmatprep.subr.bf16.mxu0 0
    %4406 = vmatpush2.bf16.msra.mxu0 0
    %4407 = vmatprep.subr.bf16.mxu0 0
    %4408 = vmatpush2.bf16.msra.mxu0 0
    %4409 = vmatprep.subr.bf16.mxu0 0
    %4410 = vmatpush2.bf16.msra.mxu0 0
    %4411 = vmatprep.subr.bf16.mxu0 0
    %4412 = vmatpush2.bf16.msra.mxu0 0
    %4413 = vmatprep.subr.bf16.mxu0 0
    %4414 = vmatpush2.bf16.msra.mxu0 0
    %4415 = vmatprep.subr.bf16.mxu0 0
    %4416 = vmatpush2.bf16.msra.mxu0 0
    %4417 = vmatprep.mubr.bf16.mxu0 0
    %4418 = vmatmul.mubr.bf16.gmra.mxu0 %v4374
    %v4419 = vpop.f32.mrf.mxu0
    %v4420 = vadd.f32 %v4347, %v4419
    %v4421 = vpop.f32.mrf.mxu0
    %v4422 = vpop.f32.mrf.mxu0
    %v4423 = vadd.f32 %v4347, %v4422
    %v4424 = vpop.f32.mrf.mxu0
    %4425 = vmatprep.mubr.bf16.mxu0 0
    %4426 = vmatmul.mubr.bf16.gmra.mxu0 %v4377
    %v4427 = vpop.f32.mrf.mxu0
    %v4428 = vadd.f32 %v4347, %v4427
    %v4429 = vpop.f32.mrf.mxu0
    %v4430 = vpop.f32.mrf.mxu0
    %v4431 = vadd.f32 %v4347, %v4430
    %v4432 = vpop.f32.mrf.mxu0
    %4433 = vmatprep.mubr.bf16.mxu0 0
    %4434 = vmatmul.mubr.bf16.gmra.mxu0 %v4380
    %v4435 = vpop.f32.mrf.mxu0
    %v4436 = vadd.f32 %v4347, %v4435
    %v4437 = vpop.f32.mrf.mxu0
    %v4438 = vpop.f32.mrf.mxu0
    %v4439 = vadd.f32 %v4347, %v4438
    %v4440 = vpop.f32.mrf.mxu0
    %4441 = vmatprep.mubr.bf16.mxu0 0
    %4442 = vmatmul.mubr.bf16.gmra.mxu0 %v4383
    %v4443 = vpop.f32.mrf.mxu0
    %v4444 = vadd.f32 %v4347, %v4443
    %v4445 = vpop.f32.mrf.mxu0
    %v4446 = vpop.f32.mrf.mxu0
    %v4447 = vadd.f32 %v4347, %v4446
    %v4448 = vpop.f32.mrf.mxu0
    %4449 = vdwg.mxu0
    %s4450 = scalar_lea.vmem %s7, 32
    %v4451 = vld [vmem:[%s4450] sm:$0xf]
    %v4452 = vld [vmem:[%s4450 + $0x4] sm:$0xf]
    %v4453 = vld [vmem:[%s4450 + $0x8] sm:$0xf]
    %v4454 = vld [vmem:[%s4450 + $0xc] sm:$0xf]
    %v4455 = vld [vmem:[%s4450 + $0x10] sm:$0xf]
    %v4456 = vld [vmem:[%s4450 + $0x14] sm:$0xf]
    %v4457 = vld [vmem:[%s4450 + $0x18] sm:$0xf]
    %v4458 = vld [vmem:[%s4450 + $0x1c] sm:$0xf]
    %s4459 = scalar_lea.vmem %s9, 1
    %v4460 = vld [vmem:[%s4459] sm:$0x1]
    %v4462 = vlaneseq
    %v4463 = vshrl.u32 %v4462, 7
    %v4464 = vsub.s32 0, %v4463
    %v4465 = vrot.slane %v4460, %v4464
    %v4475 = vunpack.c.l.b16 %v4451
    %v4476 = vunpack.c.l.b16 %v4452
    %v4477 = vunpack.c.l.b16 %v4453
    %v4478 = vunpack.c.l.b16 %v4454
    %v4479 = vunpack.c.l.b16 %v4455
    %v4480 = vunpack.c.l.b16 %v4456
    %v4481 = vunpack.c.l.b16 %v4457
    %v4482 = vunpack.c.l.b16 %v4458
    %v4483 = vpack.c.b16 %v4476, %v4475
    %v4484 = vpack.c.b16 %v4478, %v4477
    %v4485 = vpack.c.b16 %v4480, %v4479
    %v4486 = vpack.c.b16 %v4482, %v4481
    %4491 = vmatprep.subr.bf16.mxu0 0
    %4492 = vmatpush1.bf16.msra.mxu0 0
    %4493 = vmatprep.subr.bf16.mxu0 0
    %4494 = vmatpush1.bf16.msra.mxu0 0
    %4495 = vmatprep.subr.bf16.mxu0 0
    %4496 = vmatpush1.bf16.msra.mxu0 0
    %4497 = vmatprep.subr.bf16.mxu0 0
    %4498 = vmatpush1.bf16.msra.mxu0 0
    %4499 = vmatprep.subr.bf16.mxu0 0
    %4500 = vmatpush1.bf16.msra.mxu0 %v4486
    %4501 = vmatprep.subr.bf16.mxu0 0
    %4502 = vmatpush1.bf16.msra.mxu0 %v4485
    %4503 = vmatprep.subr.bf16.mxu0 0
    %4504 = vmatpush1.bf16.msra.mxu0 %v4484
    %4505 = vmatprep.subr.bf16.mxu0 0
    %4506 = vmatpush1.bf16.msra.mxu0 %v4483
    %4507 = vmatprep.subr.bf16.mxu0 0
    %4508 = vmatpush2.bf16.msra.mxu0 0
    %4509 = vmatprep.subr.bf16.mxu0 0
    %4510 = vmatpush2.bf16.msra.mxu0 0
    %4511 = vmatprep.subr.bf16.mxu0 0
    %4512 = vmatpush2.bf16.msra.mxu0 0
    %4513 = vmatprep.subr.bf16.mxu0 0
    %4514 = vmatpush2.bf16.msra.mxu0 0
    %4515 = vmatprep.subr.bf16.mxu0 0
    %4516 = vmatpush2.bf16.msra.mxu0 0
    %4517 = vmatprep.subr.bf16.mxu0 0
    %4518 = vmatpush2.bf16.msra.mxu0 0
    %4519 = vmatprep.subr.bf16.mxu0 0
    %4520 = vmatpush2.bf16.msra.mxu0 0
    %4521 = vmatprep.subr.bf16.mxu0 0
    %4522 = vmatpush2.bf16.msra.mxu0 0
    %4523 = vmatprep.mubr.bf16.mxu0 0
    %4524 = vmatmul.mubr.bf16.gmra.mxu0 %v4374
    %v4525 = vpop.f32.mrf.mxu0
    %v4526 = vadd.f32 %v4465, %v4525
    %v4527 = vpop.f32.mrf.mxu0
    %v4528 = vpop.f32.mrf.mxu0
    %v4529 = vadd.f32 %v4465, %v4528
    %v4530 = vpop.f32.mrf.mxu0
    %4531 = vmatprep.mubr.bf16.mxu0 0
    %4532 = vmatmul.mubr.bf16.gmra.mxu0 %v4377
    %v4533 = vpop.f32.mrf.mxu0
    %v4534 = vadd.f32 %v4465, %v4533
    %v4535 = vpop.f32.mrf.mxu0
    %v4536 = vpop.f32.mrf.mxu0
    %v4537 = vadd.f32 %v4465, %v4536
    %v4538 = vpop.f32.mrf.mxu0
    %4539 = vmatprep.mubr.bf16.mxu0 0
    %4540 = vmatmul.mubr.bf16.gmra.mxu0 %v4380
    %v4541 = vpop.f32.mrf.mxu0
    %v4542 = vadd.f32 %v4465, %v4541
    %v4543 = vpop.f32.mrf.mxu0
    %v4544 = vpop.f32.mrf.mxu0
    %v4545 = vadd.f32 %v4465, %v4544
    %v4546 = vpop.f32.mrf.mxu0
    %4547 = vmatprep.mubr.bf16.mxu0 0
    %4548 = vmatmul.mubr.bf16.gmra.mxu0 %v4383
    %v4549 = vpop.f32.mrf.mxu0
    %v4550 = vadd.f32 %v4465, %v4549
    %v4551 = vpop.f32.mrf.mxu0
    %v4552 = vpop.f32.mrf.mxu0
    %v4553 = vadd.f32 %v4465, %v4552
    %v4554 = vpop.f32.mrf.mxu0
    %4555 = vdwg.mxu0
    %s4556 = scalar_lea.vmem %s7, 64
    %v4557 = vld [vmem:[%s4556] sm:$0xf]
    %v4558 = vld [vmem:[%s4556 + $0x4] sm:$0xf]
    %v4559 = vld [vmem:[%s4556 + $0x8] sm:$0xf]
    %v4560 = vld [vmem:[%s4556 + $0xc] sm:$0xf]
    %v4561 = vld [vmem:[%s4556 + $0x10] sm:$0xf]
    %v4562 = vld [vmem:[%s4556 + $0x14] sm:$0xf]
    %v4563 = vld [vmem:[%s4556 + $0x18] sm:$0xf]
    %v4564 = vld [vmem:[%s4556 + $0x1c] sm:$0xf]
    %s4565 = scalar_lea.vmem %s9, 2
    %v4566 = vld [vmem:[%s4565] sm:$0x1]
    %v4568 = vlaneseq
    %v4569 = vshrl.u32 %v4568, 7
    %v4570 = vsub.s32 0, %v4569
    %v4571 = vrot.slane %v4566, %v4570
    %v4581 = vunpack.c.l.b16 %v4557
    %v4582 = vunpack.c.l.b16 %v4558
    %v4583 = vunpack.c.l.b16 %v4559
    %v4584 = vunpack.c.l.b16 %v4560
    %v4585 = vunpack.c.l.b16 %v4561
    %v4586 = vunpack.c.l.b16 %v4562
    %v4587 = vunpack.c.l.b16 %v4563
    %v4588 = vunpack.c.l.b16 %v4564
    %v4589 = vpack.c.b16 %v4582, %v4581
    %v4590 = vpack.c.b16 %v4584, %v4583
    %v4591 = vpack.c.b16 %v4586, %v4585
    %v4592 = vpack.c.b16 %v4588, %v4587
    %4597 = vmatprep.subr.bf16.mxu0 0
    %4598 = vmatpush1.bf16.msra.mxu0 0
    %4599 = vmatprep.subr.bf16.mxu0 0
    %4600 = vmatpush1.bf16.msra.mxu0 0
    %4601 = vmatprep.subr.bf16.mxu0 0
    %4602 = vmatpush1.bf16.msra.mxu0 0
    %4603 = vmatprep.subr.bf16.mxu0 0
    %4604 = vmatpush1.bf16.msra.mxu0 0
    %4605 = vmatprep.subr.bf16.mxu0 0
    %4606 = vmatpush1.bf16.msra.mxu0 %v4592
    %4607 = vmatprep.subr.bf16.mxu0 0
    %4608 = vmatpush1.bf16.msra.mxu0 %v4591
    %4609 = vmatprep.subr.bf16.mxu0 0
    %4610 = vmatpush1.bf16.msra.mxu0 %v4590
    %4611 = vmatprep.subr.bf16.mxu0 0
    %4612 = vmatpush1.bf16.msra.mxu0 %v4589
    %4613 = vmatprep.subr.bf16.mxu0 0
    %4614 = vmatpush2.bf16.msra.mxu0 0
    %4615 = vmatprep.subr.bf16.mxu0 0
    %4616 = vmatpush2.bf16.msra.mxu0 0
    %4617 = vmatprep.subr.bf16.mxu0 0
    %4618 = vmatpush2.bf16.msra.mxu0 0
    %4619 = vmatprep.subr.bf16.mxu0 0
    %4620 = vmatpush2.bf16.msra.mxu0 0
    %4621 = vmatprep.subr.bf16.mxu0 0
    %4622 = vmatpush2.bf16.msra.mxu0 0
    %4623 = vmatprep.subr.bf16.mxu0 0
    %4624 = vmatpush2.bf16.msra.mxu0 0
    %4625 = vmatprep.subr.bf16.mxu0 0
    %4626 = vmatpush2.bf16.msra.mxu0 0
    %4627 = vmatprep.subr.bf16.mxu0 0
    %4628 = vmatpush2.bf16.msra.mxu0 0
    %4629 = vmatprep.mubr.bf16.mxu0 0
    %4630 = vmatmul.mubr.bf16.gmra.mxu0 %v4374
    %v4631 = vpop.f32.mrf.mxu0
    %v4632 = vadd.f32 %v4571, %v4631
    %v4633 = vpop.f32.mrf.mxu0
    %v4634 = vpop.f32.mrf.mxu0
    %v4635 = vadd.f32 %v4571, %v4634
    %v4636 = vpop.f32.mrf.mxu0
    %4637 = vmatprep.mubr.bf16.mxu0 0
    %4638 = vmatmul.mubr.bf16.gmra.mxu0 %v4377
    %v4639 = vpop.f32.mrf.mxu0
    %v4640 = vadd.f32 %v4571, %v4639
    %v4641 = vpop.f32.mrf.mxu0
    %v4642 = vpop.f32.mrf.mxu0
    %v4643 = vadd.f32 %v4571, %v4642
    %v4644 = vpop.f32.mrf.mxu0
    %4645 = vmatprep.mubr.bf16.mxu0 0
    %4646 = vmatmul.mubr.bf16.gmra.mxu0 %v4380
    %v4647 = vpop.f32.mrf.mxu0
    %v4648 = vadd.f32 %v4571, %v4647
    %v4649 = vpop.f32.mrf.mxu0
    %v4650 = vpop.f32.mrf.mxu0
    %v4651 = vadd.f32 %v4571, %v4650
    %v4652 = vpop.f32.mrf.mxu0
    %4653 = vmatprep.mubr.bf16.mxu0 0
    %4654 = vmatmul.mubr.bf16.gmra.mxu0 %v4383
    %v4655 = vpop.f32.mrf.mxu0
    %v4656 = vadd.f32 %v4571, %v4655
    %v4657 = vpop.f32.mrf.mxu0
    %v4658 = vpop.f32.mrf.mxu0
    %v4659 = vadd.f32 %v4571, %v4658
    %v4660 = vpop.f32.mrf.mxu0
    %4661 = vdwg.mxu0
    %s4662 = scalar_lea.vmem %s7, 96
    %v4663 = vld [vmem:[%s4662] sm:$0xf]
    %v4664 = vld [vmem:[%s4662 + $0x4] sm:$0xf]
    %v4665 = vld [vmem:[%s4662 + $0x8] sm:$0xf]
    %v4666 = vld [vmem:[%s4662 + $0xc] sm:$0xf]
    %v4667 = vld [vmem:[%s4662 + $0x10] sm:$0xf]
    %v4668 = vld [vmem:[%s4662 + $0x14] sm:$0xf]
    %v4669 = vld [vmem:[%s4662 + $0x18] sm:$0xf]
    %v4670 = vld [vmem:[%s4662 + $0x1c] sm:$0xf]
    %s4671 = scalar_lea.vmem %s9, 3
    %v4672 = vld [vmem:[%s4671] sm:$0x1]
    %v4674 = vlaneseq
    %v4675 = vshrl.u32 %v4674, 7
    %v4676 = vsub.s32 0, %v4675
    %v4677 = vrot.slane %v4672, %v4676
    %v4687 = vunpack.c.l.b16 %v4663
    %v4688 = vunpack.c.l.b16 %v4664
    %v4689 = vunpack.c.l.b16 %v4665
    %v4690 = vunpack.c.l.b16 %v4666
    %v4691 = vunpack.c.l.b16 %v4667
    %v4692 = vunpack.c.l.b16 %v4668
    %v4693 = vunpack.c.l.b16 %v4669
    %v4694 = vunpack.c.l.b16 %v4670
    %v4695 = vpack.c.b16 %v4688, %v4687
    %v4696 = vpack.c.b16 %v4690, %v4689
    %v4697 = vpack.c.b16 %v4692, %v4691
    %v4698 = vpack.c.b16 %v4694, %v4693
    %4703 = vmatprep.subr.bf16.mxu0 0
    %4704 = vmatpush1.bf16.msra.mxu0 0
    %4705 = vmatprep.subr.bf16.mxu0 0
    %4706 = vmatpush1.bf16.msra.mxu0 0
    %4707 = vmatprep.subr.bf16.mxu0 0
    %4708 = vmatpush1.bf16.msra.mxu0 0
    %4709 = vmatprep.subr.bf16.mxu0 0
    %4710 = vmatpush1.bf16.msra.mxu0 0
    %4711 = vmatprep.subr.bf16.mxu0 0
    %4712 = vmatpush1.bf16.msra.mxu0 %v4698
    %4713 = vmatprep.subr.bf16.mxu0 0
    %4714 = vmatpush1.bf16.msra.mxu0 %v4697
    %4715 = vmatprep.subr.bf16.mxu0 0
    %4716 = vmatpush1.bf16.msra.mxu0 %v4696
    %4717 = vmatprep.subr.bf16.mxu0 0
    %4718 = vmatpush1.bf16.msra.mxu0 %v4695
    %4719 = vmatprep.subr.bf16.mxu0 0
    %4720 = vmatpush2.bf16.msra.mxu0 0
    %4721 = vmatprep.subr.bf16.mxu0 0
    %4722 = vmatpush2.bf16.msra.mxu0 0
    %4723 = vmatprep.subr.bf16.mxu0 0
    %4724 = vmatpush2.bf16.msra.mxu0 0
    %4725 = vmatprep.subr.bf16.mxu0 0
    %4726 = vmatpush2.bf16.msra.mxu0 0
    %4727 = vmatprep.subr.bf16.mxu0 0
    %4728 = vmatpush2.bf16.msra.mxu0 0
    %4729 = vmatprep.subr.bf16.mxu0 0
    %4730 = vmatpush2.bf16.msra.mxu0 0
    %4731 = vmatprep.subr.bf16.mxu0 0
    %4732 = vmatpush2.bf16.msra.mxu0 0
    %4733 = vmatprep.subr.bf16.mxu0 0
    %4734 = vmatpush2.bf16.msra.mxu0 0
    %4735 = vmatprep.mubr.bf16.mxu0 0
    %4736 = vmatmul.mubr.bf16.gmra.mxu0 %v4374
    %v4737 = vpop.f32.mrf.mxu0
    %v4738 = vadd.f32 %v4677, %v4737
    %v4739 = vpop.f32.mrf.mxu0
    %v4740 = vpop.f32.mrf.mxu0
    %v4741 = vadd.f32 %v4677, %v4740
    %v4742 = vpop.f32.mrf.mxu0
    %4743 = vmatprep.mubr.bf16.mxu0 0
    %4744 = vmatmul.mubr.bf16.gmra.mxu0 %v4377
    %v4745 = vpop.f32.mrf.mxu0
    %v4746 = vadd.f32 %v4677, %v4745
    %v4747 = vpop.f32.mrf.mxu0
    %v4748 = vpop.f32.mrf.mxu0
    %v4749 = vadd.f32 %v4677, %v4748
    %v4750 = vpop.f32.mrf.mxu0
    %4751 = vmatprep.mubr.bf16.mxu0 0
    %4752 = vmatmul.mubr.bf16.gmra.mxu0 %v4380
    %v4753 = vpop.f32.mrf.mxu0
    %v4754 = vadd.f32 %v4677, %v4753
    %v4755 = vpop.f32.mrf.mxu0
    %v4756 = vpop.f32.mrf.mxu0
    %v4757 = vadd.f32 %v4677, %v4756
    %v4758 = vpop.f32.mrf.mxu0
    %4759 = vmatprep.mubr.bf16.mxu0 0
    %4760 = vmatmul.mubr.bf16.gmra.mxu0 %v4383
    %v4761 = vpop.f32.mrf.mxu0
    %v4762 = vadd.f32 %v4677, %v4761
    %v4763 = vpop.f32.mrf.mxu0
    %v4764 = vpop.f32.mrf.mxu0
    %v4765 = vadd.f32 %v4677, %v4764
    %v4766 = vpop.f32.mrf.mxu0
    %4767 = vdwg.mxu0
    %v4768 = vld [vmem:[%s8] sm:$0xf]
    %v4769 = vld [vmem:[%s8 + $0x4] sm:$0xf]
    %v4770 = vld [vmem:[%s8 + $0x8] sm:$0xf]
    %v4771 = vld [vmem:[%s8 + $0xc] sm:$0xf]
    %v4772 = vld [vmem:[%s8 + $0x10] sm:$0xf]
    %v4773 = vld [vmem:[%s8 + $0x14] sm:$0xf]
    %v4774 = vld [vmem:[%s8 + $0x18] sm:$0xf]
    %v4775 = vld [vmem:[%s8 + $0x1c] sm:$0xf]
    %s4776 = scalar_lea.vmem %s8, 32
    %v4777 = vld [vmem:[%s4776] sm:$0xf]
    %v4778 = vld [vmem:[%s4776 + $0x4] sm:$0xf]
    %v4779 = vld [vmem:[%s4776 + $0x8] sm:$0xf]
    %v4780 = vld [vmem:[%s4776 + $0xc] sm:$0xf]
    %v4781 = vld [vmem:[%s4776 + $0x10] sm:$0xf]
    %v4782 = vld [vmem:[%s4776 + $0x14] sm:$0xf]
    %v4783 = vld [vmem:[%s4776 + $0x18] sm:$0xf]
    %v4784 = vld [vmem:[%s4776 + $0x1c] sm:$0xf]
    %s4785 = scalar_lea.vmem %s8, 64
    %v4786 = vld [vmem:[%s4785] sm:$0xf]
    %v4787 = vld [vmem:[%s4785 + $0x4] sm:$0xf]
    %v4788 = vld [vmem:[%s4785 + $0x8] sm:$0xf]
    %v4789 = vld [vmem:[%s4785 + $0xc] sm:$0xf]
    %v4790 = vld [vmem:[%s4785 + $0x10] sm:$0xf]
    %v4791 = vld [vmem:[%s4785 + $0x14] sm:$0xf]
    %v4792 = vld [vmem:[%s4785 + $0x18] sm:$0xf]
    %v4793 = vld [vmem:[%s4785 + $0x1c] sm:$0xf]
    %s4794 = scalar_lea.vmem %s8, 96
    %v4795 = vld [vmem:[%s4794] sm:$0xf]
    %v4796 = vld [vmem:[%s4794 + $0x4] sm:$0xf]
    %v4797 = vld [vmem:[%s4794 + $0x8] sm:$0xf]
    %v4798 = vld [vmem:[%s4794 + $0xc] sm:$0xf]
    %v4799 = vld [vmem:[%s4794 + $0x10] sm:$0xf]
    %v4800 = vld [vmem:[%s4794 + $0x14] sm:$0xf]
    %v4801 = vld [vmem:[%s4794 + $0x18] sm:$0xf]
    %v4802 = vld [vmem:[%s4794 + $0x1c] sm:$0xf]
    %v4811 = vunpack.c.l.b16 %v4768
    %v4812 = vunpack.c.l.b16 %v4769
    %v4813 = vunpack.c.l.b16 %v4770
    %v4814 = vunpack.c.l.b16 %v4771
    %v4815 = vunpack.c.l.b16 %v4772
    %v4816 = vunpack.c.l.b16 %v4773
    %v4817 = vunpack.c.l.b16 %v4774
    %v4818 = vunpack.c.l.b16 %v4775
    %v4819 = vpack.c.b16 %v4812, %v4811
    %v4820 = vpack.c.b16 %v4814, %v4813
    %v4821 = vpack.c.b16 %v4816, %v4815
    %v4822 = vpack.c.b16 %v4818, %v4817
    %v4827 = vsel %vm182, 0, 0
    %4829 = vmatprep.subr.bf16.mxu0 0
    %4830 = vmatpush1.bf16.msra.mxu0 0
    %4831 = vmatprep.subr.bf16.mxu0 0
    %4832 = vmatpush1.bf16.msra.mxu0 0
    %4833 = vmatprep.subr.bf16.mxu0 0
    %4834 = vmatpush1.bf16.msra.mxu0 0
    %4835 = vmatprep.subr.bf16.mxu0 0
    %4836 = vmatpush1.bf16.msra.mxu0 0
    %4837 = vmatprep.subr.bf16.mxu0 0
    %4838 = vmatpush1.bf16.msra.mxu0 %v4822
    %4839 = vmatprep.subr.bf16.mxu0 0
    %4840 = vmatpush1.bf16.msra.mxu0 %v4821
    %4841 = vmatprep.subr.bf16.mxu0 0
    %4842 = vmatpush1.bf16.msra.mxu0 %v4820
    %4843 = vmatprep.subr.bf16.mxu0 0
    %4844 = vmatpush1.bf16.msra.mxu0 %v4819
    %4845 = vmatprep.subr.bf16.mxu0 0
    %4846 = vmatpush2.bf16.msra.mxu0 0
    %4847 = vmatprep.subr.bf16.mxu0 0
    %4848 = vmatpush2.bf16.msra.mxu0 0
    %4849 = vmatprep.subr.bf16.mxu0 0
    %4850 = vmatpush2.bf16.msra.mxu0 0
    %4851 = vmatprep.subr.bf16.mxu0 0
    %4852 = vmatpush2.bf16.msra.mxu0 0
    %4853 = vmatprep.subr.bf16.mxu0 0
    %4854 = vmatpush2.bf16.msra.mxu0 0
    %4855 = vmatprep.subr.bf16.mxu0 0
    %4856 = vmatpush2.bf16.msra.mxu0 0
    %4857 = vmatprep.subr.bf16.mxu0 0
    %4858 = vmatpush2.bf16.msra.mxu0 0
    %4859 = vmatprep.subr.bf16.mxu0 0
    %4860 = vmatpush2.bf16.msra.mxu0 0
    %4861 = vmatprep.mubr.bf16.mxu0 0
    %4862 = vmatmul.mubr.bf16.gmra.mxu0 %v4827
    %v4863 = vpop.f32.mrf.mxu0
    %v4864 = vadd.f32 0.0, %v4863
    %v4865 = vpop.f32.mrf.mxu0
    %v4866 = vpop.f32.mrf.mxu0
    %v4867 = vpop.f32.mrf.mxu0
    %4868 = vdwg.mxu0
    %v4869 = vadd.f32 %v4420, %v4864
    %v4870 = vxor.u32 %v4869, 2147483648
    %v4871 = vmul.f32 %v4870, 1.442695
    %v4872 = vpow.pop %v4871
    %v4873 = vadd.f32 %v4872, 1.0
    %v4874 = vrcp.pop %v4873
    %v4875 = vmul.f32 1.0, %v4874
    %v4884 = vunpack.c.l.b16 %v4777
    %v4885 = vunpack.c.l.b16 %v4778
    %v4886 = vunpack.c.l.b16 %v4779
    %v4887 = vunpack.c.l.b16 %v4780
    %v4888 = vunpack.c.l.b16 %v4781
    %v4889 = vunpack.c.l.b16 %v4782
    %v4890 = vunpack.c.l.b16 %v4783
    %v4891 = vunpack.c.l.b16 %v4784
    %v4892 = vpack.c.b16 %v4885, %v4884
    %v4893 = vpack.c.b16 %v4887, %v4886
    %v4894 = vpack.c.b16 %v4889, %v4888
    %v4895 = vpack.c.b16 %v4891, %v4890
    %4900 = vmatprep.subr.bf16.mxu0 0
    %4901 = vmatpush1.bf16.msra.mxu0 0
    %4902 = vmatprep.subr.bf16.mxu0 0
    %4903 = vmatpush1.bf16.msra.mxu0 0
    %4904 = vmatprep.subr.bf16.mxu0 0
    %4905 = vmatpush1.bf16.msra.mxu0 0
    %4906 = vmatprep.subr.bf16.mxu0 0
    %4907 = vmatpush1.bf16.msra.mxu0 0
    %4908 = vmatprep.subr.bf16.mxu0 0
    %4909 = vmatpush1.bf16.msra.mxu0 %v4895
    %4910 = vmatprep.subr.bf16.mxu0 0
    %4911 = vmatpush1.bf16.msra.mxu0 %v4894
    %4912 = vmatprep.subr.bf16.mxu0 0
    %4913 = vmatpush1.bf16.msra.mxu0 %v4893
    %4914 = vmatprep.subr.bf16.mxu0 0
    %4915 = vmatpush1.bf16.msra.mxu0 %v4892
    %4916 = vmatprep.subr.bf16.mxu0 0
    %4917 = vmatpush2.bf16.msra.mxu0 0
    %4918 = vmatprep.subr.bf16.mxu0 0
    %4919 = vmatpush2.bf16.msra.mxu0 0
    %4920 = vmatprep.subr.bf16.mxu0 0
    %4921 = vmatpush2.bf16.msra.mxu0 0
    %4922 = vmatprep.subr.bf16.mxu0 0
    %4923 = vmatpush2.bf16.msra.mxu0 0
    %4924 = vmatprep.subr.bf16.mxu0 0
    %4925 = vmatpush2.bf16.msra.mxu0 0
    %4926 = vmatprep.subr.bf16.mxu0 0
    %4927 = vmatpush2.bf16.msra.mxu0 0
    %4928 = vmatprep.subr.bf16.mxu0 0
    %4929 = vmatpush2.bf16.msra.mxu0 0
    %4930 = vmatprep.subr.bf16.mxu0 0
    %4931 = vmatpush2.bf16.msra.mxu0 0
    %4932 = vmatprep.mubr.bf16.mxu0 0
    %4933 = vmatmul.mubr.bf16.gmra.mxu0 %v4827
    %v4934 = vpop.f32.mrf.mxu0
    %v4935 = vadd.f32 0.0, %v4934
    %v4936 = vpop.f32.mrf.mxu0
    %v4937 = vpop.f32.mrf.mxu0
    %v4938 = vpop.f32.mrf.mxu0
    %4939 = vdwg.mxu0
    %v4940 = vadd.f32 %v4526, %v4935
    %v4941 = vxor.u32 %v4940, 2147483648
    %v4942 = vmul.f32 %v4941, 1.442695
    %v4943 = vpow.pop %v4942
    %v4944 = vadd.f32 %v4943, 1.0
    %v4945 = vrcp.pop %v4944
    %v4946 = vmul.f32 1.0, %v4945
    %v4955 = vunpack.c.l.b16 %v4786
    %v4956 = vunpack.c.l.b16 %v4787
    %v4957 = vunpack.c.l.b16 %v4788
    %v4958 = vunpack.c.l.b16 %v4789
    %v4959 = vunpack.c.l.b16 %v4790
    %v4960 = vunpack.c.l.b16 %v4791
    %v4961 = vunpack.c.l.b16 %v4792
    %v4962 = vunpack.c.l.b16 %v4793
    %v4963 = vpack.c.b16 %v4956, %v4955
    %v4964 = vpack.c.b16 %v4958, %v4957
    %v4965 = vpack.c.b16 %v4960, %v4959
    %v4966 = vpack.c.b16 %v4962, %v4961
    %4971 = vmatprep.subr.bf16.mxu0 0
    %4972 = vmatpush1.bf16.msra.mxu0 0
    %4973 = vmatprep.subr.bf16.mxu0 0
    %4974 = vmatpush1.bf16.msra.mxu0 0
    %4975 = vmatprep.subr.bf16.mxu0 0
    %4976 = vmatpush1.bf16.msra.mxu0 0
    %4977 = vmatprep.subr.bf16.mxu0 0
    %4978 = vmatpush1.bf16.msra.mxu0 0
    %4979 = vmatprep.subr.bf16.mxu0 0
    %4980 = vmatpush1.bf16.msra.mxu0 %v4966
    %4981 = vmatprep.subr.bf16.mxu0 0
    %4982 = vmatpush1.bf16.msra.mxu0 %v4965
    %4983 = vmatprep.subr.bf16.mxu0 0
    %4984 = vmatpush1.bf16.msra.mxu0 %v4964
    %4985 = vmatprep.subr.bf16.mxu0 0
    %4986 = vmatpush1.bf16.msra.mxu0 %v4963
    %4987 = vmatprep.subr.bf16.mxu0 0
    %4988 = vmatpush2.bf16.msra.mxu0 0
    %4989 = vmatprep.subr.bf16.mxu0 0
    %4990 = vmatpush2.bf16.msra.mxu0 0
    %4991 = vmatprep.subr.bf16.mxu0 0
    %4992 = vmatpush2.bf16.msra.mxu0 0
    %4993 = vmatprep.subr.bf16.mxu0 0
    %4994 = vmatpush2.bf16.msra.mxu0 0
    %4995 = vmatprep.subr.bf16.mxu0 0
    %4996 = vmatpush2.bf16.msra.mxu0 0
    %4997 = vmatprep.subr.bf16.mxu0 0
    %4998 = vmatpush2.bf16.msra.mxu0 0
    %4999 = vmatprep.subr.bf16.mxu0 0
    %5000 = vmatpush2.bf16.msra.mxu0 0
    %5001 = vmatprep.subr.bf16.mxu0 0
    %5002 = vmatpush2.bf16.msra.mxu0 0
    %5003 = vmatprep.mubr.bf16.mxu0 0
    %5004 = vmatmul.mubr.bf16.gmra.mxu0 %v4827
    %v5005 = vpop.f32.mrf.mxu0
    %v5006 = vadd.f32 0.0, %v5005
    %v5007 = vpop.f32.mrf.mxu0
    %v5008 = vpop.f32.mrf.mxu0
    %v5009 = vpop.f32.mrf.mxu0
    %5010 = vdwg.mxu0
    %v5011 = vadd.f32 %v4632, %v5006
    %v5012 = vxor.u32 %v5011, 2147483648
    %v5013 = vmul.f32 %v5012, 1.442695
    %v5014 = vpow.pop %v5013
    %v5015 = vadd.f32 %v5014, 1.0
    %v5016 = vrcp.pop %v5015
    %v5017 = vmul.f32 1.0, %v5016
    %v5026 = vunpack.c.l.b16 %v4795
    %v5027 = vunpack.c.l.b16 %v4796
    %v5028 = vunpack.c.l.b16 %v4797
    %v5029 = vunpack.c.l.b16 %v4798
    %v5030 = vunpack.c.l.b16 %v4799
    %v5031 = vunpack.c.l.b16 %v4800
    %v5032 = vunpack.c.l.b16 %v4801
    %v5033 = vunpack.c.l.b16 %v4802
    %v5034 = vpack.c.b16 %v5027, %v5026
    %v5035 = vpack.c.b16 %v5029, %v5028
    %v5036 = vpack.c.b16 %v5031, %v5030
    %v5037 = vpack.c.b16 %v5033, %v5032
    %5042 = vmatprep.subr.bf16.mxu0 0
    %5043 = vmatpush1.bf16.msra.mxu0 0
    %5044 = vmatprep.subr.bf16.mxu0 0
    %5045 = vmatpush1.bf16.msra.mxu0 0
    %5046 = vmatprep.subr.bf16.mxu0 0
    %5047 = vmatpush1.bf16.msra.mxu0 0
    %5048 = vmatprep.subr.bf16.mxu0 0
    %5049 = vmatpush1.bf16.msra.mxu0 0
    %5050 = vmatprep.subr.bf16.mxu0 0
    %5051 = vmatpush1.bf16.msra.mxu0 %v5037
    %5052 = vmatprep.subr.bf16.mxu0 0
    %5053 = vmatpush1.bf16.msra.mxu0 %v5036
    %5054 = vmatprep.subr.bf16.mxu0 0
    %5055 = vmatpush1.bf16.msra.mxu0 %v5035
    %5056 = vmatprep.subr.bf16.mxu0 0
    %5057 = vmatpush1.bf16.msra.mxu0 %v5034
    %5058 = vmatprep.subr.bf16.mxu0 0
    %5059 = vmatpush2.bf16.msra.mxu0 0
    %5060 = vmatprep.subr.bf16.mxu0 0
    %5061 = vmatpush2.bf16.msra.mxu0 0
    %5062 = vmatprep.subr.bf16.mxu0 0
    %5063 = vmatpush2.bf16.msra.mxu0 0
    %5064 = vmatprep.subr.bf16.mxu0 0
    %5065 = vmatpush2.bf16.msra.mxu0 0
    %5066 = vmatprep.subr.bf16.mxu0 0
    %5067 = vmatpush2.bf16.msra.mxu0 0
    %5068 = vmatprep.subr.bf16.mxu0 0
    %5069 = vmatpush2.bf16.msra.mxu0 0
    %5070 = vmatprep.subr.bf16.mxu0 0
    %5071 = vmatpush2.bf16.msra.mxu0 0
    %5072 = vmatprep.subr.bf16.mxu0 0
    %5073 = vmatpush2.bf16.msra.mxu0 0
    %5074 = vmatprep.mubr.bf16.mxu0 0
    %5075 = vmatmul.mubr.bf16.gmra.mxu0 %v4827
    %v5076 = vpop.f32.mrf.mxu0
    %v5077 = vadd.f32 0.0, %v5076
    %v5078 = vpop.f32.mrf.mxu0
    %v5079 = vpop.f32.mrf.mxu0
    %v5080 = vpop.f32.mrf.mxu0
    %5081 = vdwg.mxu0
    %v5082 = vadd.f32 %v4738, %v5077
    %v5083 = vtanh.pop %v5082
    %v5084 = vmul.f32 %v4946, 0.0
    %v5085 = vmul.f32 %v4875, %v5083
    %v5086 = vadd.f32 %v5084, %v5085
    %v5087 = vtanh.pop %v5086
    %v5088 = vmul.f32 %v5017, %v5087
    %v5089 = vpack.c.bf16 %v5088, %v5088
    %v5091 = vsel %vm182, %v5089, 0
    %5093 = vmatprep.subr.bf16.mxu0 0
    %5094 = vmatpush1.bf16.msra.mxu0 0
    %5095 = vmatprep.subr.bf16.mxu0 0
    %5096 = vmatpush1.bf16.msra.mxu0 0
    %5097 = vmatprep.subr.bf16.mxu0 0
    %5098 = vmatpush1.bf16.msra.mxu0 0
    %5099 = vmatprep.subr.bf16.mxu0 0
    %5100 = vmatpush1.bf16.msra.mxu0 0
    %5101 = vmatprep.subr.bf16.mxu0 0
    %5102 = vmatpush1.bf16.msra.mxu0 %v4822
    %5103 = vmatprep.subr.bf16.mxu0 0
    %5104 = vmatpush1.bf16.msra.mxu0 %v4821
    %5105 = vmatprep.subr.bf16.mxu0 0
    %5106 = vmatpush1.bf16.msra.mxu0 %v4820
    %5107 = vmatprep.subr.bf16.mxu0 0
    %5108 = vmatpush1.bf16.msra.mxu0 %v4819
    %5109 = vmatprep.subr.bf16.mxu0 0
    %5110 = vmatpush2.bf16.msra.mxu0 0
    %5111 = vmatprep.subr.bf16.mxu0 0
    %5112 = vmatpush2.bf16.msra.mxu0 0
    %5113 = vmatprep.subr.bf16.mxu0 0
    %5114 = vmatpush2.bf16.msra.mxu0 0
    %5115 = vmatprep.subr.bf16.mxu0 0
    %5116 = vmatpush2.bf16.msra.mxu0 0
    %5117 = vmatprep.subr.bf16.mxu0 0
    %5118 = vmatpush2.bf16.msra.mxu0 0
    %5119 = vmatprep.subr.bf16.mxu0 0
    %5120 = vmatpush2.bf16.msra.mxu0 0
    %5121 = vmatprep.subr.bf16.mxu0 0
    %5122 = vmatpush2.bf16.msra.mxu0 0
    %5123 = vmatprep.subr.bf16.mxu0 0
    %5124 = vmatpush2.bf16.msra.mxu0 0
    %5125 = vmatprep.mubr.bf16.mxu0 0
    %5126 = vmatmul.mubr.bf16.gmra.mxu0 %v5091
    %v5127 = vpop.f32.mrf.mxu0
    %v5128 = vadd.f32 0.0, %v5127
    %v5129 = vpop.f32.mrf.mxu0
    %v5130 = vpop.f32.mrf.mxu0
    %v5131 = vpop.f32.mrf.mxu0
    %5132 = vdwg.mxu0
    %v5133 = vadd.f32 %v4423, %v5128
    %v5134 = vxor.u32 %v5133, 2147483648
    %v5135 = vmul.f32 %v5134, 1.442695
    %v5136 = vpow.pop %v5135
    %v5137 = vadd.f32 %v5136, 1.0
    %v5138 = vrcp.pop %v5137
    %v5139 = vmul.f32 1.0, %v5138
    %5140 = vmatprep.subr.bf16.mxu0 0
    %5141 = vmatpush1.bf16.msra.mxu0 0
    %5142 = vmatprep.subr.bf16.mxu0 0
    %5143 = vmatpush1.bf16.msra.mxu0 0
    %5144 = vmatprep.subr.bf16.mxu0 0
    %5145 = vmatpush1.bf16.msra.mxu0 0
    %5146 = vmatprep.subr.bf16.mxu0 0
    %5147 = vmatpush1.bf16.msra.mxu0 0
    %5148 = vmatprep.subr.bf16.mxu0 0
    %5149 = vmatpush1.bf16.msra.mxu0 %v4895
    %5150 = vmatprep.subr.bf16.mxu0 0
    %5151 = vmatpush1.bf16.msra.mxu0 %v4894
    %5152 = vmatprep.subr.bf16.mxu0 0
    %5153 = vmatpush1.bf16.msra.mxu0 %v4893
    %5154 = vmatprep.subr.bf16.mxu0 0
    %5155 = vmatpush1.bf16.msra.mxu0 %v4892
    %5156 = vmatprep.subr.bf16.mxu0 0
    %5157 = vmatpush2.bf16.msra.mxu0 0
    %5158 = vmatprep.subr.bf16.mxu0 0
    %5159 = vmatpush2.bf16.msra.mxu0 0
    %5160 = vmatprep.subr.bf16.mxu0 0
    %5161 = vmatpush2.bf16.msra.mxu0 0
    %5162 = vmatprep.subr.bf16.mxu0 0
    %5163 = vmatpush2.bf16.msra.mxu0 0
    %5164 = vmatprep.subr.bf16.mxu0 0
    %5165 = vmatpush2.bf16.msra.mxu0 0
    %5166 = vmatprep.subr.bf16.mxu0 0
    %5167 = vmatpush2.bf16.msra.mxu0 0
    %5168 = vmatprep.subr.bf16.mxu0 0
    %5169 = vmatpush2.bf16.msra.mxu0 0
    %5170 = vmatprep.subr.bf16.mxu0 0
    %5171 = vmatpush2.bf16.msra.mxu0 0
    %5172 = vmatprep.mubr.bf16.mxu0 0
    %5173 = vmatmul.mubr.bf16.gmra.mxu0 %v5091
    %v5174 = vpop.f32.mrf.mxu0
    %v5175 = vadd.f32 0.0, %v5174
    %v5176 = vpop.f32.mrf.mxu0
    %v5177 = vpop.f32.mrf.mxu0
    %v5178 = vpop.f32.mrf.mxu0
    %5179 = vdwg.mxu0
    %v5180 = vadd.f32 %v4529, %v5175
    %v5181 = vxor.u32 %v5180, 2147483648
    %v5182 = vmul.f32 %v5181, 1.442695
    %v5183 = vpow.pop %v5182
    %v5184 = vadd.f32 %v5183, 1.0
    %v5185 = vrcp.pop %v5184
    %v5186 = vmul.f32 1.0, %v5185
    %5187 = vmatprep.subr.bf16.mxu0 0
    %5188 = vmatpush1.bf16.msra.mxu0 0
    %5189 = vmatprep.subr.bf16.mxu0 0
    %5190 = vmatpush1.bf16.msra.mxu0 0
    %5191 = vmatprep.subr.bf16.mxu0 0
    %5192 = vmatpush1.bf16.msra.mxu0 0
    %5193 = vmatprep.subr.bf16.mxu0 0
    %5194 = vmatpush1.bf16.msra.mxu0 0
    %5195 = vmatprep.subr.bf16.mxu0 0
    %5196 = vmatpush1.bf16.msra.mxu0 %v4966
    %5197 = vmatprep.subr.bf16.mxu0 0
    %5198 = vmatpush1.bf16.msra.mxu0 %v4965
    %5199 = vmatprep.subr.bf16.mxu0 0
    %5200 = vmatpush1.bf16.msra.mxu0 %v4964
    %5201 = vmatprep.subr.bf16.mxu0 0
    %5202 = vmatpush1.bf16.msra.mxu0 %v4963
    %5203 = vmatprep.subr.bf16.mxu0 0
    %5204 = vmatpush2.bf16.msra.mxu0 0
    %5205 = vmatprep.subr.bf16.mxu0 0
    %5206 = vmatpush2.bf16.msra.mxu0 0
    %5207 = vmatprep.subr.bf16.mxu0 0
    %5208 = vmatpush2.bf16.msra.mxu0 0
    %5209 = vmatprep.subr.bf16.mxu0 0
    %5210 = vmatpush2.bf16.msra.mxu0 0
    %5211 = vmatprep.subr.bf16.mxu0 0
    %5212 = vmatpush2.bf16.msra.mxu0 0
    %5213 = vmatprep.subr.bf16.mxu0 0
    %5214 = vmatpush2.bf16.msra.mxu0 0
    %5215 = vmatprep.subr.bf16.mxu0 0
    %5216 = vmatpush2.bf16.msra.mxu0 0
    %5217 = vmatprep.subr.bf16.mxu0 0
    %5218 = vmatpush2.bf16.msra.mxu0 0
    %5219 = vmatprep.mubr.bf16.mxu0 0
    %5220 = vmatmul.mubr.bf16.gmra.mxu0 %v5091
    %v5221 = vpop.f32.mrf.mxu0
    %v5222 = vadd.f32 0.0, %v5221
    %v5223 = vpop.f32.mrf.mxu0
    %v5224 = vpop.f32.mrf.mxu0
    %v5225 = vpop.f32.mrf.mxu0
    %5226 = vdwg.mxu0
    %v5227 = vadd.f32 %v4635, %v5222
    %v5228 = vxor.u32 %v5227, 2147483648
    %v5229 = vmul.f32 %v5228, 1.442695
    %v5230 = vpow.pop %v5229
    %v5231 = vadd.f32 %v5230, 1.0
    %v5232 = vrcp.pop %v5231
    %v5233 = vmul.f32 1.0, %v5232
    %5234 = vmatprep.subr.bf16.mxu0 0
    %5235 = vmatpush1.bf16.msra.mxu0 0
    %5236 = vmatprep.subr.bf16.mxu0 0
    %5237 = vmatpush1.bf16.msra.mxu0 0
    %5238 = vmatprep.subr.bf16.mxu0 0
    %5239 = vmatpush1.bf16.msra.mxu0 0
    %5240 = vmatprep.subr.bf16.mxu0 0
    %5241 = vmatpush1.bf16.msra.mxu0 0
    %5242 = vmatprep.subr.bf16.mxu0 0
    %5243 = vmatpush1.bf16.msra.mxu0 %v5037
    %5244 = vmatprep.subr.bf16.mxu0 0
    %5245 = vmatpush1.bf16.msra.mxu0 %v5036
    %5246 = vmatprep.subr.bf16.mxu0 0
    %5247 = vmatpush1.bf16.msra.mxu0 %v5035
    %5248 = vmatprep.subr.bf16.mxu0 0
    %5249 = vmatpush1.bf16.msra.mxu0 %v5034
    %5250 = vmatprep.subr.bf16.mxu0 0
    %5251 = vmatpush2.bf16.msra.mxu0 0
    %5252 = vmatprep.subr.bf16.mxu0 0
    %5253 = vmatpush2.bf16.msra.mxu0 0
    %5254 = vmatprep.subr.bf16.mxu0 0
    %5255 = vmatpush2.bf16.msra.mxu0 0
    %5256 = vmatprep.subr.bf16.mxu0 0
    %5257 = vmatpush2.bf16.msra.mxu0 0
    %5258 = vmatprep.subr.bf16.mxu0 0
    %5259 = vmatpush2.bf16.msra.mxu0 0
    %5260 = vmatprep.subr.bf16.mxu0 0
    %5261 = vmatpush2.bf16.msra.mxu0 0
    %5262 = vmatprep.subr.bf16.mxu0 0
    %5263 = vmatpush2.bf16.msra.mxu0 0
    %5264 = vmatprep.subr.bf16.mxu0 0
    %5265 = vmatpush2.bf16.msra.mxu0 0
    %5266 = vmatprep.mubr.bf16.mxu0 0
    %5267 = vmatmul.mubr.bf16.gmra.mxu0 %v5091
    %v5268 = vpop.f32.mrf.mxu0
    %v5269 = vadd.f32 0.0, %v5268
    %v5270 = vpop.f32.mrf.mxu0
    %v5271 = vpop.f32.mrf.mxu0
    %v5272 = vpop.f32.mrf.mxu0
    %5273 = vdwg.mxu0
    %v5274 = vadd.f32 %v4741, %v5269
    %v5275 = vtanh.pop %v5274
    %v5276 = vmul.f32 %v5186, %v5086
    %v5277 = vmul.f32 %v5139, %v5275
    %v5278 = vadd.f32 %v5276, %v5277
    %v5279 = vtanh.pop %v5278
    %v5280 = vmul.f32 %v5233, %v5279
    %v5281 = vpack.c.bf16 %v5280, %v5280
    %v5283 = vsel %vm182, %v5281, 0
    %5285 = vmatprep.subr.bf16.mxu0 0
    %5286 = vmatpush1.bf16.msra.mxu0 0
    %5287 = vmatprep.subr.bf16.mxu0 0
    %5288 = vmatpush1.bf16.msra.mxu0 0
    %5289 = vmatprep.subr.bf16.mxu0 0
    %5290 = vmatpush1.bf16.msra.mxu0 0
    %5291 = vmatprep.subr.bf16.mxu0 0
    %5292 = vmatpush1.bf16.msra.mxu0 0
    %5293 = vmatprep.subr.bf16.mxu0 0
    %5294 = vmatpush1.bf16.msra.mxu0 %v4822
    %5295 = vmatprep.subr.bf16.mxu0 0
    %5296 = vmatpush1.bf16.msra.mxu0 %v4821
    %5297 = vmatprep.subr.bf16.mxu0 0
    %5298 = vmatpush1.bf16.msra.mxu0 %v4820
    %5299 = vmatprep.subr.bf16.mxu0 0
    %5300 = vmatpush1.bf16.msra.mxu0 %v4819
    %5301 = vmatprep.subr.bf16.mxu0 0
    %5302 = vmatpush2.bf16.msra.mxu0 0
    %5303 = vmatprep.subr.bf16.mxu0 0
    %5304 = vmatpush2.bf16.msra.mxu0 0
    %5305 = vmatprep.subr.bf16.mxu0 0
    %5306 = vmatpush2.bf16.msra.mxu0 0
    %5307 = vmatprep.subr.bf16.mxu0 0
    %5308 = vmatpush2.bf16.msra.mxu0 0
    %5309 = vmatprep.subr.bf16.mxu0 0
    %5310 = vmatpush2.bf16.msra.mxu0 0
    %5311 = vmatprep.subr.bf16.mxu0 0
    %5312 = vmatpush2.bf16.msra.mxu0 0
    %5313 = vmatprep.subr.bf16.mxu0 0
    %5314 = vmatpush2.bf16.msra.mxu0 0
    %5315 = vmatprep.subr.bf16.mxu0 0
    %5316 = vmatpush2.bf16.msra.mxu0 0
    %5317 = vmatprep.mubr.bf16.mxu0 0
    %5318 = vmatmul.mubr.bf16.gmra.mxu0 %v5283
    %v5319 = vpop.f32.mrf.mxu0
    %v5320 = vadd.f32 0.0, %v5319
    %v5321 = vpop.f32.mrf.mxu0
    %v5322 = vpop.f32.mrf.mxu0
    %v5323 = vpop.f32.mrf.mxu0
    %5324 = vdwg.mxu0
    %v5325 = vadd.f32 %v4428, %v5320
    %v5326 = vxor.u32 %v5325, 2147483648
    %v5327 = vmul.f32 %v5326, 1.442695
    %v5328 = vpow.pop %v5327
    %v5329 = vadd.f32 %v5328, 1.0
    %v5330 = vrcp.pop %v5329
    %v5331 = vmul.f32 1.0, %v5330
    %5332 = vmatprep.subr.bf16.mxu0 0
    %5333 = vmatpush1.bf16.msra.mxu0 0
    %5334 = vmatprep.subr.bf16.mxu0 0
    %5335 = vmatpush1.bf16.msra.mxu0 0
    %5336 = vmatprep.subr.bf16.mxu0 0
    %5337 = vmatpush1.bf16.msra.mxu0 0
    %5338 = vmatprep.subr.bf16.mxu0 0
    %5339 = vmatpush1.bf16.msra.mxu0 0
    %5340 = vmatprep.subr.bf16.mxu0 0
    %5341 = vmatpush1.bf16.msra.mxu0 %v4895
    %5342 = vmatprep.subr.bf16.mxu0 0
    %5343 = vmatpush1.bf16.msra.mxu0 %v4894
    %5344 = vmatprep.subr.bf16.mxu0 0
    %5345 = vmatpush1.bf16.msra.mxu0 %v4893
    %5346 = vmatprep.subr.bf16.mxu0 0
    %5347 = vmatpush1.bf16.msra.mxu0 %v4892
    %5348 = vmatprep.subr.bf16.mxu0 0
    %5349 = vmatpush2.bf16.msra.mxu0 0
    %5350 = vmatprep.subr.bf16.mxu0 0
    %5351 = vmatpush2.bf16.msra.mxu0 0
    %5352 = vmatprep.subr.bf16.mxu0 0
    %5353 = vmatpush2.bf16.msra.mxu0 0
    %5354 = vmatprep.subr.bf16.mxu0 0
    %5355 = vmatpush2.bf16.msra.mxu0 0
    %5356 = vmatprep.subr.bf16.mxu0 0
    %5357 = vmatpush2.bf16.msra.mxu0 0
    %5358 = vmatprep.subr.bf16.mxu0 0
    %5359 = vmatpush2.bf16.msra.mxu0 0
    %5360 = vmatprep.subr.bf16.mxu0 0
    %5361 = vmatpush2.bf16.msra.mxu0 0
    %5362 = vmatprep.subr.bf16.mxu0 0
    %5363 = vmatpush2.bf16.msra.mxu0 0
    %5364 = vmatprep.mubr.bf16.mxu0 0
    %5365 = vmatmul.mubr.bf16.gmra.mxu0 %v5283
    %v5366 = vpop.f32.mrf.mxu0
    %v5367 = vadd.f32 0.0, %v5366
    %v5368 = vpop.f32.mrf.mxu0
    %v5369 = vpop.f32.mrf.mxu0
    %v5370 = vpop.f32.mrf.mxu0
    %5371 = vdwg.mxu0
    %v5372 = vadd.f32 %v4534, %v5367
    %v5373 = vxor.u32 %v5372, 2147483648
    %v5374 = vmul.f32 %v5373, 1.442695
    %v5375 = vpow.pop %v5374
    %v5376 = vadd.f32 %v5375, 1.0
    %v5377 = vrcp.pop %v5376
    %v5378 = vmul.f32 1.0, %v5377
    %5379 = vmatprep.subr.bf16.mxu0 0
    %5380 = vmatpush1.bf16.msra.mxu0 0
    %5381 = vmatprep.subr.bf16.mxu0 0
    %5382 = vmatpush1.bf16.msra.mxu0 0
    %5383 = vmatprep.subr.bf16.mxu0 0
    %5384 = vmatpush1.bf16.msra.mxu0 0
    %5385 = vmatprep.subr.bf16.mxu0 0
    %5386 = vmatpush1.bf16.msra.mxu0 0
    %5387 = vmatprep.subr.bf16.mxu0 0
    %5388 = vmatpush1.bf16.msra.mxu0 %v4966
    %5389 = vmatprep.subr.bf16.mxu0 0
    %5390 = vmatpush1.bf16.msra.mxu0 %v4965
    %5391 = vmatprep.subr.bf16.mxu0 0
    %5392 = vmatpush1.bf16.msra.mxu0 %v4964
    %5393 = vmatprep.subr.bf16.mxu0 0
    %5394 = vmatpush1.bf16.msra.mxu0 %v4963
    %5395 = vmatprep.subr.bf16.mxu0 0
    %5396 = vmatpush2.bf16.msra.mxu0 0
    %5397 = vmatprep.subr.bf16.mxu0 0
    %5398 = vmatpush2.bf16.msra.mxu0 0
    %5399 = vmatprep.subr.bf16.mxu0 0
    %5400 = vmatpush2.bf16.msra.mxu0 0
    %5401 = vmatprep.subr.bf16.mxu0 0
    %5402 = vmatpush2.bf16.msra.mxu0 0
    %5403 = vmatprep.subr.bf16.mxu0 0
    %5404 = vmatpush2.bf16.msra.mxu0 0
    %5405 = vmatprep.subr.bf16.mxu0 0
    %5406 = vmatpush2.bf16.msra.mxu0 0
    %5407 = vmatprep.subr.bf16.mxu0 0
    %5408 = vmatpush2.bf16.msra.mxu0 0
    %5409 = vmatprep.subr.bf16.mxu0 0
    %5410 = vmatpush2.bf16.msra.mxu0 0
    %5411 = vmatprep.mubr.bf16.mxu0 0
    %5412 = vmatmul.mubr.bf16.gmra.mxu0 %v5283
    %v5413 = vpop.f32.mrf.mxu0
    %v5414 = vadd.f32 0.0, %v5413
    %v5415 = vpop.f32.mrf.mxu0
    %v5416 = vpop.f32.mrf.mxu0
    %v5417 = vpop.f32.mrf.mxu0
    %5418 = vdwg.mxu0
    %v5419 = vadd.f32 %v4640, %v5414
    %v5420 = vxor.u32 %v5419, 2147483648
    %v5421 = vmul.f32 %v5420, 1.442695
    %v5422 = vpow.pop %v5421
    %v5423 = vadd.f32 %v5422, 1.0
    %v5424 = vrcp.pop %v5423
    %v5425 = vmul.f32 1.0, %v5424
    %5426 = vmatprep.subr.bf16.mxu0 0
    %5427 = vmatpush1.bf16.msra.mxu0 0
    %5428 = vmatprep.subr.bf16.mxu0 0
    %5429 = vmatpush1.bf16.msra.mxu0 0
    %5430 = vmatprep.subr.bf16.mxu0 0
    %5431 = vmatpush1.bf16.msra.mxu0 0
    %5432 = vmatprep.subr.bf16.mxu0 0
    %5433 = vmatpush1.bf16.msra.mxu0 0
    %5434 = vmatprep.subr.bf16.mxu0 0
    %5435 = vmatpush1.bf16.msra.mxu0 %v5037
    %5436 = vmatprep.subr.bf16.mxu0 0
    %5437 = vmatpush1.bf16.msra.mxu0 %v5036
    %5438 = vmatprep.subr.bf16.mxu0 0
    %5439 = vmatpush1.bf16.msra.mxu0 %v5035
    %5440 = vmatprep.subr.bf16.mxu0 0
    %5441 = vmatpush1.bf16.msra.mxu0 %v5034
    %5442 = vmatprep.subr.bf16.mxu0 0
    %5443 = vmatpush2.bf16.msra.mxu0 0
    %5444 = vmatprep.subr.bf16.mxu0 0
    %5445 = vmatpush2.bf16.msra.mxu0 0
    %5446 = vmatprep.subr.bf16.mxu0 0
    %5447 = vmatpush2.bf16.msra.mxu0 0
    %5448 = vmatprep.subr.bf16.mxu0 0
    %5449 = vmatpush2.bf16.msra.mxu0 0
    %5450 = vmatprep.subr.bf16.mxu0 0
    %5451 = vmatpush2.bf16.msra.mxu0 0
    %5452 = vmatprep.subr.bf16.mxu0 0
    %5453 = vmatpush2.bf16.msra.mxu0 0
    %5454 = vmatprep.subr.bf16.mxu0 0
    %5455 = vmatpush2.bf16.msra.mxu0 0
    %5456 = vmatprep.subr.bf16.mxu0 0
    %5457 = vmatpush2.bf16.msra.mxu0 0
    %5458 = vmatprep.mubr.bf16.mxu0 0
    %5459 = vmatmul.mubr.bf16.gmra.mxu0 %v5283
    %v5460 = vpop.f32.mrf.mxu0
    %v5461 = vadd.f32 0.0, %v5460
    %v5462 = vpop.f32.mrf.mxu0
    %v5463 = vpop.f32.mrf.mxu0
    %v5464 = vpop.f32.mrf.mxu0
    %5465 = vdwg.mxu0
    %v5466 = vadd.f32 %v4746, %v5461
    %v5467 = vtanh.pop %v5466
    %v5468 = vmul.f32 %v5378, %v5278
    %v5469 = vmul.f32 %v5331, %v5467
    %v5470 = vadd.f32 %v5468, %v5469
    %v5471 = vtanh.pop %v5470
    %v5472 = vmul.f32 %v5425, %v5471
    %v5473 = vpack.c.bf16 %v5472, %v5472
    %v5475 = vsel %vm182, %v5473, 0
    %5477 = vmatprep.subr.bf16.mxu0 0
    %5478 = vmatpush1.bf16.msra.mxu0 0
    %5479 = vmatprep.subr.bf16.mxu0 0
    %5480 = vmatpush1.bf16.msra.mxu0 0
    %5481 = vmatprep.subr.bf16.mxu0 0
    %5482 = vmatpush1.bf16.msra.mxu0 0
    %5483 = vmatprep.subr.bf16.mxu0 0
    %5484 = vmatpush1.bf16.msra.mxu0 0
    %5485 = vmatprep.subr.bf16.mxu0 0
    %5486 = vmatpush1.bf16.msra.mxu0 %v4822
    %5487 = vmatprep.subr.bf16.mxu0 0
    %5488 = vmatpush1.bf16.msra.mxu0 %v4821
    %5489 = vmatprep.subr.bf16.mxu0 0
    %5490 = vmatpush1.bf16.msra.mxu0 %v4820
    %5491 = vmatprep.subr.bf16.mxu0 0
    %5492 = vmatpush1.bf16.msra.mxu0 %v4819
    %5493 = vmatprep.subr.bf16.mxu0 0
    %5494 = vmatpush2.bf16.msra.mxu0 0
    %5495 = vmatprep.subr.bf16.mxu0 0
    %5496 = vmatpush2.bf16.msra.mxu0 0
    %5497 = vmatprep.subr.bf16.mxu0 0
    %5498 = vmatpush2.bf16.msra.mxu0 0
    %5499 = vmatprep.subr.bf16.mxu0 0
    %5500 = vmatpush2.bf16.msra.mxu0 0
    %5501 = vmatprep.subr.bf16.mxu0 0
    %5502 = vmatpush2.bf16.msra.mxu0 0
    %5503 = vmatprep.subr.bf16.mxu0 0
    %5504 = vmatpush2.bf16.msra.mxu0 0
    %5505 = vmatprep.subr.bf16.mxu0 0
    %5506 = vmatpush2.bf16.msra.mxu0 0
    %5507 = vmatprep.subr.bf16.mxu0 0
    %5508 = vmatpush2.bf16.msra.mxu0 0
    %5509 = vmatprep.mubr.bf16.mxu0 0
    %5510 = vmatmul.mubr.bf16.gmra.mxu0 %v5475
    %v5511 = vpop.f32.mrf.mxu0
    %v5512 = vadd.f32 0.0, %v5511
    %v5513 = vpop.f32.mrf.mxu0
    %v5514 = vpop.f32.mrf.mxu0
    %v5515 = vpop.f32.mrf.mxu0
    %5516 = vdwg.mxu0
    %v5517 = vadd.f32 %v4431, %v5512
    %v5518 = vxor.u32 %v5517, 2147483648
    %v5519 = vmul.f32 %v5518, 1.442695
    %v5520 = vpow.pop %v5519
    %v5521 = vadd.f32 %v5520, 1.0
    %v5522 = vrcp.pop %v5521
    %v5523 = vmul.f32 1.0, %v5522
    %5524 = vmatprep.subr.bf16.mxu0 0
    %5525 = vmatpush1.bf16.msra.mxu0 0
    %5526 = vmatprep.subr.bf16.mxu0 0
    %5527 = vmatpush1.bf16.msra.mxu0 0
    %5528 = vmatprep.subr.bf16.mxu0 0
    %5529 = vmatpush1.bf16.msra.mxu0 0
    %5530 = vmatprep.subr.bf16.mxu0 0
    %5531 = vmatpush1.bf16.msra.mxu0 0
    %5532 = vmatprep.subr.bf16.mxu0 0
    %5533 = vmatpush1.bf16.msra.mxu0 %v4895
    %5534 = vmatprep.subr.bf16.mxu0 0
    %5535 = vmatpush1.bf16.msra.mxu0 %v4894
    %5536 = vmatprep.subr.bf16.mxu0 0
    %5537 = vmatpush1.bf16.msra.mxu0 %v4893
    %5538 = vmatprep.subr.bf16.mxu0 0
    %5539 = vmatpush1.bf16.msra.mxu0 %v4892
    %5540 = vmatprep.subr.bf16.mxu0 0
    %5541 = vmatpush2.bf16.msra.mxu0 0
    %5542 = vmatprep.subr.bf16.mxu0 0
    %5543 = vmatpush2.bf16.msra.mxu0 0
    %5544 = vmatprep.subr.bf16.mxu0 0
    %5545 = vmatpush2.bf16.msra.mxu0 0
    %5546 = vmatprep.subr.bf16.mxu0 0
    %5547 = vmatpush2.bf16.msra.mxu0 0
    %5548 = vmatprep.subr.bf16.mxu0 0
    %5549 = vmatpush2.bf16.msra.mxu0 0
    %5550 = vmatprep.subr.bf16.mxu0 0
    %5551 = vmatpush2.bf16.msra.mxu0 0
    %5552 = vmatprep.subr.bf16.mxu0 0
    %5553 = vmatpush2.bf16.msra.mxu0 0
    %5554 = vmatprep.subr.bf16.mxu0 0
    %5555 = vmatpush2.bf16.msra.mxu0 0
    %5556 = vmatprep.mubr.bf16.mxu0 0
    %5557 = vmatmul.mubr.bf16.gmra.mxu0 %v5475
    %v5558 = vpop.f32.mrf.mxu0
    %v5559 = vadd.f32 0.0, %v5558
    %v5560 = vpop.f32.mrf.mxu0
    %v5561 = vpop.f32.mrf.mxu0
    %v5562 = vpop.f32.mrf.mxu0
    %5563 = vdwg.mxu0
    %v5564 = vadd.f32 %v4537, %v5559
    %v5565 = vxor.u32 %v5564, 2147483648
    %v5566 = vmul.f32 %v5565, 1.442695
    %v5567 = vpow.pop %v5566
    %v5568 = vadd.f32 %v5567, 1.0
    %v5569 = vrcp.pop %v5568
    %v5570 = vmul.f32 1.0, %v5569
    %5571 = vmatprep.subr.bf16.mxu0 0
    %5572 = vmatpush1.bf16.msra.mxu0 0
    %5573 = vmatprep.subr.bf16.mxu0 0
    %5574 = vmatpush1.bf16.msra.mxu0 0
    %5575 = vmatprep.subr.bf16.mxu0 0
    %5576 = vmatpush1.bf16.msra.mxu0 0
    %5577 = vmatprep.subr.bf16.mxu0 0
    %5578 = vmatpush1.bf16.msra.mxu0 0
    %5579 = vmatprep.subr.bf16.mxu0 0
    %5580 = vmatpush1.bf16.msra.mxu0 %v4966
    %5581 = vmatprep.subr.bf16.mxu0 0
    %5582 = vmatpush1.bf16.msra.mxu0 %v4965
    %5583 = vmatprep.subr.bf16.mxu0 0
    %5584 = vmatpush1.bf16.msra.mxu0 %v4964
    %5585 = vmatprep.subr.bf16.mxu0 0
    %5586 = vmatpush1.bf16.msra.mxu0 %v4963
    %5587 = vmatprep.subr.bf16.mxu0 0
    %5588 = vmatpush2.bf16.msra.mxu0 0
    %5589 = vmatprep.subr.bf16.mxu0 0
    %5590 = vmatpush2.bf16.msra.mxu0 0
    %5591 = vmatprep.subr.bf16.mxu0 0
    %5592 = vmatpush2.bf16.msra.mxu0 0
    %5593 = vmatprep.subr.bf16.mxu0 0
    %5594 = vmatpush2.bf16.msra.mxu0 0
    %5595 = vmatprep.subr.bf16.mxu0 0
    %5596 = vmatpush2.bf16.msra.mxu0 0
    %5597 = vmatprep.subr.bf16.mxu0 0
    %5598 = vmatpush2.bf16.msra.mxu0 0
    %5599 = vmatprep.subr.bf16.mxu0 0
    %5600 = vmatpush2.bf16.msra.mxu0 0
    %5601 = vmatprep.subr.bf16.mxu0 0
    %5602 = vmatpush2.bf16.msra.mxu0 0
    %5603 = vmatprep.mubr.bf16.mxu0 0
    %5604 = vmatmul.mubr.bf16.gmra.mxu0 %v5475
    %v5605 = vpop.f32.mrf.mxu0
    %v5606 = vadd.f32 0.0, %v5605
    %v5607 = vpop.f32.mrf.mxu0
    %v5608 = vpop.f32.mrf.mxu0
    %v5609 = vpop.f32.mrf.mxu0
    %5610 = vdwg.mxu0
    %v5611 = vadd.f32 %v4643, %v5606
    %v5612 = vxor.u32 %v5611, 2147483648
    %v5613 = vmul.f32 %v5612, 1.442695
    %v5614 = vpow.pop %v5613
    %v5615 = vadd.f32 %v5614, 1.0
    %v5616 = vrcp.pop %v5615
    %v5617 = vmul.f32 1.0, %v5616
    %5618 = vmatprep.subr.bf16.mxu0 0
    %5619 = vmatpush1.bf16.msra.mxu0 0
    %5620 = vmatprep.subr.bf16.mxu0 0
    %5621 = vmatpush1.bf16.msra.mxu0 0
    %5622 = vmatprep.subr.bf16.mxu0 0
    %5623 = vmatpush1.bf16.msra.mxu0 0
    %5624 = vmatprep.subr.bf16.mxu0 0
    %5625 = vmatpush1.bf16.msra.mxu0 0
    %5626 = vmatprep.subr.bf16.mxu0 0
    %5627 = vmatpush1.bf16.msra.mxu0 %v5037
    %5628 = vmatprep.subr.bf16.mxu0 0
    %5629 = vmatpush1.bf16.msra.mxu0 %v5036
    %5630 = vmatprep.subr.bf16.mxu0 0
    %5631 = vmatpush1.bf16.msra.mxu0 %v5035
    %5632 = vmatprep.subr.bf16.mxu0 0
    %5633 = vmatpush1.bf16.msra.mxu0 %v5034
    %5634 = vmatprep.subr.bf16.mxu0 0
    %5635 = vmatpush2.bf16.msra.mxu0 0
    %5636 = vmatprep.subr.bf16.mxu0 0
    %5637 = vmatpush2.bf16.msra.mxu0 0
    %5638 = vmatprep.subr.bf16.mxu0 0
    %5639 = vmatpush2.bf16.msra.mxu0 0
    %5640 = vmatprep.subr.bf16.mxu0 0
    %5641 = vmatpush2.bf16.msra.mxu0 0
    %5642 = vmatprep.subr.bf16.mxu0 0
    %5643 = vmatpush2.bf16.msra.mxu0 0
    %5644 = vmatprep.subr.bf16.mxu0 0
    %5645 = vmatpush2.bf16.msra.mxu0 0
    %5646 = vmatprep.subr.bf16.mxu0 0
    %5647 = vmatpush2.bf16.msra.mxu0 0
    %5648 = vmatprep.subr.bf16.mxu0 0
    %5649 = vmatpush2.bf16.msra.mxu0 0
    %5650 = vmatprep.mubr.bf16.mxu0 0
    %5651 = vmatmul.mubr.bf16.gmra.mxu0 %v5475
    %v5652 = vpop.f32.mrf.mxu0
    %v5653 = vadd.f32 0.0, %v5652
    %v5654 = vpop.f32.mrf.mxu0
    %v5655 = vpop.f32.mrf.mxu0
    %v5656 = vpop.f32.mrf.mxu0
    %5657 = vdwg.mxu0
    %v5658 = vadd.f32 %v4749, %v5653
    %v5659 = vtanh.pop %v5658
    %v5660 = vmul.f32 %v5570, %v5470
    %v5661 = vmul.f32 %v5523, %v5659
    %v5662 = vadd.f32 %v5660, %v5661
    %v5663 = vtanh.pop %v5662
    %v5664 = vmul.f32 %v5617, %v5663
    %v5665 = vpack.c.bf16 %v5664, %v5664
    %v5667 = vsel %vm182, %v5665, 0
    %5669 = vmatprep.subr.bf16.mxu0 0
    %5670 = vmatpush1.bf16.msra.mxu0 0
    %5671 = vmatprep.subr.bf16.mxu0 0
    %5672 = vmatpush1.bf16.msra.mxu0 0
    %5673 = vmatprep.subr.bf16.mxu0 0
    %5674 = vmatpush1.bf16.msra.mxu0 0
    %5675 = vmatprep.subr.bf16.mxu0 0
    %5676 = vmatpush1.bf16.msra.mxu0 0
    %5677 = vmatprep.subr.bf16.mxu0 0
    %5678 = vmatpush1.bf16.msra.mxu0 %v4822
    %5679 = vmatprep.subr.bf16.mxu0 0
    %5680 = vmatpush1.bf16.msra.mxu0 %v4821
    %5681 = vmatprep.subr.bf16.mxu0 0
    %5682 = vmatpush1.bf16.msra.mxu0 %v4820
    %5683 = vmatprep.subr.bf16.mxu0 0
    %5684 = vmatpush1.bf16.msra.mxu0 %v4819
    %5685 = vmatprep.subr.bf16.mxu0 0
    %5686 = vmatpush2.bf16.msra.mxu0 0
    %5687 = vmatprep.subr.bf16.mxu0 0
    %5688 = vmatpush2.bf16.msra.mxu0 0
    %5689 = vmatprep.subr.bf16.mxu0 0
    %5690 = vmatpush2.bf16.msra.mxu0 0
    %5691 = vmatprep.subr.bf16.mxu0 0
    %5692 = vmatpush2.bf16.msra.mxu0 0
    %5693 = vmatprep.subr.bf16.mxu0 0
    %5694 = vmatpush2.bf16.msra.mxu0 0
    %5695 = vmatprep.subr.bf16.mxu0 0
    %5696 = vmatpush2.bf16.msra.mxu0 0
    %5697 = vmatprep.subr.bf16.mxu0 0
    %5698 = vmatpush2.bf16.msra.mxu0 0
    %5699 = vmatprep.subr.bf16.mxu0 0
    %5700 = vmatpush2.bf16.msra.mxu0 0
    %5701 = vmatprep.mubr.bf16.mxu0 0
    %5702 = vmatmul.mubr.bf16.gmra.mxu0 %v5667
    %v5703 = vpop.f32.mrf.mxu0
    %v5704 = vadd.f32 0.0, %v5703
    %v5705 = vpop.f32.mrf.mxu0
    %v5706 = vpop.f32.mrf.mxu0
    %v5707 = vpop.f32.mrf.mxu0
    %5708 = vdwg.mxu0
    %v5709 = vadd.f32 %v4436, %v5704
    %v5710 = vxor.u32 %v5709, 2147483648
    %v5711 = vmul.f32 %v5710, 1.442695
    %v5712 = vpow.pop %v5711
    %v5713 = vadd.f32 %v5712, 1.0
    %v5714 = vrcp.pop %v5713
    %v5715 = vmul.f32 1.0, %v5714
    %5716 = vmatprep.subr.bf16.mxu0 0
    %5717 = vmatpush1.bf16.msra.mxu0 0
    %5718 = vmatprep.subr.bf16.mxu0 0
    %5719 = vmatpush1.bf16.msra.mxu0 0
    %5720 = vmatprep.subr.bf16.mxu0 0
    %5721 = vmatpush1.bf16.msra.mxu0 0
    %5722 = vmatprep.subr.bf16.mxu0 0
    %5723 = vmatpush1.bf16.msra.mxu0 0
    %5724 = vmatprep.subr.bf16.mxu0 0
    %5725 = vmatpush1.bf16.msra.mxu0 %v4895
    %5726 = vmatprep.subr.bf16.mxu0 0
    %5727 = vmatpush1.bf16.msra.mxu0 %v4894
    %5728 = vmatprep.subr.bf16.mxu0 0
    %5729 = vmatpush1.bf16.msra.mxu0 %v4893
    %5730 = vmatprep.subr.bf16.mxu0 0
    %5731 = vmatpush1.bf16.msra.mxu0 %v4892
    %5732 = vmatprep.subr.bf16.mxu0 0
    %5733 = vmatpush2.bf16.msra.mxu0 0
    %5734 = vmatprep.subr.bf16.mxu0 0
    %5735 = vmatpush2.bf16.msra.mxu0 0
    %5736 = vmatprep.subr.bf16.mxu0 0
    %5737 = vmatpush2.bf16.msra.mxu0 0
    %5738 = vmatprep.subr.bf16.mxu0 0
    %5739 = vmatpush2.bf16.msra.mxu0 0
    %5740 = vmatprep.subr.bf16.mxu0 0
    %5741 = vmatpush2.bf16.msra.mxu0 0
    %5742 = vmatprep.subr.bf16.mxu0 0
    %5743 = vmatpush2.bf16.msra.mxu0 0
    %5744 = vmatprep.subr.bf16.mxu0 0
    %5745 = vmatpush2.bf16.msra.mxu0 0
    %5746 = vmatprep.subr.bf16.mxu0 0
    %5747 = vmatpush2.bf16.msra.mxu0 0
    %5748 = vmatprep.mubr.bf16.mxu0 0
    %5749 = vmatmul.mubr.bf16.gmra.mxu0 %v5667
    %v5750 = vpop.f32.mrf.mxu0
    %v5751 = vadd.f32 0.0, %v5750
    %v5752 = vpop.f32.mrf.mxu0
    %v5753 = vpop.f32.mrf.mxu0
    %v5754 = vpop.f32.mrf.mxu0
    %5755 = vdwg.mxu0
    %v5756 = vadd.f32 %v4542, %v5751
    %v5757 = vxor.u32 %v5756, 2147483648
    %v5758 = vmul.f32 %v5757, 1.442695
    %v5759 = vpow.pop %v5758
    %v5760 = vadd.f32 %v5759, 1.0
    %v5761 = vrcp.pop %v5760
    %v5762 = vmul.f32 1.0, %v5761
    %5763 = vmatprep.subr.bf16.mxu0 0
    %5764 = vmatpush1.bf16.msra.mxu0 0
    %5765 = vmatprep.subr.bf16.mxu0 0
    %5766 = vmatpush1.bf16.msra.mxu0 0
    %5767 = vmatprep.subr.bf16.mxu0 0
    %5768 = vmatpush1.bf16.msra.mxu0 0
    %5769 = vmatprep.subr.bf16.mxu0 0
    %5770 = vmatpush1.bf16.msra.mxu0 0
    %5771 = vmatprep.subr.bf16.mxu0 0
    %5772 = vmatpush1.bf16.msra.mxu0 %v4966
    %5773 = vmatprep.subr.bf16.mxu0 0
    %5774 = vmatpush1.bf16.msra.mxu0 %v4965
    %5775 = vmatprep.subr.bf16.mxu0 0
    %5776 = vmatpush1.bf16.msra.mxu0 %v4964
    %5777 = vmatprep.subr.bf16.mxu0 0
    %5778 = vmatpush1.bf16.msra.mxu0 %v4963
    %5779 = vmatprep.subr.bf16.mxu0 0
    %5780 = vmatpush2.bf16.msra.mxu0 0
    %5781 = vmatprep.subr.bf16.mxu0 0
    %5782 = vmatpush2.bf16.msra.mxu0 0
    %5783 = vmatprep.subr.bf16.mxu0 0
    %5784 = vmatpush2.bf16.msra.mxu0 0
    %5785 = vmatprep.subr.bf16.mxu0 0
    %5786 = vmatpush2.bf16.msra.mxu0 0
    %5787 = vmatprep.subr.bf16.mxu0 0
    %5788 = vmatpush2.bf16.msra.mxu0 0
    %5789 = vmatprep.subr.bf16.mxu0 0
    %5790 = vmatpush2.bf16.msra.mxu0 0
    %5791 = vmatprep.subr.bf16.mxu0 0
    %5792 = vmatpush2.bf16.msra.mxu0 0
    %5793 = vmatprep.subr.bf16.mxu0 0
    %5794 = vmatpush2.bf16.msra.mxu0 0
    %5795 = vmatprep.mubr.bf16.mxu0 0
    %5796 = vmatmul.mubr.bf16.gmra.mxu0 %v5667
    %v5797 = vpop.f32.mrf.mxu0
    %v5798 = vadd.f32 0.0, %v5797
    %v5799 = vpop.f32.mrf.mxu0
    %v5800 = vpop.f32.mrf.mxu0
    %v5801 = vpop.f32.mrf.mxu0
    %5802 = vdwg.mxu0
    %v5803 = vadd.f32 %v4648, %v5798
    %v5804 = vxor.u32 %v5803, 2147483648
    %v5805 = vmul.f32 %v5804, 1.442695
    %v5806 = vpow.pop %v5805
    %v5807 = vadd.f32 %v5806, 1.0
    %v5808 = vrcp.pop %v5807
    %v5809 = vmul.f32 1.0, %v5808
    %5810 = vmatprep.subr.bf16.mxu0 0
    %5811 = vmatpush1.bf16.msra.mxu0 0
    %5812 = vmatprep.subr.bf16.mxu0 0
    %5813 = vmatpush1.bf16.msra.mxu0 0
    %5814 = vmatprep.subr.bf16.mxu0 0
    %5815 = vmatpush1.bf16.msra.mxu0 0
    %5816 = vmatprep.subr.bf16.mxu0 0
    %5817 = vmatpush1.bf16.msra.mxu0 0
    %5818 = vmatprep.subr.bf16.mxu0 0
    %5819 = vmatpush1.bf16.msra.mxu0 %v5037
    %5820 = vmatprep.subr.bf16.mxu0 0
    %5821 = vmatpush1.bf16.msra.mxu0 %v5036
    %5822 = vmatprep.subr.bf16.mxu0 0
    %5823 = vmatpush1.bf16.msra.mxu0 %v5035
    %5824 = vmatprep.subr.bf16.mxu0 0
    %5825 = vmatpush1.bf16.msra.mxu0 %v5034
    %5826 = vmatprep.subr.bf16.mxu0 0
    %5827 = vmatpush2.bf16.msra.mxu0 0
    %5828 = vmatprep.subr.bf16.mxu0 0
    %5829 = vmatpush2.bf16.msra.mxu0 0
    %5830 = vmatprep.subr.bf16.mxu0 0
    %5831 = vmatpush2.bf16.msra.mxu0 0
    %5832 = vmatprep.subr.bf16.mxu0 0
    %5833 = vmatpush2.bf16.msra.mxu0 0
    %5834 = vmatprep.subr.bf16.mxu0 0
    %5835 = vmatpush2.bf16.msra.mxu0 0
    %5836 = vmatprep.subr.bf16.mxu0 0
    %5837 = vmatpush2.bf16.msra.mxu0 0
    %5838 = vmatprep.subr.bf16.mxu0 0
    %5839 = vmatpush2.bf16.msra.mxu0 0
    %5840 = vmatprep.subr.bf16.mxu0 0
    %5841 = vmatpush2.bf16.msra.mxu0 0
    %5842 = vmatprep.mubr.bf16.mxu0 0
    %5843 = vmatmul.mubr.bf16.gmra.mxu0 %v5667
    %v5844 = vpop.f32.mrf.mxu0
    %v5845 = vadd.f32 0.0, %v5844
    %v5846 = vpop.f32.mrf.mxu0
    %v5847 = vpop.f32.mrf.mxu0
    %v5848 = vpop.f32.mrf.mxu0
    %5849 = vdwg.mxu0
    %v5850 = vadd.f32 %v4754, %v5845
    %v5851 = vtanh.pop %v5850
    %v5852 = vmul.f32 %v5762, %v5662
    %v5853 = vmul.f32 %v5715, %v5851
    %v5854 = vadd.f32 %v5852, %v5853
    %v5855 = vtanh.pop %v5854
    %v5856 = vmul.f32 %v5809, %v5855
    %v5857 = vpack.c.bf16 %v5856, %v5856
    %v5859 = vsel %vm182, %v5857, 0
    %5861 = vmatprep.subr.bf16.mxu0 0
    %5862 = vmatpush1.bf16.msra.mxu0 0
    %5863 = vmatprep.subr.bf16.mxu0 0
    %5864 = vmatpush1.bf16.msra.mxu0 0
    %5865 = vmatprep.subr.bf16.mxu0 0
    %5866 = vmatpush1.bf16.msra.mxu0 0
    %5867 = vmatprep.subr.bf16.mxu0 0
    %5868 = vmatpush1.bf16.msra.mxu0 0
    %5869 = vmatprep.subr.bf16.mxu0 0
    %5870 = vmatpush1.bf16.msra.mxu0 %v4822
    %5871 = vmatprep.subr.bf16.mxu0 0
    %5872 = vmatpush1.bf16.msra.mxu0 %v4821
    %5873 = vmatprep.subr.bf16.mxu0 0
    %5874 = vmatpush1.bf16.msra.mxu0 %v4820
    %5875 = vmatprep.subr.bf16.mxu0 0
    %5876 = vmatpush1.bf16.msra.mxu0 %v4819
    %5877 = vmatprep.subr.bf16.mxu0 0
    %5878 = vmatpush2.bf16.msra.mxu0 0
    %5879 = vmatprep.subr.bf16.mxu0 0
    %5880 = vmatpush2.bf16.msra.mxu0 0
    %5881 = vmatprep.subr.bf16.mxu0 0
    %5882 = vmatpush2.bf16.msra.mxu0 0
    %5883 = vmatprep.subr.bf16.mxu0 0
    %5884 = vmatpush2.bf16.msra.mxu0 0
    %5885 = vmatprep.subr.bf16.mxu0 0
    %5886 = vmatpush2.bf16.msra.mxu0 0
    %5887 = vmatprep.subr.bf16.mxu0 0
    %5888 = vmatpush2.bf16.msra.mxu0 0
    %5889 = vmatprep.subr.bf16.mxu0 0
    %5890 = vmatpush2.bf16.msra.mxu0 0
    %5891 = vmatprep.subr.bf16.mxu0 0
    %5892 = vmatpush2.bf16.msra.mxu0 0
    %5893 = vmatprep.mubr.bf16.mxu0 0
    %5894 = vmatmul.mubr.bf16.gmra.mxu0 %v5859
    %v5895 = vpop.f32.mrf.mxu0
    %v5896 = vadd.f32 0.0, %v5895
    %v5897 = vpop.f32.mrf.mxu0
    %v5898 = vpop.f32.mrf.mxu0
    %v5899 = vpop.f32.mrf.mxu0
    %5900 = vdwg.mxu0
    %v5901 = vadd.f32 %v4439, %v5896
    %v5902 = vxor.u32 %v5901, 2147483648
    %v5903 = vmul.f32 %v5902, 1.442695
    %v5904 = vpow.pop %v5903
    %v5905 = vadd.f32 %v5904, 1.0
    %v5906 = vrcp.pop %v5905
    %v5907 = vmul.f32 1.0, %v5906
    %5908 = vmatprep.subr.bf16.mxu0 0
    %5909 = vmatpush1.bf16.msra.mxu0 0
    %5910 = vmatprep.subr.bf16.mxu0 0
    %5911 = vmatpush1.bf16.msra.mxu0 0
    %5912 = vmatprep.subr.bf16.mxu0 0
    %5913 = vmatpush1.bf16.msra.mxu0 0
    %5914 = vmatprep.subr.bf16.mxu0 0
    %5915 = vmatpush1.bf16.msra.mxu0 0
    %5916 = vmatprep.subr.bf16.mxu0 0
    %5917 = vmatpush1.bf16.msra.mxu0 %v4895
    %5918 = vmatprep.subr.bf16.mxu0 0
    %5919 = vmatpush1.bf16.msra.mxu0 %v4894
    %5920 = vmatprep.subr.bf16.mxu0 0
    %5921 = vmatpush1.bf16.msra.mxu0 %v4893
    %5922 = vmatprep.subr.bf16.mxu0 0
    %5923 = vmatpush1.bf16.msra.mxu0 %v4892
    %5924 = vmatprep.subr.bf16.mxu0 0
    %5925 = vmatpush2.bf16.msra.mxu0 0
    %5926 = vmatprep.subr.bf16.mxu0 0
    %5927 = vmatpush2.bf16.msra.mxu0 0
    %5928 = vmatprep.subr.bf16.mxu0 0
    %5929 = vmatpush2.bf16.msra.mxu0 0
    %5930 = vmatprep.subr.bf16.mxu0 0
    %5931 = vmatpush2.bf16.msra.mxu0 0
    %5932 = vmatprep.subr.bf16.mxu0 0
    %5933 = vmatpush2.bf16.msra.mxu0 0
    %5934 = vmatprep.subr.bf16.mxu0 0
    %5935 = vmatpush2.bf16.msra.mxu0 0
    %5936 = vmatprep.subr.bf16.mxu0 0
    %5937 = vmatpush2.bf16.msra.mxu0 0
    %5938 = vmatprep.subr.bf16.mxu0 0
    %5939 = vmatpush2.bf16.msra.mxu0 0
    %5940 = vmatprep.mubr.bf16.mxu0 0
    %5941 = vmatmul.mubr.bf16.gmra.mxu0 %v5859
    %v5942 = vpop.f32.mrf.mxu0
    %v5943 = vadd.f32 0.0, %v5942
    %v5944 = vpop.f32.mrf.mxu0
    %v5945 = vpop.f32.mrf.mxu0
    %v5946 = vpop.f32.mrf.mxu0
    %5947 = vdwg.mxu0
    %v5948 = vadd.f32 %v4545, %v5943
    %v5949 = vxor.u32 %v5948, 2147483648
    %v5950 = vmul.f32 %v5949, 1.442695
    %v5951 = vpow.pop %v5950
    %v5952 = vadd.f32 %v5951, 1.0
    %v5953 = vrcp.pop %v5952
    %v5954 = vmul.f32 1.0, %v5953
    %5955 = vmatprep.subr.bf16.mxu0 0
    %5956 = vmatpush1.bf16.msra.mxu0 0
    %5957 = vmatprep.subr.bf16.mxu0 0
    %5958 = vmatpush1.bf16.msra.mxu0 0
    %5959 = vmatprep.subr.bf16.mxu0 0
    %5960 = vmatpush1.bf16.msra.mxu0 0
    %5961 = vmatprep.subr.bf16.mxu0 0
    %5962 = vmatpush1.bf16.msra.mxu0 0
    %5963 = vmatprep.subr.bf16.mxu0 0
    %5964 = vmatpush1.bf16.msra.mxu0 %v4966
    %5965 = vmatprep.subr.bf16.mxu0 0
    %5966 = vmatpush1.bf16.msra.mxu0 %v4965
    %5967 = vmatprep.subr.bf16.mxu0 0
    %5968 = vmatpush1.bf16.msra.mxu0 %v4964
    %5969 = vmatprep.subr.bf16.mxu0 0
    %5970 = vmatpush1.bf16.msra.mxu0 %v4963
    %5971 = vmatprep.subr.bf16.mxu0 0
    %5972 = vmatpush2.bf16.msra.mxu0 0
    %5973 = vmatprep.subr.bf16.mxu0 0
    %5974 = vmatpush2.bf16.msra.mxu0 0
    %5975 = vmatprep.subr.bf16.mxu0 0
    %5976 = vmatpush2.bf16.msra.mxu0 0
    %5977 = vmatprep.subr.bf16.mxu0 0
    %5978 = vmatpush2.bf16.msra.mxu0 0
    %5979 = vmatprep.subr.bf16.mxu0 0
    %5980 = vmatpush2.bf16.msra.mxu0 0
    %5981 = vmatprep.subr.bf16.mxu0 0
    %5982 = vmatpush2.bf16.msra.mxu0 0
    %5983 = vmatprep.subr.bf16.mxu0 0
    %5984 = vmatpush2.bf16.msra.mxu0 0
    %5985 = vmatprep.subr.bf16.mxu0 0
    %5986 = vmatpush2.bf16.msra.mxu0 0
    %5987 = vmatprep.mubr.bf16.mxu0 0
    %5988 = vmatmul.mubr.bf16.gmra.mxu0 %v5859
    %v5989 = vpop.f32.mrf.mxu0
    %v5990 = vadd.f32 0.0, %v5989
    %v5991 = vpop.f32.mrf.mxu0
    %v5992 = vpop.f32.mrf.mxu0
    %v5993 = vpop.f32.mrf.mxu0
    %5994 = vdwg.mxu0
    %v5995 = vadd.f32 %v4651, %v5990
    %v5996 = vxor.u32 %v5995, 2147483648
    %v5997 = vmul.f32 %v5996, 1.442695
    %v5998 = vpow.pop %v5997
    %v5999 = vadd.f32 %v5998, 1.0
    %v6000 = vrcp.pop %v5999
    %v6001 = vmul.f32 1.0, %v6000
    %6002 = vmatprep.subr.bf16.mxu0 0
    %6003 = vmatpush1.bf16.msra.mxu0 0
    %6004 = vmatprep.subr.bf16.mxu0 0
    %6005 = vmatpush1.bf16.msra.mxu0 0
    %6006 = vmatprep.subr.bf16.mxu0 0
    %6007 = vmatpush1.bf16.msra.mxu0 0
    %6008 = vmatprep.subr.bf16.mxu0 0
    %6009 = vmatpush1.bf16.msra.mxu0 0
    %6010 = vmatprep.subr.bf16.mxu0 0
    %6011 = vmatpush1.bf16.msra.mxu0 %v5037
    %6012 = vmatprep.subr.bf16.mxu0 0
    %6013 = vmatpush1.bf16.msra.mxu0 %v5036
    %6014 = vmatprep.subr.bf16.mxu0 0
    %6015 = vmatpush1.bf16.msra.mxu0 %v5035
    %6016 = vmatprep.subr.bf16.mxu0 0
    %6017 = vmatpush1.bf16.msra.mxu0 %v5034
    %6018 = vmatprep.subr.bf16.mxu0 0
    %6019 = vmatpush2.bf16.msra.mxu0 0
    %6020 = vmatprep.subr.bf16.mxu0 0
    %6021 = vmatpush2.bf16.msra.mxu0 0
    %6022 = vmatprep.subr.bf16.mxu0 0
    %6023 = vmatpush2.bf16.msra.mxu0 0
    %6024 = vmatprep.subr.bf16.mxu0 0
    %6025 = vmatpush2.bf16.msra.mxu0 0
    %6026 = vmatprep.subr.bf16.mxu0 0
    %6027 = vmatpush2.bf16.msra.mxu0 0
    %6028 = vmatprep.subr.bf16.mxu0 0
    %6029 = vmatpush2.bf16.msra.mxu0 0
    %6030 = vmatprep.subr.bf16.mxu0 0
    %6031 = vmatpush2.bf16.msra.mxu0 0
    %6032 = vmatprep.subr.bf16.mxu0 0
    %6033 = vmatpush2.bf16.msra.mxu0 0
    %6034 = vmatprep.mubr.bf16.mxu0 0
    %6035 = vmatmul.mubr.bf16.gmra.mxu0 %v5859
    %v6036 = vpop.f32.mrf.mxu0
    %v6037 = vadd.f32 0.0, %v6036
    %v6038 = vpop.f32.mrf.mxu0
    %v6039 = vpop.f32.mrf.mxu0
    %v6040 = vpop.f32.mrf.mxu0
    %6041 = vdwg.mxu0
    %v6042 = vadd.f32 %v4757, %v6037
    %v6043 = vtanh.pop %v6042
    %v6044 = vmul.f32 %v5954, %v5854
    %v6045 = vmul.f32 %v5907, %v6043
    %v6046 = vadd.f32 %v6044, %v6045
    %v6047 = vtanh.pop %v6046
    %v6048 = vmul.f32 %v6001, %v6047
    %v6049 = vpack.c.bf16 %v6048, %v6048
    %v6051 = vsel %vm182, %v6049, 0
    %6053 = vmatprep.subr.bf16.mxu0 0
    %6054 = vmatpush1.bf16.msra.mxu0 0
    %6055 = vmatprep.subr.bf16.mxu0 0
    %6056 = vmatpush1.bf16.msra.mxu0 0
    %6057 = vmatprep.subr.bf16.mxu0 0
    %6058 = vmatpush1.bf16.msra.mxu0 0
    %6059 = vmatprep.subr.bf16.mxu0 0
    %6060 = vmatpush1.bf16.msra.mxu0 0
    %6061 = vmatprep.subr.bf16.mxu0 0
    %6062 = vmatpush1.bf16.msra.mxu0 %v4822
    %6063 = vmatprep.subr.bf16.mxu0 0
    %6064 = vmatpush1.bf16.msra.mxu0 %v4821
    %6065 = vmatprep.subr.bf16.mxu0 0
    %6066 = vmatpush1.bf16.msra.mxu0 %v4820
    %6067 = vmatprep.subr.bf16.mxu0 0
    %6068 = vmatpush1.bf16.msra.mxu0 %v4819
    %6069 = vmatprep.subr.bf16.mxu0 0
    %6070 = vmatpush2.bf16.msra.mxu0 0
    %6071 = vmatprep.subr.bf16.mxu0 0
    %6072 = vmatpush2.bf16.msra.mxu0 0
    %6073 = vmatprep.subr.bf16.mxu0 0
    %6074 = vmatpush2.bf16.msra.mxu0 0
    %6075 = vmatprep.subr.bf16.mxu0 0
    %6076 = vmatpush2.bf16.msra.mxu0 0
    %6077 = vmatprep.subr.bf16.mxu0 0
    %6078 = vmatpush2.bf16.msra.mxu0 0
    %6079 = vmatprep.subr.bf16.mxu0 0
    %6080 = vmatpush2.bf16.msra.mxu0 0
    %6081 = vmatprep.subr.bf16.mxu0 0
    %6082 = vmatpush2.bf16.msra.mxu0 0
    %6083 = vmatprep.subr.bf16.mxu0 0
    %6084 = vmatpush2.bf16.msra.mxu0 0
    %6085 = vmatprep.mubr.bf16.mxu0 0
    %6086 = vmatmul.mubr.bf16.gmra.mxu0 %v6051
    %v6087 = vpop.f32.mrf.mxu0
    %v6088 = vadd.f32 0.0, %v6087
    %v6089 = vpop.f32.mrf.mxu0
    %v6090 = vpop.f32.mrf.mxu0
    %v6091 = vpop.f32.mrf.mxu0
    %6092 = vdwg.mxu0
    %v6093 = vadd.f32 %v4444, %v6088
    %v6094 = vxor.u32 %v6093, 2147483648
    %v6095 = vmul.f32 %v6094, 1.442695
    %v6096 = vpow.pop %v6095
    %v6097 = vadd.f32 %v6096, 1.0
    %v6098 = vrcp.pop %v6097
    %v6099 = vmul.f32 1.0, %v6098
    %6100 = vmatprep.subr.bf16.mxu0 0
    %6101 = vmatpush1.bf16.msra.mxu0 0
    %6102 = vmatprep.subr.bf16.mxu0 0
    %6103 = vmatpush1.bf16.msra.mxu0 0
    %6104 = vmatprep.subr.bf16.mxu0 0
    %6105 = vmatpush1.bf16.msra.mxu0 0
    %6106 = vmatprep.subr.bf16.mxu0 0
    %6107 = vmatpush1.bf16.msra.mxu0 0
    %6108 = vmatprep.subr.bf16.mxu0 0
    %6109 = vmatpush1.bf16.msra.mxu0 %v4895
    %6110 = vmatprep.subr.bf16.mxu0 0
    %6111 = vmatpush1.bf16.msra.mxu0 %v4894
    %6112 = vmatprep.subr.bf16.mxu0 0
    %6113 = vmatpush1.bf16.msra.mxu0 %v4893
    %6114 = vmatprep.subr.bf16.mxu0 0
    %6115 = vmatpush1.bf16.msra.mxu0 %v4892
    %6116 = vmatprep.subr.bf16.mxu0 0
    %6117 = vmatpush2.bf16.msra.mxu0 0
    %6118 = vmatprep.subr.bf16.mxu0 0
    %6119 = vmatpush2.bf16.msra.mxu0 0
    %6120 = vmatprep.subr.bf16.mxu0 0
    %6121 = vmatpush2.bf16.msra.mxu0 0
    %6122 = vmatprep.subr.bf16.mxu0 0
    %6123 = vmatpush2.bf16.msra.mxu0 0
    %6124 = vmatprep.subr.bf16.mxu0 0
    %6125 = vmatpush2.bf16.msra.mxu0 0
    %6126 = vmatprep.subr.bf16.mxu0 0
    %6127 = vmatpush2.bf16.msra.mxu0 0
    %6128 = vmatprep.subr.bf16.mxu0 0
    %6129 = vmatpush2.bf16.msra.mxu0 0
    %6130 = vmatprep.subr.bf16.mxu0 0
    %6131 = vmatpush2.bf16.msra.mxu0 0
    %6132 = vmatprep.mubr.bf16.mxu0 0
    %6133 = vmatmul.mubr.bf16.gmra.mxu0 %v6051
    %v6134 = vpop.f32.mrf.mxu0
    %v6135 = vadd.f32 0.0, %v6134
    %v6136 = vpop.f32.mrf.mxu0
    %v6137 = vpop.f32.mrf.mxu0
    %v6138 = vpop.f32.mrf.mxu0
    %6139 = vdwg.mxu0
    %v6140 = vadd.f32 %v4550, %v6135
    %v6141 = vxor.u32 %v6140, 2147483648
    %v6142 = vmul.f32 %v6141, 1.442695
    %v6143 = vpow.pop %v6142
    %v6144 = vadd.f32 %v6143, 1.0
    %v6145 = vrcp.pop %v6144
    %v6146 = vmul.f32 1.0, %v6145
    %6147 = vmatprep.subr.bf16.mxu0 0
    %6148 = vmatpush1.bf16.msra.mxu0 0
    %6149 = vmatprep.subr.bf16.mxu0 0
    %6150 = vmatpush1.bf16.msra.mxu0 0
    %6151 = vmatprep.subr.bf16.mxu0 0
    %6152 = vmatpush1.bf16.msra.mxu0 0
    %6153 = vmatprep.subr.bf16.mxu0 0
    %6154 = vmatpush1.bf16.msra.mxu0 0
    %6155 = vmatprep.subr.bf16.mxu0 0
    %6156 = vmatpush1.bf16.msra.mxu0 %v4966
    %6157 = vmatprep.subr.bf16.mxu0 0
    %6158 = vmatpush1.bf16.msra.mxu0 %v4965
    %6159 = vmatprep.subr.bf16.mxu0 0
    %6160 = vmatpush1.bf16.msra.mxu0 %v4964
    %6161 = vmatprep.subr.bf16.mxu0 0
    %6162 = vmatpush1.bf16.msra.mxu0 %v4963
    %6163 = vmatprep.subr.bf16.mxu0 0
    %6164 = vmatpush2.bf16.msra.mxu0 0
    %6165 = vmatprep.subr.bf16.mxu0 0
    %6166 = vmatpush2.bf16.msra.mxu0 0
    %6167 = vmatprep.subr.bf16.mxu0 0
    %6168 = vmatpush2.bf16.msra.mxu0 0
    %6169 = vmatprep.subr.bf16.mxu0 0
    %6170 = vmatpush2.bf16.msra.mxu0 0
    %6171 = vmatprep.subr.bf16.mxu0 0
    %6172 = vmatpush2.bf16.msra.mxu0 0
    %6173 = vmatprep.subr.bf16.mxu0 0
    %6174 = vmatpush2.bf16.msra.mxu0 0
    %6175 = vmatprep.subr.bf16.mxu0 0
    %6176 = vmatpush2.bf16.msra.mxu0 0
    %6177 = vmatprep.subr.bf16.mxu0 0
    %6178 = vmatpush2.bf16.msra.mxu0 0
    %6179 = vmatprep.mubr.bf16.mxu0 0
    %6180 = vmatmul.mubr.bf16.gmra.mxu0 %v6051
    %v6181 = vpop.f32.mrf.mxu0
    %v6182 = vadd.f32 0.0, %v6181
    %v6183 = vpop.f32.mrf.mxu0
    %v6184 = vpop.f32.mrf.mxu0
    %v6185 = vpop.f32.mrf.mxu0
    %6186 = vdwg.mxu0
    %v6187 = vadd.f32 %v4656, %v6182
    %v6188 = vxor.u32 %v6187, 2147483648
    %v6189 = vmul.f32 %v6188, 1.442695
    %v6190 = vpow.pop %v6189
    %v6191 = vadd.f32 %v6190, 1.0
    %v6192 = vrcp.pop %v6191
    %v6193 = vmul.f32 1.0, %v6192
    %6194 = vmatprep.subr.bf16.mxu0 0
    %6195 = vmatpush1.bf16.msra.mxu0 0
    %6196 = vmatprep.subr.bf16.mxu0 0
    %6197 = vmatpush1.bf16.msra.mxu0 0
    %6198 = vmatprep.subr.bf16.mxu0 0
    %6199 = vmatpush1.bf16.msra.mxu0 0
    %6200 = vmatprep.subr.bf16.mxu0 0
    %6201 = vmatpush1.bf16.msra.mxu0 0
    %6202 = vmatprep.subr.bf16.mxu0 0
    %6203 = vmatpush1.bf16.msra.mxu0 %v5037
    %6204 = vmatprep.subr.bf16.mxu0 0
    %6205 = vmatpush1.bf16.msra.mxu0 %v5036
    %6206 = vmatprep.subr.bf16.mxu0 0
    %6207 = vmatpush1.bf16.msra.mxu0 %v5035
    %6208 = vmatprep.subr.bf16.mxu0 0
    %6209 = vmatpush1.bf16.msra.mxu0 %v5034
    %6210 = vmatprep.subr.bf16.mxu0 0
    %6211 = vmatpush2.bf16.msra.mxu0 0
    %6212 = vmatprep.subr.bf16.mxu0 0
    %6213 = vmatpush2.bf16.msra.mxu0 0
    %6214 = vmatprep.subr.bf16.mxu0 0
    %6215 = vmatpush2.bf16.msra.mxu0 0
    %6216 = vmatprep.subr.bf16.mxu0 0
    %6217 = vmatpush2.bf16.msra.mxu0 0
    %6218 = vmatprep.subr.bf16.mxu0 0
    %6219 = vmatpush2.bf16.msra.mxu0 0
    %6220 = vmatprep.subr.bf16.mxu0 0
    %6221 = vmatpush2.bf16.msra.mxu0 0
    %6222 = vmatprep.subr.bf16.mxu0 0
    %6223 = vmatpush2.bf16.msra.mxu0 0
    %6224 = vmatprep.subr.bf16.mxu0 0
    %6225 = vmatpush2.bf16.msra.mxu0 0
    %6226 = vmatprep.mubr.bf16.mxu0 0
    %6227 = vmatmul.mubr.bf16.gmra.mxu0 %v6051
    %v6228 = vpop.f32.mrf.mxu0
    %v6229 = vadd.f32 0.0, %v6228
    %v6230 = vpop.f32.mrf.mxu0
    %v6231 = vpop.f32.mrf.mxu0
    %v6232 = vpop.f32.mrf.mxu0
    %6233 = vdwg.mxu0
    %v6234 = vadd.f32 %v4762, %v6229
    %v6235 = vtanh.pop %v6234
    %v6236 = vmul.f32 %v6146, %v6046
    %v6237 = vmul.f32 %v6099, %v6235
    %v6238 = vadd.f32 %v6236, %v6237
    %v6239 = vtanh.pop %v6238
    %v6240 = vmul.f32 %v6193, %v6239
    %v6241 = vpack.c.bf16 %v6240, %v6240
    %v6243 = vsel %vm182, %v6241, 0
    %6245 = vmatprep.subr.bf16.mxu0 0
    %6246 = vmatpush1.bf16.msra.mxu0 0
    %6247 = vmatprep.subr.bf16.mxu0 0
    %6248 = vmatpush1.bf16.msra.mxu0 0
    %6249 = vmatprep.subr.bf16.mxu0 0
    %6250 = vmatpush1.bf16.msra.mxu0 0
    %6251 = vmatprep.subr.bf16.mxu0 0
    %6252 = vmatpush1.bf16.msra.mxu0 0
    %6253 = vmatprep.subr.bf16.mxu0 0
    %6254 = vmatpush1.bf16.msra.mxu0 %v4822
    %6255 = vmatprep.subr.bf16.mxu0 0
    %6256 = vmatpush1.bf16.msra.mxu0 %v4821
    %6257 = vmatprep.subr.bf16.mxu0 0
    %6258 = vmatpush1.bf16.msra.mxu0 %v4820
    %6259 = vmatprep.subr.bf16.mxu0 0
    %6260 = vmatpush1.bf16.msra.mxu0 %v4819
    %6261 = vmatprep.subr.bf16.mxu0 0
    %6262 = vmatpush2.bf16.msra.mxu0 0
    %6263 = vmatprep.subr.bf16.mxu0 0
    %6264 = vmatpush2.bf16.msra.mxu0 0
    %6265 = vmatprep.subr.bf16.mxu0 0
    %6266 = vmatpush2.bf16.msra.mxu0 0
    %6267 = vmatprep.subr.bf16.mxu0 0
    %6268 = vmatpush2.bf16.msra.mxu0 0
    %6269 = vmatprep.subr.bf16.mxu0 0
    %6270 = vmatpush2.bf16.msra.mxu0 0
    %6271 = vmatprep.subr.bf16.mxu0 0
    %6272 = vmatpush2.bf16.msra.mxu0 0
    %6273 = vmatprep.subr.bf16.mxu0 0
    %6274 = vmatpush2.bf16.msra.mxu0 0
    %6275 = vmatprep.subr.bf16.mxu0 0
    %6276 = vmatpush2.bf16.msra.mxu0 0
    %6277 = vmatprep.mubr.bf16.mxu0 0
    %6278 = vmatmul.mubr.bf16.gmra.mxu0 %v6243
    %v6279 = vpop.f32.mrf.mxu0
    %v6280 = vadd.f32 0.0, %v6279
    %v6281 = vpop.f32.mrf.mxu0
    %v6282 = vpop.f32.mrf.mxu0
    %v6283 = vpop.f32.mrf.mxu0
    %6284 = vdwg.mxu0
    %v6285 = vadd.f32 %v4447, %v6280
    %v6286 = vxor.u32 %v6285, 2147483648
    %v6287 = vmul.f32 %v6286, 1.442695
    %v6288 = vpow.pop %v6287
    %v6289 = vadd.f32 %v6288, 1.0
    %v6290 = vrcp.pop %v6289
    %v6291 = vmul.f32 1.0, %v6290
    %6292 = vmatprep.subr.bf16.mxu0 0
    %6293 = vmatpush1.bf16.msra.mxu0 0
    %6294 = vmatprep.subr.bf16.mxu0 0
    %6295 = vmatpush1.bf16.msra.mxu0 0
    %6296 = vmatprep.subr.bf16.mxu0 0
    %6297 = vmatpush1.bf16.msra.mxu0 0
    %6298 = vmatprep.subr.bf16.mxu0 0
    %6299 = vmatpush1.bf16.msra.mxu0 0
    %6300 = vmatprep.subr.bf16.mxu0 0
    %6301 = vmatpush1.bf16.msra.mxu0 %v4895
    %6302 = vmatprep.subr.bf16.mxu0 0
    %6303 = vmatpush1.bf16.msra.mxu0 %v4894
    %6304 = vmatprep.subr.bf16.mxu0 0
    %6305 = vmatpush1.bf16.msra.mxu0 %v4893
    %6306 = vmatprep.subr.bf16.mxu0 0
    %6307 = vmatpush1.bf16.msra.mxu0 %v4892
    %6308 = vmatprep.subr.bf16.mxu0 0
    %6309 = vmatpush2.bf16.msra.mxu0 0
    %6310 = vmatprep.subr.bf16.mxu0 0
    %6311 = vmatpush2.bf16.msra.mxu0 0
    %6312 = vmatprep.subr.bf16.mxu0 0
    %6313 = vmatpush2.bf16.msra.mxu0 0
    %6314 = vmatprep.subr.bf16.mxu0 0
    %6315 = vmatpush2.bf16.msra.mxu0 0
    %6316 = vmatprep.subr.bf16.mxu0 0
    %6317 = vmatpush2.bf16.msra.mxu0 0
    %6318 = vmatprep.subr.bf16.mxu0 0
    %6319 = vmatpush2.bf16.msra.mxu0 0
    %6320 = vmatprep.subr.bf16.mxu0 0
    %6321 = vmatpush2.bf16.msra.mxu0 0
    %6322 = vmatprep.subr.bf16.mxu0 0
    %6323 = vmatpush2.bf16.msra.mxu0 0
    %6324 = vmatprep.mubr.bf16.mxu0 0
    %6325 = vmatmul.mubr.bf16.gmra.mxu0 %v6243
    %v6326 = vpop.f32.mrf.mxu0
    %v6327 = vadd.f32 0.0, %v6326
    %v6328 = vpop.f32.mrf.mxu0
    %v6329 = vpop.f32.mrf.mxu0
    %v6330 = vpop.f32.mrf.mxu0
    %6331 = vdwg.mxu0
    %v6332 = vadd.f32 %v4553, %v6327
    %v6333 = vxor.u32 %v6332, 2147483648
    %v6334 = vmul.f32 %v6333, 1.442695
    %v6335 = vpow.pop %v6334
    %v6336 = vadd.f32 %v6335, 1.0
    %v6337 = vrcp.pop %v6336
    %v6338 = vmul.f32 1.0, %v6337
    %6339 = vmatprep.subr.bf16.mxu0 0
    %6340 = vmatpush1.bf16.msra.mxu0 0
    %6341 = vmatprep.subr.bf16.mxu0 0
    %6342 = vmatpush1.bf16.msra.mxu0 0
    %6343 = vmatprep.subr.bf16.mxu0 0
    %6344 = vmatpush1.bf16.msra.mxu0 0
    %6345 = vmatprep.subr.bf16.mxu0 0
    %6346 = vmatpush1.bf16.msra.mxu0 0
    %6347 = vmatprep.subr.bf16.mxu0 0
    %6348 = vmatpush1.bf16.msra.mxu0 %v4966
    %6349 = vmatprep.subr.bf16.mxu0 0
    %6350 = vmatpush1.bf16.msra.mxu0 %v4965
    %6351 = vmatprep.subr.bf16.mxu0 0
    %6352 = vmatpush1.bf16.msra.mxu0 %v4964
    %6353 = vmatprep.subr.bf16.mxu0 0
    %6354 = vmatpush1.bf16.msra.mxu0 %v4963
    %6355 = vmatprep.subr.bf16.mxu0 0
    %6356 = vmatpush2.bf16.msra.mxu0 0
    %6357 = vmatprep.subr.bf16.mxu0 0
    %6358 = vmatpush2.bf16.msra.mxu0 0
    %6359 = vmatprep.subr.bf16.mxu0 0
    %6360 = vmatpush2.bf16.msra.mxu0 0
    %6361 = vmatprep.subr.bf16.mxu0 0
    %6362 = vmatpush2.bf16.msra.mxu0 0
    %6363 = vmatprep.subr.bf16.mxu0 0
    %6364 = vmatpush2.bf16.msra.mxu0 0
    %6365 = vmatprep.subr.bf16.mxu0 0
    %6366 = vmatpush2.bf16.msra.mxu0 0
    %6367 = vmatprep.subr.bf16.mxu0 0
    %6368 = vmatpush2.bf16.msra.mxu0 0
    %6369 = vmatprep.subr.bf16.mxu0 0
    %6370 = vmatpush2.bf16.msra.mxu0 0
    %6371 = vmatprep.mubr.bf16.mxu0 0
    %6372 = vmatmul.mubr.bf16.gmra.mxu0 %v6243
    %v6373 = vpop.f32.mrf.mxu0
    %v6374 = vadd.f32 0.0, %v6373
    %v6375 = vpop.f32.mrf.mxu0
    %v6376 = vpop.f32.mrf.mxu0
    %v6377 = vpop.f32.mrf.mxu0
    %6378 = vdwg.mxu0
    %v6379 = vadd.f32 %v4659, %v6374
    %v6380 = vxor.u32 %v6379, 2147483648
    %v6381 = vmul.f32 %v6380, 1.442695
    %v6382 = vpow.pop %v6381
    %v6383 = vadd.f32 %v6382, 1.0
    %v6384 = vrcp.pop %v6383
    %v6385 = vmul.f32 1.0, %v6384
    %6386 = vmatprep.subr.bf16.mxu0 0
    %6387 = vmatpush1.bf16.msra.mxu0 0
    %6388 = vmatprep.subr.bf16.mxu0 0
    %6389 = vmatpush1.bf16.msra.mxu0 0
    %6390 = vmatprep.subr.bf16.mxu0 0
    %6391 = vmatpush1.bf16.msra.mxu0 0
    %6392 = vmatprep.subr.bf16.mxu0 0
    %6393 = vmatpush1.bf16.msra.mxu0 0
    %6394 = vmatprep.subr.bf16.mxu0 0
    %6395 = vmatpush1.bf16.msra.mxu0 %v5037
    %6396 = vmatprep.subr.bf16.mxu0 0
    %6397 = vmatpush1.bf16.msra.mxu0 %v5036
    %6398 = vmatprep.subr.bf16.mxu0 0
    %6399 = vmatpush1.bf16.msra.mxu0 %v5035
    %6400 = vmatprep.subr.bf16.mxu0 0
    %6401 = vmatpush1.bf16.msra.mxu0 %v5034
    %6402 = vmatprep.subr.bf16.mxu0 0
    %6403 = vmatpush2.bf16.msra.mxu0 0
    %6404 = vmatprep.subr.bf16.mxu0 0
    %6405 = vmatpush2.bf16.msra.mxu0 0
    %6406 = vmatprep.subr.bf16.mxu0 0
    %6407 = vmatpush2.bf16.msra.mxu0 0
    %6408 = vmatprep.subr.bf16.mxu0 0
    %6409 = vmatpush2.bf16.msra.mxu0 0
    %6410 = vmatprep.subr.bf16.mxu0 0
    %6411 = vmatpush2.bf16.msra.mxu0 0
    %6412 = vmatprep.subr.bf16.mxu0 0
    %6413 = vmatpush2.bf16.msra.mxu0 0
    %6414 = vmatprep.subr.bf16.mxu0 0
    %6415 = vmatpush2.bf16.msra.mxu0 0
    %6416 = vmatprep.subr.bf16.mxu0 0
    %6417 = vmatpush2.bf16.msra.mxu0 0
    %6418 = vmatprep.mubr.bf16.mxu0 0
    %6419 = vmatmul.mubr.bf16.gmra.mxu0 %v6243
    %v6420 = vpop.f32.mrf.mxu0
    %v6421 = vadd.f32 0.0, %v6420
    %v6422 = vpop.f32.mrf.mxu0
    %v6423 = vpop.f32.mrf.mxu0
    %v6424 = vpop.f32.mrf.mxu0
    %6425 = vdwg.mxu0
    %v6426 = vadd.f32 %v4765, %v6421
    %v6427 = vtanh.pop %v6426
    %v6428 = vmul.f32 %v6338, %v6238
    %v6429 = vmul.f32 %v6291, %v6427
    %v6430 = vadd.f32 %v6428, %v6429
    %v6431 = vtanh.pop %v6430
    %v6432 = vmul.f32 %v6385, %v6431
    %v6433 = vsel %vm130, %v5088, %v6432
    %v6434 = vsel %vm130, %v5280, %v6240
    %v6435 = vsel %vm130, %v5472, %v6048
    %v6436 = vsel %vm130, %v5664, %v5856
    %v6437 = vsel %vm130, %v5856, %v5664
    %v6438 = vsel %vm130, %v6048, %v5472
    %v6439 = vsel %vm130, %v6240, %v5280
    %v6440 = vsel %vm130, %v6432, %v5088
    %6441 = vst.msk [vmem:[#allocation11] sm:$0xff] %vm182, %v6433
    %6442 = vst.msk [vmem:[#allocation11 + $0x8] sm:$0xff] %vm182, %v6434
    %6443 = vst.msk [vmem:[#allocation11 + $0x10] sm:$0xff] %vm182, %v6435
    %6444 = vst.msk [vmem:[#allocation11 + $0x18] sm:$0xff] %vm182, %v6436
    %6445 = vst.msk [vmem:[#allocation11 + $0x20] sm:$0xff] %vm182, %v6437
    %6446 = vst.msk [vmem:[#allocation11 + $0x28] sm:$0xff] %vm182, %v6438
    %6447 = vst.msk [vmem:[#allocation11 + $0x30] sm:$0xff] %vm182, %v6439
    %6448 = vst.msk [vmem:[#allocation11 + $0x38] sm:$0xff] %vm182, %v6440
    %v6449 = vpack.c.bf16 %v6434, %v6433
    %v6450 = vpack.c.bf16 %v6436, %v6435
    %v6451 = vpack.c.bf16 %v6438, %v6437
    %v6452 = vpack.c.bf16 %v6440, %v6439
    %v6453 = vld [vmem:[#allocation7] sm:$0xf]
    %v6454 = vld [vmem:[#allocation7 + $0x4] sm:$0xf]
    %v6455 = vld [vmem:[#allocation7 + $0x8] sm:$0xf]
    %v6456 = vld [vmem:[#allocation7 + $0xc] sm:$0xf]
    %v6457 = vld [vmem:[#allocation7 + $0x10] sm:$0xf]
    %v6458 = vld [vmem:[#allocation7 + $0x14] sm:$0xf]
    %v6459 = vld [vmem:[#allocation7 + $0x18] sm:$0xf]
    %v6460 = vld [vmem:[#allocation7 + $0x1c] sm:$0xf]
    %v6461 = vld [vmem:[%s11] sm:$0x1]
    %v6463 = vlaneseq
    %v6464 = vshrl.u32 %v6463, 7
    %v6465 = vsub.s32 0, %v6464
    %v6466 = vrot.slane %v6461, %v6465
    %v6476 = vunpack.c.l.b16 %v6453
    %v6477 = vunpack.c.l.b16 %v6454
    %v6478 = vunpack.c.l.b16 %v6455
    %v6479 = vunpack.c.l.b16 %v6456
    %v6480 = vunpack.c.l.b16 %v6457
    %v6481 = vunpack.c.l.b16 %v6458
    %v6482 = vunpack.c.l.b16 %v6459
    %v6483 = vunpack.c.l.b16 %v6460
    %v6484 = vpack.c.b16 %v6477, %v6476
    %v6485 = vpack.c.b16 %v6479, %v6478
    %v6486 = vpack.c.b16 %v6481, %v6480
    %v6487 = vpack.c.b16 %v6483, %v6482
    %v6493 = vsel %vm182, %v6449, 0
    %v6496 = vsel %vm182, %v6450, 0
    %v6499 = vsel %vm182, %v6451, 0
    %v6502 = vsel %vm182, %v6452, 0
    %6504 = vmatprep.subr.bf16.mxu0 0
    %6505 = vmatpush1.bf16.msra.mxu0 0
    %6506 = vmatprep.subr.bf16.mxu0 0
    %6507 = vmatpush1.bf16.msra.mxu0 0
    %6508 = vmatprep.subr.bf16.mxu0 0
    %6509 = vmatpush1.bf16.msra.mxu0 0
    %6510 = vmatprep.subr.bf16.mxu0 0
    %6511 = vmatpush1.bf16.msra.mxu0 0
    %6512 = vmatprep.subr.bf16.mxu0 0
    %6513 = vmatpush1.bf16.msra.mxu0 %v6487
    %6514 = vmatprep.subr.bf16.mxu0 0
    %6515 = vmatpush1.bf16.msra.mxu0 %v6486
    %6516 = vmatprep.subr.bf16.mxu0 0
    %6517 = vmatpush1.bf16.msra.mxu0 %v6485
    %6518 = vmatprep.subr.bf16.mxu0 0
    %6519 = vmatpush1.bf16.msra.mxu0 %v6484
    %6520 = vmatprep.subr.bf16.mxu0 0
    %6521 = vmatpush2.bf16.msra.mxu0 0
    %6522 = vmatprep.subr.bf16.mxu0 0
    %6523 = vmatpush2.bf16.msra.mxu0 0
    %6524 = vmatprep.subr.bf16.mxu0 0
    %6525 = vmatpush2.bf16.msra.mxu0 0
    %6526 = vmatprep.subr.bf16.mxu0 0
    %6527 = vmatpush2.bf16.msra.mxu0 0
    %6528 = vmatprep.subr.bf16.mxu0 0
    %6529 = vmatpush2.bf16.msra.mxu0 0
    %6530 = vmatprep.subr.bf16.mxu0 0
    %6531 = vmatpush2.bf16.msra.mxu0 0
    %6532 = vmatprep.subr.bf16.mxu0 0
    %6533 = vmatpush2.bf16.msra.mxu0 0
    %6534 = vmatprep.subr.bf16.mxu0 0
    %6535 = vmatpush2.bf16.msra.mxu0 0
    %6536 = vmatprep.mubr.bf16.mxu0 0
    %6537 = vmatmul.mubr.bf16.gmra.mxu0 %v6493
    %v6538 = vpop.f32.mrf.mxu0
    %v6539 = vadd.f32 %v6466, %v6538
    %v6540 = vpop.f32.mrf.mxu0
    %v6541 = vpop.f32.mrf.mxu0
    %v6542 = vadd.f32 %v6466, %v6541
    %v6543 = vpop.f32.mrf.mxu0
    %6544 = vmatprep.mubr.bf16.mxu0 0
    %6545 = vmatmul.mubr.bf16.gmra.mxu0 %v6496
    %v6546 = vpop.f32.mrf.mxu0
    %v6547 = vadd.f32 %v6466, %v6546
    %v6548 = vpop.f32.mrf.mxu0
    %v6549 = vpop.f32.mrf.mxu0
    %v6550 = vadd.f32 %v6466, %v6549
    %v6551 = vpop.f32.mrf.mxu0
    %6552 = vmatprep.mubr.bf16.mxu0 0
    %6553 = vmatmul.mubr.bf16.gmra.mxu0 %v6499
    %v6554 = vpop.f32.mrf.mxu0
    %v6555 = vadd.f32 %v6466, %v6554
    %v6556 = vpop.f32.mrf.mxu0
    %v6557 = vpop.f32.mrf.mxu0
    %v6558 = vadd.f32 %v6466, %v6557
    %v6559 = vpop.f32.mrf.mxu0
    %6560 = vmatprep.mubr.bf16.mxu0 0
    %6561 = vmatmul.mubr.bf16.gmra.mxu0 %v6502
    %v6562 = vpop.f32.mrf.mxu0
    %v6563 = vadd.f32 %v6466, %v6562
    %v6564 = vpop.f32.mrf.mxu0
    %v6565 = vpop.f32.mrf.mxu0
    %v6566 = vadd.f32 %v6466, %v6565
    %v6567 = vpop.f32.mrf.mxu0
    %6568 = vdwg.mxu0
    %6569 = vst [vmem:[#allocation12] sm:$0xff] %v6539
    %6570 = vst [vmem:[#allocation12 + $0x8] sm:$0xff] %v6542
    %6571 = vst [vmem:[#allocation12 + $0x10] sm:$0xff] %v6547
    %6572 = vst [vmem:[#allocation12 + $0x18] sm:$0xff] %v6550
    %6573 = vst [vmem:[#allocation12 + $0x20] sm:$0xff] %v6555
    %6574 = vst [vmem:[#allocation12 + $0x28] sm:$0xff] %v6558
    %6575 = vst [vmem:[#allocation12 + $0x30] sm:$0xff] %v6563
    %6576 = vst [vmem:[#allocation12 + $0x38] sm:$0xff] %v6566
    // Predicated region
    $region62: #{tpu_custom_call.1} parent=1 // pred_check
      _
    $region63: #{tpu_custom_call.1} parent=1 // pred_check_branch
      %6578 = sbr.rel (0) target = $region65
    $region64: #{tpu_custom_call.1} parent=1 // pred_region
      %s6580 = ssub.s32 1024, 1024
      %6581 = vsyncadd [#allocation4], %s6580
      %s6582 = sshll.u32 [#allocation8], 4
      %s6583 = int_to_ptr.vmem [resolvable:$true] %s6582
      %6588 = dma.vmem_to_hbm [thread:$0]  %s6583, 1024, %s12, [#allocation4], 128, 128, 8
    $region65: #{tpu_custom_call.1} parent=1 // pred_fallthru
      _
    // Predicated region
    $region66: #{tpu_custom_call.1} parent=1 // pred_check
      _
    $region67: #{tpu_custom_call.1} parent=1 // pred_check_branch
      %6590 = sbr.rel (0) target = $region69
    $region68: #{tpu_custom_call.1} parent=1 // pred_region
      %s6592 = ssub.s32 1024, 1024
      %6593 = vsyncadd [#allocation10], %s6592
      %s6594 = sshll.u32 [#allocation9], 4
      %s6595 = int_to_ptr.vmem [resolvable:$true] %s6594
      %6600 = dma.vmem_to_hbm [thread:$0]  %s6595, 1024, %s13, [#allocation10], 128, 128, 8
    $region69: #{tpu_custom_call.1} parent=1 // pred_fallthru
      _
    // Predicated region
    $region70: #{tpu_custom_call.1} parent=1 // pred_check
      _
    $region71: #{tpu_custom_call.1} parent=1 // pred_check_branch
      %6602 = sbr.rel (0) target = $region73
    $region72: #{tpu_custom_call.1} parent=1 // pred_region
      %s6604 = ssub.s32 1024, 1024
      %6605 = vsyncadd [#allocation10], %s6604
      %s6606 = sshll.u32 [#allocation11], 4
      %s6607 = int_to_ptr.vmem [resolvable:$true] %s6606
      %6612 = dma.vmem_to_hbm [thread:$0]  %s6607, 1024, %s14, [#allocation10], 128, 128, 8
    $region73: #{tpu_custom_call.1} parent=1 // pred_fallthru
      _
    // Predicated region
    $region74: #{tpu_custom_call.1} parent=1 // pred_check
      _
    $region75: #{tpu_custom_call.1} parent=1 // pred_check_branch
      %6614 = sbr.rel (0) target = $region77
    $region76: #{tpu_custom_call.1} parent=1 // pred_region
      %s6616 = ssub.s32 1024, 1024
      %6617 = vsyncadd [#allocation13], %s6616
      %s6618 = sshll.u32 [#allocation12], 4
      %s6619 = int_to_ptr.vmem [resolvable:$true] %s6618
      %6624 = dma.vmem_to_hbm [thread:$0]  %s6619, 1024, %s15, [#allocation13], 128, 128, 8
    $region77: #{tpu_custom_call.1} parent=1 // pred_fallthru
      _
    // Predicated region
    $region78: #{tpu_custom_call.1} parent=1 // pred_check
      _
    $region79: #{tpu_custom_call.1} parent=1 // pred_check_branch
      %6626 = sbr.rel (0) target = $region81
    $region80: #{tpu_custom_call.1} parent=1 // pred_region
      %6627 = dma.done [#allocation4], 1024
    $region81: #{tpu_custom_call.1} parent=1 // pred_fallthru
      _
    // Predicated region
    $region82: #{tpu_custom_call.1} parent=1 // pred_check
      _
    $region83: #{tpu_custom_call.1} parent=1 // pred_check_branch
      %6629 = sbr.rel (0) target = $region85
    $region84: #{tpu_custom_call.1} parent=1 // pred_region
      %6630 = dma.done [#allocation10], 1024
    $region85: #{tpu_custom_call.1} parent=1 // pred_fallthru
      _
    // Predicated region
    $region86: #{tpu_custom_call.1} parent=1 // pred_check
      _
    $region87: #{tpu_custom_call.1} parent=1 // pred_check_branch
      %6632 = sbr.rel (0) target = $region89
    $region88: #{tpu_custom_call.1} parent=1 // pred_region
      %6633 = dma.done [#allocation10], 1024
    $region89: #{tpu_custom_call.1} parent=1 // pred_fallthru
      _
    // Predicated region
    $region90: #{tpu_custom_call.1} parent=1 // pred_check
      _
    $region91: #{tpu_custom_call.1} parent=1 // pred_check_branch
      %6635 = sbr.rel (0) target = $region93
    $region92: #{tpu_custom_call.1} parent=1 // pred_region
      %6636 = dma.done [#allocation13], 1024
    $region93: #{tpu_custom_call.1} parent=1 // pred_fallthru
      _
    %6637 = vsyncpa [#allocation3], 1
    %6638 = vsyncpa [#allocation6], 1
    %6639 = vsyncpa [#allocation4], 1
    %6640 = vsyncpa [#allocation10], 1
    %6641 = vsyncpa [#allocation13], 1

</llo_original>
